<compile_context>
chip_gen: v6e
topology: v6e:2x2x1
jax: 0.10.0
libtpu: 0.0.40
codegen_flags: <defaults>
</compile_context>

<pallas_src>
import jax
import jax.numpy as jnp
from jax.experimental import pallas as pl
from jax.experimental.pallas import tpu as pltpu

# Original (PyTorch) dims
IN_F, H1, H2, OUT = 5000, 1000, 500, 64

# TPU-aligned padded dims (sublane multiple of 8, lane multiple of 128)
B_PAD = 8
TK = 2560                 # fc1 reduction tile (grid = 2 steps)
IN_PAD = 2 * TK           # 5120
H1_PAD = 1024
H2_PAD = 512
OUT_PAD = 128


def _smlp_kernel(x_ref, w1_ref, b1_ref, w2_ref, b2_ref, w3_ref, b3_ref,
                 o_ref, acc_ref):
    k = pl.program_id(0)

    # Partial fc1: bf16 x bf16 on the MXU, f32 accumulation.
    partial = jnp.dot(x_ref[...].astype(jnp.bfloat16), w1_ref[...],
                      preferred_element_type=jnp.float32)

    @pl.when(k == 0)
    def _init():
        # Fold the fc1 bias into the first write (no init + RMW on step 0).
        acc_ref[...] = jnp.broadcast_to(b1_ref[...], acc_ref.shape) + partial

    @pl.when(k > 0)
    def _accum():
        acc_ref[...] += partial

    @pl.when(k == pl.num_programs(0) - 1)
    def _epilogue():
        h1 = jnp.maximum(acc_ref[...], 0.0)                        # ReLU(fc1)
        h2 = jnp.dot(h1, w2_ref[...].astype(jnp.float32),
                     preferred_element_type=jnp.float32)
        h2 = jnp.maximum(h2 + b2_ref[...], 0.0)                    # ReLU(fc2)
        y = jnp.dot(h2, w3_ref[...].astype(jnp.float32),
                    preferred_element_type=jnp.float32)
        o_ref[...] = (y + b3_ref[...]).astype(o_ref.dtype)         # fc3 (mu path)


def smlp_forward(padded_params, x):
    """x: (B, 5000) f32 -> (B, 64) f32. Eval-mode SMlp forward."""
    w1p, b1p, w2p, b2p, w3p, b3p = padded_params
    B = x.shape[0]
    assert B <= B_PAD, f"batch {B} > supported padded batch {B_PAD}"
    x_p = jnp.pad(x.astype(jnp.float32),
                  ((0, B_PAD - B), (0, IN_PAD - IN_F)))

    out = pl.pallas_call(
        _smlp_kernel,
        out_shape=jax.ShapeDtypeStruct((B_PAD, OUT_PAD), jnp.float32),
        grid_spec=pltpu.PrefetchScalarGridSpec(
            num_scalar_prefetch=0,
            grid=(IN_PAD // TK,),
            in_specs=[
                pl.BlockSpec((B_PAD, TK), lambda k: (0, k)),        # x tile (f32)
                pl.BlockSpec((TK, H1_PAD), lambda k: (k, 0)),       # W1 tile (bf16)
                pl.BlockSpec((1, H1_PAD), lambda k: (0, 0)),        # b1 (f32)
                pl.BlockSpec((H1_PAD, H2_PAD), lambda k: (0, 0)),   # W2 resident (bf16)
                pl.BlockSpec((1, H2_PAD), lambda k: (0, 0)),        # b2 (f32)
                pl.BlockSpec((H2_PAD, OUT_PAD), lambda k: (0, 0)),  # W3 resident (bf16)
                pl.BlockSpec((1, OUT_PAD), lambda k: (0, 0)),       # b3 (f32)
            ],
            out_specs=pl.BlockSpec((B_PAD, OUT_PAD), lambda k: (0, 0)),
            scratch_shapes=[pltpu.VMEM((B_PAD, H1_PAD), jnp.float32)],
        ),
        compiler_params=pltpu.CompilerParams(
            dimension_semantics=("arbitrary",),      # K-reduction axis
            vmem_limit_bytes=32 * 1024 * 1024,
        ),
    )(x_p, w1p, b1p, w2p, b2p, w3p, b3p)
    return out[:B, :OUT]


def init_smlp_params(key):
    """Deterministic params with the PyTorch module's shapes (weights stored
    as (in, out), i.e. fc3_mu is stored transposed: (500, 64))."""
    k1, k2, k3, k4, k5, k6 = jax.random.split(key, 6)

    def lin(kw, kb, fin, fout):
        bound = 1.0 / jnp.sqrt(fin).astype(jnp.float32)
        w = jax.random.uniform(kw, (fin, fout), jnp.float32, -bound, bound)
        b = jax.random.uniform(kb, (fout,), jnp.float32, -bound, bound)
        return w, b

    w1, b1 = lin(k1, k2, IN_F, H1)
    w2, b2 = lin(k3, k4, H1, H2)
    w3 = 0.05 * jax.random.normal(k5, (H2, OUT), jnp.float32)   # fc3_mu.T
    b3 = 0.05 * jax.random.normal(k6, (OUT,), jnp.float32)      # fc3_bias
    return (w1, b1, w2, b2, w3, b3)


def pad_params(params):
    """Zero-pad parameters to the TPU-aligned layout and cast weights to bf16
    (biases stay f32). Done once."""
    w1, b1, w2, b2, w3, b3 = params
    w1p = jnp.zeros((IN_PAD, H1_PAD), jnp.bfloat16).at[:IN_F, :H1].set(
        w1.astype(jnp.bfloat16))
    b1p = jnp.zeros((1, H1_PAD), jnp.float32).at[0, :H1].set(b1)
    w2p = jnp.zeros((H1_PAD, H2_PAD), jnp.bfloat16).at[:H1, :H2].set(
        w2.astype(jnp.bfloat16))
    b2p = jnp.zeros((1, H2_PAD), jnp.float32).at[0, :H2].set(b2)
    w3p = jnp.zeros((H2_PAD, OUT_PAD), jnp.bfloat16).at[:H2, :OUT].set(
        w3.astype(jnp.bfloat16))
    b3p = jnp.zeros((1, OUT_PAD), jnp.float32).at[0, :OUT].set(b3)
    return (w1p, b1p, w2p, b2p, w3p, b3p)


def _reference_forward(params, x):
    w1, b1, w2, b2, w3, b3 = params
    h = jnp.maximum(x @ w1 + b1, 0.0)
    h = jnp.maximum(h @ w2 + b2, 0.0)
    return h @ w3 + b3


if __name__ == "__main__":
    batch = 2
    key = jax.random.PRNGKey(0)
    key, kx, kp = jax.random.split(key, 3)

    x = jax.random.normal(kx, (batch, IN_F), dtype=jnp.float32)
    params = init_smlp_params(kp)
    padded = pad_params(params)

    out = smlp_forward(padded, x)
    out = jax.block_until_ready(out)

    ref = _reference_forward(params, x)
    assert out.shape == (batch, OUT)
    assert jnp.allclose(out, ref, atol=1e-2, rtol=1e-2), (
        float(jnp.max(jnp.abs(out - ref))))

    print("KERNEL_OK")
</pallas_src>

<mosaic_0001>
module attributes {stable_mosaic.version = 11 : i64} {
  func.func @_smlp_kernel(%arg0: i32, %arg1: memref<8x2560xf32, #tpu.memory_space<vmem>>, %arg2: memref<2560x1024xbf16, #tpu.memory_space<vmem>>, %arg3: memref<1x1024xf32, #tpu.memory_space<vmem>>, %arg4: memref<1024x512xbf16, #tpu.memory_space<vmem>>, %arg5: memref<1x512xf32, #tpu.memory_space<vmem>>, %arg6: memref<512x128xbf16, #tpu.memory_space<vmem>>, %arg7: memref<1x128xf32, #tpu.memory_space<vmem>>, %arg8: memref<8x128xf32, #tpu.memory_space<vmem>>, %arg9: memref<8x1024xf32, #tpu.memory_space<vmem>>) attributes {dimension_semantics = [#tpu.dimension_semantics<arbitrary>], iteration_bounds = array<i64: 2>, scalar_prefetch = 0 : i64, scratch_operands = 1 : i64, tpu.core_type = #tpu.core_type<tc>, window_params = [{transform_indices = @transform_0, window_bounds = array<i64: 8, 2560>}, {transform_indices = @transform_1, window_bounds = array<i64: 2560, 1024>}, {pipeline_mode = #tpu.pipeline_mode<synchronous>, transform_indices = @transform_2, window_bounds = array<i64: 1, 1024>}, {pipeline_mode = #tpu.pipeline_mode<synchronous>, transform_indices = @transform_3, window_bounds = array<i64: 1024, 512>}, {pipeline_mode = #tpu.pipeline_mode<synchronous>, transform_indices = @transform_4, window_bounds = array<i64: 1, 512>}, {pipeline_mode = #tpu.pipeline_mode<synchronous>, transform_indices = @transform_5, window_bounds = array<i64: 512, 128>}, {pipeline_mode = #tpu.pipeline_mode<synchronous>, transform_indices = @transform_6, window_bounds = array<i64: 1, 128>}, {pipeline_mode = #tpu.pipeline_mode<synchronous>, transform_indices = @transform_7, window_bounds = array<i64: 8, 128>}]} {
    %c0 = arith.constant 0 : index
    %c0_0 = arith.constant 0 : index
    %0 = vector.load %arg1[%c0, %c0_0] : memref<8x2560xf32, #tpu.memory_space<vmem>>, vector<8x2560xf32>
    %1 = arith.truncf %0 : vector<8x2560xf32> to vector<8x2560xbf16>
    %c0_1 = arith.constant 0 : index
    %c0_2 = arith.constant 0 : index
    %2 = vector.load %arg2[%c0_1, %c0_2] : memref<2560x1024xbf16, #tpu.memory_space<vmem>>, vector<2560x1024xbf16>
    %cst = arith.constant dense<0.000000e+00> : vector<8x1024xf32>
    %3 = tpu.matmul %1, %2, %cst {dimension_numbers = #tpu.dot_dimension_numbers<[1], [0], [0], [1], [0, 0, 1, 1], [], []>} : vector<8x2560xbf16>, vector<2560x1024xbf16>, vector<8x1024xf32> -> vector<8x1024xf32>
    %c0_i32 = arith.constant 0 : i32
    %4 = arith.cmpi eq, %arg0, %c0_i32 : i32
    %5 = arith.extui %4 : i1 to i32
    %c0_i32_3 = arith.constant 0 : i32
    %6 = arith.cmpi ne, %5, %c0_i32_3 : i32
    scf.if %6 {
      %c0_7 = arith.constant 0 : index
      %c0_8 = arith.constant 0 : index
      %13 = vector.load %arg3[%c0_7, %c0_8] : memref<1x1024xf32, #tpu.memory_space<vmem>>, vector<1x1024xf32>
      %14 = vector.shape_cast %13 : vector<1x1024xf32> to vector<1x1024xf32>
      %15 = vector.broadcast %14 : vector<1x1024xf32> to vector<8x1024xf32>
      %16 = arith.addf %15, %3 : vector<8x1024xf32>
      %c0_9 = arith.constant 0 : index
      %c0_10 = arith.constant 0 : index
      %17 = vector.load %arg9[%c0_9, %c0_10] : memref<8x1024xf32, #tpu.memory_space<vmem>>, vector<8x1024xf32>
      tpu.vector_store %arg9[%c0_9, %c0_10], %16 {strides = array<i32>} : memref<8x1024xf32, #tpu.memory_space<vmem>>, vector<8x1024xf32>,
    } else {
    }
    %c0_i32_4 = arith.constant 0 : i32
    %7 = arith.cmpi sgt, %arg0, %c0_i32_4 : i32
    %8 = arith.extui %7 : i1 to i32
    %c0_i32_5 = arith.constant 0 : i32
    %9 = arith.cmpi ne, %8, %c0_i32_5 : i32
    scf.if %9 {
      %c0_7 = arith.constant 0 : index
      %c0_8 = arith.constant 0 : index
      %13 = vector.load %arg9[%c0_7, %c0_8] : memref<8x1024xf32, #tpu.memory_space<vmem>>, vector<8x1024xf32>
      %14 = arith.addf %13, %3 : vector<8x1024xf32>
      %c0_9 = arith.constant 0 : index
      %c0_10 = arith.constant 0 : index
      %15 = vector.load %arg9[%c0_9, %c0_10] : memref<8x1024xf32, #tpu.memory_space<vmem>>, vector<8x1024xf32>
      tpu.vector_store %arg9[%c0_9, %c0_10], %14 {strides = array<i32>} : memref<8x1024xf32, #tpu.memory_space<vmem>>, vector<8x1024xf32>,
    } else {
    }
    %c1_i32 = arith.constant 1 : i32
    %10 = arith.cmpi eq, %arg0, %c1_i32 : i32
    %11 = arith.extui %10 : i1 to i32
    %c0_i32_6 = arith.constant 0 : i32
    %12 = arith.cmpi ne, %11, %c0_i32_6 : i32
    scf.if %12 {
      %c0_7 = arith.constant 0 : index
      %c0_8 = arith.constant 0 : index
      %13 = vector.load %arg9[%c0_7, %c0_8] : memref<8x1024xf32, #tpu.memory_space<vmem>>, vector<8x1024xf32>
      %cst_9 = arith.constant 0.000000e+00 : f32
      %14 = vector.broadcast %cst_9 : f32 to vector<8x1024xf32>
      %15 = arith.maximumf %13, %14 : vector<8x1024xf32>
      %c0_10 = arith.constant 0 : index
      %c0_11 = arith.constant 0 : index
      %16 = vector.load %arg4[%c0_10, %c0_11] : memref<1024x512xbf16, #tpu.memory_space<vmem>>, vector<1024x512xbf16>
      %17 = arith.extf %16 : vector<1024x512xbf16> to vector<1024x512xf32>
      %cst_12 = arith.constant dense<0.000000e+00> : vector<8x512xf32>
      %18 = tpu.matmul %15, %17, %cst_12 {dimension_numbers = #tpu.dot_dimension_numbers<[1], [0], [0], [1], [0, 0, 1, 1], [], []>} : vector<8x1024xf32>, vector<1024x512xf32>, vector<8x512xf32> -> vector<8x512xf32>
      %c0_13 = arith.constant 0 : index
      %c0_14 = arith.constant 0 : index
      %19 = vector.load %arg5[%c0_13, %c0_14] : memref<1x512xf32, #tpu.memory_space<vmem>>, vector<1x512xf32>
      %20 = vector.broadcast %19 : vector<1x512xf32> to vector<8x512xf32>
      %21 = arith.addf %18, %20 : vector<8x512xf32>
      %cst_15 = arith.constant 0.000000e+00 : f32
      %22 = vector.broadcast %cst_15 : f32 to vector<8x512xf32>
      %23 = arith.maximumf %21, %22 : vector<8x512xf32>
      %c0_16 = arith.constant 0 : index
      %c0_17 = arith.constant 0 : index
      %24 = vector.load %arg6[%c0_16, %c0_17] : memref<512x128xbf16, #tpu.memory_space<vmem>>, vector<512x128xbf16>
      %25 = arith.extf %24 : vector<512x128xbf16> to vector<512x128xf32>
      %cst_18 = arith.constant dense<0.000000e+00> : vector<8x128xf32>
      %26 = tpu.matmul %23, %25, %cst_18 {dimension_numbers = #tpu.dot_dimension_numbers<[1], [0], [0], [1], [0, 0, 1, 1], [], []>} : vector<8x512xf32>, vector<512x128xf32>, vector<8x128xf32> -> vector<8x128xf32>
      %c0_19 = arith.constant 0 : index
      %c0_20 = arith.constant 0 : index
      %27 = vector.load %arg7[%c0_19, %c0_20] : memref<1x128xf32, #tpu.memory_space<vmem>>, vector<1x128xf32>
      %28 = vector.broadcast %27 : vector<1x128xf32> to vector<8x128xf32>
      %29 = arith.addf %26, %28 : vector<8x128xf32>
      %c0_21 = arith.constant 0 : index
      %c0_22 = arith.constant 0 : index
      %30 = vector.load %arg8[%c0_21, %c0_22] : memref<8x128xf32, #tpu.memory_space<vmem>>, vector<8x128xf32>
      tpu.vector_store %arg8[%c0_21, %c0_22], %29 {strides = array<i32>} : memref<8x128xf32, #tpu.memory_space<vmem>>, vector<8x128xf32>,
    } else {
    }
    return
  }
  func.func @transform_0(%arg0: i32) -> (i32, i32) {
    %c0_i32 = arith.constant 0 : i32
    %c0_i32_0 = arith.constant 0 : i32
    return %c0_i32, %arg0 : i32, i32
  }
  func.func @transform_1(%arg0: i32) -> (i32, i32) {
    %c0_i32 = arith.constant 0 : i32
    %c0_i32_0 = arith.constant 0 : i32
    return %arg0, %c0_i32 : i32, i32
  }
  func.func @transform_2(%arg0: i32) -> (i32, i32) {
    %c0_i32 = arith.constant 0 : i32
    %c0_i32_0 = arith.constant 0 : i32
    %c0_i32_1 = arith.constant 0 : i32
    return %c0_i32, %c0_i32_0 : i32, i32
  }
  func.func @transform_3(%arg0: i32) -> (i32, i32) {
    %c0_i32 = arith.constant 0 : i32
    %c0_i32_0 = arith.constant 0 : i32
    %c0_i32_1 = arith.constant 0 : i32
    return %c0_i32, %c0_i32_0 : i32, i32
  }
  func.func @transform_4(%arg0: i32) -> (i32, i32) {
    %c0_i32 = arith.constant 0 : i32
    %c0_i32_0 = arith.constant 0 : i32
    %c0_i32_1 = arith.constant 0 : i32
    return %c0_i32, %c0_i32_0 : i32, i32
  }
  func.func @transform_5(%arg0: i32) -> (i32, i32) {
    %c0_i32 = arith.constant 0 : i32
    %c0_i32_0 = arith.constant 0 : i32
    %c0_i32_1 = arith.constant 0 : i32
    return %c0_i32, %c0_i32_0 : i32, i32
  }
  func.func @transform_6(%arg0: i32) -> (i32, i32) {
    %c0_i32 = arith.constant 0 : i32
    %c0_i32_0 = arith.constant 0 : i32
    %c0_i32_1 = arith.constant 0 : i32
    return %c0_i32, %c0_i32_0 : i32, i32
  }
  func.func @transform_7(%arg0: i32) -> (i32, i32) {
    %c0_i32 = arith.constant 0 : i32
    %c0_i32_0 = arith.constant 0 : i32
    %c0_i32_1 = arith.constant 0 : i32
    return %c0_i32, %c0_i32_0 : i32, i32
  }
}

</mosaic_0001>

<llo_original>
// kernel: tpu_custom_call.1
$region0: #{tpu_custom_call.1}
  #allocation0 [shape = 'u32[]', space=smem, size = 0x4, offset = 0x4, fixed_abs, tag = 'smem constant byte address 0x4 - core index']
  #allocation1 [shape = 'u32[144,128]{1,0:T(1,128)}', space=vmem, size = 0x12000, scoped, tag = 'internal scratch']
  #allocation2 [shape = 'f32[8,1024]{1,0:T(8,128)}', space=vmem, size = 0x8000, scoped, tag = 'scratch operand']
  %s0 = inlined_call_operand.hbm [shape: f32[8,5120], index: 0, kind: input, shape index: {}]
  %s1 = inlined_call_operand.hbm [shape: bf16[5120,1024], index: 1, kind: input, shape index: {}]
  %s2 = inlined_call_operand.hbm [shape: f32[1,1024], index: 2, kind: input, shape index: {}]
  %s3 = inlined_call_operand.hbm [shape: bf16[1024,512], index: 3, kind: input, shape index: {}]
  %s4 = inlined_call_operand.hbm [shape: f32[1,512], index: 4, kind: input, shape index: {}]
  %s5 = inlined_call_operand.hbm [shape: bf16[512,128], index: 5, kind: input, shape index: {}]
  %s6 = inlined_call_operand.hbm [shape: f32[1,128], index: 6, kind: input, shape index: {}]
  %s7 = inlined_call_operand.hbm [shape: f32[8,128], index: 7, kind: output, shape index: {}]
  %s8 = sld [smem:[#allocation0]]
  $region101: #{tpu_custom_call.1} parent=0
    _
  %s10 = ssub.s32 1, %s8
  %s11 = scalar_select 0, %s10, %s8
  $region1: #{tpu_custom_call.1} parent=0
    #allocation3 [shape = 'u8[163840]{0}', space=vmem, size = 0x28000, scoped, tag = 'input window, operand 0']
    #allocation4 [shape = 's32[2]{0}', space=sflag, size = 0x8, scoped, tag = 'scoped memory for tpu_custom_call.1']
    #allocation5 [shape = 's32[2]{0}', space=sflag, size = 0x8, scoped, tag = 'scoped memory for tpu_custom_call.1']
    #allocation6 [shape = 'u8[10485760]{0}', space=vmem, size = 0xa00000, scoped, tag = 'input window, operand 1']
    #allocation7 [shape = 's32[2]{0}', space=sflag, size = 0x8, scoped, tag = 'scoped memory for tpu_custom_call.1']
    #allocation8 [shape = 'u8[4096]{0}', space=vmem, size = 0x1000, scoped, tag = 'input window, operand 2, single buffered']
    #allocation9 [shape = 'u8[1048576]{0}', space=vmem, size = 0x100000, scoped, tag = 'input window, operand 3, single buffered']
    #allocation10 [shape = 's32[1]{0}', space=sflag, size = 0x4, scoped, tag = 'scoped memory for tpu_custom_call.1']
    #allocation11 [shape = 'u8[2048]{0}', space=vmem, size = 0x800, scoped, tag = 'input window, operand 4, single buffered']
    #allocation12 [shape = 'u8[131072]{0}', space=vmem, size = 0x20000, scoped, tag = 'input window, operand 5, single buffered']
    #allocation13 [shape = 's32[1]{0}', space=sflag, size = 0x4, scoped, tag = 'scoped memory for tpu_custom_call.1']
    #allocation14 [shape = 'u8[512]{0}', space=vmem, size = 0x400, scoped, tag = 'input window, operand 6, single buffered']
    #allocation15 [shape = 'u8[4096]{0}', space=vmem, size = 0x1000, scoped, tag = 'output window, operand 0, single buffered']
    %12 = vsyncpa [#allocation4], 0
    %s13 = scalar_lea.sflag [#allocation4], 1
    %14 = vsyncpa %s13, 0
    %15 = vsyncpa [#allocation7], 0
    %s16 = scalar_lea.sflag [#allocation7], 1
    %17 = vsyncpa %s16, 0
    %18 = vsyncpa [#allocation10], 0
    %19 = vsyncpa [#allocation13], 0
    %20 = vsyncpa [#allocation5], 0
    loop: start=0, step=1, limit=4
    $region2: #{tpu_custom_call.1} parent=1 // loop_pre_header
      _
    $region3: #{tpu_custom_call.1} parent=1 // loop_header
      %s22 = sphi 0, %s26
      %p23 = scmp.ge.s32.totalorder %s22, 4
      %s32 = sphi 0, %s34
      %s35 = sphi 0, %s32
      %s36 = sphi 0, %s35
      %s52 = sphi 0, %s36
      %s58 = sphi 0, %s60
      %s61 = sphi 0, %s58
      %s62 = sphi 0, %s61
      %s78 = sphi 0, %s62
      %s82 = sphi 0, %s82
      %s84 = sphi 0, %s82
      %s85 = sphi 0, %s84
      %s99 = sphi 0, %s85
      %s103 = sphi 0, %s103
      %s105 = sphi 0, %s103
      %s106 = sphi 0, %s105
      %s120 = sphi 0, %s106
      %s124 = sphi 0, %s124
      %s126 = sphi 0, %s124
      %s127 = sphi 0, %s126
      %s141 = sphi 0, %s127
      %s145 = sphi 0, %s145
      %s147 = sphi 0, %s145
      %s148 = sphi 0, %s147
      %s162 = sphi 0, %s148
      %s166 = sphi 0, %s166
      %s168 = sphi 0, %s166
      %s169 = sphi 0, %s168
      %s183 = sphi 0, %s169
      %s187 = sphi 0, %s187
      %s189 = sphi 0, %s187
      %s190 = sphi 0, %s189
      %s204 = sphi 0, %s190
    $region4: #{tpu_custom_call.1} parent=1 // loop_header_branch
      %25 = sbr.rel (%p23) target = $region8
    $region5: #{tpu_custom_call.1} parent=1 // loop_body
      %s27 = ssub.s32 %s22, 1
      %s28 = ssub.s32 %s22, 2
      %s29 = sadd.s32 %s22, 1
      %s30 = ssub.s32 %s22, %s29
      %p31 = scmp.eq.s32.totalorder %s30, 0
      %s33 = sadd.s32 %s32, 1
      %s34 = scalar_select %p31, %s32, %s33
      %p37 = pneg %p31
      %p38 = scmp.eq.s32.totalorder %s22, 1
      %p39 = por %p37, %p38
      %p40 = scmp.ne.s32.totalorder %s32, %s35
      %p41 = scmp.eq.s32.totalorder %s22, 0
      %p42 = por %p40, %p41
      %p43 = scmp.ne.s32.totalorder %s32, %s35
      %p44 = scmp.eq.s32.totalorder %s27, 1
      %p45 = por %p43, %p44
      %p46 = scmp.ne.s32.totalorder %s35, %s36
      %p47 = scmp.eq.s32.totalorder %s27, 0
      %p48 = por %p46, %p47
      %p49 = scmp.ne.s32.totalorder %s35, %s36
      %p50 = scmp.eq.s32.totalorder %s28, 1
      %p51 = por %p49, %p50
      %p53 = scmp.ne.s32.totalorder %s36, %s52
      %p54 = scmp.eq.s32.totalorder %s28, 0
      %p55 = por %p53, %p54
      %s56 = ssub.s32 %s22, %s29
      %p57 = scmp.eq.s32.totalorder %s56, 0
      %s59 = sadd.s32 %s58, 1
      %s60 = scalar_select %p57, %s58, %s59
      %p63 = pneg %p57
      %p64 = scmp.eq.s32.totalorder %s22, 1
      %p65 = por %p63, %p64
      %p66 = scmp.ne.s32.totalorder %s58, %s61
      %p67 = scmp.eq.s32.totalorder %s22, 0
      %p68 = por %p66, %p67
      %p69 = scmp.ne.s32.totalorder %s58, %s61
      %p70 = scmp.eq.s32.totalorder %s27, 1
      %p71 = por %p69, %p70
      %p72 = scmp.ne.s32.totalorder %s61, %s62
      %p73 = scmp.eq.s32.totalorder %s27, 0
      %p74 = por %p72, %p73
      %p75 = scmp.ne.s32.totalorder %s61, %s62
      %p76 = scmp.eq.s32.totalorder %s28, 1
      %p77 = por %p75, %p76
      %p79 = scmp.ne.s32.totalorder %s62, %s78
      %p80 = scmp.eq.s32.totalorder %s28, 0
      %p81 = por %p79, %p80
      %s83 = sadd.s32 %s82, 1
      %p86 = scmp.eq.s32.totalorder %s22, 1
      %p87 = scmp.ne.s32.totalorder %s82, %s84
      %p88 = scmp.eq.s32.totalorder %s22, 0
      %p89 = por %p87, %p88
      %p90 = scmp.ne.s32.totalorder %s82, %s84
      %p91 = scmp.eq.s32.totalorder %s27, 1
      %p92 = por %p90, %p91
      %p93 = scmp.ne.s32.totalorder %s84, %s85
      %p94 = scmp.eq.s32.totalorder %s27, 0
      %p95 = por %p93, %p94
      %p96 = scmp.ne.s32.totalorder %s84, %s85
      %p97 = scmp.eq.s32.totalorder %s28, 1
      %p98 = por %p96, %p97
      %p100 = scmp.ne.s32.totalorder %s85, %s99
      %p101 = scmp.eq.s32.totalorder %s28, 0
      %p102 = por %p100, %p101
      %s104 = sadd.s32 %s103, 1
      %p107 = scmp.eq.s32.totalorder %s22, 1
      %p108 = scmp.ne.s32.totalorder %s103, %s105
      %p109 = scmp.eq.s32.totalorder %s22, 0
      %p110 = por %p108, %p109
      %p111 = scmp.ne.s32.totalorder %s103, %s105
      %p112 = scmp.eq.s32.totalorder %s27, 1
      %p113 = por %p111, %p112
      %p114 = scmp.ne.s32.totalorder %s105, %s106
      %p115 = scmp.eq.s32.totalorder %s27, 0
      %p116 = por %p114, %p115
      %p117 = scmp.ne.s32.totalorder %s105, %s106
      %p118 = scmp.eq.s32.totalorder %s28, 1
      %p119 = por %p117, %p118
      %p121 = scmp.ne.s32.totalorder %s106, %s120
      %p122 = scmp.eq.s32.totalorder %s28, 0
      %p123 = por %p121, %p122
      %s125 = sadd.s32 %s124, 1
      %p128 = scmp.eq.s32.totalorder %s22, 1
      %p129 = scmp.ne.s32.totalorder %s124, %s126
      %p130 = scmp.eq.s32.totalorder %s22, 0
      %p131 = por %p129, %p130
      %p132 = scmp.ne.s32.totalorder %s124, %s126
      %p133 = scmp.eq.s32.totalorder %s27, 1
      %p134 = por %p132, %p133
      %p135 = scmp.ne.s32.totalorder %s126, %s127
      %p136 = scmp.eq.s32.totalorder %s27, 0
      %p137 = por %p135, %p136
      %p138 = scmp.ne.s32.totalorder %s126, %s127
      %p139 = scmp.eq.s32.totalorder %s28, 1
      %p140 = por %p138, %p139
      %p142 = scmp.ne.s32.totalorder %s127, %s141
      %p143 = scmp.eq.s32.totalorder %s28, 0
      %p144 = por %p142, %p143
      %s146 = sadd.s32 %s145, 1
      %p149 = scmp.eq.s32.totalorder %s22, 1
      %p150 = scmp.ne.s32.totalorder %s145, %s147
      %p151 = scmp.eq.s32.totalorder %s22, 0
      %p152 = por %p150, %p151
      %p153 = scmp.ne.s32.totalorder %s145, %s147
      %p154 = scmp.eq.s32.totalorder %s27, 1
      %p155 = por %p153, %p154
      %p156 = scmp.ne.s32.totalorder %s147, %s148
      %p157 = scmp.eq.s32.totalorder %s27, 0
      %p158 = por %p156, %p157
      %p159 = scmp.ne.s32.totalorder %s147, %s148
      %p160 = scmp.eq.s32.totalorder %s28, 1
      %p161 = por %p159, %p160
      %p163 = scmp.ne.s32.totalorder %s148, %s162
      %p164 = scmp.eq.s32.totalorder %s28, 0
      %p165 = por %p163, %p164
      %s167 = sadd.s32 %s166, 1
      %p170 = scmp.eq.s32.totalorder %s22, 1
      %p171 = scmp.ne.s32.totalorder %s166, %s168
      %p172 = scmp.eq.s32.totalorder %s22, 0
      %p173 = por %p171, %p172
      %p174 = scmp.ne.s32.totalorder %s166, %s168
      %p175 = scmp.eq.s32.totalorder %s27, 1
      %p176 = por %p174, %p175
      %p177 = scmp.ne.s32.totalorder %s168, %s169
      %p178 = scmp.eq.s32.totalorder %s27, 0
      %p179 = por %p177, %p178
      %p180 = scmp.ne.s32.totalorder %s168, %s169
      %p181 = scmp.eq.s32.totalorder %s28, 1
      %p182 = por %p180, %p181
      %p184 = scmp.ne.s32.totalorder %s169, %s183
      %p185 = scmp.eq.s32.totalorder %s28, 0
      %p186 = por %p184, %p185
      %s188 = sadd.s32 %s187, 1
      %p191 = scmp.eq.s32.totalorder %s22, 1
      %p192 = scmp.ne.s32.totalorder %s187, %s189
      %p193 = scmp.eq.s32.totalorder %s22, 0
      %p194 = por %p192, %p193
      %p195 = scmp.ne.s32.totalorder %s187, %s189
      %p196 = scmp.eq.s32.totalorder %s27, 1
      %p197 = por %p195, %p196
      %p198 = scmp.ne.s32.totalorder %s189, %s190
      %p199 = scmp.eq.s32.totalorder %s27, 0
      %p200 = por %p198, %p199
      %p201 = scmp.ne.s32.totalorder %s189, %s190
      %p202 = scmp.eq.s32.totalorder %s28, 1
      %p203 = por %p201, %p202
      %p205 = scmp.ne.s32.totalorder %s190, %s204
      %p206 = scmp.eq.s32.totalorder %s28, 0
      %p207 = por %p205, %p206
      %p208 = scmp.le.s32.totalorder 1, %s22
      %p209 = scmp.lt.s32.totalorder %s22, 3
      %p210 = pnand %p208, %p209
      %p211 = pneg %p210
      // Predicated region
      $region9: #{tpu_custom_call.1} parent=5 // pred_check
        _
      $region10: #{tpu_custom_call.1} parent=5 // pred_check_branch
        %213 = sbr.rel (%p210) target = $region12
      $region11: #{tpu_custom_call.1} parent=5 // pred_region
        %s214 = ssub.s32 %s22, 1
        // Predicated region
        $region13: #{tpu_custom_call.1} parent=11 // pred_check
          %p215 = pneg %p95
        $region14: #{tpu_custom_call.1} parent=11 // pred_check_branch
          %217 = sbr.rel (%p215) target = $region16
        $region15: #{tpu_custom_call.1} parent=11 // pred_region
          %s219 = ssub.s32 128, 128
          %220 = vsyncadd [#allocation7], %s219
          %s222 = sshll.u32 [#allocation8], 4
          %s223 = int_to_ptr.vmem [resolvable:$true] %s222
          %225 = dma.hbm_to_vmem [thread:$0]  %s2, 128, %s223, [#allocation7]
        $region16: #{tpu_custom_call.1} parent=11 // pred_fallthru
          _
        // Predicated region
        $region17: #{tpu_custom_call.1} parent=11 // pred_check
          %p226 = pneg %p116
        $region18: #{tpu_custom_call.1} parent=11 // pred_check_branch
          %228 = sbr.rel (%p226) target = $region20
        $region19: #{tpu_custom_call.1} parent=11 // pred_region
          %s230 = ssub.s32 32768, 32768
          %231 = vsyncadd [#allocation10], %s230
          %s232 = sshll.u32 [#allocation9], 4
          %s233 = int_to_ptr.vmem [resolvable:$true] %s232
          %238 = dma.hbm_to_vmem [thread:$0]  %s3, 32768, %s233, [#allocation10], 256, 256, 16
        $region20: #{tpu_custom_call.1} parent=11 // pred_fallthru
          _
        // Predicated region
        $region21: #{tpu_custom_call.1} parent=11 // pred_check
          %p239 = pneg %p137
        $region22: #{tpu_custom_call.1} parent=11 // pred_check_branch
          %241 = sbr.rel (%p239) target = $region24
        $region23: #{tpu_custom_call.1} parent=11 // pred_region
          %s243 = ssub.s32 64, 64
          %244 = vsyncadd [#allocation10], %s243
          %s246 = sshll.u32 [#allocation11], 4
          %s247 = int_to_ptr.vmem [resolvable:$true] %s246
          %249 = dma.hbm_to_vmem [thread:$0]  %s4, 64, %s247, [#allocation10]
        $region24: #{tpu_custom_call.1} parent=11 // pred_fallthru
          _
        // Predicated region
        $region25: #{tpu_custom_call.1} parent=11 // pred_check
          %p250 = pneg %p158
        $region26: #{tpu_custom_call.1} parent=11 // pred_check_branch
          %252 = sbr.rel (%p250) target = $region28
        $region27: #{tpu_custom_call.1} parent=11 // pred_region
          %s254 = ssub.s32 4096, 4096
          %255 = vsyncadd [#allocation13], %s254
          %s256 = sshll.u32 [#allocation12], 4
          %s257 = int_to_ptr.vmem [resolvable:$true] %s256
          %262 = dma.hbm_to_vmem [thread:$0]  %s5, 4096, %s257, [#allocation13], 64, 64, 4
        $region28: #{tpu_custom_call.1} parent=11 // pred_fallthru
          _
        // Predicated region
        $region29: #{tpu_custom_call.1} parent=11 // pred_check
          %p263 = pneg %p179
        $region30: #{tpu_custom_call.1} parent=11 // pred_check_branch
          %265 = sbr.rel (%p263) target = $region32
        $region31: #{tpu_custom_call.1} parent=11 // pred_region
          %s267 = ssub.s32 16, 16
          %268 = vsyncadd [#allocation13], %s267
          %s270 = sshll.u32 [#allocation14], 4
          %s271 = int_to_ptr.vmem [resolvable:$true] %s270
          %273 = dma.hbm_to_vmem [thread:$0]  %s6, 16, %s271, [#allocation13]
        $region32: #{tpu_custom_call.1} parent=11 // pred_fallthru
          _
      $region12: #{tpu_custom_call.1} parent=5 // pred_fallthru
        _
      %p274 = scmp.lt.s32.totalorder %s22, 2
      // Predicated region
      $region33: #{tpu_custom_call.1} parent=5 // pred_check
        %p275 = pneg %p274
      $region34: #{tpu_custom_call.1} parent=5 // pred_check_branch
        %277 = sbr.rel (%p275) target = $region36
      $region35: #{tpu_custom_call.1} parent=5 // pred_region
        // Predicated region
        $region37: #{tpu_custom_call.1} parent=35 // pred_check
          %p278 = pneg %p42
        $region38: #{tpu_custom_call.1} parent=35 // pred_check_branch
          %280 = sbr.rel (%p278) target = $region40
        $region39: #{tpu_custom_call.1} parent=35 // pred_region
          %s281 = sand.u32 %s32, 1
          %s282 = scalar_lea.sflag [#allocation4], %s281
          %s283 = sand.u32 %s32, 1
          %s284 = smul.addr %s283, 160
          %s285 = scalar_lea.vmem [#allocation3], %s284
          %s286 = smul.u32 20, %s22
          %s288 = ssub.s32 2560, 2560
          %289 = vsyncadd %s282, %s288
          %s290 = smul.addr %s286, 128
          %s291 = scalar_lea.hbm %s0, %s290
          %s293 = sshll.u32 %s285, 4
          %s294 = int_to_ptr.vmem [resolvable:$true] %s293
          %296 = dma.hbm_to_vmem [thread:$0]  %s291, 2560, %s294, %s282
        $region40: #{tpu_custom_call.1} parent=35 // pred_fallthru
          _
        // Predicated region
        $region41: #{tpu_custom_call.1} parent=35 // pred_check
          %p297 = pneg %p68
        $region42: #{tpu_custom_call.1} parent=35 // pred_check_branch
          %299 = sbr.rel (%p297) target = $region44
        $region43: #{tpu_custom_call.1} parent=35 // pred_region
          %s300 = sand.u32 %s22, 1
          %s301 = scalar_lea.sflag [#allocation7], %s300
          %s302 = sand.u32 %s58, 1
          %s303 = smul.addr %s302, 10240
          %s304 = scalar_lea.vmem [#allocation6], %s303
          %s305 = smul.u32 320, %s22
          %s307 = ssub.s32 163840, 163840
          %308 = vsyncadd %s301, %s307
          %s309 = smul.addr %s305, 8
          %s310 = smul.addr %s309, 64
          %s311 = scalar_lea.hbm %s1, %s310
          %s312 = sshll.u32 %s304, 4
          %s313 = int_to_ptr.vmem [resolvable:$true] %s312
          %318 = dma.hbm_to_vmem [thread:$0]  %s311, 163840, %s313, %s301, 512, 512, 32
        $region44: #{tpu_custom_call.1} parent=35 // pred_fallthru
          _
      $region36: #{tpu_custom_call.1} parent=5 // pred_fallthru
        _
      %p319 = scmp.le.s32.totalorder 1, %s22
      %p320 = scmp.lt.s32.totalorder %s22, 3
      %p321 = pnand %p319, %p320
      %p322 = pneg %p321
      // Predicated region
      $region45: #{tpu_custom_call.1} parent=5 // pred_check
        _
      $region46: #{tpu_custom_call.1} parent=5 // pred_check_branch
        %324 = sbr.rel (%p321) target = $region48
      $region47: #{tpu_custom_call.1} parent=5 // pred_region
        %s325 = ssub.s32 %s22, 1
        %s326 = sand.u32 %s35, 1
        %s327 = scalar_lea.sflag [#allocation4], %s326
        %s328 = sand.u32 %s35, 1
        %s329 = smul.addr %s328, 160
        %s330 = scalar_lea.vmem [#allocation3], %s329
        // Predicated region
        $region49: #{tpu_custom_call.1} parent=47 // pred_check
          %p331 = pneg %p48
        $region50: #{tpu_custom_call.1} parent=47 // pred_check_branch
          %333 = sbr.rel (%p331) target = $region52
        $region51: #{tpu_custom_call.1} parent=47 // pred_region
          %334 = dma.done %s327, 2560
        $region52: #{tpu_custom_call.1} parent=47 // pred_fallthru
          _
        %s335 = sand.u32 %s27, 1
        %s336 = scalar_lea.sflag [#allocation7], %s335
        %s337 = sand.u32 %s61, 1
        %s338 = smul.addr %s337, 10240
        %s339 = scalar_lea.vmem [#allocation6], %s338
        // Predicated region
        $region53: #{tpu_custom_call.1} parent=47 // pred_check
          %p340 = pneg %p74
        $region54: #{tpu_custom_call.1} parent=47 // pred_check_branch
          %342 = sbr.rel (%p340) target = $region56
        $region55: #{tpu_custom_call.1} parent=47 // pred_region
          %343 = dma.done %s336, 163840
        $region56: #{tpu_custom_call.1} parent=47 // pred_fallthru
          _
        // Predicated region
        $region57: #{tpu_custom_call.1} parent=47 // pred_check
          %p344 = pneg %p95
        $region58: #{tpu_custom_call.1} parent=47 // pred_check_branch
          %346 = sbr.rel (%p344) target = $region60
        $region59: #{tpu_custom_call.1} parent=47 // pred_region
          %347 = dma.done [#allocation7], 128
        $region60: #{tpu_custom_call.1} parent=47 // pred_fallthru
          _
        // Predicated region
        $region61: #{tpu_custom_call.1} parent=47 // pred_check
          %p348 = pneg %p116
        $region62: #{tpu_custom_call.1} parent=47 // pred_check_branch
          %350 = sbr.rel (%p348) target = $region64
        $region63: #{tpu_custom_call.1} parent=47 // pred_region
          %351 = dma.done [#allocation10], 32768
        $region64: #{tpu_custom_call.1} parent=47 // pred_fallthru
          _
        // Predicated region
        $region65: #{tpu_custom_call.1} parent=47 // pred_check
          %p352 = pneg %p137
        $region66: #{tpu_custom_call.1} parent=47 // pred_check_branch
          %354 = sbr.rel (%p352) target = $region68
        $region67: #{tpu_custom_call.1} parent=47 // pred_region
          %355 = dma.done [#allocation10], 64
        $region68: #{tpu_custom_call.1} parent=47 // pred_fallthru
          _
        // Predicated region
        $region69: #{tpu_custom_call.1} parent=47 // pred_check
          %p356 = pneg %p158
        $region70: #{tpu_custom_call.1} parent=47 // pred_check_branch
          %358 = sbr.rel (%p356) target = $region72
        $region71: #{tpu_custom_call.1} parent=47 // pred_region
          %359 = dma.done [#allocation13], 4096
        $region72: #{tpu_custom_call.1} parent=47 // pred_fallthru
          _
        // Predicated region
        $region73: #{tpu_custom_call.1} parent=47 // pred_check
          %p360 = pneg %p179
        $region74: #{tpu_custom_call.1} parent=47 // pred_check_branch
          %362 = sbr.rel (%p360) target = $region76
        $region75: #{tpu_custom_call.1} parent=47 // pred_region
          %363 = dma.done [#allocation13], 16
        $region76: #{tpu_custom_call.1} parent=47 // pred_fallthru
          _
        %s364 = sand.u32 %s35, 1
        %s365 = scalar_lea.sflag [#allocation4], %s364
        %s366 = sand.u32 %s35, 1
        %s367 = smul.addr %s366, 160
        %s368 = scalar_lea.vmem [#allocation3], %s367
        %p369 = pneg %p48
        %p370 = pneg %p45
        %s371 = sand.u32 %s27, 1
        %s372 = scalar_lea.sflag [#allocation7], %s371
        %s373 = sand.u32 %s61, 1
        %s374 = smul.addr %s373, 10240
        %s375 = scalar_lea.vmem [#allocation6], %s374
        %p376 = pneg %p74
        %p377 = pneg %p71
        %p378 = pneg %p95
        %p379 = pneg %p92
        %p380 = pneg %p116
        %p381 = pneg %p113
        %p382 = pneg %p137
        %p383 = pneg %p134
        %p384 = pneg %p158
        %p385 = pneg %p155
        %p386 = pneg %p179
        %p387 = pneg %p176
        %p388 = pneg %p200
        %p389 = pneg %p197
        %s390 = smul.u32 20, %s27
        %s391 = smul.u32 320, %s27
        %v392 = vld [vmem:[%s330] sm:$0xff]
        %v393 = vld [vmem:[%s330 + $0x8] sm:$0xff]
        %v394 = vld [vmem:[%s330 + $0x10] sm:$0xff]
        %v395 = vld [vmem:[%s330 + $0x18] sm:$0xff]
        %v396 = vld [vmem:[%s330 + $0x20] sm:$0xff]
        %v397 = vld [vmem:[%s330 + $0x28] sm:$0xff]
        %v398 = vld [vmem:[%s330 + $0x30] sm:$0xff]
        %v399 = vld [vmem:[%s330 + $0x38] sm:$0xff]
        %v400 = vld [vmem:[%s330 + $0x40] sm:$0xff]
        %v401 = vld [vmem:[%s330 + $0x48] sm:$0xff]
        %v402 = vld [vmem:[%s330 + $0x50] sm:$0xff]
        %v403 = vld [vmem:[%s330 + $0x58] sm:$0xff]
        %v404 = vld [vmem:[%s330 + $0x60] sm:$0xff]
        %v405 = vld [vmem:[%s330 + $0x68] sm:$0xff]
        %v406 = vld [vmem:[%s330 + $0x70] sm:$0xff]
        %v407 = vld [vmem:[%s330 + $0x78] sm:$0xff]
        %v408 = vld [vmem:[%s330 + $0x80] sm:$0xff]
        %v409 = vld [vmem:[%s330 + $0x88] sm:$0xff]
        %v410 = vld [vmem:[%s330 + $0x90] sm:$0xff]
        %v411 = vld [vmem:[%s330 + $0x98] sm:$0xff]
        %v412 = vpack.c.bf16 %v392, %v392
        %v413 = vpack.c.bf16 %v393, %v393
        %v414 = vpack.c.bf16 %v394, %v394
        %v415 = vpack.c.bf16 %v395, %v395
        %v416 = vpack.c.bf16 %v396, %v396
        %v417 = vpack.c.bf16 %v397, %v397
        %v418 = vpack.c.bf16 %v398, %v398
        %v419 = vpack.c.bf16 %v399, %v399
        %v420 = vpack.c.bf16 %v400, %v400
        %v421 = vpack.c.bf16 %v401, %v401
        %v422 = vpack.c.bf16 %v402, %v402
        %v423 = vpack.c.bf16 %v403, %v403
        %v424 = vpack.c.bf16 %v404, %v404
        %v425 = vpack.c.bf16 %v405, %v405
        %v426 = vpack.c.bf16 %v406, %v406
        %v427 = vpack.c.bf16 %v407, %v407
        %v428 = vpack.c.bf16 %v408, %v408
        %v429 = vpack.c.bf16 %v409, %v409
        %v430 = vpack.c.bf16 %v410, %v410
        %v431 = vpack.c.bf16 %v411, %v411
        %v432 = vld [vmem:[%s339] sm:$0xff]
        %v433 = vld [vmem:[%s339 + $0x8] sm:$0xff]
        %v434 = vld [vmem:[%s339 + $0x10] sm:$0xff]
        %v435 = vld [vmem:[%s339 + $0x18] sm:$0xff]
        %v436 = vld [vmem:[%s339 + $0x20] sm:$0xff]
        %v437 = vld [vmem:[%s339 + $0x28] sm:$0xff]
        %v438 = vld [vmem:[%s339 + $0x30] sm:$0xff]
        %v439 = vld [vmem:[%s339 + $0x38] sm:$0xff]
        %v440 = vld [vmem:[%s339 + $0x40] sm:$0xff]
        %v441 = vld [vmem:[%s339 + $0x48] sm:$0xff]
        %v442 = vld [vmem:[%s339 + $0x50] sm:$0xff]
        %v443 = vld [vmem:[%s339 + $0x58] sm:$0xff]
        %v444 = vld [vmem:[%s339 + $0x60] sm:$0xff]
        %v445 = vld [vmem:[%s339 + $0x68] sm:$0xff]
        %v446 = vld [vmem:[%s339 + $0x70] sm:$0xff]
        %v447 = vld [vmem:[%s339 + $0x78] sm:$0xff]
        %v448 = vld [vmem:[%s339 + $0x80] sm:$0xff]
        %v449 = vld [vmem:[%s339 + $0x88] sm:$0xff]
        %v450 = vld [vmem:[%s339 + $0x90] sm:$0xff]
        %v451 = vld [vmem:[%s339 + $0x98] sm:$0xff]
        %v452 = vld [vmem:[%s339 + $0xa0] sm:$0xff]
        %v453 = vld [vmem:[%s339 + $0xa8] sm:$0xff]
        %v454 = vld [vmem:[%s339 + $0xb0] sm:$0xff]
        %v455 = vld [vmem:[%s339 + $0xb8] sm:$0xff]
        %v456 = vld [vmem:[%s339 + $0xc0] sm:$0xff]
        %v457 = vld [vmem:[%s339 + $0xc8] sm:$0xff]
        %v458 = vld [vmem:[%s339 + $0xd0] sm:$0xff]
        %v459 = vld [vmem:[%s339 + $0xd8] sm:$0xff]
        %v460 = vld [vmem:[%s339 + $0xe0] sm:$0xff]
        %v461 = vld [vmem:[%s339 + $0xe8] sm:$0xff]
        %v462 = vld [vmem:[%s339 + $0xf0] sm:$0xff]
        %v463 = vld [vmem:[%s339 + $0xf8] sm:$0xff]
        %v464 = vld [vmem:[%s339 + $0x100] sm:$0xff]
        %v465 = vld [vmem:[%s339 + $0x108] sm:$0xff]
        %v466 = vld [vmem:[%s339 + $0x110] sm:$0xff]
        %v467 = vld [vmem:[%s339 + $0x118] sm:$0xff]
        %v468 = vld [vmem:[%s339 + $0x120] sm:$0xff]
        %v469 = vld [vmem:[%s339 + $0x128] sm:$0xff]
        %v470 = vld [vmem:[%s339 + $0x130] sm:$0xff]
        %v471 = vld [vmem:[%s339 + $0x138] sm:$0xff]
        %v472 = vld [vmem:[%s339 + $0x140] sm:$0xff]
        %v473 = vld [vmem:[%s339 + $0x148] sm:$0xff]
        %v474 = vld [vmem:[%s339 + $0x150] sm:$0xff]
        %v475 = vld [vmem:[%s339 + $0x158] sm:$0xff]
        %v476 = vld [vmem:[%s339 + $0x160] sm:$0xff]
        %v477 = vld [vmem:[%s339 + $0x168] sm:$0xff]
        %v478 = vld [vmem:[%s339 + $0x170] sm:$0xff]
        %v479 = vld [vmem:[%s339 + $0x178] sm:$0xff]
        %v480 = vld [vmem:[%s339 + $0x180] sm:$0xff]
        %v481 = vld [vmem:[%s339 + $0x188] sm:$0xff]
        %v482 = vld [vmem:[%s339 + $0x190] sm:$0xff]
        %v483 = vld [vmem:[%s339 + $0x198] sm:$0xff]
        %v484 = vld [vmem:[%s339 + $0x1a0] sm:$0xff]
        %v485 = vld [vmem:[%s339 + $0x1a8] sm:$0xff]
        %v486 = vld [vmem:[%s339 + $0x1b0] sm:$0xff]
        %v487 = vld [vmem:[%s339 + $0x1b8] sm:$0xff]
        %v488 = vld [vmem:[%s339 + $0x1c0] sm:$0xff]
        %v489 = vld [vmem:[%s339 + $0x1c8] sm:$0xff]
        %v490 = vld [vmem:[%s339 + $0x1d0] sm:$0xff]
        %v491 = vld [vmem:[%s339 + $0x1d8] sm:$0xff]
        %v492 = vld [vmem:[%s339 + $0x1e0] sm:$0xff]
        %v493 = vld [vmem:[%s339 + $0x1e8] sm:$0xff]
        %v494 = vld [vmem:[%s339 + $0x1f0] sm:$0xff]
        %v495 = vld [vmem:[%s339 + $0x1f8] sm:$0xff]
        %v496 = vld [vmem:[%s339 + $0x200] sm:$0xff]
        %v497 = vld [vmem:[%s339 + $0x208] sm:$0xff]
        %v498 = vld [vmem:[%s339 + $0x210] sm:$0xff]
        %v499 = vld [vmem:[%s339 + $0x218] sm:$0xff]
        %v500 = vld [vmem:[%s339 + $0x220] sm:$0xff]
        %v501 = vld [vmem:[%s339 + $0x228] sm:$0xff]
        %v502 = vld [vmem:[%s339 + $0x230] sm:$0xff]
        %v503 = vld [vmem:[%s339 + $0x238] sm:$0xff]
        %v504 = vld [vmem:[%s339 + $0x240] sm:$0xff]
        %v505 = vld [vmem:[%s339 + $0x248] sm:$0xff]
        %v506 = vld [vmem:[%s339 + $0x250] sm:$0xff]
        %v507 = vld [vmem:[%s339 + $0x258] sm:$0xff]
        %v508 = vld [vmem:[%s339 + $0x260] sm:$0xff]
        %v509 = vld [vmem:[%s339 + $0x268] sm:$0xff]
        %v510 = vld [vmem:[%s339 + $0x270] sm:$0xff]
        %v511 = vld [vmem:[%s339 + $0x278] sm:$0xff]
        %v512 = vld [vmem:[%s339 + $0x280] sm:$0xff]
        %v513 = vld [vmem:[%s339 + $0x288] sm:$0xff]
        %v514 = vld [vmem:[%s339 + $0x290] sm:$0xff]
        %v515 = vld [vmem:[%s339 + $0x298] sm:$0xff]
        %v516 = vld [vmem:[%s339 + $0x2a0] sm:$0xff]
        %v517 = vld [vmem:[%s339 + $0x2a8] sm:$0xff]
        %v518 = vld [vmem:[%s339 + $0x2b0] sm:$0xff]
        %v519 = vld [vmem:[%s339 + $0x2b8] sm:$0xff]
        %v520 = vld [vmem:[%s339 + $0x2c0] sm:$0xff]
        %v521 = vld [vmem:[%s339 + $0x2c8] sm:$0xff]
        %v522 = vld [vmem:[%s339 + $0x2d0] sm:$0xff]
        %v523 = vld [vmem:[%s339 + $0x2d8] sm:$0xff]
        %v524 = vld [vmem:[%s339 + $0x2e0] sm:$0xff]
        %v525 = vld [vmem:[%s339 + $0x2e8] sm:$0xff]
        %v526 = vld [vmem:[%s339 + $0x2f0] sm:$0xff]
        %v527 = vld [vmem:[%s339 + $0x2f8] sm:$0xff]
        %v528 = vld [vmem:[%s339 + $0x300] sm:$0xff]
        %v529 = vld [vmem:[%s339 + $0x308] sm:$0xff]
        %v530 = vld [vmem:[%s339 + $0x310] sm:$0xff]
        %v531 = vld [vmem:[%s339 + $0x318] sm:$0xff]
        %v532 = vld [vmem:[%s339 + $0x320] sm:$0xff]
        %v533 = vld [vmem:[%s339 + $0x328] sm:$0xff]
        %v534 = vld [vmem:[%s339 + $0x330] sm:$0xff]
        %v535 = vld [vmem:[%s339 + $0x338] sm:$0xff]
        %v536 = vld [vmem:[%s339 + $0x340] sm:$0xff]
        %v537 = vld [vmem:[%s339 + $0x348] sm:$0xff]
        %v538 = vld [vmem:[%s339 + $0x350] sm:$0xff]
        %v539 = vld [vmem:[%s339 + $0x358] sm:$0xff]
        %v540 = vld [vmem:[%s339 + $0x360] sm:$0xff]
        %v541 = vld [vmem:[%s339 + $0x368] sm:$0xff]
        %v542 = vld [vmem:[%s339 + $0x370] sm:$0xff]
        %v543 = vld [vmem:[%s339 + $0x378] sm:$0xff]
        %v544 = vld [vmem:[%s339 + $0x380] sm:$0xff]
        %v545 = vld [vmem:[%s339 + $0x388] sm:$0xff]
        %v546 = vld [vmem:[%s339 + $0x390] sm:$0xff]
        %v547 = vld [vmem:[%s339 + $0x398] sm:$0xff]
        %v548 = vld [vmem:[%s339 + $0x3a0] sm:$0xff]
        %v549 = vld [vmem:[%s339 + $0x3a8] sm:$0xff]
        %v550 = vld [vmem:[%s339 + $0x3b0] sm:$0xff]
        %v551 = vld [vmem:[%s339 + $0x3b8] sm:$0xff]
        %v552 = vld [vmem:[%s339 + $0x3c0] sm:$0xff]
        %v553 = vld [vmem:[%s339 + $0x3c8] sm:$0xff]
        %v554 = vld [vmem:[%s339 + $0x3d0] sm:$0xff]
        %v555 = vld [vmem:[%s339 + $0x3d8] sm:$0xff]
        %v556 = vld [vmem:[%s339 + $0x3e0] sm:$0xff]
        %v557 = vld [vmem:[%s339 + $0x3e8] sm:$0xff]
        %v558 = vld [vmem:[%s339 + $0x3f0] sm:$0xff]
        %v559 = vld [vmem:[%s339 + $0x3f8] sm:$0xff]
        %v560 = vld [vmem:[%s339 + $0x400] sm:$0xff]
        %v561 = vld [vmem:[%s339 + $0x408] sm:$0xff]
        %v562 = vld [vmem:[%s339 + $0x410] sm:$0xff]
        %v563 = vld [vmem:[%s339 + $0x418] sm:$0xff]
        %v564 = vld [vmem:[%s339 + $0x420] sm:$0xff]
        %v565 = vld [vmem:[%s339 + $0x428] sm:$0xff]
        %v566 = vld [vmem:[%s339 + $0x430] sm:$0xff]
        %v567 = vld [vmem:[%s339 + $0x438] sm:$0xff]
        %v568 = vld [vmem:[%s339 + $0x440] sm:$0xff]
        %v569 = vld [vmem:[%s339 + $0x448] sm:$0xff]
        %v570 = vld [vmem:[%s339 + $0x450] sm:$0xff]
        %v571 = vld [vmem:[%s339 + $0x458] sm:$0xff]
        %v572 = vld [vmem:[%s339 + $0x460] sm:$0xff]
        %v573 = vld [vmem:[%s339 + $0x468] sm:$0xff]
        %v574 = vld [vmem:[%s339 + $0x470] sm:$0xff]
        %v575 = vld [vmem:[%s339 + $0x478] sm:$0xff]
        %v576 = vld [vmem:[%s339 + $0x480] sm:$0xff]
        %v577 = vld [vmem:[%s339 + $0x488] sm:$0xff]
        %v578 = vld [vmem:[%s339 + $0x490] sm:$0xff]
        %v579 = vld [vmem:[%s339 + $0x498] sm:$0xff]
        %v580 = vld [vmem:[%s339 + $0x4a0] sm:$0xff]
        %v581 = vld [vmem:[%s339 + $0x4a8] sm:$0xff]
        %v582 = vld [vmem:[%s339 + $0x4b0] sm:$0xff]
        %v583 = vld [vmem:[%s339 + $0x4b8] sm:$0xff]
        %v584 = vld [vmem:[%s339 + $0x4c0] sm:$0xff]
        %v585 = vld [vmem:[%s339 + $0x4c8] sm:$0xff]
        %v586 = vld [vmem:[%s339 + $0x4d0] sm:$0xff]
        %v587 = vld [vmem:[%s339 + $0x4d8] sm:$0xff]
        %v588 = vld [vmem:[%s339 + $0x4e0] sm:$0xff]
        %v589 = vld [vmem:[%s339 + $0x4e8] sm:$0xff]
        %v590 = vld [vmem:[%s339 + $0x4f0] sm:$0xff]
        %v591 = vld [vmem:[%s339 + $0x4f8] sm:$0xff]
        %v592 = vld [vmem:[%s339 + $0x500] sm:$0xff]
        %v593 = vld [vmem:[%s339 + $0x508] sm:$0xff]
        %v594 = vld [vmem:[%s339 + $0x510] sm:$0xff]
        %v595 = vld [vmem:[%s339 + $0x518] sm:$0xff]
        %v596 = vld [vmem:[%s339 + $0x520] sm:$0xff]
        %v597 = vld [vmem:[%s339 + $0x528] sm:$0xff]
        %v598 = vld [vmem:[%s339 + $0x530] sm:$0xff]
        %v599 = vld [vmem:[%s339 + $0x538] sm:$0xff]
        %v600 = vld [vmem:[%s339 + $0x540] sm:$0xff]
        %v601 = vld [vmem:[%s339 + $0x548] sm:$0xff]
        %v602 = vld [vmem:[%s339 + $0x550] sm:$0xff]
        %v603 = vld [vmem:[%s339 + $0x558] sm:$0xff]
        %v604 = vld [vmem:[%s339 + $0x560] sm:$0xff]
        %v605 = vld [vmem:[%s339 + $0x568] sm:$0xff]
        %v606 = vld [vmem:[%s339 + $0x570] sm:$0xff]
        %v607 = vld [vmem:[%s339 + $0x578] sm:$0xff]
        %v608 = vld [vmem:[%s339 + $0x580] sm:$0xff]
        %v609 = vld [vmem:[%s339 + $0x588] sm:$0xff]
        %v610 = vld [vmem:[%s339 + $0x590] sm:$0xff]
        %v611 = vld [vmem:[%s339 + $0x598] sm:$0xff]
        %v612 = vld [vmem:[%s339 + $0x5a0] sm:$0xff]
        %v613 = vld [vmem:[%s339 + $0x5a8] sm:$0xff]
        %v614 = vld [vmem:[%s339 + $0x5b0] sm:$0xff]
        %v615 = vld [vmem:[%s339 + $0x5b8] sm:$0xff]
        %v616 = vld [vmem:[%s339 + $0x5c0] sm:$0xff]
        %v617 = vld [vmem:[%s339 + $0x5c8] sm:$0xff]
        %v618 = vld [vmem:[%s339 + $0x5d0] sm:$0xff]
        %v619 = vld [vmem:[%s339 + $0x5d8] sm:$0xff]
        %v620 = vld [vmem:[%s339 + $0x5e0] sm:$0xff]
        %v621 = vld [vmem:[%s339 + $0x5e8] sm:$0xff]
        %v622 = vld [vmem:[%s339 + $0x5f0] sm:$0xff]
        %v623 = vld [vmem:[%s339 + $0x5f8] sm:$0xff]
        %v624 = vld [vmem:[%s339 + $0x600] sm:$0xff]
        %v625 = vld [vmem:[%s339 + $0x608] sm:$0xff]
        %v626 = vld [vmem:[%s339 + $0x610] sm:$0xff]
        %v627 = vld [vmem:[%s339 + $0x618] sm:$0xff]
        %v628 = vld [vmem:[%s339 + $0x620] sm:$0xff]
        %v629 = vld [vmem:[%s339 + $0x628] sm:$0xff]
        %v630 = vld [vmem:[%s339 + $0x630] sm:$0xff]
        %v631 = vld [vmem:[%s339 + $0x638] sm:$0xff]
        %v632 = vld [vmem:[%s339 + $0x640] sm:$0xff]
        %v633 = vld [vmem:[%s339 + $0x648] sm:$0xff]
        %v634 = vld [vmem:[%s339 + $0x650] sm:$0xff]
        %v635 = vld [vmem:[%s339 + $0x658] sm:$0xff]
        %v636 = vld [vmem:[%s339 + $0x660] sm:$0xff]
        %v637 = vld [vmem:[%s339 + $0x668] sm:$0xff]
        %v638 = vld [vmem:[%s339 + $0x670] sm:$0xff]
        %v639 = vld [vmem:[%s339 + $0x678] sm:$0xff]
        %v640 = vld [vmem:[%s339 + $0x680] sm:$0xff]
        %v641 = vld [vmem:[%s339 + $0x688] sm:$0xff]
        %v642 = vld [vmem:[%s339 + $0x690] sm:$0xff]
        %v643 = vld [vmem:[%s339 + $0x698] sm:$0xff]
        %v644 = vld [vmem:[%s339 + $0x6a0] sm:$0xff]
        %v645 = vld [vmem:[%s339 + $0x6a8] sm:$0xff]
        %v646 = vld [vmem:[%s339 + $0x6b0] sm:$0xff]
        %v647 = vld [vmem:[%s339 + $0x6b8] sm:$0xff]
        %v648 = vld [vmem:[%s339 + $0x6c0] sm:$0xff]
        %v649 = vld [vmem:[%s339 + $0x6c8] sm:$0xff]
        %v650 = vld [vmem:[%s339 + $0x6d0] sm:$0xff]
        %v651 = vld [vmem:[%s339 + $0x6d8] sm:$0xff]
        %v652 = vld [vmem:[%s339 + $0x6e0] sm:$0xff]
        %v653 = vld [vmem:[%s339 + $0x6e8] sm:$0xff]
        %v654 = vld [vmem:[%s339 + $0x6f0] sm:$0xff]
        %v655 = vld [vmem:[%s339 + $0x6f8] sm:$0xff]
        %v656 = vld [vmem:[%s339 + $0x700] sm:$0xff]
        %v657 = vld [vmem:[%s339 + $0x708] sm:$0xff]
        %v658 = vld [vmem:[%s339 + $0x710] sm:$0xff]
        %v659 = vld [vmem:[%s339 + $0x718] sm:$0xff]
        %v660 = vld [vmem:[%s339 + $0x720] sm:$0xff]
        %v661 = vld [vmem:[%s339 + $0x728] sm:$0xff]
        %v662 = vld [vmem:[%s339 + $0x730] sm:$0xff]
        %v663 = vld [vmem:[%s339 + $0x738] sm:$0xff]
        %v664 = vld [vmem:[%s339 + $0x740] sm:$0xff]
        %v665 = vld [vmem:[%s339 + $0x748] sm:$0xff]
        %v666 = vld [vmem:[%s339 + $0x750] sm:$0xff]
        %v667 = vld [vmem:[%s339 + $0x758] sm:$0xff]
        %v668 = vld [vmem:[%s339 + $0x760] sm:$0xff]
        %v669 = vld [vmem:[%s339 + $0x768] sm:$0xff]
        %v670 = vld [vmem:[%s339 + $0x770] sm:$0xff]
        %v671 = vld [vmem:[%s339 + $0x778] sm:$0xff]
        %v672 = vld [vmem:[%s339 + $0x780] sm:$0xff]
        %v673 = vld [vmem:[%s339 + $0x788] sm:$0xff]
        %v674 = vld [vmem:[%s339 + $0x790] sm:$0xff]
        %v675 = vld [vmem:[%s339 + $0x798] sm:$0xff]
        %v676 = vld [vmem:[%s339 + $0x7a0] sm:$0xff]
        %v677 = vld [vmem:[%s339 + $0x7a8] sm:$0xff]
        %v678 = vld [vmem:[%s339 + $0x7b0] sm:$0xff]
        %v679 = vld [vmem:[%s339 + $0x7b8] sm:$0xff]
        %v680 = vld [vmem:[%s339 + $0x7c0] sm:$0xff]
        %v681 = vld [vmem:[%s339 + $0x7c8] sm:$0xff]
        %v682 = vld [vmem:[%s339 + $0x7d0] sm:$0xff]
        %v683 = vld [vmem:[%s339 + $0x7d8] sm:$0xff]
        %v684 = vld [vmem:[%s339 + $0x7e0] sm:$0xff]
        %v685 = vld [vmem:[%s339 + $0x7e8] sm:$0xff]
        %v686 = vld [vmem:[%s339 + $0x7f0] sm:$0xff]
        %v687 = vld [vmem:[%s339 + $0x7f8] sm:$0xff]
        %v688 = vld [vmem:[%s339 + $0x800] sm:$0xff]
        %v689 = vld [vmem:[%s339 + $0x808] sm:$0xff]
        %v690 = vld [vmem:[%s339 + $0x810] sm:$0xff]
        %v691 = vld [vmem:[%s339 + $0x818] sm:$0xff]
        %v692 = vld [vmem:[%s339 + $0x820] sm:$0xff]
        %v693 = vld [vmem:[%s339 + $0x828] sm:$0xff]
        %v694 = vld [vmem:[%s339 + $0x830] sm:$0xff]
        %v695 = vld [vmem:[%s339 + $0x838] sm:$0xff]
        %v696 = vld [vmem:[%s339 + $0x840] sm:$0xff]
        %v697 = vld [vmem:[%s339 + $0x848] sm:$0xff]
        %v698 = vld [vmem:[%s339 + $0x850] sm:$0xff]
        %v699 = vld [vmem:[%s339 + $0x858] sm:$0xff]
        %v700 = vld [vmem:[%s339 + $0x860] sm:$0xff]
        %v701 = vld [vmem:[%s339 + $0x868] sm:$0xff]
        %v702 = vld [vmem:[%s339 + $0x870] sm:$0xff]
        %v703 = vld [vmem:[%s339 + $0x878] sm:$0xff]
        %v704 = vld [vmem:[%s339 + $0x880] sm:$0xff]
        %v705 = vld [vmem:[%s339 + $0x888] sm:$0xff]
        %v706 = vld [vmem:[%s339 + $0x890] sm:$0xff]
        %v707 = vld [vmem:[%s339 + $0x898] sm:$0xff]
        %v708 = vld [vmem:[%s339 + $0x8a0] sm:$0xff]
        %v709 = vld [vmem:[%s339 + $0x8a8] sm:$0xff]
        %v710 = vld [vmem:[%s339 + $0x8b0] sm:$0xff]
        %v711 = vld [vmem:[%s339 + $0x8b8] sm:$0xff]
        %v712 = vld [vmem:[%s339 + $0x8c0] sm:$0xff]
        %v713 = vld [vmem:[%s339 + $0x8c8] sm:$0xff]
        %v714 = vld [vmem:[%s339 + $0x8d0] sm:$0xff]
        %v715 = vld [vmem:[%s339 + $0x8d8] sm:$0xff]
        %v716 = vld [vmem:[%s339 + $0x8e0] sm:$0xff]
        %v717 = vld [vmem:[%s339 + $0x8e8] sm:$0xff]
        %v718 = vld [vmem:[%s339 + $0x8f0] sm:$0xff]
        %v719 = vld [vmem:[%s339 + $0x8f8] sm:$0xff]
        %v720 = vld [vmem:[%s339 + $0x900] sm:$0xff]
        %v721 = vld [vmem:[%s339 + $0x908] sm:$0xff]
        %v722 = vld [vmem:[%s339 + $0x910] sm:$0xff]
        %v723 = vld [vmem:[%s339 + $0x918] sm:$0xff]
        %v724 = vld [vmem:[%s339 + $0x920] sm:$0xff]
        %v725 = vld [vmem:[%s339 + $0x928] sm:$0xff]
        %v726 = vld [vmem:[%s339 + $0x930] sm:$0xff]
        %v727 = vld [vmem:[%s339 + $0x938] sm:$0xff]
        %v728 = vld [vmem:[%s339 + $0x940] sm:$0xff]
        %v729 = vld [vmem:[%s339 + $0x948] sm:$0xff]
        %v730 = vld [vmem:[%s339 + $0x950] sm:$0xff]
        %v731 = vld [vmem:[%s339 + $0x958] sm:$0xff]
        %v732 = vld [vmem:[%s339 + $0x960] sm:$0xff]
        %v733 = vld [vmem:[%s339 + $0x968] sm:$0xff]
        %v734 = vld [vmem:[%s339 + $0x970] sm:$0xff]
        %v735 = vld [vmem:[%s339 + $0x978] sm:$0xff]
        %v736 = vld [vmem:[%s339 + $0x980] sm:$0xff]
        %v737 = vld [vmem:[%s339 + $0x988] sm:$0xff]
        %v738 = vld [vmem:[%s339 + $0x990] sm:$0xff]
        %v739 = vld [vmem:[%s339 + $0x998] sm:$0xff]
        %v740 = vld [vmem:[%s339 + $0x9a0] sm:$0xff]
        %v741 = vld [vmem:[%s339 + $0x9a8] sm:$0xff]
        %v742 = vld [vmem:[%s339 + $0x9b0] sm:$0xff]
        %v743 = vld [vmem:[%s339 + $0x9b8] sm:$0xff]
        %v744 = vld [vmem:[%s339 + $0x9c0] sm:$0xff]
        %v745 = vld [vmem:[%s339 + $0x9c8] sm:$0xff]
        %v746 = vld [vmem:[%s339 + $0x9d0] sm:$0xff]
        %v747 = vld [vmem:[%s339 + $0x9d8] sm:$0xff]
        %v748 = vld [vmem:[%s339 + $0x9e0] sm:$0xff]
        %v749 = vld [vmem:[%s339 + $0x9e8] sm:$0xff]
        %v750 = vld [vmem:[%s339 + $0x9f0] sm:$0xff]
        %v751 = vld [vmem:[%s339 + $0x9f8] sm:$0xff]
        %v752 = vld [vmem:[%s339 + $0xa00] sm:$0xff]
        %v753 = vld [vmem:[%s339 + $0xa08] sm:$0xff]
        %v754 = vld [vmem:[%s339 + $0xa10] sm:$0xff]
        %v755 = vld [vmem:[%s339 + $0xa18] sm:$0xff]
        %v756 = vld [vmem:[%s339 + $0xa20] sm:$0xff]
        %v757 = vld [vmem:[%s339 + $0xa28] sm:$0xff]
        %v758 = vld [vmem:[%s339 + $0xa30] sm:$0xff]
        %v759 = vld [vmem:[%s339 + $0xa38] sm:$0xff]
        %v760 = vld [vmem:[%s339 + $0xa40] sm:$0xff]
        %v761 = vld [vmem:[%s339 + $0xa48] sm:$0xff]
        %v762 = vld [vmem:[%s339 + $0xa50] sm:$0xff]
        %v763 = vld [vmem:[%s339 + $0xa58] sm:$0xff]
        %v764 = vld [vmem:[%s339 + $0xa60] sm:$0xff]
        %v765 = vld [vmem:[%s339 + $0xa68] sm:$0xff]
        %v766 = vld [vmem:[%s339 + $0xa70] sm:$0xff]
        %v767 = vld [vmem:[%s339 + $0xa78] sm:$0xff]
        %v768 = vld [vmem:[%s339 + $0xa80] sm:$0xff]
        %v769 = vld [vmem:[%s339 + $0xa88] sm:$0xff]
        %v770 = vld [vmem:[%s339 + $0xa90] sm:$0xff]
        %v771 = vld [vmem:[%s339 + $0xa98] sm:$0xff]
        %v772 = vld [vmem:[%s339 + $0xaa0] sm:$0xff]
        %v773 = vld [vmem:[%s339 + $0xaa8] sm:$0xff]
        %v774 = vld [vmem:[%s339 + $0xab0] sm:$0xff]
        %v775 = vld [vmem:[%s339 + $0xab8] sm:$0xff]
        %v776 = vld [vmem:[%s339 + $0xac0] sm:$0xff]
        %v777 = vld [vmem:[%s339 + $0xac8] sm:$0xff]
        %v778 = vld [vmem:[%s339 + $0xad0] sm:$0xff]
        %v779 = vld [vmem:[%s339 + $0xad8] sm:$0xff]
        %v780 = vld [vmem:[%s339 + $0xae0] sm:$0xff]
        %v781 = vld [vmem:[%s339 + $0xae8] sm:$0xff]
        %v782 = vld [vmem:[%s339 + $0xaf0] sm:$0xff]
        %v783 = vld [vmem:[%s339 + $0xaf8] sm:$0xff]
        %v784 = vld [vmem:[%s339 + $0xb00] sm:$0xff]
        %v785 = vld [vmem:[%s339 + $0xb08] sm:$0xff]
        %v786 = vld [vmem:[%s339 + $0xb10] sm:$0xff]
        %v787 = vld [vmem:[%s339 + $0xb18] sm:$0xff]
        %v788 = vld [vmem:[%s339 + $0xb20] sm:$0xff]
        %v789 = vld [vmem:[%s339 + $0xb28] sm:$0xff]
        %v790 = vld [vmem:[%s339 + $0xb30] sm:$0xff]
        %v791 = vld [vmem:[%s339 + $0xb38] sm:$0xff]
        %v792 = vld [vmem:[%s339 + $0xb40] sm:$0xff]
        %v793 = vld [vmem:[%s339 + $0xb48] sm:$0xff]
        %v794 = vld [vmem:[%s339 + $0xb50] sm:$0xff]
        %v795 = vld [vmem:[%s339 + $0xb58] sm:$0xff]
        %v796 = vld [vmem:[%s339 + $0xb60] sm:$0xff]
        %v797 = vld [vmem:[%s339 + $0xb68] sm:$0xff]
        %v798 = vld [vmem:[%s339 + $0xb70] sm:$0xff]
        %v799 = vld [vmem:[%s339 + $0xb78] sm:$0xff]
        %v800 = vld [vmem:[%s339 + $0xb80] sm:$0xff]
        %v801 = vld [vmem:[%s339 + $0xb88] sm:$0xff]
        %v802 = vld [vmem:[%s339 + $0xb90] sm:$0xff]
        %v803 = vld [vmem:[%s339 + $0xb98] sm:$0xff]
        %v804 = vld [vmem:[%s339 + $0xba0] sm:$0xff]
        %v805 = vld [vmem:[%s339 + $0xba8] sm:$0xff]
        %v806 = vld [vmem:[%s339 + $0xbb0] sm:$0xff]
        %v807 = vld [vmem:[%s339 + $0xbb8] sm:$0xff]
        %v808 = vld [vmem:[%s339 + $0xbc0] sm:$0xff]
        %v809 = vld [vmem:[%s339 + $0xbc8] sm:$0xff]
        %v810 = vld [vmem:[%s339 + $0xbd0] sm:$0xff]
        %v811 = vld [vmem:[%s339 + $0xbd8] sm:$0xff]
        %v812 = vld [vmem:[%s339 + $0xbe0] sm:$0xff]
        %v813 = vld [vmem:[%s339 + $0xbe8] sm:$0xff]
        %v814 = vld [vmem:[%s339 + $0xbf0] sm:$0xff]
        %v815 = vld [vmem:[%s339 + $0xbf8] sm:$0xff]
        %v816 = vld [vmem:[%s339 + $0xc00] sm:$0xff]
        %v817 = vld [vmem:[%s339 + $0xc08] sm:$0xff]
        %v818 = vld [vmem:[%s339 + $0xc10] sm:$0xff]
        %v819 = vld [vmem:[%s339 + $0xc18] sm:$0xff]
        %v820 = vld [vmem:[%s339 + $0xc20] sm:$0xff]
        %v821 = vld [vmem:[%s339 + $0xc28] sm:$0xff]
        %v822 = vld [vmem:[%s339 + $0xc30] sm:$0xff]
        %v823 = vld [vmem:[%s339 + $0xc38] sm:$0xff]
        %v824 = vld [vmem:[%s339 + $0xc40] sm:$0xff]
        %v825 = vld [vmem:[%s339 + $0xc48] sm:$0xff]
        %v826 = vld [vmem:[%s339 + $0xc50] sm:$0xff]
        %v827 = vld [vmem:[%s339 + $0xc58] sm:$0xff]
        %v828 = vld [vmem:[%s339 + $0xc60] sm:$0xff]
        %v829 = vld [vmem:[%s339 + $0xc68] sm:$0xff]
        %v830 = vld [vmem:[%s339 + $0xc70] sm:$0xff]
        %v831 = vld [vmem:[%s339 + $0xc78] sm:$0xff]
        %v832 = vld [vmem:[%s339 + $0xc80] sm:$0xff]
        %v833 = vld [vmem:[%s339 + $0xc88] sm:$0xff]
        %v834 = vld [vmem:[%s339 + $0xc90] sm:$0xff]
        %v835 = vld [vmem:[%s339 + $0xc98] sm:$0xff]
        %v836 = vld [vmem:[%s339 + $0xca0] sm:$0xff]
        %v837 = vld [vmem:[%s339 + $0xca8] sm:$0xff]
        %v838 = vld [vmem:[%s339 + $0xcb0] sm:$0xff]
        %v839 = vld [vmem:[%s339 + $0xcb8] sm:$0xff]
        %v840 = vld [vmem:[%s339 + $0xcc0] sm:$0xff]
        %v841 = vld [vmem:[%s339 + $0xcc8] sm:$0xff]
        %v842 = vld [vmem:[%s339 + $0xcd0] sm:$0xff]
        %v843 = vld [vmem:[%s339 + $0xcd8] sm:$0xff]
        %v844 = vld [vmem:[%s339 + $0xce0] sm:$0xff]
        %v845 = vld [vmem:[%s339 + $0xce8] sm:$0xff]
        %v846 = vld [vmem:[%s339 + $0xcf0] sm:$0xff]
        %v847 = vld [vmem:[%s339 + $0xcf8] sm:$0xff]
        %v848 = vld [vmem:[%s339 + $0xd00] sm:$0xff]
        %v849 = vld [vmem:[%s339 + $0xd08] sm:$0xff]
        %v850 = vld [vmem:[%s339 + $0xd10] sm:$0xff]
        %v851 = vld [vmem:[%s339 + $0xd18] sm:$0xff]
        %v852 = vld [vmem:[%s339 + $0xd20] sm:$0xff]
        %v853 = vld [vmem:[%s339 + $0xd28] sm:$0xff]
        %v854 = vld [vmem:[%s339 + $0xd30] sm:$0xff]
        %v855 = vld [vmem:[%s339 + $0xd38] sm:$0xff]
        %v856 = vld [vmem:[%s339 + $0xd40] sm:$0xff]
        %v857 = vld [vmem:[%s339 + $0xd48] sm:$0xff]
        %v858 = vld [vmem:[%s339 + $0xd50] sm:$0xff]
        %v859 = vld [vmem:[%s339 + $0xd58] sm:$0xff]
        %v860 = vld [vmem:[%s339 + $0xd60] sm:$0xff]
        %v861 = vld [vmem:[%s339 + $0xd68] sm:$0xff]
        %v862 = vld [vmem:[%s339 + $0xd70] sm:$0xff]
        %v863 = vld [vmem:[%s339 + $0xd78] sm:$0xff]
        %v864 = vld [vmem:[%s339 + $0xd80] sm:$0xff]
        %v865 = vld [vmem:[%s339 + $0xd88] sm:$0xff]
        %v866 = vld [vmem:[%s339 + $0xd90] sm:$0xff]
        %v867 = vld [vmem:[%s339 + $0xd98] sm:$0xff]
        %v868 = vld [vmem:[%s339 + $0xda0] sm:$0xff]
        %v869 = vld [vmem:[%s339 + $0xda8] sm:$0xff]
        %v870 = vld [vmem:[%s339 + $0xdb0] sm:$0xff]
        %v871 = vld [vmem:[%s339 + $0xdb8] sm:$0xff]
        %v872 = vld [vmem:[%s339 + $0xdc0] sm:$0xff]
        %v873 = vld [vmem:[%s339 + $0xdc8] sm:$0xff]
        %v874 = vld [vmem:[%s339 + $0xdd0] sm:$0xff]
        %v875 = vld [vmem:[%s339 + $0xdd8] sm:$0xff]
        %v876 = vld [vmem:[%s339 + $0xde0] sm:$0xff]
        %v877 = vld [vmem:[%s339 + $0xde8] sm:$0xff]
        %v878 = vld [vmem:[%s339 + $0xdf0] sm:$0xff]
        %v879 = vld [vmem:[%s339 + $0xdf8] sm:$0xff]
        %v880 = vld [vmem:[%s339 + $0xe00] sm:$0xff]
        %v881 = vld [vmem:[%s339 + $0xe08] sm:$0xff]
        %v882 = vld [vmem:[%s339 + $0xe10] sm:$0xff]
        %v883 = vld [vmem:[%s339 + $0xe18] sm:$0xff]
        %v884 = vld [vmem:[%s339 + $0xe20] sm:$0xff]
        %v885 = vld [vmem:[%s339 + $0xe28] sm:$0xff]
        %v886 = vld [vmem:[%s339 + $0xe30] sm:$0xff]
        %v887 = vld [vmem:[%s339 + $0xe38] sm:$0xff]
        %v888 = vld [vmem:[%s339 + $0xe40] sm:$0xff]
        %v889 = vld [vmem:[%s339 + $0xe48] sm:$0xff]
        %v890 = vld [vmem:[%s339 + $0xe50] sm:$0xff]
        %v891 = vld [vmem:[%s339 + $0xe58] sm:$0xff]
        %v892 = vld [vmem:[%s339 + $0xe60] sm:$0xff]
        %v893 = vld [vmem:[%s339 + $0xe68] sm:$0xff]
        %v894 = vld [vmem:[%s339 + $0xe70] sm:$0xff]
        %v895 = vld [vmem:[%s339 + $0xe78] sm:$0xff]
        %v896 = vld [vmem:[%s339 + $0xe80] sm:$0xff]
        %v897 = vld [vmem:[%s339 + $0xe88] sm:$0xff]
        %v898 = vld [vmem:[%s339 + $0xe90] sm:$0xff]
        %v899 = vld [vmem:[%s339 + $0xe98] sm:$0xff]
        %v900 = vld [vmem:[%s339 + $0xea0] sm:$0xff]
        %v901 = vld [vmem:[%s339 + $0xea8] sm:$0xff]
        %v902 = vld [vmem:[%s339 + $0xeb0] sm:$0xff]
        %v903 = vld [vmem:[%s339 + $0xeb8] sm:$0xff]
        %v904 = vld [vmem:[%s339 + $0xec0] sm:$0xff]
        %v905 = vld [vmem:[%s339 + $0xec8] sm:$0xff]
        %v906 = vld [vmem:[%s339 + $0xed0] sm:$0xff]
        %v907 = vld [vmem:[%s339 + $0xed8] sm:$0xff]
        %v908 = vld [vmem:[%s339 + $0xee0] sm:$0xff]
        %v909 = vld [vmem:[%s339 + $0xee8] sm:$0xff]
        %v910 = vld [vmem:[%s339 + $0xef0] sm:$0xff]
        %v911 = vld [vmem:[%s339 + $0xef8] sm:$0xff]
        %v912 = vld [vmem:[%s339 + $0xf00] sm:$0xff]
        %v913 = vld [vmem:[%s339 + $0xf08] sm:$0xff]
        %v914 = vld [vmem:[%s339 + $0xf10] sm:$0xff]
        %v915 = vld [vmem:[%s339 + $0xf18] sm:$0xff]
        %v916 = vld [vmem:[%s339 + $0xf20] sm:$0xff]
        %v917 = vld [vmem:[%s339 + $0xf28] sm:$0xff]
        %v918 = vld [vmem:[%s339 + $0xf30] sm:$0xff]
        %v919 = vld [vmem:[%s339 + $0xf38] sm:$0xff]
        %v920 = vld [vmem:[%s339 + $0xf40] sm:$0xff]
        %v921 = vld [vmem:[%s339 + $0xf48] sm:$0xff]
        %v922 = vld [vmem:[%s339 + $0xf50] sm:$0xff]
        %v923 = vld [vmem:[%s339 + $0xf58] sm:$0xff]
        %v924 = vld [vmem:[%s339 + $0xf60] sm:$0xff]
        %v925 = vld [vmem:[%s339 + $0xf68] sm:$0xff]
        %v926 = vld [vmem:[%s339 + $0xf70] sm:$0xff]
        %v927 = vld [vmem:[%s339 + $0xf78] sm:$0xff]
        %v928 = vld [vmem:[%s339 + $0xf80] sm:$0xff]
        %v929 = vld [vmem:[%s339 + $0xf88] sm:$0xff]
        %v930 = vld [vmem:[%s339 + $0xf90] sm:$0xff]
        %v931 = vld [vmem:[%s339 + $0xf98] sm:$0xff]
        %v932 = vld [vmem:[%s339 + $0xfa0] sm:$0xff]
        %v933 = vld [vmem:[%s339 + $0xfa8] sm:$0xff]
        %v934 = vld [vmem:[%s339 + $0xfb0] sm:$0xff]
        %v935 = vld [vmem:[%s339 + $0xfb8] sm:$0xff]
        %v936 = vld [vmem:[%s339 + $0xfc0] sm:$0xff]
        %v937 = vld [vmem:[%s339 + $0xfc8] sm:$0xff]
        %v938 = vld [vmem:[%s339 + $0xfd0] sm:$0xff]
        %v939 = vld [vmem:[%s339 + $0xfd8] sm:$0xff]
        %v940 = vld [vmem:[%s339 + $0xfe0] sm:$0xff]
        %v941 = vld [vmem:[%s339 + $0xfe8] sm:$0xff]
        %v942 = vld [vmem:[%s339 + $0xff0] sm:$0xff]
        %v943 = vld [vmem:[%s339 + $0xff8] sm:$0xff]
        %v944 = vld [vmem:[%s339 + $0x1000] sm:$0xff]
        %v945 = vld [vmem:[%s339 + $0x1008] sm:$0xff]
        %v946 = vld [vmem:[%s339 + $0x1010] sm:$0xff]
        %v947 = vld [vmem:[%s339 + $0x1018] sm:$0xff]
        %v948 = vld [vmem:[%s339 + $0x1020] sm:$0xff]
        %v949 = vld [vmem:[%s339 + $0x1028] sm:$0xff]
        %v950 = vld [vmem:[%s339 + $0x1030] sm:$0xff]
        %v951 = vld [vmem:[%s339 + $0x1038] sm:$0xff]
        %v952 = vld [vmem:[%s339 + $0x1040] sm:$0xff]
        %v953 = vld [vmem:[%s339 + $0x1048] sm:$0xff]
        %v954 = vld [vmem:[%s339 + $0x1050] sm:$0xff]
        %v955 = vld [vmem:[%s339 + $0x1058] sm:$0xff]
        %v956 = vld [vmem:[%s339 + $0x1060] sm:$0xff]
        %v957 = vld [vmem:[%s339 + $0x1068] sm:$0xff]
        %v958 = vld [vmem:[%s339 + $0x1070] sm:$0xff]
        %v959 = vld [vmem:[%s339 + $0x1078] sm:$0xff]
        %v960 = vld [vmem:[%s339 + $0x1080] sm:$0xff]
        %v961 = vld [vmem:[%s339 + $0x1088] sm:$0xff]
        %v962 = vld [vmem:[%s339 + $0x1090] sm:$0xff]
        %v963 = vld [vmem:[%s339 + $0x1098] sm:$0xff]
        %v964 = vld [vmem:[%s339 + $0x10a0] sm:$0xff]
        %v965 = vld [vmem:[%s339 + $0x10a8] sm:$0xff]
        %v966 = vld [vmem:[%s339 + $0x10b0] sm:$0xff]
        %v967 = vld [vmem:[%s339 + $0x10b8] sm:$0xff]
        %v968 = vld [vmem:[%s339 + $0x10c0] sm:$0xff]
        %v969 = vld [vmem:[%s339 + $0x10c8] sm:$0xff]
        %v970 = vld [vmem:[%s339 + $0x10d0] sm:$0xff]
        %v971 = vld [vmem:[%s339 + $0x10d8] sm:$0xff]
        %v972 = vld [vmem:[%s339 + $0x10e0] sm:$0xff]
        %v973 = vld [vmem:[%s339 + $0x10e8] sm:$0xff]
        %v974 = vld [vmem:[%s339 + $0x10f0] sm:$0xff]
        %v975 = vld [vmem:[%s339 + $0x10f8] sm:$0xff]
        %v976 = vld [vmem:[%s339 + $0x1100] sm:$0xff]
        %v977 = vld [vmem:[%s339 + $0x1108] sm:$0xff]
        %v978 = vld [vmem:[%s339 + $0x1110] sm:$0xff]
        %v979 = vld [vmem:[%s339 + $0x1118] sm:$0xff]
        %v980 = vld [vmem:[%s339 + $0x1120] sm:$0xff]
        %v981 = vld [vmem:[%s339 + $0x1128] sm:$0xff]
        %v982 = vld [vmem:[%s339 + $0x1130] sm:$0xff]
        %v983 = vld [vmem:[%s339 + $0x1138] sm:$0xff]
        %v984 = vld [vmem:[%s339 + $0x1140] sm:$0xff]
        %v985 = vld [vmem:[%s339 + $0x1148] sm:$0xff]
        %v986 = vld [vmem:[%s339 + $0x1150] sm:$0xff]
        %v987 = vld [vmem:[%s339 + $0x1158] sm:$0xff]
        %v988 = vld [vmem:[%s339 + $0x1160] sm:$0xff]
        %v989 = vld [vmem:[%s339 + $0x1168] sm:$0xff]
        %v990 = vld [vmem:[%s339 + $0x1170] sm:$0xff]
        %v991 = vld [vmem:[%s339 + $0x1178] sm:$0xff]
        %v992 = vld [vmem:[%s339 + $0x1180] sm:$0xff]
        %v993 = vld [vmem:[%s339 + $0x1188] sm:$0xff]
        %v994 = vld [vmem:[%s339 + $0x1190] sm:$0xff]
        %v995 = vld [vmem:[%s339 + $0x1198] sm:$0xff]
        %v996 = vld [vmem:[%s339 + $0x11a0] sm:$0xff]
        %v997 = vld [vmem:[%s339 + $0x11a8] sm:$0xff]
        %v998 = vld [vmem:[%s339 + $0x11b0] sm:$0xff]
        %v999 = vld [vmem:[%s339 + $0x11b8] sm:$0xff]
        %v1000 = vld [vmem:[%s339 + $0x11c0] sm:$0xff]
        %v1001 = vld [vmem:[%s339 + $0x11c8] sm:$0xff]
        %v1002 = vld [vmem:[%s339 + $0x11d0] sm:$0xff]
        %v1003 = vld [vmem:[%s339 + $0x11d8] sm:$0xff]
        %v1004 = vld [vmem:[%s339 + $0x11e0] sm:$0xff]
        %v1005 = vld [vmem:[%s339 + $0x11e8] sm:$0xff]
        %v1006 = vld [vmem:[%s339 + $0x11f0] sm:$0xff]
        %v1007 = vld [vmem:[%s339 + $0x11f8] sm:$0xff]
        %v1008 = vld [vmem:[%s339 + $0x1200] sm:$0xff]
        %v1009 = vld [vmem:[%s339 + $0x1208] sm:$0xff]
        %v1010 = vld [vmem:[%s339 + $0x1210] sm:$0xff]
        %v1011 = vld [vmem:[%s339 + $0x1218] sm:$0xff]
        %v1012 = vld [vmem:[%s339 + $0x1220] sm:$0xff]
        %v1013 = vld [vmem:[%s339 + $0x1228] sm:$0xff]
        %v1014 = vld [vmem:[%s339 + $0x1230] sm:$0xff]
        %v1015 = vld [vmem:[%s339 + $0x1238] sm:$0xff]
        %v1016 = vld [vmem:[%s339 + $0x1240] sm:$0xff]
        %v1017 = vld [vmem:[%s339 + $0x1248] sm:$0xff]
        %v1018 = vld [vmem:[%s339 + $0x1250] sm:$0xff]
        %v1019 = vld [vmem:[%s339 + $0x1258] sm:$0xff]
        %v1020 = vld [vmem:[%s339 + $0x1260] sm:$0xff]
        %v1021 = vld [vmem:[%s339 + $0x1268] sm:$0xff]
        %v1022 = vld [vmem:[%s339 + $0x1270] sm:$0xff]
        %v1023 = vld [vmem:[%s339 + $0x1278] sm:$0xff]
        %v1024 = vld [vmem:[%s339 + $0x1280] sm:$0xff]
        %v1025 = vld [vmem:[%s339 + $0x1288] sm:$0xff]
        %v1026 = vld [vmem:[%s339 + $0x1290] sm:$0xff]
        %v1027 = vld [vmem:[%s339 + $0x1298] sm:$0xff]
        %v1028 = vld [vmem:[%s339 + $0x12a0] sm:$0xff]
        %v1029 = vld [vmem:[%s339 + $0x12a8] sm:$0xff]
        %v1030 = vld [vmem:[%s339 + $0x12b0] sm:$0xff]
        %v1031 = vld [vmem:[%s339 + $0x12b8] sm:$0xff]
        %v1032 = vld [vmem:[%s339 + $0x12c0] sm:$0xff]
        %v1033 = vld [vmem:[%s339 + $0x12c8] sm:$0xff]
        %v1034 = vld [vmem:[%s339 + $0x12d0] sm:$0xff]
        %v1035 = vld [vmem:[%s339 + $0x12d8] sm:$0xff]
        %v1036 = vld [vmem:[%s339 + $0x12e0] sm:$0xff]
        %v1037 = vld [vmem:[%s339 + $0x12e8] sm:$0xff]
        %v1038 = vld [vmem:[%s339 + $0x12f0] sm:$0xff]
        %v1039 = vld [vmem:[%s339 + $0x12f8] sm:$0xff]
        %v1040 = vld [vmem:[%s339 + $0x1300] sm:$0xff]
        %v1041 = vld [vmem:[%s339 + $0x1308] sm:$0xff]
        %v1042 = vld [vmem:[%s339 + $0x1310] sm:$0xff]
        %v1043 = vld [vmem:[%s339 + $0x1318] sm:$0xff]
        %v1044 = vld [vmem:[%s339 + $0x1320] sm:$0xff]
        %v1045 = vld [vmem:[%s339 + $0x1328] sm:$0xff]
        %v1046 = vld [vmem:[%s339 + $0x1330] sm:$0xff]
        %v1047 = vld [vmem:[%s339 + $0x1338] sm:$0xff]
        %v1048 = vld [vmem:[%s339 + $0x1340] sm:$0xff]
        %v1049 = vld [vmem:[%s339 + $0x1348] sm:$0xff]
        %v1050 = vld [vmem:[%s339 + $0x1350] sm:$0xff]
        %v1051 = vld [vmem:[%s339 + $0x1358] sm:$0xff]
        %v1052 = vld [vmem:[%s339 + $0x1360] sm:$0xff]
        %v1053 = vld [vmem:[%s339 + $0x1368] sm:$0xff]
        %v1054 = vld [vmem:[%s339 + $0x1370] sm:$0xff]
        %v1055 = vld [vmem:[%s339 + $0x1378] sm:$0xff]
        %v1056 = vld [vmem:[%s339 + $0x1380] sm:$0xff]
        %v1057 = vld [vmem:[%s339 + $0x1388] sm:$0xff]
        %v1058 = vld [vmem:[%s339 + $0x1390] sm:$0xff]
        %v1059 = vld [vmem:[%s339 + $0x1398] sm:$0xff]
        %v1060 = vld [vmem:[%s339 + $0x13a0] sm:$0xff]
        %v1061 = vld [vmem:[%s339 + $0x13a8] sm:$0xff]
        %v1062 = vld [vmem:[%s339 + $0x13b0] sm:$0xff]
        %v1063 = vld [vmem:[%s339 + $0x13b8] sm:$0xff]
        %v1064 = vld [vmem:[%s339 + $0x13c0] sm:$0xff]
        %v1065 = vld [vmem:[%s339 + $0x13c8] sm:$0xff]
        %v1066 = vld [vmem:[%s339 + $0x13d0] sm:$0xff]
        %v1067 = vld [vmem:[%s339 + $0x13d8] sm:$0xff]
        %v1068 = vld [vmem:[%s339 + $0x13e0] sm:$0xff]
        %v1069 = vld [vmem:[%s339 + $0x13e8] sm:$0xff]
        %v1070 = vld [vmem:[%s339 + $0x13f0] sm:$0xff]
        %v1071 = vld [vmem:[%s339 + $0x13f8] sm:$0xff]
        %v1072 = vld [vmem:[%s339 + $0x1400] sm:$0xff]
        %v1073 = vld [vmem:[%s339 + $0x1408] sm:$0xff]
        %v1074 = vld [vmem:[%s339 + $0x1410] sm:$0xff]
        %v1075 = vld [vmem:[%s339 + $0x1418] sm:$0xff]
        %v1076 = vld [vmem:[%s339 + $0x1420] sm:$0xff]
        %v1077 = vld [vmem:[%s339 + $0x1428] sm:$0xff]
        %v1078 = vld [vmem:[%s339 + $0x1430] sm:$0xff]
        %v1079 = vld [vmem:[%s339 + $0x1438] sm:$0xff]
        %v1080 = vld [vmem:[%s339 + $0x1440] sm:$0xff]
        %v1081 = vld [vmem:[%s339 + $0x1448] sm:$0xff]
        %v1082 = vld [vmem:[%s339 + $0x1450] sm:$0xff]
        %v1083 = vld [vmem:[%s339 + $0x1458] sm:$0xff]
        %v1084 = vld [vmem:[%s339 + $0x1460] sm:$0xff]
        %v1085 = vld [vmem:[%s339 + $0x1468] sm:$0xff]
        %v1086 = vld [vmem:[%s339 + $0x1470] sm:$0xff]
        %v1087 = vld [vmem:[%s339 + $0x1478] sm:$0xff]
        %v1088 = vld [vmem:[%s339 + $0x1480] sm:$0xff]
        %v1089 = vld [vmem:[%s339 + $0x1488] sm:$0xff]
        %v1090 = vld [vmem:[%s339 + $0x1490] sm:$0xff]
        %v1091 = vld [vmem:[%s339 + $0x1498] sm:$0xff]
        %v1092 = vld [vmem:[%s339 + $0x14a0] sm:$0xff]
        %v1093 = vld [vmem:[%s339 + $0x14a8] sm:$0xff]
        %v1094 = vld [vmem:[%s339 + $0x14b0] sm:$0xff]
        %v1095 = vld [vmem:[%s339 + $0x14b8] sm:$0xff]
        %v1096 = vld [vmem:[%s339 + $0x14c0] sm:$0xff]
        %v1097 = vld [vmem:[%s339 + $0x14c8] sm:$0xff]
        %v1098 = vld [vmem:[%s339 + $0x14d0] sm:$0xff]
        %v1099 = vld [vmem:[%s339 + $0x14d8] sm:$0xff]
        %v1100 = vld [vmem:[%s339 + $0x14e0] sm:$0xff]
        %v1101 = vld [vmem:[%s339 + $0x14e8] sm:$0xff]
        %v1102 = vld [vmem:[%s339 + $0x14f0] sm:$0xff]
        %v1103 = vld [vmem:[%s339 + $0x14f8] sm:$0xff]
        %v1104 = vld [vmem:[%s339 + $0x1500] sm:$0xff]
        %v1105 = vld [vmem:[%s339 + $0x1508] sm:$0xff]
        %v1106 = vld [vmem:[%s339 + $0x1510] sm:$0xff]
        %v1107 = vld [vmem:[%s339 + $0x1518] sm:$0xff]
        %v1108 = vld [vmem:[%s339 + $0x1520] sm:$0xff]
        %v1109 = vld [vmem:[%s339 + $0x1528] sm:$0xff]
        %v1110 = vld [vmem:[%s339 + $0x1530] sm:$0xff]
        %v1111 = vld [vmem:[%s339 + $0x1538] sm:$0xff]
        %v1112 = vld [vmem:[%s339 + $0x1540] sm:$0xff]
        %v1113 = vld [vmem:[%s339 + $0x1548] sm:$0xff]
        %v1114 = vld [vmem:[%s339 + $0x1550] sm:$0xff]
        %v1115 = vld [vmem:[%s339 + $0x1558] sm:$0xff]
        %v1116 = vld [vmem:[%s339 + $0x1560] sm:$0xff]
        %v1117 = vld [vmem:[%s339 + $0x1568] sm:$0xff]
        %v1118 = vld [vmem:[%s339 + $0x1570] sm:$0xff]
        %v1119 = vld [vmem:[%s339 + $0x1578] sm:$0xff]
        %v1120 = vld [vmem:[%s339 + $0x1580] sm:$0xff]
        %v1121 = vld [vmem:[%s339 + $0x1588] sm:$0xff]
        %v1122 = vld [vmem:[%s339 + $0x1590] sm:$0xff]
        %v1123 = vld [vmem:[%s339 + $0x1598] sm:$0xff]
        %v1124 = vld [vmem:[%s339 + $0x15a0] sm:$0xff]
        %v1125 = vld [vmem:[%s339 + $0x15a8] sm:$0xff]
        %v1126 = vld [vmem:[%s339 + $0x15b0] sm:$0xff]
        %v1127 = vld [vmem:[%s339 + $0x15b8] sm:$0xff]
        %v1128 = vld [vmem:[%s339 + $0x15c0] sm:$0xff]
        %v1129 = vld [vmem:[%s339 + $0x15c8] sm:$0xff]
        %v1130 = vld [vmem:[%s339 + $0x15d0] sm:$0xff]
        %v1131 = vld [vmem:[%s339 + $0x15d8] sm:$0xff]
        %v1132 = vld [vmem:[%s339 + $0x15e0] sm:$0xff]
        %v1133 = vld [vmem:[%s339 + $0x15e8] sm:$0xff]
        %v1134 = vld [vmem:[%s339 + $0x15f0] sm:$0xff]
        %v1135 = vld [vmem:[%s339 + $0x15f8] sm:$0xff]
        %v1136 = vld [vmem:[%s339 + $0x1600] sm:$0xff]
        %v1137 = vld [vmem:[%s339 + $0x1608] sm:$0xff]
        %v1138 = vld [vmem:[%s339 + $0x1610] sm:$0xff]
        %v1139 = vld [vmem:[%s339 + $0x1618] sm:$0xff]
        %v1140 = vld [vmem:[%s339 + $0x1620] sm:$0xff]
        %v1141 = vld [vmem:[%s339 + $0x1628] sm:$0xff]
        %v1142 = vld [vmem:[%s339 + $0x1630] sm:$0xff]
        %v1143 = vld [vmem:[%s339 + $0x1638] sm:$0xff]
        %v1144 = vld [vmem:[%s339 + $0x1640] sm:$0xff]
        %v1145 = vld [vmem:[%s339 + $0x1648] sm:$0xff]
        %v1146 = vld [vmem:[%s339 + $0x1650] sm:$0xff]
        %v1147 = vld [vmem:[%s339 + $0x1658] sm:$0xff]
        %v1148 = vld [vmem:[%s339 + $0x1660] sm:$0xff]
        %v1149 = vld [vmem:[%s339 + $0x1668] sm:$0xff]
        %v1150 = vld [vmem:[%s339 + $0x1670] sm:$0xff]
        %v1151 = vld [vmem:[%s339 + $0x1678] sm:$0xff]
        %v1152 = vld [vmem:[%s339 + $0x1680] sm:$0xff]
        %v1153 = vld [vmem:[%s339 + $0x1688] sm:$0xff]
        %v1154 = vld [vmem:[%s339 + $0x1690] sm:$0xff]
        %v1155 = vld [vmem:[%s339 + $0x1698] sm:$0xff]
        %v1156 = vld [vmem:[%s339 + $0x16a0] sm:$0xff]
        %v1157 = vld [vmem:[%s339 + $0x16a8] sm:$0xff]
        %v1158 = vld [vmem:[%s339 + $0x16b0] sm:$0xff]
        %v1159 = vld [vmem:[%s339 + $0x16b8] sm:$0xff]
        %v1160 = vld [vmem:[%s339 + $0x16c0] sm:$0xff]
        %v1161 = vld [vmem:[%s339 + $0x16c8] sm:$0xff]
        %v1162 = vld [vmem:[%s339 + $0x16d0] sm:$0xff]
        %v1163 = vld [vmem:[%s339 + $0x16d8] sm:$0xff]
        %v1164 = vld [vmem:[%s339 + $0x16e0] sm:$0xff]
        %v1165 = vld [vmem:[%s339 + $0x16e8] sm:$0xff]
        %v1166 = vld [vmem:[%s339 + $0x16f0] sm:$0xff]
        %v1167 = vld [vmem:[%s339 + $0x16f8] sm:$0xff]
        %v1168 = vld [vmem:[%s339 + $0x1700] sm:$0xff]
        %v1169 = vld [vmem:[%s339 + $0x1708] sm:$0xff]
        %v1170 = vld [vmem:[%s339 + $0x1710] sm:$0xff]
        %v1171 = vld [vmem:[%s339 + $0x1718] sm:$0xff]
        %v1172 = vld [vmem:[%s339 + $0x1720] sm:$0xff]
        %v1173 = vld [vmem:[%s339 + $0x1728] sm:$0xff]
        %v1174 = vld [vmem:[%s339 + $0x1730] sm:$0xff]
        %v1175 = vld [vmem:[%s339 + $0x1738] sm:$0xff]
        %v1176 = vld [vmem:[%s339 + $0x1740] sm:$0xff]
        %v1177 = vld [vmem:[%s339 + $0x1748] sm:$0xff]
        %v1178 = vld [vmem:[%s339 + $0x1750] sm:$0xff]
        %v1179 = vld [vmem:[%s339 + $0x1758] sm:$0xff]
        %v1180 = vld [vmem:[%s339 + $0x1760] sm:$0xff]
        %v1181 = vld [vmem:[%s339 + $0x1768] sm:$0xff]
        %v1182 = vld [vmem:[%s339 + $0x1770] sm:$0xff]
        %v1183 = vld [vmem:[%s339 + $0x1778] sm:$0xff]
        %v1184 = vld [vmem:[%s339 + $0x1780] sm:$0xff]
        %v1185 = vld [vmem:[%s339 + $0x1788] sm:$0xff]
        %v1186 = vld [vmem:[%s339 + $0x1790] sm:$0xff]
        %v1187 = vld [vmem:[%s339 + $0x1798] sm:$0xff]
        %v1188 = vld [vmem:[%s339 + $0x17a0] sm:$0xff]
        %v1189 = vld [vmem:[%s339 + $0x17a8] sm:$0xff]
        %v1190 = vld [vmem:[%s339 + $0x17b0] sm:$0xff]
        %v1191 = vld [vmem:[%s339 + $0x17b8] sm:$0xff]
        %v1192 = vld [vmem:[%s339 + $0x17c0] sm:$0xff]
        %v1193 = vld [vmem:[%s339 + $0x17c8] sm:$0xff]
        %v1194 = vld [vmem:[%s339 + $0x17d0] sm:$0xff]
        %v1195 = vld [vmem:[%s339 + $0x17d8] sm:$0xff]
        %v1196 = vld [vmem:[%s339 + $0x17e0] sm:$0xff]
        %v1197 = vld [vmem:[%s339 + $0x17e8] sm:$0xff]
        %v1198 = vld [vmem:[%s339 + $0x17f0] sm:$0xff]
        %v1199 = vld [vmem:[%s339 + $0x17f8] sm:$0xff]
        %v1200 = vld [vmem:[%s339 + $0x1800] sm:$0xff]
        %v1201 = vld [vmem:[%s339 + $0x1808] sm:$0xff]
        %v1202 = vld [vmem:[%s339 + $0x1810] sm:$0xff]
        %v1203 = vld [vmem:[%s339 + $0x1818] sm:$0xff]
        %v1204 = vld [vmem:[%s339 + $0x1820] sm:$0xff]
        %v1205 = vld [vmem:[%s339 + $0x1828] sm:$0xff]
        %v1206 = vld [vmem:[%s339 + $0x1830] sm:$0xff]
        %v1207 = vld [vmem:[%s339 + $0x1838] sm:$0xff]
        %v1208 = vld [vmem:[%s339 + $0x1840] sm:$0xff]
        %v1209 = vld [vmem:[%s339 + $0x1848] sm:$0xff]
        %v1210 = vld [vmem:[%s339 + $0x1850] sm:$0xff]
        %v1211 = vld [vmem:[%s339 + $0x1858] sm:$0xff]
        %v1212 = vld [vmem:[%s339 + $0x1860] sm:$0xff]
        %v1213 = vld [vmem:[%s339 + $0x1868] sm:$0xff]
        %v1214 = vld [vmem:[%s339 + $0x1870] sm:$0xff]
        %v1215 = vld [vmem:[%s339 + $0x1878] sm:$0xff]
        %v1216 = vld [vmem:[%s339 + $0x1880] sm:$0xff]
        %v1217 = vld [vmem:[%s339 + $0x1888] sm:$0xff]
        %v1218 = vld [vmem:[%s339 + $0x1890] sm:$0xff]
        %v1219 = vld [vmem:[%s339 + $0x1898] sm:$0xff]
        %v1220 = vld [vmem:[%s339 + $0x18a0] sm:$0xff]
        %v1221 = vld [vmem:[%s339 + $0x18a8] sm:$0xff]
        %v1222 = vld [vmem:[%s339 + $0x18b0] sm:$0xff]
        %v1223 = vld [vmem:[%s339 + $0x18b8] sm:$0xff]
        %v1224 = vld [vmem:[%s339 + $0x18c0] sm:$0xff]
        %v1225 = vld [vmem:[%s339 + $0x18c8] sm:$0xff]
        %v1226 = vld [vmem:[%s339 + $0x18d0] sm:$0xff]
        %v1227 = vld [vmem:[%s339 + $0x18d8] sm:$0xff]
        %v1228 = vld [vmem:[%s339 + $0x18e0] sm:$0xff]
        %v1229 = vld [vmem:[%s339 + $0x18e8] sm:$0xff]
        %v1230 = vld [vmem:[%s339 + $0x18f0] sm:$0xff]
        %v1231 = vld [vmem:[%s339 + $0x18f8] sm:$0xff]
        %v1232 = vld [vmem:[%s339 + $0x1900] sm:$0xff]
        %v1233 = vld [vmem:[%s339 + $0x1908] sm:$0xff]
        %v1234 = vld [vmem:[%s339 + $0x1910] sm:$0xff]
        %v1235 = vld [vmem:[%s339 + $0x1918] sm:$0xff]
        %v1236 = vld [vmem:[%s339 + $0x1920] sm:$0xff]
        %v1237 = vld [vmem:[%s339 + $0x1928] sm:$0xff]
        %v1238 = vld [vmem:[%s339 + $0x1930] sm:$0xff]
        %v1239 = vld [vmem:[%s339 + $0x1938] sm:$0xff]
        %v1240 = vld [vmem:[%s339 + $0x1940] sm:$0xff]
        %v1241 = vld [vmem:[%s339 + $0x1948] sm:$0xff]
        %v1242 = vld [vmem:[%s339 + $0x1950] sm:$0xff]
        %v1243 = vld [vmem:[%s339 + $0x1958] sm:$0xff]
        %v1244 = vld [vmem:[%s339 + $0x1960] sm:$0xff]
        %v1245 = vld [vmem:[%s339 + $0x1968] sm:$0xff]
        %v1246 = vld [vmem:[%s339 + $0x1970] sm:$0xff]
        %v1247 = vld [vmem:[%s339 + $0x1978] sm:$0xff]
        %v1248 = vld [vmem:[%s339 + $0x1980] sm:$0xff]
        %v1249 = vld [vmem:[%s339 + $0x1988] sm:$0xff]
        %v1250 = vld [vmem:[%s339 + $0x1990] sm:$0xff]
        %v1251 = vld [vmem:[%s339 + $0x1998] sm:$0xff]
        %v1252 = vld [vmem:[%s339 + $0x19a0] sm:$0xff]
        %v1253 = vld [vmem:[%s339 + $0x19a8] sm:$0xff]
        %v1254 = vld [vmem:[%s339 + $0x19b0] sm:$0xff]
        %v1255 = vld [vmem:[%s339 + $0x19b8] sm:$0xff]
        %v1256 = vld [vmem:[%s339 + $0x19c0] sm:$0xff]
        %v1257 = vld [vmem:[%s339 + $0x19c8] sm:$0xff]
        %v1258 = vld [vmem:[%s339 + $0x19d0] sm:$0xff]
        %v1259 = vld [vmem:[%s339 + $0x19d8] sm:$0xff]
        %v1260 = vld [vmem:[%s339 + $0x19e0] sm:$0xff]
        %v1261 = vld [vmem:[%s339 + $0x19e8] sm:$0xff]
        %v1262 = vld [vmem:[%s339 + $0x19f0] sm:$0xff]
        %v1263 = vld [vmem:[%s339 + $0x19f8] sm:$0xff]
        %v1264 = vld [vmem:[%s339 + $0x1a00] sm:$0xff]
        %v1265 = vld [vmem:[%s339 + $0x1a08] sm:$0xff]
        %v1266 = vld [vmem:[%s339 + $0x1a10] sm:$0xff]
        %v1267 = vld [vmem:[%s339 + $0x1a18] sm:$0xff]
        %v1268 = vld [vmem:[%s339 + $0x1a20] sm:$0xff]
        %v1269 = vld [vmem:[%s339 + $0x1a28] sm:$0xff]
        %v1270 = vld [vmem:[%s339 + $0x1a30] sm:$0xff]
        %v1271 = vld [vmem:[%s339 + $0x1a38] sm:$0xff]
        %v1272 = vld [vmem:[%s339 + $0x1a40] sm:$0xff]
        %v1273 = vld [vmem:[%s339 + $0x1a48] sm:$0xff]
        %v1274 = vld [vmem:[%s339 + $0x1a50] sm:$0xff]
        %v1275 = vld [vmem:[%s339 + $0x1a58] sm:$0xff]
        %v1276 = vld [vmem:[%s339 + $0x1a60] sm:$0xff]
        %v1277 = vld [vmem:[%s339 + $0x1a68] sm:$0xff]
        %v1278 = vld [vmem:[%s339 + $0x1a70] sm:$0xff]
        %v1279 = vld [vmem:[%s339 + $0x1a78] sm:$0xff]
        %v1280 = vld [vmem:[%s339 + $0x1a80] sm:$0xff]
        %v1281 = vld [vmem:[%s339 + $0x1a88] sm:$0xff]
        %v1282 = vld [vmem:[%s339 + $0x1a90] sm:$0xff]
        %v1283 = vld [vmem:[%s339 + $0x1a98] sm:$0xff]
        %v1284 = vld [vmem:[%s339 + $0x1aa0] sm:$0xff]
        %v1285 = vld [vmem:[%s339 + $0x1aa8] sm:$0xff]
        %v1286 = vld [vmem:[%s339 + $0x1ab0] sm:$0xff]
        %v1287 = vld [vmem:[%s339 + $0x1ab8] sm:$0xff]
        %v1288 = vld [vmem:[%s339 + $0x1ac0] sm:$0xff]
        %v1289 = vld [vmem:[%s339 + $0x1ac8] sm:$0xff]
        %v1290 = vld [vmem:[%s339 + $0x1ad0] sm:$0xff]
        %v1291 = vld [vmem:[%s339 + $0x1ad8] sm:$0xff]
        %v1292 = vld [vmem:[%s339 + $0x1ae0] sm:$0xff]
        %v1293 = vld [vmem:[%s339 + $0x1ae8] sm:$0xff]
        %v1294 = vld [vmem:[%s339 + $0x1af0] sm:$0xff]
        %v1295 = vld [vmem:[%s339 + $0x1af8] sm:$0xff]
        %v1296 = vld [vmem:[%s339 + $0x1b00] sm:$0xff]
        %v1297 = vld [vmem:[%s339 + $0x1b08] sm:$0xff]
        %v1298 = vld [vmem:[%s339 + $0x1b10] sm:$0xff]
        %v1299 = vld [vmem:[%s339 + $0x1b18] sm:$0xff]
        %v1300 = vld [vmem:[%s339 + $0x1b20] sm:$0xff]
        %v1301 = vld [vmem:[%s339 + $0x1b28] sm:$0xff]
        %v1302 = vld [vmem:[%s339 + $0x1b30] sm:$0xff]
        %v1303 = vld [vmem:[%s339 + $0x1b38] sm:$0xff]
        %v1304 = vld [vmem:[%s339 + $0x1b40] sm:$0xff]
        %v1305 = vld [vmem:[%s339 + $0x1b48] sm:$0xff]
        %v1306 = vld [vmem:[%s339 + $0x1b50] sm:$0xff]
        %v1307 = vld [vmem:[%s339 + $0x1b58] sm:$0xff]
        %v1308 = vld [vmem:[%s339 + $0x1b60] sm:$0xff]
        %v1309 = vld [vmem:[%s339 + $0x1b68] sm:$0xff]
        %v1310 = vld [vmem:[%s339 + $0x1b70] sm:$0xff]
        %v1311 = vld [vmem:[%s339 + $0x1b78] sm:$0xff]
        %v1312 = vld [vmem:[%s339 + $0x1b80] sm:$0xff]
        %v1313 = vld [vmem:[%s339 + $0x1b88] sm:$0xff]
        %v1314 = vld [vmem:[%s339 + $0x1b90] sm:$0xff]
        %v1315 = vld [vmem:[%s339 + $0x1b98] sm:$0xff]
        %v1316 = vld [vmem:[%s339 + $0x1ba0] sm:$0xff]
        %v1317 = vld [vmem:[%s339 + $0x1ba8] sm:$0xff]
        %v1318 = vld [vmem:[%s339 + $0x1bb0] sm:$0xff]
        %v1319 = vld [vmem:[%s339 + $0x1bb8] sm:$0xff]
        %v1320 = vld [vmem:[%s339 + $0x1bc0] sm:$0xff]
        %v1321 = vld [vmem:[%s339 + $0x1bc8] sm:$0xff]
        %v1322 = vld [vmem:[%s339 + $0x1bd0] sm:$0xff]
        %v1323 = vld [vmem:[%s339 + $0x1bd8] sm:$0xff]
        %v1324 = vld [vmem:[%s339 + $0x1be0] sm:$0xff]
        %v1325 = vld [vmem:[%s339 + $0x1be8] sm:$0xff]
        %v1326 = vld [vmem:[%s339 + $0x1bf0] sm:$0xff]
        %v1327 = vld [vmem:[%s339 + $0x1bf8] sm:$0xff]
        %v1328 = vld [vmem:[%s339 + $0x1c00] sm:$0xff]
        %v1329 = vld [vmem:[%s339 + $0x1c08] sm:$0xff]
        %v1330 = vld [vmem:[%s339 + $0x1c10] sm:$0xff]
        %v1331 = vld [vmem:[%s339 + $0x1c18] sm:$0xff]
        %v1332 = vld [vmem:[%s339 + $0x1c20] sm:$0xff]
        %v1333 = vld [vmem:[%s339 + $0x1c28] sm:$0xff]
        %v1334 = vld [vmem:[%s339 + $0x1c30] sm:$0xff]
        %v1335 = vld [vmem:[%s339 + $0x1c38] sm:$0xff]
        %v1336 = vld [vmem:[%s339 + $0x1c40] sm:$0xff]
        %v1337 = vld [vmem:[%s339 + $0x1c48] sm:$0xff]
        %v1338 = vld [vmem:[%s339 + $0x1c50] sm:$0xff]
        %v1339 = vld [vmem:[%s339 + $0x1c58] sm:$0xff]
        %v1340 = vld [vmem:[%s339 + $0x1c60] sm:$0xff]
        %v1341 = vld [vmem:[%s339 + $0x1c68] sm:$0xff]
        %v1342 = vld [vmem:[%s339 + $0x1c70] sm:$0xff]
        %v1343 = vld [vmem:[%s339 + $0x1c78] sm:$0xff]
        %v1344 = vld [vmem:[%s339 + $0x1c80] sm:$0xff]
        %v1345 = vld [vmem:[%s339 + $0x1c88] sm:$0xff]
        %v1346 = vld [vmem:[%s339 + $0x1c90] sm:$0xff]
        %v1347 = vld [vmem:[%s339 + $0x1c98] sm:$0xff]
        %v1348 = vld [vmem:[%s339 + $0x1ca0] sm:$0xff]
        %v1349 = vld [vmem:[%s339 + $0x1ca8] sm:$0xff]
        %v1350 = vld [vmem:[%s339 + $0x1cb0] sm:$0xff]
        %v1351 = vld [vmem:[%s339 + $0x1cb8] sm:$0xff]
        %v1352 = vld [vmem:[%s339 + $0x1cc0] sm:$0xff]
        %v1353 = vld [vmem:[%s339 + $0x1cc8] sm:$0xff]
        %v1354 = vld [vmem:[%s339 + $0x1cd0] sm:$0xff]
        %v1355 = vld [vmem:[%s339 + $0x1cd8] sm:$0xff]
        %v1356 = vld [vmem:[%s339 + $0x1ce0] sm:$0xff]
        %v1357 = vld [vmem:[%s339 + $0x1ce8] sm:$0xff]
        %v1358 = vld [vmem:[%s339 + $0x1cf0] sm:$0xff]
        %v1359 = vld [vmem:[%s339 + $0x1cf8] sm:$0xff]
        %v1360 = vld [vmem:[%s339 + $0x1d00] sm:$0xff]
        %v1361 = vld [vmem:[%s339 + $0x1d08] sm:$0xff]
        %v1362 = vld [vmem:[%s339 + $0x1d10] sm:$0xff]
        %v1363 = vld [vmem:[%s339 + $0x1d18] sm:$0xff]
        %v1364 = vld [vmem:[%s339 + $0x1d20] sm:$0xff]
        %v1365 = vld [vmem:[%s339 + $0x1d28] sm:$0xff]
        %v1366 = vld [vmem:[%s339 + $0x1d30] sm:$0xff]
        %v1367 = vld [vmem:[%s339 + $0x1d38] sm:$0xff]
        %v1368 = vld [vmem:[%s339 + $0x1d40] sm:$0xff]
        %v1369 = vld [vmem:[%s339 + $0x1d48] sm:$0xff]
        %v1370 = vld [vmem:[%s339 + $0x1d50] sm:$0xff]
        %v1371 = vld [vmem:[%s339 + $0x1d58] sm:$0xff]
        %v1372 = vld [vmem:[%s339 + $0x1d60] sm:$0xff]
        %v1373 = vld [vmem:[%s339 + $0x1d68] sm:$0xff]
        %v1374 = vld [vmem:[%s339 + $0x1d70] sm:$0xff]
        %v1375 = vld [vmem:[%s339 + $0x1d78] sm:$0xff]
        %v1376 = vld [vmem:[%s339 + $0x1d80] sm:$0xff]
        %v1377 = vld [vmem:[%s339 + $0x1d88] sm:$0xff]
        %v1378 = vld [vmem:[%s339 + $0x1d90] sm:$0xff]
        %v1379 = vld [vmem:[%s339 + $0x1d98] sm:$0xff]
        %v1380 = vld [vmem:[%s339 + $0x1da0] sm:$0xff]
        %v1381 = vld [vmem:[%s339 + $0x1da8] sm:$0xff]
        %v1382 = vld [vmem:[%s339 + $0x1db0] sm:$0xff]
        %v1383 = vld [vmem:[%s339 + $0x1db8] sm:$0xff]
        %v1384 = vld [vmem:[%s339 + $0x1dc0] sm:$0xff]
        %v1385 = vld [vmem:[%s339 + $0x1dc8] sm:$0xff]
        %v1386 = vld [vmem:[%s339 + $0x1dd0] sm:$0xff]
        %v1387 = vld [vmem:[%s339 + $0x1dd8] sm:$0xff]
        %v1388 = vld [vmem:[%s339 + $0x1de0] sm:$0xff]
        %v1389 = vld [vmem:[%s339 + $0x1de8] sm:$0xff]
        %v1390 = vld [vmem:[%s339 + $0x1df0] sm:$0xff]
        %v1391 = vld [vmem:[%s339 + $0x1df8] sm:$0xff]
        %v1392 = vld [vmem:[%s339 + $0x1e00] sm:$0xff]
        %v1393 = vld [vmem:[%s339 + $0x1e08] sm:$0xff]
        %v1394 = vld [vmem:[%s339 + $0x1e10] sm:$0xff]
        %v1395 = vld [vmem:[%s339 + $0x1e18] sm:$0xff]
        %v1396 = vld [vmem:[%s339 + $0x1e20] sm:$0xff]
        %v1397 = vld [vmem:[%s339 + $0x1e28] sm:$0xff]
        %v1398 = vld [vmem:[%s339 + $0x1e30] sm:$0xff]
        %v1399 = vld [vmem:[%s339 + $0x1e38] sm:$0xff]
        %v1400 = vld [vmem:[%s339 + $0x1e40] sm:$0xff]
        %v1401 = vld [vmem:[%s339 + $0x1e48] sm:$0xff]
        %v1402 = vld [vmem:[%s339 + $0x1e50] sm:$0xff]
        %v1403 = vld [vmem:[%s339 + $0x1e58] sm:$0xff]
        %v1404 = vld [vmem:[%s339 + $0x1e60] sm:$0xff]
        %v1405 = vld [vmem:[%s339 + $0x1e68] sm:$0xff]
        %v1406 = vld [vmem:[%s339 + $0x1e70] sm:$0xff]
        %v1407 = vld [vmem:[%s339 + $0x1e78] sm:$0xff]
        %v1408 = vld [vmem:[%s339 + $0x1e80] sm:$0xff]
        %v1409 = vld [vmem:[%s339 + $0x1e88] sm:$0xff]
        %v1410 = vld [vmem:[%s339 + $0x1e90] sm:$0xff]
        %v1411 = vld [vmem:[%s339 + $0x1e98] sm:$0xff]
        %v1412 = vld [vmem:[%s339 + $0x1ea0] sm:$0xff]
        %v1413 = vld [vmem:[%s339 + $0x1ea8] sm:$0xff]
        %v1414 = vld [vmem:[%s339 + $0x1eb0] sm:$0xff]
        %v1415 = vld [vmem:[%s339 + $0x1eb8] sm:$0xff]
        %v1416 = vld [vmem:[%s339 + $0x1ec0] sm:$0xff]
        %v1417 = vld [vmem:[%s339 + $0x1ec8] sm:$0xff]
        %v1418 = vld [vmem:[%s339 + $0x1ed0] sm:$0xff]
        %v1419 = vld [vmem:[%s339 + $0x1ed8] sm:$0xff]
        %v1420 = vld [vmem:[%s339 + $0x1ee0] sm:$0xff]
        %v1421 = vld [vmem:[%s339 + $0x1ee8] sm:$0xff]
        %v1422 = vld [vmem:[%s339 + $0x1ef0] sm:$0xff]
        %v1423 = vld [vmem:[%s339 + $0x1ef8] sm:$0xff]
        %v1424 = vld [vmem:[%s339 + $0x1f00] sm:$0xff]
        %v1425 = vld [vmem:[%s339 + $0x1f08] sm:$0xff]
        %v1426 = vld [vmem:[%s339 + $0x1f10] sm:$0xff]
        %v1427 = vld [vmem:[%s339 + $0x1f18] sm:$0xff]
        %v1428 = vld [vmem:[%s339 + $0x1f20] sm:$0xff]
        %v1429 = vld [vmem:[%s339 + $0x1f28] sm:$0xff]
        %v1430 = vld [vmem:[%s339 + $0x1f30] sm:$0xff]
        %v1431 = vld [vmem:[%s339 + $0x1f38] sm:$0xff]
        %v1432 = vld [vmem:[%s339 + $0x1f40] sm:$0xff]
        %v1433 = vld [vmem:[%s339 + $0x1f48] sm:$0xff]
        %v1434 = vld [vmem:[%s339 + $0x1f50] sm:$0xff]
        %v1435 = vld [vmem:[%s339 + $0x1f58] sm:$0xff]
        %v1436 = vld [vmem:[%s339 + $0x1f60] sm:$0xff]
        %v1437 = vld [vmem:[%s339 + $0x1f68] sm:$0xff]
        %v1438 = vld [vmem:[%s339 + $0x1f70] sm:$0xff]
        %v1439 = vld [vmem:[%s339 + $0x1f78] sm:$0xff]
        %v1440 = vld [vmem:[%s339 + $0x1f80] sm:$0xff]
        %v1441 = vld [vmem:[%s339 + $0x1f88] sm:$0xff]
        %v1442 = vld [vmem:[%s339 + $0x1f90] sm:$0xff]
        %v1443 = vld [vmem:[%s339 + $0x1f98] sm:$0xff]
        %v1444 = vld [vmem:[%s339 + $0x1fa0] sm:$0xff]
        %v1445 = vld [vmem:[%s339 + $0x1fa8] sm:$0xff]
        %v1446 = vld [vmem:[%s339 + $0x1fb0] sm:$0xff]
        %v1447 = vld [vmem:[%s339 + $0x1fb8] sm:$0xff]
        %v1448 = vld [vmem:[%s339 + $0x1fc0] sm:$0xff]
        %v1449 = vld [vmem:[%s339 + $0x1fc8] sm:$0xff]
        %v1450 = vld [vmem:[%s339 + $0x1fd0] sm:$0xff]
        %v1451 = vld [vmem:[%s339 + $0x1fd8] sm:$0xff]
        %v1452 = vld [vmem:[%s339 + $0x1fe0] sm:$0xff]
        %v1453 = vld [vmem:[%s339 + $0x1fe8] sm:$0xff]
        %v1454 = vld [vmem:[%s339 + $0x1ff0] sm:$0xff]
        %v1455 = vld [vmem:[%s339 + $0x1ff8] sm:$0xff]
        %v1456 = vld [vmem:[%s339 + $0x2000] sm:$0xff]
        %v1457 = vld [vmem:[%s339 + $0x2008] sm:$0xff]
        %v1458 = vld [vmem:[%s339 + $0x2010] sm:$0xff]
        %v1459 = vld [vmem:[%s339 + $0x2018] sm:$0xff]
        %v1460 = vld [vmem:[%s339 + $0x2020] sm:$0xff]
        %v1461 = vld [vmem:[%s339 + $0x2028] sm:$0xff]
        %v1462 = vld [vmem:[%s339 + $0x2030] sm:$0xff]
        %v1463 = vld [vmem:[%s339 + $0x2038] sm:$0xff]
        %v1464 = vld [vmem:[%s339 + $0x2040] sm:$0xff]
        %v1465 = vld [vmem:[%s339 + $0x2048] sm:$0xff]
        %v1466 = vld [vmem:[%s339 + $0x2050] sm:$0xff]
        %v1467 = vld [vmem:[%s339 + $0x2058] sm:$0xff]
        %v1468 = vld [vmem:[%s339 + $0x2060] sm:$0xff]
        %v1469 = vld [vmem:[%s339 + $0x2068] sm:$0xff]
        %v1470 = vld [vmem:[%s339 + $0x2070] sm:$0xff]
        %v1471 = vld [vmem:[%s339 + $0x2078] sm:$0xff]
        %v1472 = vld [vmem:[%s339 + $0x2080] sm:$0xff]
        %v1473 = vld [vmem:[%s339 + $0x2088] sm:$0xff]
        %v1474 = vld [vmem:[%s339 + $0x2090] sm:$0xff]
        %v1475 = vld [vmem:[%s339 + $0x2098] sm:$0xff]
        %v1476 = vld [vmem:[%s339 + $0x20a0] sm:$0xff]
        %v1477 = vld [vmem:[%s339 + $0x20a8] sm:$0xff]
        %v1478 = vld [vmem:[%s339 + $0x20b0] sm:$0xff]
        %v1479 = vld [vmem:[%s339 + $0x20b8] sm:$0xff]
        %v1480 = vld [vmem:[%s339 + $0x20c0] sm:$0xff]
        %v1481 = vld [vmem:[%s339 + $0x20c8] sm:$0xff]
        %v1482 = vld [vmem:[%s339 + $0x20d0] sm:$0xff]
        %v1483 = vld [vmem:[%s339 + $0x20d8] sm:$0xff]
        %v1484 = vld [vmem:[%s339 + $0x20e0] sm:$0xff]
        %v1485 = vld [vmem:[%s339 + $0x20e8] sm:$0xff]
        %v1486 = vld [vmem:[%s339 + $0x20f0] sm:$0xff]
        %v1487 = vld [vmem:[%s339 + $0x20f8] sm:$0xff]
        %v1488 = vld [vmem:[%s339 + $0x2100] sm:$0xff]
        %v1489 = vld [vmem:[%s339 + $0x2108] sm:$0xff]
        %v1490 = vld [vmem:[%s339 + $0x2110] sm:$0xff]
        %v1491 = vld [vmem:[%s339 + $0x2118] sm:$0xff]
        %v1492 = vld [vmem:[%s339 + $0x2120] sm:$0xff]
        %v1493 = vld [vmem:[%s339 + $0x2128] sm:$0xff]
        %v1494 = vld [vmem:[%s339 + $0x2130] sm:$0xff]
        %v1495 = vld [vmem:[%s339 + $0x2138] sm:$0xff]
        %v1496 = vld [vmem:[%s339 + $0x2140] sm:$0xff]
        %v1497 = vld [vmem:[%s339 + $0x2148] sm:$0xff]
        %v1498 = vld [vmem:[%s339 + $0x2150] sm:$0xff]
        %v1499 = vld [vmem:[%s339 + $0x2158] sm:$0xff]
        %v1500 = vld [vmem:[%s339 + $0x2160] sm:$0xff]
        %v1501 = vld [vmem:[%s339 + $0x2168] sm:$0xff]
        %v1502 = vld [vmem:[%s339 + $0x2170] sm:$0xff]
        %v1503 = vld [vmem:[%s339 + $0x2178] sm:$0xff]
        %v1504 = vld [vmem:[%s339 + $0x2180] sm:$0xff]
        %v1505 = vld [vmem:[%s339 + $0x2188] sm:$0xff]
        %v1506 = vld [vmem:[%s339 + $0x2190] sm:$0xff]
        %v1507 = vld [vmem:[%s339 + $0x2198] sm:$0xff]
        %v1508 = vld [vmem:[%s339 + $0x21a0] sm:$0xff]
        %v1509 = vld [vmem:[%s339 + $0x21a8] sm:$0xff]
        %v1510 = vld [vmem:[%s339 + $0x21b0] sm:$0xff]
        %v1511 = vld [vmem:[%s339 + $0x21b8] sm:$0xff]
        %v1512 = vld [vmem:[%s339 + $0x21c0] sm:$0xff]
        %v1513 = vld [vmem:[%s339 + $0x21c8] sm:$0xff]
        %v1514 = vld [vmem:[%s339 + $0x21d0] sm:$0xff]
        %v1515 = vld [vmem:[%s339 + $0x21d8] sm:$0xff]
        %v1516 = vld [vmem:[%s339 + $0x21e0] sm:$0xff]
        %v1517 = vld [vmem:[%s339 + $0x21e8] sm:$0xff]
        %v1518 = vld [vmem:[%s339 + $0x21f0] sm:$0xff]
        %v1519 = vld [vmem:[%s339 + $0x21f8] sm:$0xff]
        %v1520 = vld [vmem:[%s339 + $0x2200] sm:$0xff]
        %v1521 = vld [vmem:[%s339 + $0x2208] sm:$0xff]
        %v1522 = vld [vmem:[%s339 + $0x2210] sm:$0xff]
        %v1523 = vld [vmem:[%s339 + $0x2218] sm:$0xff]
        %v1524 = vld [vmem:[%s339 + $0x2220] sm:$0xff]
        %v1525 = vld [vmem:[%s339 + $0x2228] sm:$0xff]
        %v1526 = vld [vmem:[%s339 + $0x2230] sm:$0xff]
        %v1527 = vld [vmem:[%s339 + $0x2238] sm:$0xff]
        %v1528 = vld [vmem:[%s339 + $0x2240] sm:$0xff]
        %v1529 = vld [vmem:[%s339 + $0x2248] sm:$0xff]
        %v1530 = vld [vmem:[%s339 + $0x2250] sm:$0xff]
        %v1531 = vld [vmem:[%s339 + $0x2258] sm:$0xff]
        %v1532 = vld [vmem:[%s339 + $0x2260] sm:$0xff]
        %v1533 = vld [vmem:[%s339 + $0x2268] sm:$0xff]
        %v1534 = vld [vmem:[%s339 + $0x2270] sm:$0xff]
        %v1535 = vld [vmem:[%s339 + $0x2278] sm:$0xff]
        %v1536 = vld [vmem:[%s339 + $0x2280] sm:$0xff]
        %v1537 = vld [vmem:[%s339 + $0x2288] sm:$0xff]
        %v1538 = vld [vmem:[%s339 + $0x2290] sm:$0xff]
        %v1539 = vld [vmem:[%s339 + $0x2298] sm:$0xff]
        %v1540 = vld [vmem:[%s339 + $0x22a0] sm:$0xff]
        %v1541 = vld [vmem:[%s339 + $0x22a8] sm:$0xff]
        %v1542 = vld [vmem:[%s339 + $0x22b0] sm:$0xff]
        %v1543 = vld [vmem:[%s339 + $0x22b8] sm:$0xff]
        %v1544 = vld [vmem:[%s339 + $0x22c0] sm:$0xff]
        %v1545 = vld [vmem:[%s339 + $0x22c8] sm:$0xff]
        %v1546 = vld [vmem:[%s339 + $0x22d0] sm:$0xff]
        %v1547 = vld [vmem:[%s339 + $0x22d8] sm:$0xff]
        %v1548 = vld [vmem:[%s339 + $0x22e0] sm:$0xff]
        %v1549 = vld [vmem:[%s339 + $0x22e8] sm:$0xff]
        %v1550 = vld [vmem:[%s339 + $0x22f0] sm:$0xff]
        %v1551 = vld [vmem:[%s339 + $0x22f8] sm:$0xff]
        %v1552 = vld [vmem:[%s339 + $0x2300] sm:$0xff]
        %v1553 = vld [vmem:[%s339 + $0x2308] sm:$0xff]
        %v1554 = vld [vmem:[%s339 + $0x2310] sm:$0xff]
        %v1555 = vld [vmem:[%s339 + $0x2318] sm:$0xff]
        %v1556 = vld [vmem:[%s339 + $0x2320] sm:$0xff]
        %v1557 = vld [vmem:[%s339 + $0x2328] sm:$0xff]
        %v1558 = vld [vmem:[%s339 + $0x2330] sm:$0xff]
        %v1559 = vld [vmem:[%s339 + $0x2338] sm:$0xff]
        %v1560 = vld [vmem:[%s339 + $0x2340] sm:$0xff]
        %v1561 = vld [vmem:[%s339 + $0x2348] sm:$0xff]
        %v1562 = vld [vmem:[%s339 + $0x2350] sm:$0xff]
        %v1563 = vld [vmem:[%s339 + $0x2358] sm:$0xff]
        %v1564 = vld [vmem:[%s339 + $0x2360] sm:$0xff]
        %v1565 = vld [vmem:[%s339 + $0x2368] sm:$0xff]
        %v1566 = vld [vmem:[%s339 + $0x2370] sm:$0xff]
        %v1567 = vld [vmem:[%s339 + $0x2378] sm:$0xff]
        %v1568 = vld [vmem:[%s339 + $0x2380] sm:$0xff]
        %v1569 = vld [vmem:[%s339 + $0x2388] sm:$0xff]
        %v1570 = vld [vmem:[%s339 + $0x2390] sm:$0xff]
        %v1571 = vld [vmem:[%s339 + $0x2398] sm:$0xff]
        %v1572 = vld [vmem:[%s339 + $0x23a0] sm:$0xff]
        %v1573 = vld [vmem:[%s339 + $0x23a8] sm:$0xff]
        %v1574 = vld [vmem:[%s339 + $0x23b0] sm:$0xff]
        %v1575 = vld [vmem:[%s339 + $0x23b8] sm:$0xff]
        %v1576 = vld [vmem:[%s339 + $0x23c0] sm:$0xff]
        %v1577 = vld [vmem:[%s339 + $0x23c8] sm:$0xff]
        %v1578 = vld [vmem:[%s339 + $0x23d0] sm:$0xff]
        %v1579 = vld [vmem:[%s339 + $0x23d8] sm:$0xff]
        %v1580 = vld [vmem:[%s339 + $0x23e0] sm:$0xff]
        %v1581 = vld [vmem:[%s339 + $0x23e8] sm:$0xff]
        %v1582 = vld [vmem:[%s339 + $0x23f0] sm:$0xff]
        %v1583 = vld [vmem:[%s339 + $0x23f8] sm:$0xff]
        %v1584 = vld [vmem:[%s339 + $0x2400] sm:$0xff]
        %v1585 = vld [vmem:[%s339 + $0x2408] sm:$0xff]
        %v1586 = vld [vmem:[%s339 + $0x2410] sm:$0xff]
        %v1587 = vld [vmem:[%s339 + $0x2418] sm:$0xff]
        %v1588 = vld [vmem:[%s339 + $0x2420] sm:$0xff]
        %v1589 = vld [vmem:[%s339 + $0x2428] sm:$0xff]
        %v1590 = vld [vmem:[%s339 + $0x2430] sm:$0xff]
        %v1591 = vld [vmem:[%s339 + $0x2438] sm:$0xff]
        %v1592 = vld [vmem:[%s339 + $0x2440] sm:$0xff]
        %v1593 = vld [vmem:[%s339 + $0x2448] sm:$0xff]
        %v1594 = vld [vmem:[%s339 + $0x2450] sm:$0xff]
        %v1595 = vld [vmem:[%s339 + $0x2458] sm:$0xff]
        %v1596 = vld [vmem:[%s339 + $0x2460] sm:$0xff]
        %v1597 = vld [vmem:[%s339 + $0x2468] sm:$0xff]
        %v1598 = vld [vmem:[%s339 + $0x2470] sm:$0xff]
        %v1599 = vld [vmem:[%s339 + $0x2478] sm:$0xff]
        %v1600 = vld [vmem:[%s339 + $0x2480] sm:$0xff]
        %v1601 = vld [vmem:[%s339 + $0x2488] sm:$0xff]
        %v1602 = vld [vmem:[%s339 + $0x2490] sm:$0xff]
        %v1603 = vld [vmem:[%s339 + $0x2498] sm:$0xff]
        %v1604 = vld [vmem:[%s339 + $0x24a0] sm:$0xff]
        %v1605 = vld [vmem:[%s339 + $0x24a8] sm:$0xff]
        %v1606 = vld [vmem:[%s339 + $0x24b0] sm:$0xff]
        %v1607 = vld [vmem:[%s339 + $0x24b8] sm:$0xff]
        %v1608 = vld [vmem:[%s339 + $0x24c0] sm:$0xff]
        %v1609 = vld [vmem:[%s339 + $0x24c8] sm:$0xff]
        %v1610 = vld [vmem:[%s339 + $0x24d0] sm:$0xff]
        %v1611 = vld [vmem:[%s339 + $0x24d8] sm:$0xff]
        %v1612 = vld [vmem:[%s339 + $0x24e0] sm:$0xff]
        %v1613 = vld [vmem:[%s339 + $0x24e8] sm:$0xff]
        %v1614 = vld [vmem:[%s339 + $0x24f0] sm:$0xff]
        %v1615 = vld [vmem:[%s339 + $0x24f8] sm:$0xff]
        %v1616 = vld [vmem:[%s339 + $0x2500] sm:$0xff]
        %v1617 = vld [vmem:[%s339 + $0x2508] sm:$0xff]
        %v1618 = vld [vmem:[%s339 + $0x2510] sm:$0xff]
        %v1619 = vld [vmem:[%s339 + $0x2518] sm:$0xff]
        %v1620 = vld [vmem:[%s339 + $0x2520] sm:$0xff]
        %v1621 = vld [vmem:[%s339 + $0x2528] sm:$0xff]
        %v1622 = vld [vmem:[%s339 + $0x2530] sm:$0xff]
        %v1623 = vld [vmem:[%s339 + $0x2538] sm:$0xff]
        %v1624 = vld [vmem:[%s339 + $0x2540] sm:$0xff]
        %v1625 = vld [vmem:[%s339 + $0x2548] sm:$0xff]
        %v1626 = vld [vmem:[%s339 + $0x2550] sm:$0xff]
        %v1627 = vld [vmem:[%s339 + $0x2558] sm:$0xff]
        %v1628 = vld [vmem:[%s339 + $0x2560] sm:$0xff]
        %v1629 = vld [vmem:[%s339 + $0x2568] sm:$0xff]
        %v1630 = vld [vmem:[%s339 + $0x2570] sm:$0xff]
        %v1631 = vld [vmem:[%s339 + $0x2578] sm:$0xff]
        %v1632 = vld [vmem:[%s339 + $0x2580] sm:$0xff]
        %v1633 = vld [vmem:[%s339 + $0x2588] sm:$0xff]
        %v1634 = vld [vmem:[%s339 + $0x2590] sm:$0xff]
        %v1635 = vld [vmem:[%s339 + $0x2598] sm:$0xff]
        %v1636 = vld [vmem:[%s339 + $0x25a0] sm:$0xff]
        %v1637 = vld [vmem:[%s339 + $0x25a8] sm:$0xff]
        %v1638 = vld [vmem:[%s339 + $0x25b0] sm:$0xff]
        %v1639 = vld [vmem:[%s339 + $0x25b8] sm:$0xff]
        %v1640 = vld [vmem:[%s339 + $0x25c0] sm:$0xff]
        %v1641 = vld [vmem:[%s339 + $0x25c8] sm:$0xff]
        %v1642 = vld [vmem:[%s339 + $0x25d0] sm:$0xff]
        %v1643 = vld [vmem:[%s339 + $0x25d8] sm:$0xff]
        %v1644 = vld [vmem:[%s339 + $0x25e0] sm:$0xff]
        %v1645 = vld [vmem:[%s339 + $0x25e8] sm:$0xff]
        %v1646 = vld [vmem:[%s339 + $0x25f0] sm:$0xff]
        %v1647 = vld [vmem:[%s339 + $0x25f8] sm:$0xff]
        %v1648 = vld [vmem:[%s339 + $0x2600] sm:$0xff]
        %v1649 = vld [vmem:[%s339 + $0x2608] sm:$0xff]
        %v1650 = vld [vmem:[%s339 + $0x2610] sm:$0xff]
        %v1651 = vld [vmem:[%s339 + $0x2618] sm:$0xff]
        %v1652 = vld [vmem:[%s339 + $0x2620] sm:$0xff]
        %v1653 = vld [vmem:[%s339 + $0x2628] sm:$0xff]
        %v1654 = vld [vmem:[%s339 + $0x2630] sm:$0xff]
        %v1655 = vld [vmem:[%s339 + $0x2638] sm:$0xff]
        %v1656 = vld [vmem:[%s339 + $0x2640] sm:$0xff]
        %v1657 = vld [vmem:[%s339 + $0x2648] sm:$0xff]
        %v1658 = vld [vmem:[%s339 + $0x2650] sm:$0xff]
        %v1659 = vld [vmem:[%s339 + $0x2658] sm:$0xff]
        %v1660 = vld [vmem:[%s339 + $0x2660] sm:$0xff]
        %v1661 = vld [vmem:[%s339 + $0x2668] sm:$0xff]
        %v1662 = vld [vmem:[%s339 + $0x2670] sm:$0xff]
        %v1663 = vld [vmem:[%s339 + $0x2678] sm:$0xff]
        %v1664 = vld [vmem:[%s339 + $0x2680] sm:$0xff]
        %v1665 = vld [vmem:[%s339 + $0x2688] sm:$0xff]
        %v1666 = vld [vmem:[%s339 + $0x2690] sm:$0xff]
        %v1667 = vld [vmem:[%s339 + $0x2698] sm:$0xff]
        %v1668 = vld [vmem:[%s339 + $0x26a0] sm:$0xff]
        %v1669 = vld [vmem:[%s339 + $0x26a8] sm:$0xff]
        %v1670 = vld [vmem:[%s339 + $0x26b0] sm:$0xff]
        %v1671 = vld [vmem:[%s339 + $0x26b8] sm:$0xff]
        %v1672 = vld [vmem:[%s339 + $0x26c0] sm:$0xff]
        %v1673 = vld [vmem:[%s339 + $0x26c8] sm:$0xff]
        %v1674 = vld [vmem:[%s339 + $0x26d0] sm:$0xff]
        %v1675 = vld [vmem:[%s339 + $0x26d8] sm:$0xff]
        %v1676 = vld [vmem:[%s339 + $0x26e0] sm:$0xff]
        %v1677 = vld [vmem:[%s339 + $0x26e8] sm:$0xff]
        %v1678 = vld [vmem:[%s339 + $0x26f0] sm:$0xff]
        %v1679 = vld [vmem:[%s339 + $0x26f8] sm:$0xff]
        %v1680 = vld [vmem:[%s339 + $0x2700] sm:$0xff]
        %v1681 = vld [vmem:[%s339 + $0x2708] sm:$0xff]
        %v1682 = vld [vmem:[%s339 + $0x2710] sm:$0xff]
        %v1683 = vld [vmem:[%s339 + $0x2718] sm:$0xff]
        %v1684 = vld [vmem:[%s339 + $0x2720] sm:$0xff]
        %v1685 = vld [vmem:[%s339 + $0x2728] sm:$0xff]
        %v1686 = vld [vmem:[%s339 + $0x2730] sm:$0xff]
        %v1687 = vld [vmem:[%s339 + $0x2738] sm:$0xff]
        %v1688 = vld [vmem:[%s339 + $0x2740] sm:$0xff]
        %v1689 = vld [vmem:[%s339 + $0x2748] sm:$0xff]
        %v1690 = vld [vmem:[%s339 + $0x2750] sm:$0xff]
        %v1691 = vld [vmem:[%s339 + $0x2758] sm:$0xff]
        %v1692 = vld [vmem:[%s339 + $0x2760] sm:$0xff]
        %v1693 = vld [vmem:[%s339 + $0x2768] sm:$0xff]
        %v1694 = vld [vmem:[%s339 + $0x2770] sm:$0xff]
        %v1695 = vld [vmem:[%s339 + $0x2778] sm:$0xff]
        %v1696 = vld [vmem:[%s339 + $0x2780] sm:$0xff]
        %v1697 = vld [vmem:[%s339 + $0x2788] sm:$0xff]
        %v1698 = vld [vmem:[%s339 + $0x2790] sm:$0xff]
        %v1699 = vld [vmem:[%s339 + $0x2798] sm:$0xff]
        %v1700 = vld [vmem:[%s339 + $0x27a0] sm:$0xff]
        %v1701 = vld [vmem:[%s339 + $0x27a8] sm:$0xff]
        %v1702 = vld [vmem:[%s339 + $0x27b0] sm:$0xff]
        %v1703 = vld [vmem:[%s339 + $0x27b8] sm:$0xff]
        %v1704 = vld [vmem:[%s339 + $0x27c0] sm:$0xff]
        %v1705 = vld [vmem:[%s339 + $0x27c8] sm:$0xff]
        %v1706 = vld [vmem:[%s339 + $0x27d0] sm:$0xff]
        %v1707 = vld [vmem:[%s339 + $0x27d8] sm:$0xff]
        %v1708 = vld [vmem:[%s339 + $0x27e0] sm:$0xff]
        %v1709 = vld [vmem:[%s339 + $0x27e8] sm:$0xff]
        %v1710 = vld [vmem:[%s339 + $0x27f0] sm:$0xff]
        %v1711 = vld [vmem:[%s339 + $0x27f8] sm:$0xff]
        %v2992 = vunpack.c.l.b16 %v432
        %v2993 = vunpack.c.h.b16 %v432
        %v2994 = vunpack.c.l.b16 %v433
        %v2995 = vunpack.c.h.b16 %v433
        %v2996 = vunpack.c.l.b16 %v434
        %v2997 = vunpack.c.h.b16 %v434
        %v2998 = vunpack.c.l.b16 %v435
        %v2999 = vunpack.c.h.b16 %v435
        %v3000 = vunpack.c.l.b16 %v436
        %v3001 = vunpack.c.h.b16 %v436
        %v3002 = vunpack.c.l.b16 %v437
        %v3003 = vunpack.c.h.b16 %v437
        %v3004 = vunpack.c.l.b16 %v438
        %v3005 = vunpack.c.h.b16 %v438
        %v3006 = vunpack.c.l.b16 %v439
        %v3007 = vunpack.c.h.b16 %v439
        %v3008 = vunpack.c.l.b16 %v440
        %v3009 = vunpack.c.h.b16 %v440
        %v3010 = vunpack.c.l.b16 %v441
        %v3011 = vunpack.c.h.b16 %v441
        %v3012 = vunpack.c.l.b16 %v442
        %v3013 = vunpack.c.h.b16 %v442
        %v3014 = vunpack.c.l.b16 %v443
        %v3015 = vunpack.c.h.b16 %v443
        %v3016 = vunpack.c.l.b16 %v444
        %v3017 = vunpack.c.h.b16 %v444
        %v3018 = vunpack.c.l.b16 %v445
        %v3019 = vunpack.c.h.b16 %v445
        %v3020 = vunpack.c.l.b16 %v446
        %v3021 = vunpack.c.h.b16 %v446
        %v3022 = vunpack.c.l.b16 %v447
        %v3023 = vunpack.c.h.b16 %v447
        %v3024 = vunpack.c.l.b16 %v448
        %v3025 = vunpack.c.h.b16 %v448
        %v3026 = vunpack.c.l.b16 %v449
        %v3027 = vunpack.c.h.b16 %v449
        %v3028 = vunpack.c.l.b16 %v450
        %v3029 = vunpack.c.h.b16 %v450
        %v3030 = vunpack.c.l.b16 %v451
        %v3031 = vunpack.c.h.b16 %v451
        %v3032 = vunpack.c.l.b16 %v452
        %v3033 = vunpack.c.h.b16 %v452
        %v3034 = vunpack.c.l.b16 %v453
        %v3035 = vunpack.c.h.b16 %v453
        %v3036 = vunpack.c.l.b16 %v454
        %v3037 = vunpack.c.h.b16 %v454
        %v3038 = vunpack.c.l.b16 %v455
        %v3039 = vunpack.c.h.b16 %v455
        %v3040 = vunpack.c.l.b16 %v456
        %v3041 = vunpack.c.h.b16 %v456
        %v3042 = vunpack.c.l.b16 %v457
        %v3043 = vunpack.c.h.b16 %v457
        %v3044 = vunpack.c.l.b16 %v458
        %v3045 = vunpack.c.h.b16 %v458
        %v3046 = vunpack.c.l.b16 %v459
        %v3047 = vunpack.c.h.b16 %v459
        %v3048 = vunpack.c.l.b16 %v460
        %v3049 = vunpack.c.h.b16 %v460
        %v3050 = vunpack.c.l.b16 %v461
        %v3051 = vunpack.c.h.b16 %v461
        %v3052 = vunpack.c.l.b16 %v462
        %v3053 = vunpack.c.h.b16 %v462
        %v3054 = vunpack.c.l.b16 %v463
        %v3055 = vunpack.c.h.b16 %v463
        %v3056 = vunpack.c.l.b16 %v464
        %v3057 = vunpack.c.h.b16 %v464
        %v3058 = vunpack.c.l.b16 %v465
        %v3059 = vunpack.c.h.b16 %v465
        %v3060 = vunpack.c.l.b16 %v466
        %v3061 = vunpack.c.h.b16 %v466
        %v3062 = vunpack.c.l.b16 %v467
        %v3063 = vunpack.c.h.b16 %v467
        %v3064 = vunpack.c.l.b16 %v468
        %v3065 = vunpack.c.h.b16 %v468
        %v3066 = vunpack.c.l.b16 %v469
        %v3067 = vunpack.c.h.b16 %v469
        %v3068 = vunpack.c.l.b16 %v470
        %v3069 = vunpack.c.h.b16 %v470
        %v3070 = vunpack.c.l.b16 %v471
        %v3071 = vunpack.c.h.b16 %v471
        %v3072 = vunpack.c.l.b16 %v472
        %v3073 = vunpack.c.h.b16 %v472
        %v3074 = vunpack.c.l.b16 %v473
        %v3075 = vunpack.c.h.b16 %v473
        %v3076 = vunpack.c.l.b16 %v474
        %v3077 = vunpack.c.h.b16 %v474
        %v3078 = vunpack.c.l.b16 %v475
        %v3079 = vunpack.c.h.b16 %v475
        %v3080 = vunpack.c.l.b16 %v476
        %v3081 = vunpack.c.h.b16 %v476
        %v3082 = vunpack.c.l.b16 %v477
        %v3083 = vunpack.c.h.b16 %v477
        %v3084 = vunpack.c.l.b16 %v478
        %v3085 = vunpack.c.h.b16 %v478
        %v3086 = vunpack.c.l.b16 %v479
        %v3087 = vunpack.c.h.b16 %v479
        %v3088 = vunpack.c.l.b16 %v480
        %v3089 = vunpack.c.h.b16 %v480
        %v3090 = vunpack.c.l.b16 %v481
        %v3091 = vunpack.c.h.b16 %v481
        %v3092 = vunpack.c.l.b16 %v482
        %v3093 = vunpack.c.h.b16 %v482
        %v3094 = vunpack.c.l.b16 %v483
        %v3095 = vunpack.c.h.b16 %v483
        %v3096 = vunpack.c.l.b16 %v484
        %v3097 = vunpack.c.h.b16 %v484
        %v3098 = vunpack.c.l.b16 %v485
        %v3099 = vunpack.c.h.b16 %v485
        %v3100 = vunpack.c.l.b16 %v486
        %v3101 = vunpack.c.h.b16 %v486
        %v3102 = vunpack.c.l.b16 %v487
        %v3103 = vunpack.c.h.b16 %v487
        %v3104 = vunpack.c.l.b16 %v488
        %v3105 = vunpack.c.h.b16 %v488
        %v3106 = vunpack.c.l.b16 %v489
        %v3107 = vunpack.c.h.b16 %v489
        %v3108 = vunpack.c.l.b16 %v490
        %v3109 = vunpack.c.h.b16 %v490
        %v3110 = vunpack.c.l.b16 %v491
        %v3111 = vunpack.c.h.b16 %v491
        %v3112 = vunpack.c.l.b16 %v492
        %v3113 = vunpack.c.h.b16 %v492
        %v3114 = vunpack.c.l.b16 %v493
        %v3115 = vunpack.c.h.b16 %v493
        %v3116 = vunpack.c.l.b16 %v494
        %v3117 = vunpack.c.h.b16 %v494
        %v3118 = vunpack.c.l.b16 %v495
        %v3119 = vunpack.c.h.b16 %v495
        %v3120 = vunpack.c.l.b16 %v496
        %v3121 = vunpack.c.h.b16 %v496
        %v3122 = vunpack.c.l.b16 %v497
        %v3123 = vunpack.c.h.b16 %v497
        %v3124 = vunpack.c.l.b16 %v498
        %v3125 = vunpack.c.h.b16 %v498
        %v3126 = vunpack.c.l.b16 %v499
        %v3127 = vunpack.c.h.b16 %v499
        %v3128 = vunpack.c.l.b16 %v500
        %v3129 = vunpack.c.h.b16 %v500
        %v3130 = vunpack.c.l.b16 %v501
        %v3131 = vunpack.c.h.b16 %v501
        %v3132 = vunpack.c.l.b16 %v502
        %v3133 = vunpack.c.h.b16 %v502
        %v3134 = vunpack.c.l.b16 %v503
        %v3135 = vunpack.c.h.b16 %v503
        %v3136 = vunpack.c.l.b16 %v504
        %v3137 = vunpack.c.h.b16 %v504
        %v3138 = vunpack.c.l.b16 %v505
        %v3139 = vunpack.c.h.b16 %v505
        %v3140 = vunpack.c.l.b16 %v506
        %v3141 = vunpack.c.h.b16 %v506
        %v3142 = vunpack.c.l.b16 %v507
        %v3143 = vunpack.c.h.b16 %v507
        %v3144 = vunpack.c.l.b16 %v508
        %v3145 = vunpack.c.h.b16 %v508
        %v3146 = vunpack.c.l.b16 %v509
        %v3147 = vunpack.c.h.b16 %v509
        %v3148 = vunpack.c.l.b16 %v510
        %v3149 = vunpack.c.h.b16 %v510
        %v3150 = vunpack.c.l.b16 %v511
        %v3151 = vunpack.c.h.b16 %v511
        %v3152 = vunpack.c.l.b16 %v512
        %v3153 = vunpack.c.h.b16 %v512
        %v3154 = vunpack.c.l.b16 %v513
        %v3155 = vunpack.c.h.b16 %v513
        %v3156 = vunpack.c.l.b16 %v514
        %v3157 = vunpack.c.h.b16 %v514
        %v3158 = vunpack.c.l.b16 %v515
        %v3159 = vunpack.c.h.b16 %v515
        %v3160 = vunpack.c.l.b16 %v516
        %v3161 = vunpack.c.h.b16 %v516
        %v3162 = vunpack.c.l.b16 %v517
        %v3163 = vunpack.c.h.b16 %v517
        %v3164 = vunpack.c.l.b16 %v518
        %v3165 = vunpack.c.h.b16 %v518
        %v3166 = vunpack.c.l.b16 %v519
        %v3167 = vunpack.c.h.b16 %v519
        %v3168 = vunpack.c.l.b16 %v520
        %v3169 = vunpack.c.h.b16 %v520
        %v3170 = vunpack.c.l.b16 %v521
        %v3171 = vunpack.c.h.b16 %v521
        %v3172 = vunpack.c.l.b16 %v522
        %v3173 = vunpack.c.h.b16 %v522
        %v3174 = vunpack.c.l.b16 %v523
        %v3175 = vunpack.c.h.b16 %v523
        %v3176 = vunpack.c.l.b16 %v524
        %v3177 = vunpack.c.h.b16 %v524
        %v3178 = vunpack.c.l.b16 %v525
        %v3179 = vunpack.c.h.b16 %v525
        %v3180 = vunpack.c.l.b16 %v526
        %v3181 = vunpack.c.h.b16 %v526
        %v3182 = vunpack.c.l.b16 %v527
        %v3183 = vunpack.c.h.b16 %v527
        %v3184 = vunpack.c.l.b16 %v528
        %v3185 = vunpack.c.h.b16 %v528
        %v3186 = vunpack.c.l.b16 %v529
        %v3187 = vunpack.c.h.b16 %v529
        %v3188 = vunpack.c.l.b16 %v530
        %v3189 = vunpack.c.h.b16 %v530
        %v3190 = vunpack.c.l.b16 %v531
        %v3191 = vunpack.c.h.b16 %v531
        %v3192 = vunpack.c.l.b16 %v532
        %v3193 = vunpack.c.h.b16 %v532
        %v3194 = vunpack.c.l.b16 %v533
        %v3195 = vunpack.c.h.b16 %v533
        %v3196 = vunpack.c.l.b16 %v534
        %v3197 = vunpack.c.h.b16 %v534
        %v3198 = vunpack.c.l.b16 %v535
        %v3199 = vunpack.c.h.b16 %v535
        %v3200 = vunpack.c.l.b16 %v536
        %v3201 = vunpack.c.h.b16 %v536
        %v3202 = vunpack.c.l.b16 %v537
        %v3203 = vunpack.c.h.b16 %v537
        %v3204 = vunpack.c.l.b16 %v538
        %v3205 = vunpack.c.h.b16 %v538
        %v3206 = vunpack.c.l.b16 %v539
        %v3207 = vunpack.c.h.b16 %v539
        %v3208 = vunpack.c.l.b16 %v540
        %v3209 = vunpack.c.h.b16 %v540
        %v3210 = vunpack.c.l.b16 %v541
        %v3211 = vunpack.c.h.b16 %v541
        %v3212 = vunpack.c.l.b16 %v542
        %v3213 = vunpack.c.h.b16 %v542
        %v3214 = vunpack.c.l.b16 %v543
        %v3215 = vunpack.c.h.b16 %v543
        %v3216 = vunpack.c.l.b16 %v544
        %v3217 = vunpack.c.h.b16 %v544
        %v3218 = vunpack.c.l.b16 %v545
        %v3219 = vunpack.c.h.b16 %v545
        %v3220 = vunpack.c.l.b16 %v546
        %v3221 = vunpack.c.h.b16 %v546
        %v3222 = vunpack.c.l.b16 %v547
        %v3223 = vunpack.c.h.b16 %v547
        %v3224 = vunpack.c.l.b16 %v548
        %v3225 = vunpack.c.h.b16 %v548
        %v3226 = vunpack.c.l.b16 %v549
        %v3227 = vunpack.c.h.b16 %v549
        %v3228 = vunpack.c.l.b16 %v550
        %v3229 = vunpack.c.h.b16 %v550
        %v3230 = vunpack.c.l.b16 %v551
        %v3231 = vunpack.c.h.b16 %v551
        %v3232 = vunpack.c.l.b16 %v552
        %v3233 = vunpack.c.h.b16 %v552
        %v3234 = vunpack.c.l.b16 %v553
        %v3235 = vunpack.c.h.b16 %v553
        %v3236 = vunpack.c.l.b16 %v554
        %v3237 = vunpack.c.h.b16 %v554
        %v3238 = vunpack.c.l.b16 %v555
        %v3239 = vunpack.c.h.b16 %v555
        %v3240 = vunpack.c.l.b16 %v556
        %v3241 = vunpack.c.h.b16 %v556
        %v3242 = vunpack.c.l.b16 %v557
        %v3243 = vunpack.c.h.b16 %v557
        %v3244 = vunpack.c.l.b16 %v558
        %v3245 = vunpack.c.h.b16 %v558
        %v3246 = vunpack.c.l.b16 %v559
        %v3247 = vunpack.c.h.b16 %v559
        %v3248 = vunpack.c.l.b16 %v560
        %v3249 = vunpack.c.h.b16 %v560
        %v3250 = vunpack.c.l.b16 %v561
        %v3251 = vunpack.c.h.b16 %v561
        %v3252 = vunpack.c.l.b16 %v562
        %v3253 = vunpack.c.h.b16 %v562
        %v3254 = vunpack.c.l.b16 %v563
        %v3255 = vunpack.c.h.b16 %v563
        %v3256 = vunpack.c.l.b16 %v564
        %v3257 = vunpack.c.h.b16 %v564
        %v3258 = vunpack.c.l.b16 %v565
        %v3259 = vunpack.c.h.b16 %v565
        %v3260 = vunpack.c.l.b16 %v566
        %v3261 = vunpack.c.h.b16 %v566
        %v3262 = vunpack.c.l.b16 %v567
        %v3263 = vunpack.c.h.b16 %v567
        %v3264 = vunpack.c.l.b16 %v568
        %v3265 = vunpack.c.h.b16 %v568
        %v3266 = vunpack.c.l.b16 %v569
        %v3267 = vunpack.c.h.b16 %v569
        %v3268 = vunpack.c.l.b16 %v570
        %v3269 = vunpack.c.h.b16 %v570
        %v3270 = vunpack.c.l.b16 %v571
        %v3271 = vunpack.c.h.b16 %v571
        %v3272 = vunpack.c.l.b16 %v572
        %v3273 = vunpack.c.h.b16 %v572
        %v3274 = vunpack.c.l.b16 %v573
        %v3275 = vunpack.c.h.b16 %v573
        %v3276 = vunpack.c.l.b16 %v574
        %v3277 = vunpack.c.h.b16 %v574
        %v3278 = vunpack.c.l.b16 %v575
        %v3279 = vunpack.c.h.b16 %v575
        %v3280 = vunpack.c.l.b16 %v576
        %v3281 = vunpack.c.h.b16 %v576
        %v3282 = vunpack.c.l.b16 %v577
        %v3283 = vunpack.c.h.b16 %v577
        %v3284 = vunpack.c.l.b16 %v578
        %v3285 = vunpack.c.h.b16 %v578
        %v3286 = vunpack.c.l.b16 %v579
        %v3287 = vunpack.c.h.b16 %v579
        %v3288 = vunpack.c.l.b16 %v580
        %v3289 = vunpack.c.h.b16 %v580
        %v3290 = vunpack.c.l.b16 %v581
        %v3291 = vunpack.c.h.b16 %v581
        %v3292 = vunpack.c.l.b16 %v582
        %v3293 = vunpack.c.h.b16 %v582
        %v3294 = vunpack.c.l.b16 %v583
        %v3295 = vunpack.c.h.b16 %v583
        %v3296 = vunpack.c.l.b16 %v584
        %v3297 = vunpack.c.h.b16 %v584
        %v3298 = vunpack.c.l.b16 %v585
        %v3299 = vunpack.c.h.b16 %v585
        %v3300 = vunpack.c.l.b16 %v586
        %v3301 = vunpack.c.h.b16 %v586
        %v3302 = vunpack.c.l.b16 %v587
        %v3303 = vunpack.c.h.b16 %v587
        %v3304 = vunpack.c.l.b16 %v588
        %v3305 = vunpack.c.h.b16 %v588
        %v3306 = vunpack.c.l.b16 %v589
        %v3307 = vunpack.c.h.b16 %v589
        %v3308 = vunpack.c.l.b16 %v590
        %v3309 = vunpack.c.h.b16 %v590
        %v3310 = vunpack.c.l.b16 %v591
        %v3311 = vunpack.c.h.b16 %v591
        %v3312 = vunpack.c.l.b16 %v592
        %v3313 = vunpack.c.h.b16 %v592
        %v3314 = vunpack.c.l.b16 %v593
        %v3315 = vunpack.c.h.b16 %v593
        %v3316 = vunpack.c.l.b16 %v594
        %v3317 = vunpack.c.h.b16 %v594
        %v3318 = vunpack.c.l.b16 %v595
        %v3319 = vunpack.c.h.b16 %v595
        %v3320 = vunpack.c.l.b16 %v596
        %v3321 = vunpack.c.h.b16 %v596
        %v3322 = vunpack.c.l.b16 %v597
        %v3323 = vunpack.c.h.b16 %v597
        %v3324 = vunpack.c.l.b16 %v598
        %v3325 = vunpack.c.h.b16 %v598
        %v3326 = vunpack.c.l.b16 %v599
        %v3327 = vunpack.c.h.b16 %v599
        %v3328 = vunpack.c.l.b16 %v600
        %v3329 = vunpack.c.h.b16 %v600
        %v3330 = vunpack.c.l.b16 %v601
        %v3331 = vunpack.c.h.b16 %v601
        %v3332 = vunpack.c.l.b16 %v602
        %v3333 = vunpack.c.h.b16 %v602
        %v3334 = vunpack.c.l.b16 %v603
        %v3335 = vunpack.c.h.b16 %v603
        %v3336 = vunpack.c.l.b16 %v604
        %v3337 = vunpack.c.h.b16 %v604
        %v3338 = vunpack.c.l.b16 %v605
        %v3339 = vunpack.c.h.b16 %v605
        %v3340 = vunpack.c.l.b16 %v606
        %v3341 = vunpack.c.h.b16 %v606
        %v3342 = vunpack.c.l.b16 %v607
        %v3343 = vunpack.c.h.b16 %v607
        %v3344 = vunpack.c.l.b16 %v608
        %v3345 = vunpack.c.h.b16 %v608
        %v3346 = vunpack.c.l.b16 %v609
        %v3347 = vunpack.c.h.b16 %v609
        %v3348 = vunpack.c.l.b16 %v610
        %v3349 = vunpack.c.h.b16 %v610
        %v3350 = vunpack.c.l.b16 %v611
        %v3351 = vunpack.c.h.b16 %v611
        %v3352 = vunpack.c.l.b16 %v612
        %v3353 = vunpack.c.h.b16 %v612
        %v3354 = vunpack.c.l.b16 %v613
        %v3355 = vunpack.c.h.b16 %v613
        %v3356 = vunpack.c.l.b16 %v614
        %v3357 = vunpack.c.h.b16 %v614
        %v3358 = vunpack.c.l.b16 %v615
        %v3359 = vunpack.c.h.b16 %v615
        %v3360 = vunpack.c.l.b16 %v616
        %v3361 = vunpack.c.h.b16 %v616
        %v3362 = vunpack.c.l.b16 %v617
        %v3363 = vunpack.c.h.b16 %v617
        %v3364 = vunpack.c.l.b16 %v618
        %v3365 = vunpack.c.h.b16 %v618
        %v3366 = vunpack.c.l.b16 %v619
        %v3367 = vunpack.c.h.b16 %v619
        %v3368 = vunpack.c.l.b16 %v620
        %v3369 = vunpack.c.h.b16 %v620
        %v3370 = vunpack.c.l.b16 %v621
        %v3371 = vunpack.c.h.b16 %v621
        %v3372 = vunpack.c.l.b16 %v622
        %v3373 = vunpack.c.h.b16 %v622
        %v3374 = vunpack.c.l.b16 %v623
        %v3375 = vunpack.c.h.b16 %v623
        %v3376 = vunpack.c.l.b16 %v624
        %v3377 = vunpack.c.h.b16 %v624
        %v3378 = vunpack.c.l.b16 %v625
        %v3379 = vunpack.c.h.b16 %v625
        %v3380 = vunpack.c.l.b16 %v626
        %v3381 = vunpack.c.h.b16 %v626
        %v3382 = vunpack.c.l.b16 %v627
        %v3383 = vunpack.c.h.b16 %v627
        %v3384 = vunpack.c.l.b16 %v628
        %v3385 = vunpack.c.h.b16 %v628
        %v3386 = vunpack.c.l.b16 %v629
        %v3387 = vunpack.c.h.b16 %v629
        %v3388 = vunpack.c.l.b16 %v630
        %v3389 = vunpack.c.h.b16 %v630
        %v3390 = vunpack.c.l.b16 %v631
        %v3391 = vunpack.c.h.b16 %v631
        %v3392 = vunpack.c.l.b16 %v632
        %v3393 = vunpack.c.h.b16 %v632
        %v3394 = vunpack.c.l.b16 %v633
        %v3395 = vunpack.c.h.b16 %v633
        %v3396 = vunpack.c.l.b16 %v634
        %v3397 = vunpack.c.h.b16 %v634
        %v3398 = vunpack.c.l.b16 %v635
        %v3399 = vunpack.c.h.b16 %v635
        %v3400 = vunpack.c.l.b16 %v636
        %v3401 = vunpack.c.h.b16 %v636
        %v3402 = vunpack.c.l.b16 %v637
        %v3403 = vunpack.c.h.b16 %v637
        %v3404 = vunpack.c.l.b16 %v638
        %v3405 = vunpack.c.h.b16 %v638
        %v3406 = vunpack.c.l.b16 %v639
        %v3407 = vunpack.c.h.b16 %v639
        %v3408 = vunpack.c.l.b16 %v640
        %v3409 = vunpack.c.h.b16 %v640
        %v3410 = vunpack.c.l.b16 %v641
        %v3411 = vunpack.c.h.b16 %v641
        %v3412 = vunpack.c.l.b16 %v642
        %v3413 = vunpack.c.h.b16 %v642
        %v3414 = vunpack.c.l.b16 %v643
        %v3415 = vunpack.c.h.b16 %v643
        %v3416 = vunpack.c.l.b16 %v644
        %v3417 = vunpack.c.h.b16 %v644
        %v3418 = vunpack.c.l.b16 %v645
        %v3419 = vunpack.c.h.b16 %v645
        %v3420 = vunpack.c.l.b16 %v646
        %v3421 = vunpack.c.h.b16 %v646
        %v3422 = vunpack.c.l.b16 %v647
        %v3423 = vunpack.c.h.b16 %v647
        %v3424 = vunpack.c.l.b16 %v648
        %v3425 = vunpack.c.h.b16 %v648
        %v3426 = vunpack.c.l.b16 %v649
        %v3427 = vunpack.c.h.b16 %v649
        %v3428 = vunpack.c.l.b16 %v650
        %v3429 = vunpack.c.h.b16 %v650
        %v3430 = vunpack.c.l.b16 %v651
        %v3431 = vunpack.c.h.b16 %v651
        %v3432 = vunpack.c.l.b16 %v652
        %v3433 = vunpack.c.h.b16 %v652
        %v3434 = vunpack.c.l.b16 %v653
        %v3435 = vunpack.c.h.b16 %v653
        %v3436 = vunpack.c.l.b16 %v654
        %v3437 = vunpack.c.h.b16 %v654
        %v3438 = vunpack.c.l.b16 %v655
        %v3439 = vunpack.c.h.b16 %v655
        %v3440 = vunpack.c.l.b16 %v656
        %v3441 = vunpack.c.h.b16 %v656
        %v3442 = vunpack.c.l.b16 %v657
        %v3443 = vunpack.c.h.b16 %v657
        %v3444 = vunpack.c.l.b16 %v658
        %v3445 = vunpack.c.h.b16 %v658
        %v3446 = vunpack.c.l.b16 %v659
        %v3447 = vunpack.c.h.b16 %v659
        %v3448 = vunpack.c.l.b16 %v660
        %v3449 = vunpack.c.h.b16 %v660
        %v3450 = vunpack.c.l.b16 %v661
        %v3451 = vunpack.c.h.b16 %v661
        %v3452 = vunpack.c.l.b16 %v662
        %v3453 = vunpack.c.h.b16 %v662
        %v3454 = vunpack.c.l.b16 %v663
        %v3455 = vunpack.c.h.b16 %v663
        %v3456 = vunpack.c.l.b16 %v664
        %v3457 = vunpack.c.h.b16 %v664
        %v3458 = vunpack.c.l.b16 %v665
        %v3459 = vunpack.c.h.b16 %v665
        %v3460 = vunpack.c.l.b16 %v666
        %v3461 = vunpack.c.h.b16 %v666
        %v3462 = vunpack.c.l.b16 %v667
        %v3463 = vunpack.c.h.b16 %v667
        %v3464 = vunpack.c.l.b16 %v668
        %v3465 = vunpack.c.h.b16 %v668
        %v3466 = vunpack.c.l.b16 %v669
        %v3467 = vunpack.c.h.b16 %v669
        %v3468 = vunpack.c.l.b16 %v670
        %v3469 = vunpack.c.h.b16 %v670
        %v3470 = vunpack.c.l.b16 %v671
        %v3471 = vunpack.c.h.b16 %v671
        %v3472 = vunpack.c.l.b16 %v672
        %v3473 = vunpack.c.h.b16 %v672
        %v3474 = vunpack.c.l.b16 %v673
        %v3475 = vunpack.c.h.b16 %v673
        %v3476 = vunpack.c.l.b16 %v674
        %v3477 = vunpack.c.h.b16 %v674
        %v3478 = vunpack.c.l.b16 %v675
        %v3479 = vunpack.c.h.b16 %v675
        %v3480 = vunpack.c.l.b16 %v676
        %v3481 = vunpack.c.h.b16 %v676
        %v3482 = vunpack.c.l.b16 %v677
        %v3483 = vunpack.c.h.b16 %v677
        %v3484 = vunpack.c.l.b16 %v678
        %v3485 = vunpack.c.h.b16 %v678
        %v3486 = vunpack.c.l.b16 %v679
        %v3487 = vunpack.c.h.b16 %v679
        %v3488 = vunpack.c.l.b16 %v680
        %v3489 = vunpack.c.h.b16 %v680
        %v3490 = vunpack.c.l.b16 %v681
        %v3491 = vunpack.c.h.b16 %v681
        %v3492 = vunpack.c.l.b16 %v682
        %v3493 = vunpack.c.h.b16 %v682
        %v3494 = vunpack.c.l.b16 %v683
        %v3495 = vunpack.c.h.b16 %v683
        %v3496 = vunpack.c.l.b16 %v684
        %v3497 = vunpack.c.h.b16 %v684
        %v3498 = vunpack.c.l.b16 %v685
        %v3499 = vunpack.c.h.b16 %v685
        %v3500 = vunpack.c.l.b16 %v686
        %v3501 = vunpack.c.h.b16 %v686
        %v3502 = vunpack.c.l.b16 %v687
        %v3503 = vunpack.c.h.b16 %v687
        %v3504 = vunpack.c.l.b16 %v688
        %v3505 = vunpack.c.h.b16 %v688
        %v3506 = vunpack.c.l.b16 %v689
        %v3507 = vunpack.c.h.b16 %v689
        %v3508 = vunpack.c.l.b16 %v690
        %v3509 = vunpack.c.h.b16 %v690
        %v3510 = vunpack.c.l.b16 %v691
        %v3511 = vunpack.c.h.b16 %v691
        %v3512 = vunpack.c.l.b16 %v692
        %v3513 = vunpack.c.h.b16 %v692
        %v3514 = vunpack.c.l.b16 %v693
        %v3515 = vunpack.c.h.b16 %v693
        %v3516 = vunpack.c.l.b16 %v694
        %v3517 = vunpack.c.h.b16 %v694
        %v3518 = vunpack.c.l.b16 %v695
        %v3519 = vunpack.c.h.b16 %v695
        %v3520 = vunpack.c.l.b16 %v696
        %v3521 = vunpack.c.h.b16 %v696
        %v3522 = vunpack.c.l.b16 %v697
        %v3523 = vunpack.c.h.b16 %v697
        %v3524 = vunpack.c.l.b16 %v698
        %v3525 = vunpack.c.h.b16 %v698
        %v3526 = vunpack.c.l.b16 %v699
        %v3527 = vunpack.c.h.b16 %v699
        %v3528 = vunpack.c.l.b16 %v700
        %v3529 = vunpack.c.h.b16 %v700
        %v3530 = vunpack.c.l.b16 %v701
        %v3531 = vunpack.c.h.b16 %v701
        %v3532 = vunpack.c.l.b16 %v702
        %v3533 = vunpack.c.h.b16 %v702
        %v3534 = vunpack.c.l.b16 %v703
        %v3535 = vunpack.c.h.b16 %v703
        %v3536 = vunpack.c.l.b16 %v704
        %v3537 = vunpack.c.h.b16 %v704
        %v3538 = vunpack.c.l.b16 %v705
        %v3539 = vunpack.c.h.b16 %v705
        %v3540 = vunpack.c.l.b16 %v706
        %v3541 = vunpack.c.h.b16 %v706
        %v3542 = vunpack.c.l.b16 %v707
        %v3543 = vunpack.c.h.b16 %v707
        %v3544 = vunpack.c.l.b16 %v708
        %v3545 = vunpack.c.h.b16 %v708
        %v3546 = vunpack.c.l.b16 %v709
        %v3547 = vunpack.c.h.b16 %v709
        %v3548 = vunpack.c.l.b16 %v710
        %v3549 = vunpack.c.h.b16 %v710
        %v3550 = vunpack.c.l.b16 %v711
        %v3551 = vunpack.c.h.b16 %v711
        %v3552 = vunpack.c.l.b16 %v712
        %v3553 = vunpack.c.h.b16 %v712
        %v3554 = vunpack.c.l.b16 %v713
        %v3555 = vunpack.c.h.b16 %v713
        %v3556 = vunpack.c.l.b16 %v714
        %v3557 = vunpack.c.h.b16 %v714
        %v3558 = vunpack.c.l.b16 %v715
        %v3559 = vunpack.c.h.b16 %v715
        %v3560 = vunpack.c.l.b16 %v716
        %v3561 = vunpack.c.h.b16 %v716
        %v3562 = vunpack.c.l.b16 %v717
        %v3563 = vunpack.c.h.b16 %v717
        %v3564 = vunpack.c.l.b16 %v718
        %v3565 = vunpack.c.h.b16 %v718
        %v3566 = vunpack.c.l.b16 %v719
        %v3567 = vunpack.c.h.b16 %v719
        %v3568 = vunpack.c.l.b16 %v720
        %v3569 = vunpack.c.h.b16 %v720
        %v3570 = vunpack.c.l.b16 %v721
        %v3571 = vunpack.c.h.b16 %v721
        %v3572 = vunpack.c.l.b16 %v722
        %v3573 = vunpack.c.h.b16 %v722
        %v3574 = vunpack.c.l.b16 %v723
        %v3575 = vunpack.c.h.b16 %v723
        %v3576 = vunpack.c.l.b16 %v724
        %v3577 = vunpack.c.h.b16 %v724
        %v3578 = vunpack.c.l.b16 %v725
        %v3579 = vunpack.c.h.b16 %v725
        %v3580 = vunpack.c.l.b16 %v726
        %v3581 = vunpack.c.h.b16 %v726
        %v3582 = vunpack.c.l.b16 %v727
        %v3583 = vunpack.c.h.b16 %v727
        %v3584 = vunpack.c.l.b16 %v728
        %v3585 = vunpack.c.h.b16 %v728
        %v3586 = vunpack.c.l.b16 %v729
        %v3587 = vunpack.c.h.b16 %v729
        %v3588 = vunpack.c.l.b16 %v730
        %v3589 = vunpack.c.h.b16 %v730
        %v3590 = vunpack.c.l.b16 %v731
        %v3591 = vunpack.c.h.b16 %v731
        %v3592 = vunpack.c.l.b16 %v732
        %v3593 = vunpack.c.h.b16 %v732
        %v3594 = vunpack.c.l.b16 %v733
        %v3595 = vunpack.c.h.b16 %v733
        %v3596 = vunpack.c.l.b16 %v734
        %v3597 = vunpack.c.h.b16 %v734
        %v3598 = vunpack.c.l.b16 %v735
        %v3599 = vunpack.c.h.b16 %v735
        %v3600 = vunpack.c.l.b16 %v736
        %v3601 = vunpack.c.h.b16 %v736
        %v3602 = vunpack.c.l.b16 %v737
        %v3603 = vunpack.c.h.b16 %v737
        %v3604 = vunpack.c.l.b16 %v738
        %v3605 = vunpack.c.h.b16 %v738
        %v3606 = vunpack.c.l.b16 %v739
        %v3607 = vunpack.c.h.b16 %v739
        %v3608 = vunpack.c.l.b16 %v740
        %v3609 = vunpack.c.h.b16 %v740
        %v3610 = vunpack.c.l.b16 %v741
        %v3611 = vunpack.c.h.b16 %v741
        %v3612 = vunpack.c.l.b16 %v742
        %v3613 = vunpack.c.h.b16 %v742
        %v3614 = vunpack.c.l.b16 %v743
        %v3615 = vunpack.c.h.b16 %v743
        %v3616 = vunpack.c.l.b16 %v744
        %v3617 = vunpack.c.h.b16 %v744
        %v3618 = vunpack.c.l.b16 %v745
        %v3619 = vunpack.c.h.b16 %v745
        %v3620 = vunpack.c.l.b16 %v746
        %v3621 = vunpack.c.h.b16 %v746
        %v3622 = vunpack.c.l.b16 %v747
        %v3623 = vunpack.c.h.b16 %v747
        %v3624 = vunpack.c.l.b16 %v748
        %v3625 = vunpack.c.h.b16 %v748
        %v3626 = vunpack.c.l.b16 %v749
        %v3627 = vunpack.c.h.b16 %v749
        %v3628 = vunpack.c.l.b16 %v750
        %v3629 = vunpack.c.h.b16 %v750
        %v3630 = vunpack.c.l.b16 %v751
        %v3631 = vunpack.c.h.b16 %v751
        %v3632 = vunpack.c.l.b16 %v752
        %v3633 = vunpack.c.h.b16 %v752
        %v3634 = vunpack.c.l.b16 %v753
        %v3635 = vunpack.c.h.b16 %v753
        %v3636 = vunpack.c.l.b16 %v754
        %v3637 = vunpack.c.h.b16 %v754
        %v3638 = vunpack.c.l.b16 %v755
        %v3639 = vunpack.c.h.b16 %v755
        %v3640 = vunpack.c.l.b16 %v756
        %v3641 = vunpack.c.h.b16 %v756
        %v3642 = vunpack.c.l.b16 %v757
        %v3643 = vunpack.c.h.b16 %v757
        %v3644 = vunpack.c.l.b16 %v758
        %v3645 = vunpack.c.h.b16 %v758
        %v3646 = vunpack.c.l.b16 %v759
        %v3647 = vunpack.c.h.b16 %v759
        %v3648 = vunpack.c.l.b16 %v760
        %v3649 = vunpack.c.h.b16 %v760
        %v3650 = vunpack.c.l.b16 %v761
        %v3651 = vunpack.c.h.b16 %v761
        %v3652 = vunpack.c.l.b16 %v762
        %v3653 = vunpack.c.h.b16 %v762
        %v3654 = vunpack.c.l.b16 %v763
        %v3655 = vunpack.c.h.b16 %v763
        %v3656 = vunpack.c.l.b16 %v764
        %v3657 = vunpack.c.h.b16 %v764
        %v3658 = vunpack.c.l.b16 %v765
        %v3659 = vunpack.c.h.b16 %v765
        %v3660 = vunpack.c.l.b16 %v766
        %v3661 = vunpack.c.h.b16 %v766
        %v3662 = vunpack.c.l.b16 %v767
        %v3663 = vunpack.c.h.b16 %v767
        %v3664 = vunpack.c.l.b16 %v768
        %v3665 = vunpack.c.h.b16 %v768
        %v3666 = vunpack.c.l.b16 %v769
        %v3667 = vunpack.c.h.b16 %v769
        %v3668 = vunpack.c.l.b16 %v770
        %v3669 = vunpack.c.h.b16 %v770
        %v3670 = vunpack.c.l.b16 %v771
        %v3671 = vunpack.c.h.b16 %v771
        %v3672 = vunpack.c.l.b16 %v772
        %v3673 = vunpack.c.h.b16 %v772
        %v3674 = vunpack.c.l.b16 %v773
        %v3675 = vunpack.c.h.b16 %v773
        %v3676 = vunpack.c.l.b16 %v774
        %v3677 = vunpack.c.h.b16 %v774
        %v3678 = vunpack.c.l.b16 %v775
        %v3679 = vunpack.c.h.b16 %v775
        %v3680 = vunpack.c.l.b16 %v776
        %v3681 = vunpack.c.h.b16 %v776
        %v3682 = vunpack.c.l.b16 %v777
        %v3683 = vunpack.c.h.b16 %v777
        %v3684 = vunpack.c.l.b16 %v778
        %v3685 = vunpack.c.h.b16 %v778
        %v3686 = vunpack.c.l.b16 %v779
        %v3687 = vunpack.c.h.b16 %v779
        %v3688 = vunpack.c.l.b16 %v780
        %v3689 = vunpack.c.h.b16 %v780
        %v3690 = vunpack.c.l.b16 %v781
        %v3691 = vunpack.c.h.b16 %v781
        %v3692 = vunpack.c.l.b16 %v782
        %v3693 = vunpack.c.h.b16 %v782
        %v3694 = vunpack.c.l.b16 %v783
        %v3695 = vunpack.c.h.b16 %v783
        %v3696 = vunpack.c.l.b16 %v784
        %v3697 = vunpack.c.h.b16 %v784
        %v3698 = vunpack.c.l.b16 %v785
        %v3699 = vunpack.c.h.b16 %v785
        %v3700 = vunpack.c.l.b16 %v786
        %v3701 = vunpack.c.h.b16 %v786
        %v3702 = vunpack.c.l.b16 %v787
        %v3703 = vunpack.c.h.b16 %v787
        %v3704 = vunpack.c.l.b16 %v788
        %v3705 = vunpack.c.h.b16 %v788
        %v3706 = vunpack.c.l.b16 %v789
        %v3707 = vunpack.c.h.b16 %v789
        %v3708 = vunpack.c.l.b16 %v790
        %v3709 = vunpack.c.h.b16 %v790
        %v3710 = vunpack.c.l.b16 %v791
        %v3711 = vunpack.c.h.b16 %v791
        %v3712 = vunpack.c.l.b16 %v792
        %v3713 = vunpack.c.h.b16 %v792
        %v3714 = vunpack.c.l.b16 %v793
        %v3715 = vunpack.c.h.b16 %v793
        %v3716 = vunpack.c.l.b16 %v794
        %v3717 = vunpack.c.h.b16 %v794
        %v3718 = vunpack.c.l.b16 %v795
        %v3719 = vunpack.c.h.b16 %v795
        %v3720 = vunpack.c.l.b16 %v796
        %v3721 = vunpack.c.h.b16 %v796
        %v3722 = vunpack.c.l.b16 %v797
        %v3723 = vunpack.c.h.b16 %v797
        %v3724 = vunpack.c.l.b16 %v798
        %v3725 = vunpack.c.h.b16 %v798
        %v3726 = vunpack.c.l.b16 %v799
        %v3727 = vunpack.c.h.b16 %v799
        %v3728 = vunpack.c.l.b16 %v800
        %v3729 = vunpack.c.h.b16 %v800
        %v3730 = vunpack.c.l.b16 %v801
        %v3731 = vunpack.c.h.b16 %v801
        %v3732 = vunpack.c.l.b16 %v802
        %v3733 = vunpack.c.h.b16 %v802
        %v3734 = vunpack.c.l.b16 %v803
        %v3735 = vunpack.c.h.b16 %v803
        %v3736 = vunpack.c.l.b16 %v804
        %v3737 = vunpack.c.h.b16 %v804
        %v3738 = vunpack.c.l.b16 %v805
        %v3739 = vunpack.c.h.b16 %v805
        %v3740 = vunpack.c.l.b16 %v806
        %v3741 = vunpack.c.h.b16 %v806
        %v3742 = vunpack.c.l.b16 %v807
        %v3743 = vunpack.c.h.b16 %v807
        %v3744 = vunpack.c.l.b16 %v808
        %v3745 = vunpack.c.h.b16 %v808
        %v3746 = vunpack.c.l.b16 %v809
        %v3747 = vunpack.c.h.b16 %v809
        %v3748 = vunpack.c.l.b16 %v810
        %v3749 = vunpack.c.h.b16 %v810
        %v3750 = vunpack.c.l.b16 %v811
        %v3751 = vunpack.c.h.b16 %v811
        %v3752 = vunpack.c.l.b16 %v812
        %v3753 = vunpack.c.h.b16 %v812
        %v3754 = vunpack.c.l.b16 %v813
        %v3755 = vunpack.c.h.b16 %v813
        %v3756 = vunpack.c.l.b16 %v814
        %v3757 = vunpack.c.h.b16 %v814
        %v3758 = vunpack.c.l.b16 %v815
        %v3759 = vunpack.c.h.b16 %v815
        %v3760 = vunpack.c.l.b16 %v816
        %v3761 = vunpack.c.h.b16 %v816
        %v3762 = vunpack.c.l.b16 %v817
        %v3763 = vunpack.c.h.b16 %v817
        %v3764 = vunpack.c.l.b16 %v818
        %v3765 = vunpack.c.h.b16 %v818
        %v3766 = vunpack.c.l.b16 %v819
        %v3767 = vunpack.c.h.b16 %v819
        %v3768 = vunpack.c.l.b16 %v820
        %v3769 = vunpack.c.h.b16 %v820
        %v3770 = vunpack.c.l.b16 %v821
        %v3771 = vunpack.c.h.b16 %v821
        %v3772 = vunpack.c.l.b16 %v822
        %v3773 = vunpack.c.h.b16 %v822
        %v3774 = vunpack.c.l.b16 %v823
        %v3775 = vunpack.c.h.b16 %v823
        %v3776 = vunpack.c.l.b16 %v824
        %v3777 = vunpack.c.h.b16 %v824
        %v3778 = vunpack.c.l.b16 %v825
        %v3779 = vunpack.c.h.b16 %v825
        %v3780 = vunpack.c.l.b16 %v826
        %v3781 = vunpack.c.h.b16 %v826
        %v3782 = vunpack.c.l.b16 %v827
        %v3783 = vunpack.c.h.b16 %v827
        %v3784 = vunpack.c.l.b16 %v828
        %v3785 = vunpack.c.h.b16 %v828
        %v3786 = vunpack.c.l.b16 %v829
        %v3787 = vunpack.c.h.b16 %v829
        %v3788 = vunpack.c.l.b16 %v830
        %v3789 = vunpack.c.h.b16 %v830
        %v3790 = vunpack.c.l.b16 %v831
        %v3791 = vunpack.c.h.b16 %v831
        %v3792 = vunpack.c.l.b16 %v832
        %v3793 = vunpack.c.h.b16 %v832
        %v3794 = vunpack.c.l.b16 %v833
        %v3795 = vunpack.c.h.b16 %v833
        %v3796 = vunpack.c.l.b16 %v834
        %v3797 = vunpack.c.h.b16 %v834
        %v3798 = vunpack.c.l.b16 %v835
        %v3799 = vunpack.c.h.b16 %v835
        %v3800 = vunpack.c.l.b16 %v836
        %v3801 = vunpack.c.h.b16 %v836
        %v3802 = vunpack.c.l.b16 %v837
        %v3803 = vunpack.c.h.b16 %v837
        %v3804 = vunpack.c.l.b16 %v838
        %v3805 = vunpack.c.h.b16 %v838
        %v3806 = vunpack.c.l.b16 %v839
        %v3807 = vunpack.c.h.b16 %v839
        %v3808 = vunpack.c.l.b16 %v840
        %v3809 = vunpack.c.h.b16 %v840
        %v3810 = vunpack.c.l.b16 %v841
        %v3811 = vunpack.c.h.b16 %v841
        %v3812 = vunpack.c.l.b16 %v842
        %v3813 = vunpack.c.h.b16 %v842
        %v3814 = vunpack.c.l.b16 %v843
        %v3815 = vunpack.c.h.b16 %v843
        %v3816 = vunpack.c.l.b16 %v844
        %v3817 = vunpack.c.h.b16 %v844
        %v3818 = vunpack.c.l.b16 %v845
        %v3819 = vunpack.c.h.b16 %v845
        %v3820 = vunpack.c.l.b16 %v846
        %v3821 = vunpack.c.h.b16 %v846
        %v3822 = vunpack.c.l.b16 %v847
        %v3823 = vunpack.c.h.b16 %v847
        %v3824 = vunpack.c.l.b16 %v848
        %v3825 = vunpack.c.h.b16 %v848
        %v3826 = vunpack.c.l.b16 %v849
        %v3827 = vunpack.c.h.b16 %v849
        %v3828 = vunpack.c.l.b16 %v850
        %v3829 = vunpack.c.h.b16 %v850
        %v3830 = vunpack.c.l.b16 %v851
        %v3831 = vunpack.c.h.b16 %v851
        %v3832 = vunpack.c.l.b16 %v852
        %v3833 = vunpack.c.h.b16 %v852
        %v3834 = vunpack.c.l.b16 %v853
        %v3835 = vunpack.c.h.b16 %v853
        %v3836 = vunpack.c.l.b16 %v854
        %v3837 = vunpack.c.h.b16 %v854
        %v3838 = vunpack.c.l.b16 %v855
        %v3839 = vunpack.c.h.b16 %v855
        %v3840 = vunpack.c.l.b16 %v856
        %v3841 = vunpack.c.h.b16 %v856
        %v3842 = vunpack.c.l.b16 %v857
        %v3843 = vunpack.c.h.b16 %v857
        %v3844 = vunpack.c.l.b16 %v858
        %v3845 = vunpack.c.h.b16 %v858
        %v3846 = vunpack.c.l.b16 %v859
        %v3847 = vunpack.c.h.b16 %v859
        %v3848 = vunpack.c.l.b16 %v860
        %v3849 = vunpack.c.h.b16 %v860
        %v3850 = vunpack.c.l.b16 %v861
        %v3851 = vunpack.c.h.b16 %v861
        %v3852 = vunpack.c.l.b16 %v862
        %v3853 = vunpack.c.h.b16 %v862
        %v3854 = vunpack.c.l.b16 %v863
        %v3855 = vunpack.c.h.b16 %v863
        %v3856 = vunpack.c.l.b16 %v864
        %v3857 = vunpack.c.h.b16 %v864
        %v3858 = vunpack.c.l.b16 %v865
        %v3859 = vunpack.c.h.b16 %v865
        %v3860 = vunpack.c.l.b16 %v866
        %v3861 = vunpack.c.h.b16 %v866
        %v3862 = vunpack.c.l.b16 %v867
        %v3863 = vunpack.c.h.b16 %v867
        %v3864 = vunpack.c.l.b16 %v868
        %v3865 = vunpack.c.h.b16 %v868
        %v3866 = vunpack.c.l.b16 %v869
        %v3867 = vunpack.c.h.b16 %v869
        %v3868 = vunpack.c.l.b16 %v870
        %v3869 = vunpack.c.h.b16 %v870
        %v3870 = vunpack.c.l.b16 %v871
        %v3871 = vunpack.c.h.b16 %v871
        %v3872 = vunpack.c.l.b16 %v872
        %v3873 = vunpack.c.h.b16 %v872
        %v3874 = vunpack.c.l.b16 %v873
        %v3875 = vunpack.c.h.b16 %v873
        %v3876 = vunpack.c.l.b16 %v874
        %v3877 = vunpack.c.h.b16 %v874
        %v3878 = vunpack.c.l.b16 %v875
        %v3879 = vunpack.c.h.b16 %v875
        %v3880 = vunpack.c.l.b16 %v876
        %v3881 = vunpack.c.h.b16 %v876
        %v3882 = vunpack.c.l.b16 %v877
        %v3883 = vunpack.c.h.b16 %v877
        %v3884 = vunpack.c.l.b16 %v878
        %v3885 = vunpack.c.h.b16 %v878
        %v3886 = vunpack.c.l.b16 %v879
        %v3887 = vunpack.c.h.b16 %v879
        %v3888 = vunpack.c.l.b16 %v880
        %v3889 = vunpack.c.h.b16 %v880
        %v3890 = vunpack.c.l.b16 %v881
        %v3891 = vunpack.c.h.b16 %v881
        %v3892 = vunpack.c.l.b16 %v882
        %v3893 = vunpack.c.h.b16 %v882
        %v3894 = vunpack.c.l.b16 %v883
        %v3895 = vunpack.c.h.b16 %v883
        %v3896 = vunpack.c.l.b16 %v884
        %v3897 = vunpack.c.h.b16 %v884
        %v3898 = vunpack.c.l.b16 %v885
        %v3899 = vunpack.c.h.b16 %v885
        %v3900 = vunpack.c.l.b16 %v886
        %v3901 = vunpack.c.h.b16 %v886
        %v3902 = vunpack.c.l.b16 %v887
        %v3903 = vunpack.c.h.b16 %v887
        %v3904 = vunpack.c.l.b16 %v888
        %v3905 = vunpack.c.h.b16 %v888
        %v3906 = vunpack.c.l.b16 %v889
        %v3907 = vunpack.c.h.b16 %v889
        %v3908 = vunpack.c.l.b16 %v890
        %v3909 = vunpack.c.h.b16 %v890
        %v3910 = vunpack.c.l.b16 %v891
        %v3911 = vunpack.c.h.b16 %v891
        %v3912 = vunpack.c.l.b16 %v892
        %v3913 = vunpack.c.h.b16 %v892
        %v3914 = vunpack.c.l.b16 %v893
        %v3915 = vunpack.c.h.b16 %v893
        %v3916 = vunpack.c.l.b16 %v894
        %v3917 = vunpack.c.h.b16 %v894
        %v3918 = vunpack.c.l.b16 %v895
        %v3919 = vunpack.c.h.b16 %v895
        %v3920 = vunpack.c.l.b16 %v896
        %v3921 = vunpack.c.h.b16 %v896
        %v3922 = vunpack.c.l.b16 %v897
        %v3923 = vunpack.c.h.b16 %v897
        %v3924 = vunpack.c.l.b16 %v898
        %v3925 = vunpack.c.h.b16 %v898
        %v3926 = vunpack.c.l.b16 %v899
        %v3927 = vunpack.c.h.b16 %v899
        %v3928 = vunpack.c.l.b16 %v900
        %v3929 = vunpack.c.h.b16 %v900
        %v3930 = vunpack.c.l.b16 %v901
        %v3931 = vunpack.c.h.b16 %v901
        %v3932 = vunpack.c.l.b16 %v902
        %v3933 = vunpack.c.h.b16 %v902
        %v3934 = vunpack.c.l.b16 %v903
        %v3935 = vunpack.c.h.b16 %v903
        %v3936 = vunpack.c.l.b16 %v904
        %v3937 = vunpack.c.h.b16 %v904
        %v3938 = vunpack.c.l.b16 %v905
        %v3939 = vunpack.c.h.b16 %v905
        %v3940 = vunpack.c.l.b16 %v906
        %v3941 = vunpack.c.h.b16 %v906
        %v3942 = vunpack.c.l.b16 %v907
        %v3943 = vunpack.c.h.b16 %v907
        %v3944 = vunpack.c.l.b16 %v908
        %v3945 = vunpack.c.h.b16 %v908
        %v3946 = vunpack.c.l.b16 %v909
        %v3947 = vunpack.c.h.b16 %v909
        %v3948 = vunpack.c.l.b16 %v910
        %v3949 = vunpack.c.h.b16 %v910
        %v3950 = vunpack.c.l.b16 %v911
        %v3951 = vunpack.c.h.b16 %v911
        %v3952 = vunpack.c.l.b16 %v912
        %v3953 = vunpack.c.h.b16 %v912
        %v3954 = vunpack.c.l.b16 %v913
        %v3955 = vunpack.c.h.b16 %v913
        %v3956 = vunpack.c.l.b16 %v914
        %v3957 = vunpack.c.h.b16 %v914
        %v3958 = vunpack.c.l.b16 %v915
        %v3959 = vunpack.c.h.b16 %v915
        %v3960 = vunpack.c.l.b16 %v916
        %v3961 = vunpack.c.h.b16 %v916
        %v3962 = vunpack.c.l.b16 %v917
        %v3963 = vunpack.c.h.b16 %v917
        %v3964 = vunpack.c.l.b16 %v918
        %v3965 = vunpack.c.h.b16 %v918
        %v3966 = vunpack.c.l.b16 %v919
        %v3967 = vunpack.c.h.b16 %v919
        %v3968 = vunpack.c.l.b16 %v920
        %v3969 = vunpack.c.h.b16 %v920
        %v3970 = vunpack.c.l.b16 %v921
        %v3971 = vunpack.c.h.b16 %v921
        %v3972 = vunpack.c.l.b16 %v922
        %v3973 = vunpack.c.h.b16 %v922
        %v3974 = vunpack.c.l.b16 %v923
        %v3975 = vunpack.c.h.b16 %v923
        %v3976 = vunpack.c.l.b16 %v924
        %v3977 = vunpack.c.h.b16 %v924
        %v3978 = vunpack.c.l.b16 %v925
        %v3979 = vunpack.c.h.b16 %v925
        %v3980 = vunpack.c.l.b16 %v926
        %v3981 = vunpack.c.h.b16 %v926
        %v3982 = vunpack.c.l.b16 %v927
        %v3983 = vunpack.c.h.b16 %v927
        %v3984 = vunpack.c.l.b16 %v928
        %v3985 = vunpack.c.h.b16 %v928
        %v3986 = vunpack.c.l.b16 %v929
        %v3987 = vunpack.c.h.b16 %v929
        %v3988 = vunpack.c.l.b16 %v930
        %v3989 = vunpack.c.h.b16 %v930
        %v3990 = vunpack.c.l.b16 %v931
        %v3991 = vunpack.c.h.b16 %v931
        %v3992 = vunpack.c.l.b16 %v932
        %v3993 = vunpack.c.h.b16 %v932
        %v3994 = vunpack.c.l.b16 %v933
        %v3995 = vunpack.c.h.b16 %v933
        %v3996 = vunpack.c.l.b16 %v934
        %v3997 = vunpack.c.h.b16 %v934
        %v3998 = vunpack.c.l.b16 %v935
        %v3999 = vunpack.c.h.b16 %v935
        %v4000 = vunpack.c.l.b16 %v936
        %v4001 = vunpack.c.h.b16 %v936
        %v4002 = vunpack.c.l.b16 %v937
        %v4003 = vunpack.c.h.b16 %v937
        %v4004 = vunpack.c.l.b16 %v938
        %v4005 = vunpack.c.h.b16 %v938
        %v4006 = vunpack.c.l.b16 %v939
        %v4007 = vunpack.c.h.b16 %v939
        %v4008 = vunpack.c.l.b16 %v940
        %v4009 = vunpack.c.h.b16 %v940
        %v4010 = vunpack.c.l.b16 %v941
        %v4011 = vunpack.c.h.b16 %v941
        %v4012 = vunpack.c.l.b16 %v942
        %v4013 = vunpack.c.h.b16 %v942
        %v4014 = vunpack.c.l.b16 %v943
        %v4015 = vunpack.c.h.b16 %v943
        %v4016 = vunpack.c.l.b16 %v944
        %v4017 = vunpack.c.h.b16 %v944
        %v4018 = vunpack.c.l.b16 %v945
        %v4019 = vunpack.c.h.b16 %v945
        %v4020 = vunpack.c.l.b16 %v946
        %v4021 = vunpack.c.h.b16 %v946
        %v4022 = vunpack.c.l.b16 %v947
        %v4023 = vunpack.c.h.b16 %v947
        %v4024 = vunpack.c.l.b16 %v948
        %v4025 = vunpack.c.h.b16 %v948
        %v4026 = vunpack.c.l.b16 %v949
        %v4027 = vunpack.c.h.b16 %v949
        %v4028 = vunpack.c.l.b16 %v950
        %v4029 = vunpack.c.h.b16 %v950
        %v4030 = vunpack.c.l.b16 %v951
        %v4031 = vunpack.c.h.b16 %v951
        %v4032 = vunpack.c.l.b16 %v952
        %v4033 = vunpack.c.h.b16 %v952
        %v4034 = vunpack.c.l.b16 %v953
        %v4035 = vunpack.c.h.b16 %v953
        %v4036 = vunpack.c.l.b16 %v954
        %v4037 = vunpack.c.h.b16 %v954
        %v4038 = vunpack.c.l.b16 %v955
        %v4039 = vunpack.c.h.b16 %v955
        %v4040 = vunpack.c.l.b16 %v956
        %v4041 = vunpack.c.h.b16 %v956
        %v4042 = vunpack.c.l.b16 %v957
        %v4043 = vunpack.c.h.b16 %v957
        %v4044 = vunpack.c.l.b16 %v958
        %v4045 = vunpack.c.h.b16 %v958
        %v4046 = vunpack.c.l.b16 %v959
        %v4047 = vunpack.c.h.b16 %v959
        %v4048 = vunpack.c.l.b16 %v960
        %v4049 = vunpack.c.h.b16 %v960
        %v4050 = vunpack.c.l.b16 %v961
        %v4051 = vunpack.c.h.b16 %v961
        %v4052 = vunpack.c.l.b16 %v962
        %v4053 = vunpack.c.h.b16 %v962
        %v4054 = vunpack.c.l.b16 %v963
        %v4055 = vunpack.c.h.b16 %v963
        %v4056 = vunpack.c.l.b16 %v964
        %v4057 = vunpack.c.h.b16 %v964
        %v4058 = vunpack.c.l.b16 %v965
        %v4059 = vunpack.c.h.b16 %v965
        %v4060 = vunpack.c.l.b16 %v966
        %v4061 = vunpack.c.h.b16 %v966
        %v4062 = vunpack.c.l.b16 %v967
        %v4063 = vunpack.c.h.b16 %v967
        %v4064 = vunpack.c.l.b16 %v968
        %v4065 = vunpack.c.h.b16 %v968
        %v4066 = vunpack.c.l.b16 %v969
        %v4067 = vunpack.c.h.b16 %v969
        %v4068 = vunpack.c.l.b16 %v970
        %v4069 = vunpack.c.h.b16 %v970
        %v4070 = vunpack.c.l.b16 %v971
        %v4071 = vunpack.c.h.b16 %v971
        %v4072 = vunpack.c.l.b16 %v972
        %v4073 = vunpack.c.h.b16 %v972
        %v4074 = vunpack.c.l.b16 %v973
        %v4075 = vunpack.c.h.b16 %v973
        %v4076 = vunpack.c.l.b16 %v974
        %v4077 = vunpack.c.h.b16 %v974
        %v4078 = vunpack.c.l.b16 %v975
        %v4079 = vunpack.c.h.b16 %v975
        %v4080 = vunpack.c.l.b16 %v976
        %v4081 = vunpack.c.h.b16 %v976
        %v4082 = vunpack.c.l.b16 %v977
        %v4083 = vunpack.c.h.b16 %v977
        %v4084 = vunpack.c.l.b16 %v978
        %v4085 = vunpack.c.h.b16 %v978
        %v4086 = vunpack.c.l.b16 %v979
        %v4087 = vunpack.c.h.b16 %v979
        %v4088 = vunpack.c.l.b16 %v980
        %v4089 = vunpack.c.h.b16 %v980
        %v4090 = vunpack.c.l.b16 %v981
        %v4091 = vunpack.c.h.b16 %v981
        %v4092 = vunpack.c.l.b16 %v982
        %v4093 = vunpack.c.h.b16 %v982
        %v4094 = vunpack.c.l.b16 %v983
        %v4095 = vunpack.c.h.b16 %v983
        %v4096 = vunpack.c.l.b16 %v984
        %v4097 = vunpack.c.h.b16 %v984
        %v4098 = vunpack.c.l.b16 %v985
        %v4099 = vunpack.c.h.b16 %v985
        %v4100 = vunpack.c.l.b16 %v986
        %v4101 = vunpack.c.h.b16 %v986
        %v4102 = vunpack.c.l.b16 %v987
        %v4103 = vunpack.c.h.b16 %v987
        %v4104 = vunpack.c.l.b16 %v988
        %v4105 = vunpack.c.h.b16 %v988
        %v4106 = vunpack.c.l.b16 %v989
        %v4107 = vunpack.c.h.b16 %v989
        %v4108 = vunpack.c.l.b16 %v990
        %v4109 = vunpack.c.h.b16 %v990
        %v4110 = vunpack.c.l.b16 %v991
        %v4111 = vunpack.c.h.b16 %v991
        %v4112 = vunpack.c.l.b16 %v992
        %v4113 = vunpack.c.h.b16 %v992
        %v4114 = vunpack.c.l.b16 %v993
        %v4115 = vunpack.c.h.b16 %v993
        %v4116 = vunpack.c.l.b16 %v994
        %v4117 = vunpack.c.h.b16 %v994
        %v4118 = vunpack.c.l.b16 %v995
        %v4119 = vunpack.c.h.b16 %v995
        %v4120 = vunpack.c.l.b16 %v996
        %v4121 = vunpack.c.h.b16 %v996
        %v4122 = vunpack.c.l.b16 %v997
        %v4123 = vunpack.c.h.b16 %v997
        %v4124 = vunpack.c.l.b16 %v998
        %v4125 = vunpack.c.h.b16 %v998
        %v4126 = vunpack.c.l.b16 %v999
        %v4127 = vunpack.c.h.b16 %v999
        %v4128 = vunpack.c.l.b16 %v1000
        %v4129 = vunpack.c.h.b16 %v1000
        %v4130 = vunpack.c.l.b16 %v1001
        %v4131 = vunpack.c.h.b16 %v1001
        %v4132 = vunpack.c.l.b16 %v1002
        %v4133 = vunpack.c.h.b16 %v1002
        %v4134 = vunpack.c.l.b16 %v1003
        %v4135 = vunpack.c.h.b16 %v1003
        %v4136 = vunpack.c.l.b16 %v1004
        %v4137 = vunpack.c.h.b16 %v1004
        %v4138 = vunpack.c.l.b16 %v1005
        %v4139 = vunpack.c.h.b16 %v1005
        %v4140 = vunpack.c.l.b16 %v1006
        %v4141 = vunpack.c.h.b16 %v1006
        %v4142 = vunpack.c.l.b16 %v1007
        %v4143 = vunpack.c.h.b16 %v1007
        %v4144 = vunpack.c.l.b16 %v1008
        %v4145 = vunpack.c.h.b16 %v1008
        %v4146 = vunpack.c.l.b16 %v1009
        %v4147 = vunpack.c.h.b16 %v1009
        %v4148 = vunpack.c.l.b16 %v1010
        %v4149 = vunpack.c.h.b16 %v1010
        %v4150 = vunpack.c.l.b16 %v1011
        %v4151 = vunpack.c.h.b16 %v1011
        %v4152 = vunpack.c.l.b16 %v1012
        %v4153 = vunpack.c.h.b16 %v1012
        %v4154 = vunpack.c.l.b16 %v1013
        %v4155 = vunpack.c.h.b16 %v1013
        %v4156 = vunpack.c.l.b16 %v1014
        %v4157 = vunpack.c.h.b16 %v1014
        %v4158 = vunpack.c.l.b16 %v1015
        %v4159 = vunpack.c.h.b16 %v1015
        %v4160 = vunpack.c.l.b16 %v1016
        %v4161 = vunpack.c.h.b16 %v1016
        %v4162 = vunpack.c.l.b16 %v1017
        %v4163 = vunpack.c.h.b16 %v1017
        %v4164 = vunpack.c.l.b16 %v1018
        %v4165 = vunpack.c.h.b16 %v1018
        %v4166 = vunpack.c.l.b16 %v1019
        %v4167 = vunpack.c.h.b16 %v1019
        %v4168 = vunpack.c.l.b16 %v1020
        %v4169 = vunpack.c.h.b16 %v1020
        %v4170 = vunpack.c.l.b16 %v1021
        %v4171 = vunpack.c.h.b16 %v1021
        %v4172 = vunpack.c.l.b16 %v1022
        %v4173 = vunpack.c.h.b16 %v1022
        %v4174 = vunpack.c.l.b16 %v1023
        %v4175 = vunpack.c.h.b16 %v1023
        %v4176 = vunpack.c.l.b16 %v1024
        %v4177 = vunpack.c.h.b16 %v1024
        %v4178 = vunpack.c.l.b16 %v1025
        %v4179 = vunpack.c.h.b16 %v1025
        %v4180 = vunpack.c.l.b16 %v1026
        %v4181 = vunpack.c.h.b16 %v1026
        %v4182 = vunpack.c.l.b16 %v1027
        %v4183 = vunpack.c.h.b16 %v1027
        %v4184 = vunpack.c.l.b16 %v1028
        %v4185 = vunpack.c.h.b16 %v1028
        %v4186 = vunpack.c.l.b16 %v1029
        %v4187 = vunpack.c.h.b16 %v1029
        %v4188 = vunpack.c.l.b16 %v1030
        %v4189 = vunpack.c.h.b16 %v1030
        %v4190 = vunpack.c.l.b16 %v1031
        %v4191 = vunpack.c.h.b16 %v1031
        %v4192 = vunpack.c.l.b16 %v1032
        %v4193 = vunpack.c.h.b16 %v1032
        %v4194 = vunpack.c.l.b16 %v1033
        %v4195 = vunpack.c.h.b16 %v1033
        %v4196 = vunpack.c.l.b16 %v1034
        %v4197 = vunpack.c.h.b16 %v1034
        %v4198 = vunpack.c.l.b16 %v1035
        %v4199 = vunpack.c.h.b16 %v1035
        %v4200 = vunpack.c.l.b16 %v1036
        %v4201 = vunpack.c.h.b16 %v1036
        %v4202 = vunpack.c.l.b16 %v1037
        %v4203 = vunpack.c.h.b16 %v1037
        %v4204 = vunpack.c.l.b16 %v1038
        %v4205 = vunpack.c.h.b16 %v1038
        %v4206 = vunpack.c.l.b16 %v1039
        %v4207 = vunpack.c.h.b16 %v1039
        %v4208 = vunpack.c.l.b16 %v1040
        %v4209 = vunpack.c.h.b16 %v1040
        %v4210 = vunpack.c.l.b16 %v1041
        %v4211 = vunpack.c.h.b16 %v1041
        %v4212 = vunpack.c.l.b16 %v1042
        %v4213 = vunpack.c.h.b16 %v1042
        %v4214 = vunpack.c.l.b16 %v1043
        %v4215 = vunpack.c.h.b16 %v1043
        %v4216 = vunpack.c.l.b16 %v1044
        %v4217 = vunpack.c.h.b16 %v1044
        %v4218 = vunpack.c.l.b16 %v1045
        %v4219 = vunpack.c.h.b16 %v1045
        %v4220 = vunpack.c.l.b16 %v1046
        %v4221 = vunpack.c.h.b16 %v1046
        %v4222 = vunpack.c.l.b16 %v1047
        %v4223 = vunpack.c.h.b16 %v1047
        %v4224 = vunpack.c.l.b16 %v1048
        %v4225 = vunpack.c.h.b16 %v1048
        %v4226 = vunpack.c.l.b16 %v1049
        %v4227 = vunpack.c.h.b16 %v1049
        %v4228 = vunpack.c.l.b16 %v1050
        %v4229 = vunpack.c.h.b16 %v1050
        %v4230 = vunpack.c.l.b16 %v1051
        %v4231 = vunpack.c.h.b16 %v1051
        %v4232 = vunpack.c.l.b16 %v1052
        %v4233 = vunpack.c.h.b16 %v1052
        %v4234 = vunpack.c.l.b16 %v1053
        %v4235 = vunpack.c.h.b16 %v1053
        %v4236 = vunpack.c.l.b16 %v1054
        %v4237 = vunpack.c.h.b16 %v1054
        %v4238 = vunpack.c.l.b16 %v1055
        %v4239 = vunpack.c.h.b16 %v1055
        %v4240 = vunpack.c.l.b16 %v1056
        %v4241 = vunpack.c.h.b16 %v1056
        %v4242 = vunpack.c.l.b16 %v1057
        %v4243 = vunpack.c.h.b16 %v1057
        %v4244 = vunpack.c.l.b16 %v1058
        %v4245 = vunpack.c.h.b16 %v1058
        %v4246 = vunpack.c.l.b16 %v1059
        %v4247 = vunpack.c.h.b16 %v1059
        %v4248 = vunpack.c.l.b16 %v1060
        %v4249 = vunpack.c.h.b16 %v1060
        %v4250 = vunpack.c.l.b16 %v1061
        %v4251 = vunpack.c.h.b16 %v1061
        %v4252 = vunpack.c.l.b16 %v1062
        %v4253 = vunpack.c.h.b16 %v1062
        %v4254 = vunpack.c.l.b16 %v1063
        %v4255 = vunpack.c.h.b16 %v1063
        %v4256 = vunpack.c.l.b16 %v1064
        %v4257 = vunpack.c.h.b16 %v1064
        %v4258 = vunpack.c.l.b16 %v1065
        %v4259 = vunpack.c.h.b16 %v1065
        %v4260 = vunpack.c.l.b16 %v1066
        %v4261 = vunpack.c.h.b16 %v1066
        %v4262 = vunpack.c.l.b16 %v1067
        %v4263 = vunpack.c.h.b16 %v1067
        %v4264 = vunpack.c.l.b16 %v1068
        %v4265 = vunpack.c.h.b16 %v1068
        %v4266 = vunpack.c.l.b16 %v1069
        %v4267 = vunpack.c.h.b16 %v1069
        %v4268 = vunpack.c.l.b16 %v1070
        %v4269 = vunpack.c.h.b16 %v1070
        %v4270 = vunpack.c.l.b16 %v1071
        %v4271 = vunpack.c.h.b16 %v1071
        %v4272 = vunpack.c.l.b16 %v1072
        %v4273 = vunpack.c.h.b16 %v1072
        %v4274 = vunpack.c.l.b16 %v1073
        %v4275 = vunpack.c.h.b16 %v1073
        %v4276 = vunpack.c.l.b16 %v1074
        %v4277 = vunpack.c.h.b16 %v1074
        %v4278 = vunpack.c.l.b16 %v1075
        %v4279 = vunpack.c.h.b16 %v1075
        %v4280 = vunpack.c.l.b16 %v1076
        %v4281 = vunpack.c.h.b16 %v1076
        %v4282 = vunpack.c.l.b16 %v1077
        %v4283 = vunpack.c.h.b16 %v1077
        %v4284 = vunpack.c.l.b16 %v1078
        %v4285 = vunpack.c.h.b16 %v1078
        %v4286 = vunpack.c.l.b16 %v1079
        %v4287 = vunpack.c.h.b16 %v1079
        %v4288 = vunpack.c.l.b16 %v1080
        %v4289 = vunpack.c.h.b16 %v1080
        %v4290 = vunpack.c.l.b16 %v1081
        %v4291 = vunpack.c.h.b16 %v1081
        %v4292 = vunpack.c.l.b16 %v1082
        %v4293 = vunpack.c.h.b16 %v1082
        %v4294 = vunpack.c.l.b16 %v1083
        %v4295 = vunpack.c.h.b16 %v1083
        %v4296 = vunpack.c.l.b16 %v1084
        %v4297 = vunpack.c.h.b16 %v1084
        %v4298 = vunpack.c.l.b16 %v1085
        %v4299 = vunpack.c.h.b16 %v1085
        %v4300 = vunpack.c.l.b16 %v1086
        %v4301 = vunpack.c.h.b16 %v1086
        %v4302 = vunpack.c.l.b16 %v1087
        %v4303 = vunpack.c.h.b16 %v1087
        %v4304 = vunpack.c.l.b16 %v1088
        %v4305 = vunpack.c.h.b16 %v1088
        %v4306 = vunpack.c.l.b16 %v1089
        %v4307 = vunpack.c.h.b16 %v1089
        %v4308 = vunpack.c.l.b16 %v1090
        %v4309 = vunpack.c.h.b16 %v1090
        %v4310 = vunpack.c.l.b16 %v1091
        %v4311 = vunpack.c.h.b16 %v1091
        %v4312 = vunpack.c.l.b16 %v1092
        %v4313 = vunpack.c.h.b16 %v1092
        %v4314 = vunpack.c.l.b16 %v1093
        %v4315 = vunpack.c.h.b16 %v1093
        %v4316 = vunpack.c.l.b16 %v1094
        %v4317 = vunpack.c.h.b16 %v1094
        %v4318 = vunpack.c.l.b16 %v1095
        %v4319 = vunpack.c.h.b16 %v1095
        %v4320 = vunpack.c.l.b16 %v1096
        %v4321 = vunpack.c.h.b16 %v1096
        %v4322 = vunpack.c.l.b16 %v1097
        %v4323 = vunpack.c.h.b16 %v1097
        %v4324 = vunpack.c.l.b16 %v1098
        %v4325 = vunpack.c.h.b16 %v1098
        %v4326 = vunpack.c.l.b16 %v1099
        %v4327 = vunpack.c.h.b16 %v1099
        %v4328 = vunpack.c.l.b16 %v1100
        %v4329 = vunpack.c.h.b16 %v1100
        %v4330 = vunpack.c.l.b16 %v1101
        %v4331 = vunpack.c.h.b16 %v1101
        %v4332 = vunpack.c.l.b16 %v1102
        %v4333 = vunpack.c.h.b16 %v1102
        %v4334 = vunpack.c.l.b16 %v1103
        %v4335 = vunpack.c.h.b16 %v1103
        %v4336 = vunpack.c.l.b16 %v1104
        %v4337 = vunpack.c.h.b16 %v1104
        %v4338 = vunpack.c.l.b16 %v1105
        %v4339 = vunpack.c.h.b16 %v1105
        %v4340 = vunpack.c.l.b16 %v1106
        %v4341 = vunpack.c.h.b16 %v1106
        %v4342 = vunpack.c.l.b16 %v1107
        %v4343 = vunpack.c.h.b16 %v1107
        %v4344 = vunpack.c.l.b16 %v1108
        %v4345 = vunpack.c.h.b16 %v1108
        %v4346 = vunpack.c.l.b16 %v1109
        %v4347 = vunpack.c.h.b16 %v1109
        %v4348 = vunpack.c.l.b16 %v1110
        %v4349 = vunpack.c.h.b16 %v1110
        %v4350 = vunpack.c.l.b16 %v1111
        %v4351 = vunpack.c.h.b16 %v1111
        %v4352 = vunpack.c.l.b16 %v1112
        %v4353 = vunpack.c.h.b16 %v1112
        %v4354 = vunpack.c.l.b16 %v1113
        %v4355 = vunpack.c.h.b16 %v1113
        %v4356 = vunpack.c.l.b16 %v1114
        %v4357 = vunpack.c.h.b16 %v1114
        %v4358 = vunpack.c.l.b16 %v1115
        %v4359 = vunpack.c.h.b16 %v1115
        %v4360 = vunpack.c.l.b16 %v1116
        %v4361 = vunpack.c.h.b16 %v1116
        %v4362 = vunpack.c.l.b16 %v1117
        %v4363 = vunpack.c.h.b16 %v1117
        %v4364 = vunpack.c.l.b16 %v1118
        %v4365 = vunpack.c.h.b16 %v1118
        %v4366 = vunpack.c.l.b16 %v1119
        %v4367 = vunpack.c.h.b16 %v1119
        %v4368 = vunpack.c.l.b16 %v1120
        %v4369 = vunpack.c.h.b16 %v1120
        %v4370 = vunpack.c.l.b16 %v1121
        %v4371 = vunpack.c.h.b16 %v1121
        %v4372 = vunpack.c.l.b16 %v1122
        %v4373 = vunpack.c.h.b16 %v1122
        %v4374 = vunpack.c.l.b16 %v1123
        %v4375 = vunpack.c.h.b16 %v1123
        %v4376 = vunpack.c.l.b16 %v1124
        %v4377 = vunpack.c.h.b16 %v1124
        %v4378 = vunpack.c.l.b16 %v1125
        %v4379 = vunpack.c.h.b16 %v1125
        %v4380 = vunpack.c.l.b16 %v1126
        %v4381 = vunpack.c.h.b16 %v1126
        %v4382 = vunpack.c.l.b16 %v1127
        %v4383 = vunpack.c.h.b16 %v1127
        %v4384 = vunpack.c.l.b16 %v1128
        %v4385 = vunpack.c.h.b16 %v1128
        %v4386 = vunpack.c.l.b16 %v1129
        %v4387 = vunpack.c.h.b16 %v1129
        %v4388 = vunpack.c.l.b16 %v1130
        %v4389 = vunpack.c.h.b16 %v1130
        %v4390 = vunpack.c.l.b16 %v1131
        %v4391 = vunpack.c.h.b16 %v1131
        %v4392 = vunpack.c.l.b16 %v1132
        %v4393 = vunpack.c.h.b16 %v1132
        %v4394 = vunpack.c.l.b16 %v1133
        %v4395 = vunpack.c.h.b16 %v1133
        %v4396 = vunpack.c.l.b16 %v1134
        %v4397 = vunpack.c.h.b16 %v1134
        %v4398 = vunpack.c.l.b16 %v1135
        %v4399 = vunpack.c.h.b16 %v1135
        %v4400 = vunpack.c.l.b16 %v1136
        %v4401 = vunpack.c.h.b16 %v1136
        %v4402 = vunpack.c.l.b16 %v1137
        %v4403 = vunpack.c.h.b16 %v1137
        %v4404 = vunpack.c.l.b16 %v1138
        %v4405 = vunpack.c.h.b16 %v1138
        %v4406 = vunpack.c.l.b16 %v1139
        %v4407 = vunpack.c.h.b16 %v1139
        %v4408 = vunpack.c.l.b16 %v1140
        %v4409 = vunpack.c.h.b16 %v1140
        %v4410 = vunpack.c.l.b16 %v1141
        %v4411 = vunpack.c.h.b16 %v1141
        %v4412 = vunpack.c.l.b16 %v1142
        %v4413 = vunpack.c.h.b16 %v1142
        %v4414 = vunpack.c.l.b16 %v1143
        %v4415 = vunpack.c.h.b16 %v1143
        %v4416 = vunpack.c.l.b16 %v1144
        %v4417 = vunpack.c.h.b16 %v1144
        %v4418 = vunpack.c.l.b16 %v1145
        %v4419 = vunpack.c.h.b16 %v1145
        %v4420 = vunpack.c.l.b16 %v1146
        %v4421 = vunpack.c.h.b16 %v1146
        %v4422 = vunpack.c.l.b16 %v1147
        %v4423 = vunpack.c.h.b16 %v1147
        %v4424 = vunpack.c.l.b16 %v1148
        %v4425 = vunpack.c.h.b16 %v1148
        %v4426 = vunpack.c.l.b16 %v1149
        %v4427 = vunpack.c.h.b16 %v1149
        %v4428 = vunpack.c.l.b16 %v1150
        %v4429 = vunpack.c.h.b16 %v1150
        %v4430 = vunpack.c.l.b16 %v1151
        %v4431 = vunpack.c.h.b16 %v1151
        %v4432 = vunpack.c.l.b16 %v1152
        %v4433 = vunpack.c.h.b16 %v1152
        %v4434 = vunpack.c.l.b16 %v1153
        %v4435 = vunpack.c.h.b16 %v1153
        %v4436 = vunpack.c.l.b16 %v1154
        %v4437 = vunpack.c.h.b16 %v1154
        %v4438 = vunpack.c.l.b16 %v1155
        %v4439 = vunpack.c.h.b16 %v1155
        %v4440 = vunpack.c.l.b16 %v1156
        %v4441 = vunpack.c.h.b16 %v1156
        %v4442 = vunpack.c.l.b16 %v1157
        %v4443 = vunpack.c.h.b16 %v1157
        %v4444 = vunpack.c.l.b16 %v1158
        %v4445 = vunpack.c.h.b16 %v1158
        %v4446 = vunpack.c.l.b16 %v1159
        %v4447 = vunpack.c.h.b16 %v1159
        %v4448 = vunpack.c.l.b16 %v1160
        %v4449 = vunpack.c.h.b16 %v1160
        %v4450 = vunpack.c.l.b16 %v1161
        %v4451 = vunpack.c.h.b16 %v1161
        %v4452 = vunpack.c.l.b16 %v1162
        %v4453 = vunpack.c.h.b16 %v1162
        %v4454 = vunpack.c.l.b16 %v1163
        %v4455 = vunpack.c.h.b16 %v1163
        %v4456 = vunpack.c.l.b16 %v1164
        %v4457 = vunpack.c.h.b16 %v1164
        %v4458 = vunpack.c.l.b16 %v1165
        %v4459 = vunpack.c.h.b16 %v1165
        %v4460 = vunpack.c.l.b16 %v1166
        %v4461 = vunpack.c.h.b16 %v1166
        %v4462 = vunpack.c.l.b16 %v1167
        %v4463 = vunpack.c.h.b16 %v1167
        %v4464 = vunpack.c.l.b16 %v1168
        %v4465 = vunpack.c.h.b16 %v1168
        %v4466 = vunpack.c.l.b16 %v1169
        %v4467 = vunpack.c.h.b16 %v1169
        %v4468 = vunpack.c.l.b16 %v1170
        %v4469 = vunpack.c.h.b16 %v1170
        %v4470 = vunpack.c.l.b16 %v1171
        %v4471 = vunpack.c.h.b16 %v1171
        %v4472 = vunpack.c.l.b16 %v1172
        %v4473 = vunpack.c.h.b16 %v1172
        %v4474 = vunpack.c.l.b16 %v1173
        %v4475 = vunpack.c.h.b16 %v1173
        %v4476 = vunpack.c.l.b16 %v1174
        %v4477 = vunpack.c.h.b16 %v1174
        %v4478 = vunpack.c.l.b16 %v1175
        %v4479 = vunpack.c.h.b16 %v1175
        %v4480 = vunpack.c.l.b16 %v1176
        %v4481 = vunpack.c.h.b16 %v1176
        %v4482 = vunpack.c.l.b16 %v1177
        %v4483 = vunpack.c.h.b16 %v1177
        %v4484 = vunpack.c.l.b16 %v1178
        %v4485 = vunpack.c.h.b16 %v1178
        %v4486 = vunpack.c.l.b16 %v1179
        %v4487 = vunpack.c.h.b16 %v1179
        %v4488 = vunpack.c.l.b16 %v1180
        %v4489 = vunpack.c.h.b16 %v1180
        %v4490 = vunpack.c.l.b16 %v1181
        %v4491 = vunpack.c.h.b16 %v1181
        %v4492 = vunpack.c.l.b16 %v1182
        %v4493 = vunpack.c.h.b16 %v1182
        %v4494 = vunpack.c.l.b16 %v1183
        %v4495 = vunpack.c.h.b16 %v1183
        %v4496 = vunpack.c.l.b16 %v1184
        %v4497 = vunpack.c.h.b16 %v1184
        %v4498 = vunpack.c.l.b16 %v1185
        %v4499 = vunpack.c.h.b16 %v1185
        %v4500 = vunpack.c.l.b16 %v1186
        %v4501 = vunpack.c.h.b16 %v1186
        %v4502 = vunpack.c.l.b16 %v1187
        %v4503 = vunpack.c.h.b16 %v1187
        %v4504 = vunpack.c.l.b16 %v1188
        %v4505 = vunpack.c.h.b16 %v1188
        %v4506 = vunpack.c.l.b16 %v1189
        %v4507 = vunpack.c.h.b16 %v1189
        %v4508 = vunpack.c.l.b16 %v1190
        %v4509 = vunpack.c.h.b16 %v1190
        %v4510 = vunpack.c.l.b16 %v1191
        %v4511 = vunpack.c.h.b16 %v1191
        %v4512 = vunpack.c.l.b16 %v1192
        %v4513 = vunpack.c.h.b16 %v1192
        %v4514 = vunpack.c.l.b16 %v1193
        %v4515 = vunpack.c.h.b16 %v1193
        %v4516 = vunpack.c.l.b16 %v1194
        %v4517 = vunpack.c.h.b16 %v1194
        %v4518 = vunpack.c.l.b16 %v1195
        %v4519 = vunpack.c.h.b16 %v1195
        %v4520 = vunpack.c.l.b16 %v1196
        %v4521 = vunpack.c.h.b16 %v1196
        %v4522 = vunpack.c.l.b16 %v1197
        %v4523 = vunpack.c.h.b16 %v1197
        %v4524 = vunpack.c.l.b16 %v1198
        %v4525 = vunpack.c.h.b16 %v1198
        %v4526 = vunpack.c.l.b16 %v1199
        %v4527 = vunpack.c.h.b16 %v1199
        %v4528 = vunpack.c.l.b16 %v1200
        %v4529 = vunpack.c.h.b16 %v1200
        %v4530 = vunpack.c.l.b16 %v1201
        %v4531 = vunpack.c.h.b16 %v1201
        %v4532 = vunpack.c.l.b16 %v1202
        %v4533 = vunpack.c.h.b16 %v1202
        %v4534 = vunpack.c.l.b16 %v1203
        %v4535 = vunpack.c.h.b16 %v1203
        %v4536 = vunpack.c.l.b16 %v1204
        %v4537 = vunpack.c.h.b16 %v1204
        %v4538 = vunpack.c.l.b16 %v1205
        %v4539 = vunpack.c.h.b16 %v1205
        %v4540 = vunpack.c.l.b16 %v1206
        %v4541 = vunpack.c.h.b16 %v1206
        %v4542 = vunpack.c.l.b16 %v1207
        %v4543 = vunpack.c.h.b16 %v1207
        %v4544 = vunpack.c.l.b16 %v1208
        %v4545 = vunpack.c.h.b16 %v1208
        %v4546 = vunpack.c.l.b16 %v1209
        %v4547 = vunpack.c.h.b16 %v1209
        %v4548 = vunpack.c.l.b16 %v1210
        %v4549 = vunpack.c.h.b16 %v1210
        %v4550 = vunpack.c.l.b16 %v1211
        %v4551 = vunpack.c.h.b16 %v1211
        %v4552 = vunpack.c.l.b16 %v1212
        %v4553 = vunpack.c.h.b16 %v1212
        %v4554 = vunpack.c.l.b16 %v1213
        %v4555 = vunpack.c.h.b16 %v1213
        %v4556 = vunpack.c.l.b16 %v1214
        %v4557 = vunpack.c.h.b16 %v1214
        %v4558 = vunpack.c.l.b16 %v1215
        %v4559 = vunpack.c.h.b16 %v1215
        %v4560 = vunpack.c.l.b16 %v1216
        %v4561 = vunpack.c.h.b16 %v1216
        %v4562 = vunpack.c.l.b16 %v1217
        %v4563 = vunpack.c.h.b16 %v1217
        %v4564 = vunpack.c.l.b16 %v1218
        %v4565 = vunpack.c.h.b16 %v1218
        %v4566 = vunpack.c.l.b16 %v1219
        %v4567 = vunpack.c.h.b16 %v1219
        %v4568 = vunpack.c.l.b16 %v1220
        %v4569 = vunpack.c.h.b16 %v1220
        %v4570 = vunpack.c.l.b16 %v1221
        %v4571 = vunpack.c.h.b16 %v1221
        %v4572 = vunpack.c.l.b16 %v1222
        %v4573 = vunpack.c.h.b16 %v1222
        %v4574 = vunpack.c.l.b16 %v1223
        %v4575 = vunpack.c.h.b16 %v1223
        %v4576 = vunpack.c.l.b16 %v1224
        %v4577 = vunpack.c.h.b16 %v1224
        %v4578 = vunpack.c.l.b16 %v1225
        %v4579 = vunpack.c.h.b16 %v1225
        %v4580 = vunpack.c.l.b16 %v1226
        %v4581 = vunpack.c.h.b16 %v1226
        %v4582 = vunpack.c.l.b16 %v1227
        %v4583 = vunpack.c.h.b16 %v1227
        %v4584 = vunpack.c.l.b16 %v1228
        %v4585 = vunpack.c.h.b16 %v1228
        %v4586 = vunpack.c.l.b16 %v1229
        %v4587 = vunpack.c.h.b16 %v1229
        %v4588 = vunpack.c.l.b16 %v1230
        %v4589 = vunpack.c.h.b16 %v1230
        %v4590 = vunpack.c.l.b16 %v1231
        %v4591 = vunpack.c.h.b16 %v1231
        %v4592 = vunpack.c.l.b16 %v1232
        %v4593 = vunpack.c.h.b16 %v1232
        %v4594 = vunpack.c.l.b16 %v1233
        %v4595 = vunpack.c.h.b16 %v1233
        %v4596 = vunpack.c.l.b16 %v1234
        %v4597 = vunpack.c.h.b16 %v1234
        %v4598 = vunpack.c.l.b16 %v1235
        %v4599 = vunpack.c.h.b16 %v1235
        %v4600 = vunpack.c.l.b16 %v1236
        %v4601 = vunpack.c.h.b16 %v1236
        %v4602 = vunpack.c.l.b16 %v1237
        %v4603 = vunpack.c.h.b16 %v1237
        %v4604 = vunpack.c.l.b16 %v1238
        %v4605 = vunpack.c.h.b16 %v1238
        %v4606 = vunpack.c.l.b16 %v1239
        %v4607 = vunpack.c.h.b16 %v1239
        %v4608 = vunpack.c.l.b16 %v1240
        %v4609 = vunpack.c.h.b16 %v1240
        %v4610 = vunpack.c.l.b16 %v1241
        %v4611 = vunpack.c.h.b16 %v1241
        %v4612 = vunpack.c.l.b16 %v1242
        %v4613 = vunpack.c.h.b16 %v1242
        %v4614 = vunpack.c.l.b16 %v1243
        %v4615 = vunpack.c.h.b16 %v1243
        %v4616 = vunpack.c.l.b16 %v1244
        %v4617 = vunpack.c.h.b16 %v1244
        %v4618 = vunpack.c.l.b16 %v1245
        %v4619 = vunpack.c.h.b16 %v1245
        %v4620 = vunpack.c.l.b16 %v1246
        %v4621 = vunpack.c.h.b16 %v1246
        %v4622 = vunpack.c.l.b16 %v1247
        %v4623 = vunpack.c.h.b16 %v1247
        %v4624 = vunpack.c.l.b16 %v1248
        %v4625 = vunpack.c.h.b16 %v1248
        %v4626 = vunpack.c.l.b16 %v1249
        %v4627 = vunpack.c.h.b16 %v1249
        %v4628 = vunpack.c.l.b16 %v1250
        %v4629 = vunpack.c.h.b16 %v1250
        %v4630 = vunpack.c.l.b16 %v1251
        %v4631 = vunpack.c.h.b16 %v1251
        %v4632 = vunpack.c.l.b16 %v1252
        %v4633 = vunpack.c.h.b16 %v1252
        %v4634 = vunpack.c.l.b16 %v1253
        %v4635 = vunpack.c.h.b16 %v1253
        %v4636 = vunpack.c.l.b16 %v1254
        %v4637 = vunpack.c.h.b16 %v1254
        %v4638 = vunpack.c.l.b16 %v1255
        %v4639 = vunpack.c.h.b16 %v1255
        %v4640 = vunpack.c.l.b16 %v1256
        %v4641 = vunpack.c.h.b16 %v1256
        %v4642 = vunpack.c.l.b16 %v1257
        %v4643 = vunpack.c.h.b16 %v1257
        %v4644 = vunpack.c.l.b16 %v1258
        %v4645 = vunpack.c.h.b16 %v1258
        %v4646 = vunpack.c.l.b16 %v1259
        %v4647 = vunpack.c.h.b16 %v1259
        %v4648 = vunpack.c.l.b16 %v1260
        %v4649 = vunpack.c.h.b16 %v1260
        %v4650 = vunpack.c.l.b16 %v1261
        %v4651 = vunpack.c.h.b16 %v1261
        %v4652 = vunpack.c.l.b16 %v1262
        %v4653 = vunpack.c.h.b16 %v1262
        %v4654 = vunpack.c.l.b16 %v1263
        %v4655 = vunpack.c.h.b16 %v1263
        %v4656 = vunpack.c.l.b16 %v1264
        %v4657 = vunpack.c.h.b16 %v1264
        %v4658 = vunpack.c.l.b16 %v1265
        %v4659 = vunpack.c.h.b16 %v1265
        %v4660 = vunpack.c.l.b16 %v1266
        %v4661 = vunpack.c.h.b16 %v1266
        %v4662 = vunpack.c.l.b16 %v1267
        %v4663 = vunpack.c.h.b16 %v1267
        %v4664 = vunpack.c.l.b16 %v1268
        %v4665 = vunpack.c.h.b16 %v1268
        %v4666 = vunpack.c.l.b16 %v1269
        %v4667 = vunpack.c.h.b16 %v1269
        %v4668 = vunpack.c.l.b16 %v1270
        %v4669 = vunpack.c.h.b16 %v1270
        %v4670 = vunpack.c.l.b16 %v1271
        %v4671 = vunpack.c.h.b16 %v1271
        %v4672 = vunpack.c.l.b16 %v1272
        %v4673 = vunpack.c.h.b16 %v1272
        %v4674 = vunpack.c.l.b16 %v1273
        %v4675 = vunpack.c.h.b16 %v1273
        %v4676 = vunpack.c.l.b16 %v1274
        %v4677 = vunpack.c.h.b16 %v1274
        %v4678 = vunpack.c.l.b16 %v1275
        %v4679 = vunpack.c.h.b16 %v1275
        %v4680 = vunpack.c.l.b16 %v1276
        %v4681 = vunpack.c.h.b16 %v1276
        %v4682 = vunpack.c.l.b16 %v1277
        %v4683 = vunpack.c.h.b16 %v1277
        %v4684 = vunpack.c.l.b16 %v1278
        %v4685 = vunpack.c.h.b16 %v1278
        %v4686 = vunpack.c.l.b16 %v1279
        %v4687 = vunpack.c.h.b16 %v1279
        %v4688 = vunpack.c.l.b16 %v1280
        %v4689 = vunpack.c.h.b16 %v1280
        %v4690 = vunpack.c.l.b16 %v1281
        %v4691 = vunpack.c.h.b16 %v1281
        %v4692 = vunpack.c.l.b16 %v1282
        %v4693 = vunpack.c.h.b16 %v1282
        %v4694 = vunpack.c.l.b16 %v1283
        %v4695 = vunpack.c.h.b16 %v1283
        %v4696 = vunpack.c.l.b16 %v1284
        %v4697 = vunpack.c.h.b16 %v1284
        %v4698 = vunpack.c.l.b16 %v1285
        %v4699 = vunpack.c.h.b16 %v1285
        %v4700 = vunpack.c.l.b16 %v1286
        %v4701 = vunpack.c.h.b16 %v1286
        %v4702 = vunpack.c.l.b16 %v1287
        %v4703 = vunpack.c.h.b16 %v1287
        %v4704 = vunpack.c.l.b16 %v1288
        %v4705 = vunpack.c.h.b16 %v1288
        %v4706 = vunpack.c.l.b16 %v1289
        %v4707 = vunpack.c.h.b16 %v1289
        %v4708 = vunpack.c.l.b16 %v1290
        %v4709 = vunpack.c.h.b16 %v1290
        %v4710 = vunpack.c.l.b16 %v1291
        %v4711 = vunpack.c.h.b16 %v1291
        %v4712 = vunpack.c.l.b16 %v1292
        %v4713 = vunpack.c.h.b16 %v1292
        %v4714 = vunpack.c.l.b16 %v1293
        %v4715 = vunpack.c.h.b16 %v1293
        %v4716 = vunpack.c.l.b16 %v1294
        %v4717 = vunpack.c.h.b16 %v1294
        %v4718 = vunpack.c.l.b16 %v1295
        %v4719 = vunpack.c.h.b16 %v1295
        %v4720 = vunpack.c.l.b16 %v1296
        %v4721 = vunpack.c.h.b16 %v1296
        %v4722 = vunpack.c.l.b16 %v1297
        %v4723 = vunpack.c.h.b16 %v1297
        %v4724 = vunpack.c.l.b16 %v1298
        %v4725 = vunpack.c.h.b16 %v1298
        %v4726 = vunpack.c.l.b16 %v1299
        %v4727 = vunpack.c.h.b16 %v1299
        %v4728 = vunpack.c.l.b16 %v1300
        %v4729 = vunpack.c.h.b16 %v1300
        %v4730 = vunpack.c.l.b16 %v1301
        %v4731 = vunpack.c.h.b16 %v1301
        %v4732 = vunpack.c.l.b16 %v1302
        %v4733 = vunpack.c.h.b16 %v1302
        %v4734 = vunpack.c.l.b16 %v1303
        %v4735 = vunpack.c.h.b16 %v1303
        %v4736 = vunpack.c.l.b16 %v1304
        %v4737 = vunpack.c.h.b16 %v1304
        %v4738 = vunpack.c.l.b16 %v1305
        %v4739 = vunpack.c.h.b16 %v1305
        %v4740 = vunpack.c.l.b16 %v1306
        %v4741 = vunpack.c.h.b16 %v1306
        %v4742 = vunpack.c.l.b16 %v1307
        %v4743 = vunpack.c.h.b16 %v1307
        %v4744 = vunpack.c.l.b16 %v1308
        %v4745 = vunpack.c.h.b16 %v1308
        %v4746 = vunpack.c.l.b16 %v1309
        %v4747 = vunpack.c.h.b16 %v1309
        %v4748 = vunpack.c.l.b16 %v1310
        %v4749 = vunpack.c.h.b16 %v1310
        %v4750 = vunpack.c.l.b16 %v1311
        %v4751 = vunpack.c.h.b16 %v1311
        %v4752 = vunpack.c.l.b16 %v1312
        %v4753 = vunpack.c.h.b16 %v1312
        %v4754 = vunpack.c.l.b16 %v1313
        %v4755 = vunpack.c.h.b16 %v1313
        %v4756 = vunpack.c.l.b16 %v1314
        %v4757 = vunpack.c.h.b16 %v1314
        %v4758 = vunpack.c.l.b16 %v1315
        %v4759 = vunpack.c.h.b16 %v1315
        %v4760 = vunpack.c.l.b16 %v1316
        %v4761 = vunpack.c.h.b16 %v1316
        %v4762 = vunpack.c.l.b16 %v1317
        %v4763 = vunpack.c.h.b16 %v1317
        %v4764 = vunpack.c.l.b16 %v1318
        %v4765 = vunpack.c.h.b16 %v1318
        %v4766 = vunpack.c.l.b16 %v1319
        %v4767 = vunpack.c.h.b16 %v1319
        %v4768 = vunpack.c.l.b16 %v1320
        %v4769 = vunpack.c.h.b16 %v1320
        %v4770 = vunpack.c.l.b16 %v1321
        %v4771 = vunpack.c.h.b16 %v1321
        %v4772 = vunpack.c.l.b16 %v1322
        %v4773 = vunpack.c.h.b16 %v1322
        %v4774 = vunpack.c.l.b16 %v1323
        %v4775 = vunpack.c.h.b16 %v1323
        %v4776 = vunpack.c.l.b16 %v1324
        %v4777 = vunpack.c.h.b16 %v1324
        %v4778 = vunpack.c.l.b16 %v1325
        %v4779 = vunpack.c.h.b16 %v1325
        %v4780 = vunpack.c.l.b16 %v1326
        %v4781 = vunpack.c.h.b16 %v1326
        %v4782 = vunpack.c.l.b16 %v1327
        %v4783 = vunpack.c.h.b16 %v1327
        %v4784 = vunpack.c.l.b16 %v1328
        %v4785 = vunpack.c.h.b16 %v1328
        %v4786 = vunpack.c.l.b16 %v1329
        %v4787 = vunpack.c.h.b16 %v1329
        %v4788 = vunpack.c.l.b16 %v1330
        %v4789 = vunpack.c.h.b16 %v1330
        %v4790 = vunpack.c.l.b16 %v1331
        %v4791 = vunpack.c.h.b16 %v1331
        %v4792 = vunpack.c.l.b16 %v1332
        %v4793 = vunpack.c.h.b16 %v1332
        %v4794 = vunpack.c.l.b16 %v1333
        %v4795 = vunpack.c.h.b16 %v1333
        %v4796 = vunpack.c.l.b16 %v1334
        %v4797 = vunpack.c.h.b16 %v1334
        %v4798 = vunpack.c.l.b16 %v1335
        %v4799 = vunpack.c.h.b16 %v1335
        %v4800 = vunpack.c.l.b16 %v1336
        %v4801 = vunpack.c.h.b16 %v1336
        %v4802 = vunpack.c.l.b16 %v1337
        %v4803 = vunpack.c.h.b16 %v1337
        %v4804 = vunpack.c.l.b16 %v1338
        %v4805 = vunpack.c.h.b16 %v1338
        %v4806 = vunpack.c.l.b16 %v1339
        %v4807 = vunpack.c.h.b16 %v1339
        %v4808 = vunpack.c.l.b16 %v1340
        %v4809 = vunpack.c.h.b16 %v1340
        %v4810 = vunpack.c.l.b16 %v1341
        %v4811 = vunpack.c.h.b16 %v1341
        %v4812 = vunpack.c.l.b16 %v1342
        %v4813 = vunpack.c.h.b16 %v1342
        %v4814 = vunpack.c.l.b16 %v1343
        %v4815 = vunpack.c.h.b16 %v1343
        %v4816 = vunpack.c.l.b16 %v1344
        %v4817 = vunpack.c.h.b16 %v1344
        %v4818 = vunpack.c.l.b16 %v1345
        %v4819 = vunpack.c.h.b16 %v1345
        %v4820 = vunpack.c.l.b16 %v1346
        %v4821 = vunpack.c.h.b16 %v1346
        %v4822 = vunpack.c.l.b16 %v1347
        %v4823 = vunpack.c.h.b16 %v1347
        %v4824 = vunpack.c.l.b16 %v1348
        %v4825 = vunpack.c.h.b16 %v1348
        %v4826 = vunpack.c.l.b16 %v1349
        %v4827 = vunpack.c.h.b16 %v1349
        %v4828 = vunpack.c.l.b16 %v1350
        %v4829 = vunpack.c.h.b16 %v1350
        %v4830 = vunpack.c.l.b16 %v1351
        %v4831 = vunpack.c.h.b16 %v1351
        %v4832 = vunpack.c.l.b16 %v1352
        %v4833 = vunpack.c.h.b16 %v1352
        %v4834 = vunpack.c.l.b16 %v1353
        %v4835 = vunpack.c.h.b16 %v1353
        %v4836 = vunpack.c.l.b16 %v1354
        %v4837 = vunpack.c.h.b16 %v1354
        %v4838 = vunpack.c.l.b16 %v1355
        %v4839 = vunpack.c.h.b16 %v1355
        %v4840 = vunpack.c.l.b16 %v1356
        %v4841 = vunpack.c.h.b16 %v1356
        %v4842 = vunpack.c.l.b16 %v1357
        %v4843 = vunpack.c.h.b16 %v1357
        %v4844 = vunpack.c.l.b16 %v1358
        %v4845 = vunpack.c.h.b16 %v1358
        %v4846 = vunpack.c.l.b16 %v1359
        %v4847 = vunpack.c.h.b16 %v1359
        %v4848 = vunpack.c.l.b16 %v1360
        %v4849 = vunpack.c.h.b16 %v1360
        %v4850 = vunpack.c.l.b16 %v1361
        %v4851 = vunpack.c.h.b16 %v1361
        %v4852 = vunpack.c.l.b16 %v1362
        %v4853 = vunpack.c.h.b16 %v1362
        %v4854 = vunpack.c.l.b16 %v1363
        %v4855 = vunpack.c.h.b16 %v1363
        %v4856 = vunpack.c.l.b16 %v1364
        %v4857 = vunpack.c.h.b16 %v1364
        %v4858 = vunpack.c.l.b16 %v1365
        %v4859 = vunpack.c.h.b16 %v1365
        %v4860 = vunpack.c.l.b16 %v1366
        %v4861 = vunpack.c.h.b16 %v1366
        %v4862 = vunpack.c.l.b16 %v1367
        %v4863 = vunpack.c.h.b16 %v1367
        %v4864 = vunpack.c.l.b16 %v1368
        %v4865 = vunpack.c.h.b16 %v1368
        %v4866 = vunpack.c.l.b16 %v1369
        %v4867 = vunpack.c.h.b16 %v1369
        %v4868 = vunpack.c.l.b16 %v1370
        %v4869 = vunpack.c.h.b16 %v1370
        %v4870 = vunpack.c.l.b16 %v1371
        %v4871 = vunpack.c.h.b16 %v1371
        %v4872 = vunpack.c.l.b16 %v1372
        %v4873 = vunpack.c.h.b16 %v1372
        %v4874 = vunpack.c.l.b16 %v1373
        %v4875 = vunpack.c.h.b16 %v1373
        %v4876 = vunpack.c.l.b16 %v1374
        %v4877 = vunpack.c.h.b16 %v1374
        %v4878 = vunpack.c.l.b16 %v1375
        %v4879 = vunpack.c.h.b16 %v1375
        %v4880 = vunpack.c.l.b16 %v1376
        %v4881 = vunpack.c.h.b16 %v1376
        %v4882 = vunpack.c.l.b16 %v1377
        %v4883 = vunpack.c.h.b16 %v1377
        %v4884 = vunpack.c.l.b16 %v1378
        %v4885 = vunpack.c.h.b16 %v1378
        %v4886 = vunpack.c.l.b16 %v1379
        %v4887 = vunpack.c.h.b16 %v1379
        %v4888 = vunpack.c.l.b16 %v1380
        %v4889 = vunpack.c.h.b16 %v1380
        %v4890 = vunpack.c.l.b16 %v1381
        %v4891 = vunpack.c.h.b16 %v1381
        %v4892 = vunpack.c.l.b16 %v1382
        %v4893 = vunpack.c.h.b16 %v1382
        %v4894 = vunpack.c.l.b16 %v1383
        %v4895 = vunpack.c.h.b16 %v1383
        %v4896 = vunpack.c.l.b16 %v1384
        %v4897 = vunpack.c.h.b16 %v1384
        %v4898 = vunpack.c.l.b16 %v1385
        %v4899 = vunpack.c.h.b16 %v1385
        %v4900 = vunpack.c.l.b16 %v1386
        %v4901 = vunpack.c.h.b16 %v1386
        %v4902 = vunpack.c.l.b16 %v1387
        %v4903 = vunpack.c.h.b16 %v1387
        %v4904 = vunpack.c.l.b16 %v1388
        %v4905 = vunpack.c.h.b16 %v1388
        %v4906 = vunpack.c.l.b16 %v1389
        %v4907 = vunpack.c.h.b16 %v1389
        %v4908 = vunpack.c.l.b16 %v1390
        %v4909 = vunpack.c.h.b16 %v1390
        %v4910 = vunpack.c.l.b16 %v1391
        %v4911 = vunpack.c.h.b16 %v1391
        %v4912 = vunpack.c.l.b16 %v1392
        %v4913 = vunpack.c.h.b16 %v1392
        %v4914 = vunpack.c.l.b16 %v1393
        %v4915 = vunpack.c.h.b16 %v1393
        %v4916 = vunpack.c.l.b16 %v1394
        %v4917 = vunpack.c.h.b16 %v1394
        %v4918 = vunpack.c.l.b16 %v1395
        %v4919 = vunpack.c.h.b16 %v1395
        %v4920 = vunpack.c.l.b16 %v1396
        %v4921 = vunpack.c.h.b16 %v1396
        %v4922 = vunpack.c.l.b16 %v1397
        %v4923 = vunpack.c.h.b16 %v1397
        %v4924 = vunpack.c.l.b16 %v1398
        %v4925 = vunpack.c.h.b16 %v1398
        %v4926 = vunpack.c.l.b16 %v1399
        %v4927 = vunpack.c.h.b16 %v1399
        %v4928 = vunpack.c.l.b16 %v1400
        %v4929 = vunpack.c.h.b16 %v1400
        %v4930 = vunpack.c.l.b16 %v1401
        %v4931 = vunpack.c.h.b16 %v1401
        %v4932 = vunpack.c.l.b16 %v1402
        %v4933 = vunpack.c.h.b16 %v1402
        %v4934 = vunpack.c.l.b16 %v1403
        %v4935 = vunpack.c.h.b16 %v1403
        %v4936 = vunpack.c.l.b16 %v1404
        %v4937 = vunpack.c.h.b16 %v1404
        %v4938 = vunpack.c.l.b16 %v1405
        %v4939 = vunpack.c.h.b16 %v1405
        %v4940 = vunpack.c.l.b16 %v1406
        %v4941 = vunpack.c.h.b16 %v1406
        %v4942 = vunpack.c.l.b16 %v1407
        %v4943 = vunpack.c.h.b16 %v1407
        %v4944 = vunpack.c.l.b16 %v1408
        %v4945 = vunpack.c.h.b16 %v1408
        %v4946 = vunpack.c.l.b16 %v1409
        %v4947 = vunpack.c.h.b16 %v1409
        %v4948 = vunpack.c.l.b16 %v1410
        %v4949 = vunpack.c.h.b16 %v1410
        %v4950 = vunpack.c.l.b16 %v1411
        %v4951 = vunpack.c.h.b16 %v1411
        %v4952 = vunpack.c.l.b16 %v1412
        %v4953 = vunpack.c.h.b16 %v1412
        %v4954 = vunpack.c.l.b16 %v1413
        %v4955 = vunpack.c.h.b16 %v1413
        %v4956 = vunpack.c.l.b16 %v1414
        %v4957 = vunpack.c.h.b16 %v1414
        %v4958 = vunpack.c.l.b16 %v1415
        %v4959 = vunpack.c.h.b16 %v1415
        %v4960 = vunpack.c.l.b16 %v1416
        %v4961 = vunpack.c.h.b16 %v1416
        %v4962 = vunpack.c.l.b16 %v1417
        %v4963 = vunpack.c.h.b16 %v1417
        %v4964 = vunpack.c.l.b16 %v1418
        %v4965 = vunpack.c.h.b16 %v1418
        %v4966 = vunpack.c.l.b16 %v1419
        %v4967 = vunpack.c.h.b16 %v1419
        %v4968 = vunpack.c.l.b16 %v1420
        %v4969 = vunpack.c.h.b16 %v1420
        %v4970 = vunpack.c.l.b16 %v1421
        %v4971 = vunpack.c.h.b16 %v1421
        %v4972 = vunpack.c.l.b16 %v1422
        %v4973 = vunpack.c.h.b16 %v1422
        %v4974 = vunpack.c.l.b16 %v1423
        %v4975 = vunpack.c.h.b16 %v1423
        %v4976 = vunpack.c.l.b16 %v1424
        %v4977 = vunpack.c.h.b16 %v1424
        %v4978 = vunpack.c.l.b16 %v1425
        %v4979 = vunpack.c.h.b16 %v1425
        %v4980 = vunpack.c.l.b16 %v1426
        %v4981 = vunpack.c.h.b16 %v1426
        %v4982 = vunpack.c.l.b16 %v1427
        %v4983 = vunpack.c.h.b16 %v1427
        %v4984 = vunpack.c.l.b16 %v1428
        %v4985 = vunpack.c.h.b16 %v1428
        %v4986 = vunpack.c.l.b16 %v1429
        %v4987 = vunpack.c.h.b16 %v1429
        %v4988 = vunpack.c.l.b16 %v1430
        %v4989 = vunpack.c.h.b16 %v1430
        %v4990 = vunpack.c.l.b16 %v1431
        %v4991 = vunpack.c.h.b16 %v1431
        %v4992 = vunpack.c.l.b16 %v1432
        %v4993 = vunpack.c.h.b16 %v1432
        %v4994 = vunpack.c.l.b16 %v1433
        %v4995 = vunpack.c.h.b16 %v1433
        %v4996 = vunpack.c.l.b16 %v1434
        %v4997 = vunpack.c.h.b16 %v1434
        %v4998 = vunpack.c.l.b16 %v1435
        %v4999 = vunpack.c.h.b16 %v1435
        %v5000 = vunpack.c.l.b16 %v1436
        %v5001 = vunpack.c.h.b16 %v1436
        %v5002 = vunpack.c.l.b16 %v1437
        %v5003 = vunpack.c.h.b16 %v1437
        %v5004 = vunpack.c.l.b16 %v1438
        %v5005 = vunpack.c.h.b16 %v1438
        %v5006 = vunpack.c.l.b16 %v1439
        %v5007 = vunpack.c.h.b16 %v1439
        %v5008 = vunpack.c.l.b16 %v1440
        %v5009 = vunpack.c.h.b16 %v1440
        %v5010 = vunpack.c.l.b16 %v1441
        %v5011 = vunpack.c.h.b16 %v1441
        %v5012 = vunpack.c.l.b16 %v1442
        %v5013 = vunpack.c.h.b16 %v1442
        %v5014 = vunpack.c.l.b16 %v1443
        %v5015 = vunpack.c.h.b16 %v1443
        %v5016 = vunpack.c.l.b16 %v1444
        %v5017 = vunpack.c.h.b16 %v1444
        %v5018 = vunpack.c.l.b16 %v1445
        %v5019 = vunpack.c.h.b16 %v1445
        %v5020 = vunpack.c.l.b16 %v1446
        %v5021 = vunpack.c.h.b16 %v1446
        %v5022 = vunpack.c.l.b16 %v1447
        %v5023 = vunpack.c.h.b16 %v1447
        %v5024 = vunpack.c.l.b16 %v1448
        %v5025 = vunpack.c.h.b16 %v1448
        %v5026 = vunpack.c.l.b16 %v1449
        %v5027 = vunpack.c.h.b16 %v1449
        %v5028 = vunpack.c.l.b16 %v1450
        %v5029 = vunpack.c.h.b16 %v1450
        %v5030 = vunpack.c.l.b16 %v1451
        %v5031 = vunpack.c.h.b16 %v1451
        %v5032 = vunpack.c.l.b16 %v1452
        %v5033 = vunpack.c.h.b16 %v1452
        %v5034 = vunpack.c.l.b16 %v1453
        %v5035 = vunpack.c.h.b16 %v1453
        %v5036 = vunpack.c.l.b16 %v1454
        %v5037 = vunpack.c.h.b16 %v1454
        %v5038 = vunpack.c.l.b16 %v1455
        %v5039 = vunpack.c.h.b16 %v1455
        %v5040 = vunpack.c.l.b16 %v1456
        %v5041 = vunpack.c.h.b16 %v1456
        %v5042 = vunpack.c.l.b16 %v1457
        %v5043 = vunpack.c.h.b16 %v1457
        %v5044 = vunpack.c.l.b16 %v1458
        %v5045 = vunpack.c.h.b16 %v1458
        %v5046 = vunpack.c.l.b16 %v1459
        %v5047 = vunpack.c.h.b16 %v1459
        %v5048 = vunpack.c.l.b16 %v1460
        %v5049 = vunpack.c.h.b16 %v1460
        %v5050 = vunpack.c.l.b16 %v1461
        %v5051 = vunpack.c.h.b16 %v1461
        %v5052 = vunpack.c.l.b16 %v1462
        %v5053 = vunpack.c.h.b16 %v1462
        %v5054 = vunpack.c.l.b16 %v1463
        %v5055 = vunpack.c.h.b16 %v1463
        %v5056 = vunpack.c.l.b16 %v1464
        %v5057 = vunpack.c.h.b16 %v1464
        %v5058 = vunpack.c.l.b16 %v1465
        %v5059 = vunpack.c.h.b16 %v1465
        %v5060 = vunpack.c.l.b16 %v1466
        %v5061 = vunpack.c.h.b16 %v1466
        %v5062 = vunpack.c.l.b16 %v1467
        %v5063 = vunpack.c.h.b16 %v1467
        %v5064 = vunpack.c.l.b16 %v1468
        %v5065 = vunpack.c.h.b16 %v1468
        %v5066 = vunpack.c.l.b16 %v1469
        %v5067 = vunpack.c.h.b16 %v1469
        %v5068 = vunpack.c.l.b16 %v1470
        %v5069 = vunpack.c.h.b16 %v1470
        %v5070 = vunpack.c.l.b16 %v1471
        %v5071 = vunpack.c.h.b16 %v1471
        %v5072 = vunpack.c.l.b16 %v1472
        %v5073 = vunpack.c.h.b16 %v1472
        %v5074 = vunpack.c.l.b16 %v1473
        %v5075 = vunpack.c.h.b16 %v1473
        %v5076 = vunpack.c.l.b16 %v1474
        %v5077 = vunpack.c.h.b16 %v1474
        %v5078 = vunpack.c.l.b16 %v1475
        %v5079 = vunpack.c.h.b16 %v1475
        %v5080 = vunpack.c.l.b16 %v1476
        %v5081 = vunpack.c.h.b16 %v1476
        %v5082 = vunpack.c.l.b16 %v1477
        %v5083 = vunpack.c.h.b16 %v1477
        %v5084 = vunpack.c.l.b16 %v1478
        %v5085 = vunpack.c.h.b16 %v1478
        %v5086 = vunpack.c.l.b16 %v1479
        %v5087 = vunpack.c.h.b16 %v1479
        %v5088 = vunpack.c.l.b16 %v1480
        %v5089 = vunpack.c.h.b16 %v1480
        %v5090 = vunpack.c.l.b16 %v1481
        %v5091 = vunpack.c.h.b16 %v1481
        %v5092 = vunpack.c.l.b16 %v1482
        %v5093 = vunpack.c.h.b16 %v1482
        %v5094 = vunpack.c.l.b16 %v1483
        %v5095 = vunpack.c.h.b16 %v1483
        %v5096 = vunpack.c.l.b16 %v1484
        %v5097 = vunpack.c.h.b16 %v1484
        %v5098 = vunpack.c.l.b16 %v1485
        %v5099 = vunpack.c.h.b16 %v1485
        %v5100 = vunpack.c.l.b16 %v1486
        %v5101 = vunpack.c.h.b16 %v1486
        %v5102 = vunpack.c.l.b16 %v1487
        %v5103 = vunpack.c.h.b16 %v1487
        %v5104 = vunpack.c.l.b16 %v1488
        %v5105 = vunpack.c.h.b16 %v1488
        %v5106 = vunpack.c.l.b16 %v1489
        %v5107 = vunpack.c.h.b16 %v1489
        %v5108 = vunpack.c.l.b16 %v1490
        %v5109 = vunpack.c.h.b16 %v1490
        %v5110 = vunpack.c.l.b16 %v1491
        %v5111 = vunpack.c.h.b16 %v1491
        %v5112 = vunpack.c.l.b16 %v1492
        %v5113 = vunpack.c.h.b16 %v1492
        %v5114 = vunpack.c.l.b16 %v1493
        %v5115 = vunpack.c.h.b16 %v1493
        %v5116 = vunpack.c.l.b16 %v1494
        %v5117 = vunpack.c.h.b16 %v1494
        %v5118 = vunpack.c.l.b16 %v1495
        %v5119 = vunpack.c.h.b16 %v1495
        %v5120 = vunpack.c.l.b16 %v1496
        %v5121 = vunpack.c.h.b16 %v1496
        %v5122 = vunpack.c.l.b16 %v1497
        %v5123 = vunpack.c.h.b16 %v1497
        %v5124 = vunpack.c.l.b16 %v1498
        %v5125 = vunpack.c.h.b16 %v1498
        %v5126 = vunpack.c.l.b16 %v1499
        %v5127 = vunpack.c.h.b16 %v1499
        %v5128 = vunpack.c.l.b16 %v1500
        %v5129 = vunpack.c.h.b16 %v1500
        %v5130 = vunpack.c.l.b16 %v1501
        %v5131 = vunpack.c.h.b16 %v1501
        %v5132 = vunpack.c.l.b16 %v1502
        %v5133 = vunpack.c.h.b16 %v1502
        %v5134 = vunpack.c.l.b16 %v1503
        %v5135 = vunpack.c.h.b16 %v1503
        %v5136 = vunpack.c.l.b16 %v1504
        %v5137 = vunpack.c.h.b16 %v1504
        %v5138 = vunpack.c.l.b16 %v1505
        %v5139 = vunpack.c.h.b16 %v1505
        %v5140 = vunpack.c.l.b16 %v1506
        %v5141 = vunpack.c.h.b16 %v1506
        %v5142 = vunpack.c.l.b16 %v1507
        %v5143 = vunpack.c.h.b16 %v1507
        %v5144 = vunpack.c.l.b16 %v1508
        %v5145 = vunpack.c.h.b16 %v1508
        %v5146 = vunpack.c.l.b16 %v1509
        %v5147 = vunpack.c.h.b16 %v1509
        %v5148 = vunpack.c.l.b16 %v1510
        %v5149 = vunpack.c.h.b16 %v1510
        %v5150 = vunpack.c.l.b16 %v1511
        %v5151 = vunpack.c.h.b16 %v1511
        %v5152 = vunpack.c.l.b16 %v1512
        %v5153 = vunpack.c.h.b16 %v1512
        %v5154 = vunpack.c.l.b16 %v1513
        %v5155 = vunpack.c.h.b16 %v1513
        %v5156 = vunpack.c.l.b16 %v1514
        %v5157 = vunpack.c.h.b16 %v1514
        %v5158 = vunpack.c.l.b16 %v1515
        %v5159 = vunpack.c.h.b16 %v1515
        %v5160 = vunpack.c.l.b16 %v1516
        %v5161 = vunpack.c.h.b16 %v1516
        %v5162 = vunpack.c.l.b16 %v1517
        %v5163 = vunpack.c.h.b16 %v1517
        %v5164 = vunpack.c.l.b16 %v1518
        %v5165 = vunpack.c.h.b16 %v1518
        %v5166 = vunpack.c.l.b16 %v1519
        %v5167 = vunpack.c.h.b16 %v1519
        %v5168 = vunpack.c.l.b16 %v1520
        %v5169 = vunpack.c.h.b16 %v1520
        %v5170 = vunpack.c.l.b16 %v1521
        %v5171 = vunpack.c.h.b16 %v1521
        %v5172 = vunpack.c.l.b16 %v1522
        %v5173 = vunpack.c.h.b16 %v1522
        %v5174 = vunpack.c.l.b16 %v1523
        %v5175 = vunpack.c.h.b16 %v1523
        %v5176 = vunpack.c.l.b16 %v1524
        %v5177 = vunpack.c.h.b16 %v1524
        %v5178 = vunpack.c.l.b16 %v1525
        %v5179 = vunpack.c.h.b16 %v1525
        %v5180 = vunpack.c.l.b16 %v1526
        %v5181 = vunpack.c.h.b16 %v1526
        %v5182 = vunpack.c.l.b16 %v1527
        %v5183 = vunpack.c.h.b16 %v1527
        %v5184 = vunpack.c.l.b16 %v1528
        %v5185 = vunpack.c.h.b16 %v1528
        %v5186 = vunpack.c.l.b16 %v1529
        %v5187 = vunpack.c.h.b16 %v1529
        %v5188 = vunpack.c.l.b16 %v1530
        %v5189 = vunpack.c.h.b16 %v1530
        %v5190 = vunpack.c.l.b16 %v1531
        %v5191 = vunpack.c.h.b16 %v1531
        %v5192 = vunpack.c.l.b16 %v1532
        %v5193 = vunpack.c.h.b16 %v1532
        %v5194 = vunpack.c.l.b16 %v1533
        %v5195 = vunpack.c.h.b16 %v1533
        %v5196 = vunpack.c.l.b16 %v1534
        %v5197 = vunpack.c.h.b16 %v1534
        %v5198 = vunpack.c.l.b16 %v1535
        %v5199 = vunpack.c.h.b16 %v1535
        %v5200 = vunpack.c.l.b16 %v1536
        %v5201 = vunpack.c.h.b16 %v1536
        %v5202 = vunpack.c.l.b16 %v1537
        %v5203 = vunpack.c.h.b16 %v1537
        %v5204 = vunpack.c.l.b16 %v1538
        %v5205 = vunpack.c.h.b16 %v1538
        %v5206 = vunpack.c.l.b16 %v1539
        %v5207 = vunpack.c.h.b16 %v1539
        %v5208 = vunpack.c.l.b16 %v1540
        %v5209 = vunpack.c.h.b16 %v1540
        %v5210 = vunpack.c.l.b16 %v1541
        %v5211 = vunpack.c.h.b16 %v1541
        %v5212 = vunpack.c.l.b16 %v1542
        %v5213 = vunpack.c.h.b16 %v1542
        %v5214 = vunpack.c.l.b16 %v1543
        %v5215 = vunpack.c.h.b16 %v1543
        %v5216 = vunpack.c.l.b16 %v1544
        %v5217 = vunpack.c.h.b16 %v1544
        %v5218 = vunpack.c.l.b16 %v1545
        %v5219 = vunpack.c.h.b16 %v1545
        %v5220 = vunpack.c.l.b16 %v1546
        %v5221 = vunpack.c.h.b16 %v1546
        %v5222 = vunpack.c.l.b16 %v1547
        %v5223 = vunpack.c.h.b16 %v1547
        %v5224 = vunpack.c.l.b16 %v1548
        %v5225 = vunpack.c.h.b16 %v1548
        %v5226 = vunpack.c.l.b16 %v1549
        %v5227 = vunpack.c.h.b16 %v1549
        %v5228 = vunpack.c.l.b16 %v1550
        %v5229 = vunpack.c.h.b16 %v1550
        %v5230 = vunpack.c.l.b16 %v1551
        %v5231 = vunpack.c.h.b16 %v1551
        %v5232 = vunpack.c.l.b16 %v1552
        %v5233 = vunpack.c.h.b16 %v1552
        %v5234 = vunpack.c.l.b16 %v1553
        %v5235 = vunpack.c.h.b16 %v1553
        %v5236 = vunpack.c.l.b16 %v1554
        %v5237 = vunpack.c.h.b16 %v1554
        %v5238 = vunpack.c.l.b16 %v1555
        %v5239 = vunpack.c.h.b16 %v1555
        %v5240 = vunpack.c.l.b16 %v1556
        %v5241 = vunpack.c.h.b16 %v1556
        %v5242 = vunpack.c.l.b16 %v1557
        %v5243 = vunpack.c.h.b16 %v1557
        %v5244 = vunpack.c.l.b16 %v1558
        %v5245 = vunpack.c.h.b16 %v1558
        %v5246 = vunpack.c.l.b16 %v1559
        %v5247 = vunpack.c.h.b16 %v1559
        %v5248 = vunpack.c.l.b16 %v1560
        %v5249 = vunpack.c.h.b16 %v1560
        %v5250 = vunpack.c.l.b16 %v1561
        %v5251 = vunpack.c.h.b16 %v1561
        %v5252 = vunpack.c.l.b16 %v1562
        %v5253 = vunpack.c.h.b16 %v1562
        %v5254 = vunpack.c.l.b16 %v1563
        %v5255 = vunpack.c.h.b16 %v1563
        %v5256 = vunpack.c.l.b16 %v1564
        %v5257 = vunpack.c.h.b16 %v1564
        %v5258 = vunpack.c.l.b16 %v1565
        %v5259 = vunpack.c.h.b16 %v1565
        %v5260 = vunpack.c.l.b16 %v1566
        %v5261 = vunpack.c.h.b16 %v1566
        %v5262 = vunpack.c.l.b16 %v1567
        %v5263 = vunpack.c.h.b16 %v1567
        %v5264 = vunpack.c.l.b16 %v1568
        %v5265 = vunpack.c.h.b16 %v1568
        %v5266 = vunpack.c.l.b16 %v1569
        %v5267 = vunpack.c.h.b16 %v1569
        %v5268 = vunpack.c.l.b16 %v1570
        %v5269 = vunpack.c.h.b16 %v1570
        %v5270 = vunpack.c.l.b16 %v1571
        %v5271 = vunpack.c.h.b16 %v1571
        %v5272 = vunpack.c.l.b16 %v1572
        %v5273 = vunpack.c.h.b16 %v1572
        %v5274 = vunpack.c.l.b16 %v1573
        %v5275 = vunpack.c.h.b16 %v1573
        %v5276 = vunpack.c.l.b16 %v1574
        %v5277 = vunpack.c.h.b16 %v1574
        %v5278 = vunpack.c.l.b16 %v1575
        %v5279 = vunpack.c.h.b16 %v1575
        %v5280 = vunpack.c.l.b16 %v1576
        %v5281 = vunpack.c.h.b16 %v1576
        %v5282 = vunpack.c.l.b16 %v1577
        %v5283 = vunpack.c.h.b16 %v1577
        %v5284 = vunpack.c.l.b16 %v1578
        %v5285 = vunpack.c.h.b16 %v1578
        %v5286 = vunpack.c.l.b16 %v1579
        %v5287 = vunpack.c.h.b16 %v1579
        %v5288 = vunpack.c.l.b16 %v1580
        %v5289 = vunpack.c.h.b16 %v1580
        %v5290 = vunpack.c.l.b16 %v1581
        %v5291 = vunpack.c.h.b16 %v1581
        %v5292 = vunpack.c.l.b16 %v1582
        %v5293 = vunpack.c.h.b16 %v1582
        %v5294 = vunpack.c.l.b16 %v1583
        %v5295 = vunpack.c.h.b16 %v1583
        %v5296 = vunpack.c.l.b16 %v1584
        %v5297 = vunpack.c.h.b16 %v1584
        %v5298 = vunpack.c.l.b16 %v1585
        %v5299 = vunpack.c.h.b16 %v1585
        %v5300 = vunpack.c.l.b16 %v1586
        %v5301 = vunpack.c.h.b16 %v1586
        %v5302 = vunpack.c.l.b16 %v1587
        %v5303 = vunpack.c.h.b16 %v1587
        %v5304 = vunpack.c.l.b16 %v1588
        %v5305 = vunpack.c.h.b16 %v1588
        %v5306 = vunpack.c.l.b16 %v1589
        %v5307 = vunpack.c.h.b16 %v1589
        %v5308 = vunpack.c.l.b16 %v1590
        %v5309 = vunpack.c.h.b16 %v1590
        %v5310 = vunpack.c.l.b16 %v1591
        %v5311 = vunpack.c.h.b16 %v1591
        %v5312 = vunpack.c.l.b16 %v1592
        %v5313 = vunpack.c.h.b16 %v1592
        %v5314 = vunpack.c.l.b16 %v1593
        %v5315 = vunpack.c.h.b16 %v1593
        %v5316 = vunpack.c.l.b16 %v1594
        %v5317 = vunpack.c.h.b16 %v1594
        %v5318 = vunpack.c.l.b16 %v1595
        %v5319 = vunpack.c.h.b16 %v1595
        %v5320 = vunpack.c.l.b16 %v1596
        %v5321 = vunpack.c.h.b16 %v1596
        %v5322 = vunpack.c.l.b16 %v1597
        %v5323 = vunpack.c.h.b16 %v1597
        %v5324 = vunpack.c.l.b16 %v1598
        %v5325 = vunpack.c.h.b16 %v1598
        %v5326 = vunpack.c.l.b16 %v1599
        %v5327 = vunpack.c.h.b16 %v1599
        %v5328 = vunpack.c.l.b16 %v1600
        %v5329 = vunpack.c.h.b16 %v1600
        %v5330 = vunpack.c.l.b16 %v1601
        %v5331 = vunpack.c.h.b16 %v1601
        %v5332 = vunpack.c.l.b16 %v1602
        %v5333 = vunpack.c.h.b16 %v1602
        %v5334 = vunpack.c.l.b16 %v1603
        %v5335 = vunpack.c.h.b16 %v1603
        %v5336 = vunpack.c.l.b16 %v1604
        %v5337 = vunpack.c.h.b16 %v1604
        %v5338 = vunpack.c.l.b16 %v1605
        %v5339 = vunpack.c.h.b16 %v1605
        %v5340 = vunpack.c.l.b16 %v1606
        %v5341 = vunpack.c.h.b16 %v1606
        %v5342 = vunpack.c.l.b16 %v1607
        %v5343 = vunpack.c.h.b16 %v1607
        %v5344 = vunpack.c.l.b16 %v1608
        %v5345 = vunpack.c.h.b16 %v1608
        %v5346 = vunpack.c.l.b16 %v1609
        %v5347 = vunpack.c.h.b16 %v1609
        %v5348 = vunpack.c.l.b16 %v1610
        %v5349 = vunpack.c.h.b16 %v1610
        %v5350 = vunpack.c.l.b16 %v1611
        %v5351 = vunpack.c.h.b16 %v1611
        %v5352 = vunpack.c.l.b16 %v1612
        %v5353 = vunpack.c.h.b16 %v1612
        %v5354 = vunpack.c.l.b16 %v1613
        %v5355 = vunpack.c.h.b16 %v1613
        %v5356 = vunpack.c.l.b16 %v1614
        %v5357 = vunpack.c.h.b16 %v1614
        %v5358 = vunpack.c.l.b16 %v1615
        %v5359 = vunpack.c.h.b16 %v1615
        %v5360 = vunpack.c.l.b16 %v1616
        %v5361 = vunpack.c.h.b16 %v1616
        %v5362 = vunpack.c.l.b16 %v1617
        %v5363 = vunpack.c.h.b16 %v1617
        %v5364 = vunpack.c.l.b16 %v1618
        %v5365 = vunpack.c.h.b16 %v1618
        %v5366 = vunpack.c.l.b16 %v1619
        %v5367 = vunpack.c.h.b16 %v1619
        %v5368 = vunpack.c.l.b16 %v1620
        %v5369 = vunpack.c.h.b16 %v1620
        %v5370 = vunpack.c.l.b16 %v1621
        %v5371 = vunpack.c.h.b16 %v1621
        %v5372 = vunpack.c.l.b16 %v1622
        %v5373 = vunpack.c.h.b16 %v1622
        %v5374 = vunpack.c.l.b16 %v1623
        %v5375 = vunpack.c.h.b16 %v1623
        %v5376 = vunpack.c.l.b16 %v1624
        %v5377 = vunpack.c.h.b16 %v1624
        %v5378 = vunpack.c.l.b16 %v1625
        %v5379 = vunpack.c.h.b16 %v1625
        %v5380 = vunpack.c.l.b16 %v1626
        %v5381 = vunpack.c.h.b16 %v1626
        %v5382 = vunpack.c.l.b16 %v1627
        %v5383 = vunpack.c.h.b16 %v1627
        %v5384 = vunpack.c.l.b16 %v1628
        %v5385 = vunpack.c.h.b16 %v1628
        %v5386 = vunpack.c.l.b16 %v1629
        %v5387 = vunpack.c.h.b16 %v1629
        %v5388 = vunpack.c.l.b16 %v1630
        %v5389 = vunpack.c.h.b16 %v1630
        %v5390 = vunpack.c.l.b16 %v1631
        %v5391 = vunpack.c.h.b16 %v1631
        %v5392 = vunpack.c.l.b16 %v1632
        %v5393 = vunpack.c.h.b16 %v1632
        %v5394 = vunpack.c.l.b16 %v1633
        %v5395 = vunpack.c.h.b16 %v1633
        %v5396 = vunpack.c.l.b16 %v1634
        %v5397 = vunpack.c.h.b16 %v1634
        %v5398 = vunpack.c.l.b16 %v1635
        %v5399 = vunpack.c.h.b16 %v1635
        %v5400 = vunpack.c.l.b16 %v1636
        %v5401 = vunpack.c.h.b16 %v1636
        %v5402 = vunpack.c.l.b16 %v1637
        %v5403 = vunpack.c.h.b16 %v1637
        %v5404 = vunpack.c.l.b16 %v1638
        %v5405 = vunpack.c.h.b16 %v1638
        %v5406 = vunpack.c.l.b16 %v1639
        %v5407 = vunpack.c.h.b16 %v1639
        %v5408 = vunpack.c.l.b16 %v1640
        %v5409 = vunpack.c.h.b16 %v1640
        %v5410 = vunpack.c.l.b16 %v1641
        %v5411 = vunpack.c.h.b16 %v1641
        %v5412 = vunpack.c.l.b16 %v1642
        %v5413 = vunpack.c.h.b16 %v1642
        %v5414 = vunpack.c.l.b16 %v1643
        %v5415 = vunpack.c.h.b16 %v1643
        %v5416 = vunpack.c.l.b16 %v1644
        %v5417 = vunpack.c.h.b16 %v1644
        %v5418 = vunpack.c.l.b16 %v1645
        %v5419 = vunpack.c.h.b16 %v1645
        %v5420 = vunpack.c.l.b16 %v1646
        %v5421 = vunpack.c.h.b16 %v1646
        %v5422 = vunpack.c.l.b16 %v1647
        %v5423 = vunpack.c.h.b16 %v1647
        %v5424 = vunpack.c.l.b16 %v1648
        %v5425 = vunpack.c.h.b16 %v1648
        %v5426 = vunpack.c.l.b16 %v1649
        %v5427 = vunpack.c.h.b16 %v1649
        %v5428 = vunpack.c.l.b16 %v1650
        %v5429 = vunpack.c.h.b16 %v1650
        %v5430 = vunpack.c.l.b16 %v1651
        %v5431 = vunpack.c.h.b16 %v1651
        %v5432 = vunpack.c.l.b16 %v1652
        %v5433 = vunpack.c.h.b16 %v1652
        %v5434 = vunpack.c.l.b16 %v1653
        %v5435 = vunpack.c.h.b16 %v1653
        %v5436 = vunpack.c.l.b16 %v1654
        %v5437 = vunpack.c.h.b16 %v1654
        %v5438 = vunpack.c.l.b16 %v1655
        %v5439 = vunpack.c.h.b16 %v1655
        %v5440 = vunpack.c.l.b16 %v1656
        %v5441 = vunpack.c.h.b16 %v1656
        %v5442 = vunpack.c.l.b16 %v1657
        %v5443 = vunpack.c.h.b16 %v1657
        %v5444 = vunpack.c.l.b16 %v1658
        %v5445 = vunpack.c.h.b16 %v1658
        %v5446 = vunpack.c.l.b16 %v1659
        %v5447 = vunpack.c.h.b16 %v1659
        %v5448 = vunpack.c.l.b16 %v1660
        %v5449 = vunpack.c.h.b16 %v1660
        %v5450 = vunpack.c.l.b16 %v1661
        %v5451 = vunpack.c.h.b16 %v1661
        %v5452 = vunpack.c.l.b16 %v1662
        %v5453 = vunpack.c.h.b16 %v1662
        %v5454 = vunpack.c.l.b16 %v1663
        %v5455 = vunpack.c.h.b16 %v1663
        %v5456 = vunpack.c.l.b16 %v1664
        %v5457 = vunpack.c.h.b16 %v1664
        %v5458 = vunpack.c.l.b16 %v1665
        %v5459 = vunpack.c.h.b16 %v1665
        %v5460 = vunpack.c.l.b16 %v1666
        %v5461 = vunpack.c.h.b16 %v1666
        %v5462 = vunpack.c.l.b16 %v1667
        %v5463 = vunpack.c.h.b16 %v1667
        %v5464 = vunpack.c.l.b16 %v1668
        %v5465 = vunpack.c.h.b16 %v1668
        %v5466 = vunpack.c.l.b16 %v1669
        %v5467 = vunpack.c.h.b16 %v1669
        %v5468 = vunpack.c.l.b16 %v1670
        %v5469 = vunpack.c.h.b16 %v1670
        %v5470 = vunpack.c.l.b16 %v1671
        %v5471 = vunpack.c.h.b16 %v1671
        %v5472 = vunpack.c.l.b16 %v1672
        %v5473 = vunpack.c.h.b16 %v1672
        %v5474 = vunpack.c.l.b16 %v1673
        %v5475 = vunpack.c.h.b16 %v1673
        %v5476 = vunpack.c.l.b16 %v1674
        %v5477 = vunpack.c.h.b16 %v1674
        %v5478 = vunpack.c.l.b16 %v1675
        %v5479 = vunpack.c.h.b16 %v1675
        %v5480 = vunpack.c.l.b16 %v1676
        %v5481 = vunpack.c.h.b16 %v1676
        %v5482 = vunpack.c.l.b16 %v1677
        %v5483 = vunpack.c.h.b16 %v1677
        %v5484 = vunpack.c.l.b16 %v1678
        %v5485 = vunpack.c.h.b16 %v1678
        %v5486 = vunpack.c.l.b16 %v1679
        %v5487 = vunpack.c.h.b16 %v1679
        %v5488 = vunpack.c.l.b16 %v1680
        %v5489 = vunpack.c.h.b16 %v1680
        %v5490 = vunpack.c.l.b16 %v1681
        %v5491 = vunpack.c.h.b16 %v1681
        %v5492 = vunpack.c.l.b16 %v1682
        %v5493 = vunpack.c.h.b16 %v1682
        %v5494 = vunpack.c.l.b16 %v1683
        %v5495 = vunpack.c.h.b16 %v1683
        %v5496 = vunpack.c.l.b16 %v1684
        %v5497 = vunpack.c.h.b16 %v1684
        %v5498 = vunpack.c.l.b16 %v1685
        %v5499 = vunpack.c.h.b16 %v1685
        %v5500 = vunpack.c.l.b16 %v1686
        %v5501 = vunpack.c.h.b16 %v1686
        %v5502 = vunpack.c.l.b16 %v1687
        %v5503 = vunpack.c.h.b16 %v1687
        %v5504 = vunpack.c.l.b16 %v1688
        %v5505 = vunpack.c.h.b16 %v1688
        %v5506 = vunpack.c.l.b16 %v1689
        %v5507 = vunpack.c.h.b16 %v1689
        %v5508 = vunpack.c.l.b16 %v1690
        %v5509 = vunpack.c.h.b16 %v1690
        %v5510 = vunpack.c.l.b16 %v1691
        %v5511 = vunpack.c.h.b16 %v1691
        %v5512 = vunpack.c.l.b16 %v1692
        %v5513 = vunpack.c.h.b16 %v1692
        %v5514 = vunpack.c.l.b16 %v1693
        %v5515 = vunpack.c.h.b16 %v1693
        %v5516 = vunpack.c.l.b16 %v1694
        %v5517 = vunpack.c.h.b16 %v1694
        %v5518 = vunpack.c.l.b16 %v1695
        %v5519 = vunpack.c.h.b16 %v1695
        %v5520 = vunpack.c.l.b16 %v1696
        %v5521 = vunpack.c.h.b16 %v1696
        %v5522 = vunpack.c.l.b16 %v1697
        %v5523 = vunpack.c.h.b16 %v1697
        %v5524 = vunpack.c.l.b16 %v1698
        %v5525 = vunpack.c.h.b16 %v1698
        %v5526 = vunpack.c.l.b16 %v1699
        %v5527 = vunpack.c.h.b16 %v1699
        %v5528 = vunpack.c.l.b16 %v1700
        %v5529 = vunpack.c.h.b16 %v1700
        %v5530 = vunpack.c.l.b16 %v1701
        %v5531 = vunpack.c.h.b16 %v1701
        %v5532 = vunpack.c.l.b16 %v1702
        %v5533 = vunpack.c.h.b16 %v1702
        %v5534 = vunpack.c.l.b16 %v1703
        %v5535 = vunpack.c.h.b16 %v1703
        %v5536 = vunpack.c.l.b16 %v1704
        %v5537 = vunpack.c.h.b16 %v1704
        %v5538 = vunpack.c.l.b16 %v1705
        %v5539 = vunpack.c.h.b16 %v1705
        %v5540 = vunpack.c.l.b16 %v1706
        %v5541 = vunpack.c.h.b16 %v1706
        %v5542 = vunpack.c.l.b16 %v1707
        %v5543 = vunpack.c.h.b16 %v1707
        %v5544 = vunpack.c.l.b16 %v1708
        %v5545 = vunpack.c.h.b16 %v1708
        %v5546 = vunpack.c.l.b16 %v1709
        %v5547 = vunpack.c.h.b16 %v1709
        %v5548 = vunpack.c.l.b16 %v1710
        %v5549 = vunpack.c.h.b16 %v1710
        %v5550 = vunpack.c.l.b16 %v1711
        %v5551 = vunpack.c.h.b16 %v1711
        %v5552 = vpack.c.b16 %v3000, %v2992
        %v5553 = vpack.c.b16 %v3001, %v2993
        %v5554 = vpack.c.b16 %v3002, %v2994
        %v5555 = vpack.c.b16 %v3003, %v2995
        %v5556 = vpack.c.b16 %v3004, %v2996
        %v5557 = vpack.c.b16 %v3005, %v2997
        %v5558 = vpack.c.b16 %v3006, %v2998
        %v5559 = vpack.c.b16 %v3007, %v2999
        %v5560 = vpack.c.b16 %v3016, %v3008
        %v5561 = vpack.c.b16 %v3017, %v3009
        %v5562 = vpack.c.b16 %v3018, %v3010
        %v5563 = vpack.c.b16 %v3019, %v3011
        %v5564 = vpack.c.b16 %v3020, %v3012
        %v5565 = vpack.c.b16 %v3021, %v3013
        %v5566 = vpack.c.b16 %v3022, %v3014
        %v5567 = vpack.c.b16 %v3023, %v3015
        %v5568 = vpack.c.b16 %v3032, %v3024
        %v5569 = vpack.c.b16 %v3033, %v3025
        %v5570 = vpack.c.b16 %v3034, %v3026
        %v5571 = vpack.c.b16 %v3035, %v3027
        %v5572 = vpack.c.b16 %v3036, %v3028
        %v5573 = vpack.c.b16 %v3037, %v3029
        %v5574 = vpack.c.b16 %v3038, %v3030
        %v5575 = vpack.c.b16 %v3039, %v3031
        %v5576 = vpack.c.b16 %v3048, %v3040
        %v5577 = vpack.c.b16 %v3049, %v3041
        %v5578 = vpack.c.b16 %v3050, %v3042
        %v5579 = vpack.c.b16 %v3051, %v3043
        %v5580 = vpack.c.b16 %v3052, %v3044
        %v5581 = vpack.c.b16 %v3053, %v3045
        %v5582 = vpack.c.b16 %v3054, %v3046
        %v5583 = vpack.c.b16 %v3055, %v3047
        %v5584 = vpack.c.b16 %v3064, %v3056
        %v5585 = vpack.c.b16 %v3065, %v3057
        %v5586 = vpack.c.b16 %v3066, %v3058
        %v5587 = vpack.c.b16 %v3067, %v3059
        %v5588 = vpack.c.b16 %v3068, %v3060
        %v5589 = vpack.c.b16 %v3069, %v3061
        %v5590 = vpack.c.b16 %v3070, %v3062
        %v5591 = vpack.c.b16 %v3071, %v3063
        %v5592 = vpack.c.b16 %v3080, %v3072
        %v5593 = vpack.c.b16 %v3081, %v3073
        %v5594 = vpack.c.b16 %v3082, %v3074
        %v5595 = vpack.c.b16 %v3083, %v3075
        %v5596 = vpack.c.b16 %v3084, %v3076
        %v5597 = vpack.c.b16 %v3085, %v3077
        %v5598 = vpack.c.b16 %v3086, %v3078
        %v5599 = vpack.c.b16 %v3087, %v3079
        %v5600 = vpack.c.b16 %v3096, %v3088
        %v5601 = vpack.c.b16 %v3097, %v3089
        %v5602 = vpack.c.b16 %v3098, %v3090
        %v5603 = vpack.c.b16 %v3099, %v3091
        %v5604 = vpack.c.b16 %v3100, %v3092
        %v5605 = vpack.c.b16 %v3101, %v3093
        %v5606 = vpack.c.b16 %v3102, %v3094
        %v5607 = vpack.c.b16 %v3103, %v3095
        %v5608 = vpack.c.b16 %v3112, %v3104
        %v5609 = vpack.c.b16 %v3113, %v3105
        %v5610 = vpack.c.b16 %v3114, %v3106
        %v5611 = vpack.c.b16 %v3115, %v3107
        %v5612 = vpack.c.b16 %v3116, %v3108
        %v5613 = vpack.c.b16 %v3117, %v3109
        %v5614 = vpack.c.b16 %v3118, %v3110
        %v5615 = vpack.c.b16 %v3119, %v3111
        %v5616 = vpack.c.b16 %v3128, %v3120
        %v5617 = vpack.c.b16 %v3129, %v3121
        %v5618 = vpack.c.b16 %v3130, %v3122
        %v5619 = vpack.c.b16 %v3131, %v3123
        %v5620 = vpack.c.b16 %v3132, %v3124
        %v5621 = vpack.c.b16 %v3133, %v3125
        %v5622 = vpack.c.b16 %v3134, %v3126
        %v5623 = vpack.c.b16 %v3135, %v3127
        %v5624 = vpack.c.b16 %v3144, %v3136
        %v5625 = vpack.c.b16 %v3145, %v3137
        %v5626 = vpack.c.b16 %v3146, %v3138
        %v5627 = vpack.c.b16 %v3147, %v3139
        %v5628 = vpack.c.b16 %v3148, %v3140
        %v5629 = vpack.c.b16 %v3149, %v3141
        %v5630 = vpack.c.b16 %v3150, %v3142
        %v5631 = vpack.c.b16 %v3151, %v3143
        %v5632 = vpack.c.b16 %v3160, %v3152
        %v5633 = vpack.c.b16 %v3161, %v3153
        %v5634 = vpack.c.b16 %v3162, %v3154
        %v5635 = vpack.c.b16 %v3163, %v3155
        %v5636 = vpack.c.b16 %v3164, %v3156
        %v5637 = vpack.c.b16 %v3165, %v3157
        %v5638 = vpack.c.b16 %v3166, %v3158
        %v5639 = vpack.c.b16 %v3167, %v3159
        %v5640 = vpack.c.b16 %v3176, %v3168
        %v5641 = vpack.c.b16 %v3177, %v3169
        %v5642 = vpack.c.b16 %v3178, %v3170
        %v5643 = vpack.c.b16 %v3179, %v3171
        %v5644 = vpack.c.b16 %v3180, %v3172
        %v5645 = vpack.c.b16 %v3181, %v3173
        %v5646 = vpack.c.b16 %v3182, %v3174
        %v5647 = vpack.c.b16 %v3183, %v3175
        %v5648 = vpack.c.b16 %v3192, %v3184
        %v5649 = vpack.c.b16 %v3193, %v3185
        %v5650 = vpack.c.b16 %v3194, %v3186
        %v5651 = vpack.c.b16 %v3195, %v3187
        %v5652 = vpack.c.b16 %v3196, %v3188
        %v5653 = vpack.c.b16 %v3197, %v3189
        %v5654 = vpack.c.b16 %v3198, %v3190
        %v5655 = vpack.c.b16 %v3199, %v3191
        %v5656 = vpack.c.b16 %v3208, %v3200
        %v5657 = vpack.c.b16 %v3209, %v3201
        %v5658 = vpack.c.b16 %v3210, %v3202
        %v5659 = vpack.c.b16 %v3211, %v3203
        %v5660 = vpack.c.b16 %v3212, %v3204
        %v5661 = vpack.c.b16 %v3213, %v3205
        %v5662 = vpack.c.b16 %v3214, %v3206
        %v5663 = vpack.c.b16 %v3215, %v3207
        %v5664 = vpack.c.b16 %v3224, %v3216
        %v5665 = vpack.c.b16 %v3225, %v3217
        %v5666 = vpack.c.b16 %v3226, %v3218
        %v5667 = vpack.c.b16 %v3227, %v3219
        %v5668 = vpack.c.b16 %v3228, %v3220
        %v5669 = vpack.c.b16 %v3229, %v3221
        %v5670 = vpack.c.b16 %v3230, %v3222
        %v5671 = vpack.c.b16 %v3231, %v3223
        %v5672 = vpack.c.b16 %v3240, %v3232
        %v5673 = vpack.c.b16 %v3241, %v3233
        %v5674 = vpack.c.b16 %v3242, %v3234
        %v5675 = vpack.c.b16 %v3243, %v3235
        %v5676 = vpack.c.b16 %v3244, %v3236
        %v5677 = vpack.c.b16 %v3245, %v3237
        %v5678 = vpack.c.b16 %v3246, %v3238
        %v5679 = vpack.c.b16 %v3247, %v3239
        %v5680 = vpack.c.b16 %v3256, %v3248
        %v5681 = vpack.c.b16 %v3257, %v3249
        %v5682 = vpack.c.b16 %v3258, %v3250
        %v5683 = vpack.c.b16 %v3259, %v3251
        %v5684 = vpack.c.b16 %v3260, %v3252
        %v5685 = vpack.c.b16 %v3261, %v3253
        %v5686 = vpack.c.b16 %v3262, %v3254
        %v5687 = vpack.c.b16 %v3263, %v3255
        %v5688 = vpack.c.b16 %v3272, %v3264
        %v5689 = vpack.c.b16 %v3273, %v3265
        %v5690 = vpack.c.b16 %v3274, %v3266
        %v5691 = vpack.c.b16 %v3275, %v3267
        %v5692 = vpack.c.b16 %v3276, %v3268
        %v5693 = vpack.c.b16 %v3277, %v3269
        %v5694 = vpack.c.b16 %v3278, %v3270
        %v5695 = vpack.c.b16 %v3279, %v3271
        %v5696 = vpack.c.b16 %v3288, %v3280
        %v5697 = vpack.c.b16 %v3289, %v3281
        %v5698 = vpack.c.b16 %v3290, %v3282
        %v5699 = vpack.c.b16 %v3291, %v3283
        %v5700 = vpack.c.b16 %v3292, %v3284
        %v5701 = vpack.c.b16 %v3293, %v3285
        %v5702 = vpack.c.b16 %v3294, %v3286
        %v5703 = vpack.c.b16 %v3295, %v3287
        %v5704 = vpack.c.b16 %v3304, %v3296
        %v5705 = vpack.c.b16 %v3305, %v3297
        %v5706 = vpack.c.b16 %v3306, %v3298
        %v5707 = vpack.c.b16 %v3307, %v3299
        %v5708 = vpack.c.b16 %v3308, %v3300
        %v5709 = vpack.c.b16 %v3309, %v3301
        %v5710 = vpack.c.b16 %v3310, %v3302
        %v5711 = vpack.c.b16 %v3311, %v3303
        %v5712 = vpack.c.b16 %v3320, %v3312
        %v5713 = vpack.c.b16 %v3321, %v3313
        %v5714 = vpack.c.b16 %v3322, %v3314
        %v5715 = vpack.c.b16 %v3323, %v3315
        %v5716 = vpack.c.b16 %v3324, %v3316
        %v5717 = vpack.c.b16 %v3325, %v3317
        %v5718 = vpack.c.b16 %v3326, %v3318
        %v5719 = vpack.c.b16 %v3327, %v3319
        %v5720 = vpack.c.b16 %v3336, %v3328
        %v5721 = vpack.c.b16 %v3337, %v3329
        %v5722 = vpack.c.b16 %v3338, %v3330
        %v5723 = vpack.c.b16 %v3339, %v3331
        %v5724 = vpack.c.b16 %v3340, %v3332
        %v5725 = vpack.c.b16 %v3341, %v3333
        %v5726 = vpack.c.b16 %v3342, %v3334
        %v5727 = vpack.c.b16 %v3343, %v3335
        %v5728 = vpack.c.b16 %v3352, %v3344
        %v5729 = vpack.c.b16 %v3353, %v3345
        %v5730 = vpack.c.b16 %v3354, %v3346
        %v5731 = vpack.c.b16 %v3355, %v3347
        %v5732 = vpack.c.b16 %v3356, %v3348
        %v5733 = vpack.c.b16 %v3357, %v3349
        %v5734 = vpack.c.b16 %v3358, %v3350
        %v5735 = vpack.c.b16 %v3359, %v3351
        %v5736 = vpack.c.b16 %v3368, %v3360
        %v5737 = vpack.c.b16 %v3369, %v3361
        %v5738 = vpack.c.b16 %v3370, %v3362
        %v5739 = vpack.c.b16 %v3371, %v3363
        %v5740 = vpack.c.b16 %v3372, %v3364
        %v5741 = vpack.c.b16 %v3373, %v3365
        %v5742 = vpack.c.b16 %v3374, %v3366
        %v5743 = vpack.c.b16 %v3375, %v3367
        %v5744 = vpack.c.b16 %v3384, %v3376
        %v5745 = vpack.c.b16 %v3385, %v3377
        %v5746 = vpack.c.b16 %v3386, %v3378
        %v5747 = vpack.c.b16 %v3387, %v3379
        %v5748 = vpack.c.b16 %v3388, %v3380
        %v5749 = vpack.c.b16 %v3389, %v3381
        %v5750 = vpack.c.b16 %v3390, %v3382
        %v5751 = vpack.c.b16 %v3391, %v3383
        %v5752 = vpack.c.b16 %v3400, %v3392
        %v5753 = vpack.c.b16 %v3401, %v3393
        %v5754 = vpack.c.b16 %v3402, %v3394
        %v5755 = vpack.c.b16 %v3403, %v3395
        %v5756 = vpack.c.b16 %v3404, %v3396
        %v5757 = vpack.c.b16 %v3405, %v3397
        %v5758 = vpack.c.b16 %v3406, %v3398
        %v5759 = vpack.c.b16 %v3407, %v3399
        %v5760 = vpack.c.b16 %v3416, %v3408
        %v5761 = vpack.c.b16 %v3417, %v3409
        %v5762 = vpack.c.b16 %v3418, %v3410
        %v5763 = vpack.c.b16 %v3419, %v3411
        %v5764 = vpack.c.b16 %v3420, %v3412
        %v5765 = vpack.c.b16 %v3421, %v3413
        %v5766 = vpack.c.b16 %v3422, %v3414
        %v5767 = vpack.c.b16 %v3423, %v3415
        %v5768 = vpack.c.b16 %v3432, %v3424
        %v5769 = vpack.c.b16 %v3433, %v3425
        %v5770 = vpack.c.b16 %v3434, %v3426
        %v5771 = vpack.c.b16 %v3435, %v3427
        %v5772 = vpack.c.b16 %v3436, %v3428
        %v5773 = vpack.c.b16 %v3437, %v3429
        %v5774 = vpack.c.b16 %v3438, %v3430
        %v5775 = vpack.c.b16 %v3439, %v3431
        %v5776 = vpack.c.b16 %v3448, %v3440
        %v5777 = vpack.c.b16 %v3449, %v3441
        %v5778 = vpack.c.b16 %v3450, %v3442
        %v5779 = vpack.c.b16 %v3451, %v3443
        %v5780 = vpack.c.b16 %v3452, %v3444
        %v5781 = vpack.c.b16 %v3453, %v3445
        %v5782 = vpack.c.b16 %v3454, %v3446
        %v5783 = vpack.c.b16 %v3455, %v3447
        %v5784 = vpack.c.b16 %v3464, %v3456
        %v5785 = vpack.c.b16 %v3465, %v3457
        %v5786 = vpack.c.b16 %v3466, %v3458
        %v5787 = vpack.c.b16 %v3467, %v3459
        %v5788 = vpack.c.b16 %v3468, %v3460
        %v5789 = vpack.c.b16 %v3469, %v3461
        %v5790 = vpack.c.b16 %v3470, %v3462
        %v5791 = vpack.c.b16 %v3471, %v3463
        %v5792 = vpack.c.b16 %v3480, %v3472
        %v5793 = vpack.c.b16 %v3481, %v3473
        %v5794 = vpack.c.b16 %v3482, %v3474
        %v5795 = vpack.c.b16 %v3483, %v3475
        %v5796 = vpack.c.b16 %v3484, %v3476
        %v5797 = vpack.c.b16 %v3485, %v3477
        %v5798 = vpack.c.b16 %v3486, %v3478
        %v5799 = vpack.c.b16 %v3487, %v3479
        %v5800 = vpack.c.b16 %v3496, %v3488
        %v5801 = vpack.c.b16 %v3497, %v3489
        %v5802 = vpack.c.b16 %v3498, %v3490
        %v5803 = vpack.c.b16 %v3499, %v3491
        %v5804 = vpack.c.b16 %v3500, %v3492
        %v5805 = vpack.c.b16 %v3501, %v3493
        %v5806 = vpack.c.b16 %v3502, %v3494
        %v5807 = vpack.c.b16 %v3503, %v3495
        %v5808 = vpack.c.b16 %v3512, %v3504
        %v5809 = vpack.c.b16 %v3513, %v3505
        %v5810 = vpack.c.b16 %v3514, %v3506
        %v5811 = vpack.c.b16 %v3515, %v3507
        %v5812 = vpack.c.b16 %v3516, %v3508
        %v5813 = vpack.c.b16 %v3517, %v3509
        %v5814 = vpack.c.b16 %v3518, %v3510
        %v5815 = vpack.c.b16 %v3519, %v3511
        %v5816 = vpack.c.b16 %v3528, %v3520
        %v5817 = vpack.c.b16 %v3529, %v3521
        %v5818 = vpack.c.b16 %v3530, %v3522
        %v5819 = vpack.c.b16 %v3531, %v3523
        %v5820 = vpack.c.b16 %v3532, %v3524
        %v5821 = vpack.c.b16 %v3533, %v3525
        %v5822 = vpack.c.b16 %v3534, %v3526
        %v5823 = vpack.c.b16 %v3535, %v3527
        %v5824 = vpack.c.b16 %v3544, %v3536
        %v5825 = vpack.c.b16 %v3545, %v3537
        %v5826 = vpack.c.b16 %v3546, %v3538
        %v5827 = vpack.c.b16 %v3547, %v3539
        %v5828 = vpack.c.b16 %v3548, %v3540
        %v5829 = vpack.c.b16 %v3549, %v3541
        %v5830 = vpack.c.b16 %v3550, %v3542
        %v5831 = vpack.c.b16 %v3551, %v3543
        %v5832 = vpack.c.b16 %v3560, %v3552
        %v5833 = vpack.c.b16 %v3561, %v3553
        %v5834 = vpack.c.b16 %v3562, %v3554
        %v5835 = vpack.c.b16 %v3563, %v3555
        %v5836 = vpack.c.b16 %v3564, %v3556
        %v5837 = vpack.c.b16 %v3565, %v3557
        %v5838 = vpack.c.b16 %v3566, %v3558
        %v5839 = vpack.c.b16 %v3567, %v3559
        %v5840 = vpack.c.b16 %v3576, %v3568
        %v5841 = vpack.c.b16 %v3577, %v3569
        %v5842 = vpack.c.b16 %v3578, %v3570
        %v5843 = vpack.c.b16 %v3579, %v3571
        %v5844 = vpack.c.b16 %v3580, %v3572
        %v5845 = vpack.c.b16 %v3581, %v3573
        %v5846 = vpack.c.b16 %v3582, %v3574
        %v5847 = vpack.c.b16 %v3583, %v3575
        %v5848 = vpack.c.b16 %v3592, %v3584
        %v5849 = vpack.c.b16 %v3593, %v3585
        %v5850 = vpack.c.b16 %v3594, %v3586
        %v5851 = vpack.c.b16 %v3595, %v3587
        %v5852 = vpack.c.b16 %v3596, %v3588
        %v5853 = vpack.c.b16 %v3597, %v3589
        %v5854 = vpack.c.b16 %v3598, %v3590
        %v5855 = vpack.c.b16 %v3599, %v3591
        %v5856 = vpack.c.b16 %v3608, %v3600
        %v5857 = vpack.c.b16 %v3609, %v3601
        %v5858 = vpack.c.b16 %v3610, %v3602
        %v5859 = vpack.c.b16 %v3611, %v3603
        %v5860 = vpack.c.b16 %v3612, %v3604
        %v5861 = vpack.c.b16 %v3613, %v3605
        %v5862 = vpack.c.b16 %v3614, %v3606
        %v5863 = vpack.c.b16 %v3615, %v3607
        %v5864 = vpack.c.b16 %v3624, %v3616
        %v5865 = vpack.c.b16 %v3625, %v3617
        %v5866 = vpack.c.b16 %v3626, %v3618
        %v5867 = vpack.c.b16 %v3627, %v3619
        %v5868 = vpack.c.b16 %v3628, %v3620
        %v5869 = vpack.c.b16 %v3629, %v3621
        %v5870 = vpack.c.b16 %v3630, %v3622
        %v5871 = vpack.c.b16 %v3631, %v3623
        %v5872 = vpack.c.b16 %v3640, %v3632
        %v5873 = vpack.c.b16 %v3641, %v3633
        %v5874 = vpack.c.b16 %v3642, %v3634
        %v5875 = vpack.c.b16 %v3643, %v3635
        %v5876 = vpack.c.b16 %v3644, %v3636
        %v5877 = vpack.c.b16 %v3645, %v3637
        %v5878 = vpack.c.b16 %v3646, %v3638
        %v5879 = vpack.c.b16 %v3647, %v3639
        %v5880 = vpack.c.b16 %v3656, %v3648
        %v5881 = vpack.c.b16 %v3657, %v3649
        %v5882 = vpack.c.b16 %v3658, %v3650
        %v5883 = vpack.c.b16 %v3659, %v3651
        %v5884 = vpack.c.b16 %v3660, %v3652
        %v5885 = vpack.c.b16 %v3661, %v3653
        %v5886 = vpack.c.b16 %v3662, %v3654
        %v5887 = vpack.c.b16 %v3663, %v3655
        %v5888 = vpack.c.b16 %v3672, %v3664
        %v5889 = vpack.c.b16 %v3673, %v3665
        %v5890 = vpack.c.b16 %v3674, %v3666
        %v5891 = vpack.c.b16 %v3675, %v3667
        %v5892 = vpack.c.b16 %v3676, %v3668
        %v5893 = vpack.c.b16 %v3677, %v3669
        %v5894 = vpack.c.b16 %v3678, %v3670
        %v5895 = vpack.c.b16 %v3679, %v3671
        %v5896 = vpack.c.b16 %v3688, %v3680
        %v5897 = vpack.c.b16 %v3689, %v3681
        %v5898 = vpack.c.b16 %v3690, %v3682
        %v5899 = vpack.c.b16 %v3691, %v3683
        %v5900 = vpack.c.b16 %v3692, %v3684
        %v5901 = vpack.c.b16 %v3693, %v3685
        %v5902 = vpack.c.b16 %v3694, %v3686
        %v5903 = vpack.c.b16 %v3695, %v3687
        %v5904 = vpack.c.b16 %v3704, %v3696
        %v5905 = vpack.c.b16 %v3705, %v3697
        %v5906 = vpack.c.b16 %v3706, %v3698
        %v5907 = vpack.c.b16 %v3707, %v3699
        %v5908 = vpack.c.b16 %v3708, %v3700
        %v5909 = vpack.c.b16 %v3709, %v3701
        %v5910 = vpack.c.b16 %v3710, %v3702
        %v5911 = vpack.c.b16 %v3711, %v3703
        %v5912 = vpack.c.b16 %v3720, %v3712
        %v5913 = vpack.c.b16 %v3721, %v3713
        %v5914 = vpack.c.b16 %v3722, %v3714
        %v5915 = vpack.c.b16 %v3723, %v3715
        %v5916 = vpack.c.b16 %v3724, %v3716
        %v5917 = vpack.c.b16 %v3725, %v3717
        %v5918 = vpack.c.b16 %v3726, %v3718
        %v5919 = vpack.c.b16 %v3727, %v3719
        %v5920 = vpack.c.b16 %v3736, %v3728
        %v5921 = vpack.c.b16 %v3737, %v3729
        %v5922 = vpack.c.b16 %v3738, %v3730
        %v5923 = vpack.c.b16 %v3739, %v3731
        %v5924 = vpack.c.b16 %v3740, %v3732
        %v5925 = vpack.c.b16 %v3741, %v3733
        %v5926 = vpack.c.b16 %v3742, %v3734
        %v5927 = vpack.c.b16 %v3743, %v3735
        %v5928 = vpack.c.b16 %v3752, %v3744
        %v5929 = vpack.c.b16 %v3753, %v3745
        %v5930 = vpack.c.b16 %v3754, %v3746
        %v5931 = vpack.c.b16 %v3755, %v3747
        %v5932 = vpack.c.b16 %v3756, %v3748
        %v5933 = vpack.c.b16 %v3757, %v3749
        %v5934 = vpack.c.b16 %v3758, %v3750
        %v5935 = vpack.c.b16 %v3759, %v3751
        %v5936 = vpack.c.b16 %v3768, %v3760
        %v5937 = vpack.c.b16 %v3769, %v3761
        %v5938 = vpack.c.b16 %v3770, %v3762
        %v5939 = vpack.c.b16 %v3771, %v3763
        %v5940 = vpack.c.b16 %v3772, %v3764
        %v5941 = vpack.c.b16 %v3773, %v3765
        %v5942 = vpack.c.b16 %v3774, %v3766
        %v5943 = vpack.c.b16 %v3775, %v3767
        %v5944 = vpack.c.b16 %v3784, %v3776
        %v5945 = vpack.c.b16 %v3785, %v3777
        %v5946 = vpack.c.b16 %v3786, %v3778
        %v5947 = vpack.c.b16 %v3787, %v3779
        %v5948 = vpack.c.b16 %v3788, %v3780
        %v5949 = vpack.c.b16 %v3789, %v3781
        %v5950 = vpack.c.b16 %v3790, %v3782
        %v5951 = vpack.c.b16 %v3791, %v3783
        %v5952 = vpack.c.b16 %v3800, %v3792
        %v5953 = vpack.c.b16 %v3801, %v3793
        %v5954 = vpack.c.b16 %v3802, %v3794
        %v5955 = vpack.c.b16 %v3803, %v3795
        %v5956 = vpack.c.b16 %v3804, %v3796
        %v5957 = vpack.c.b16 %v3805, %v3797
        %v5958 = vpack.c.b16 %v3806, %v3798
        %v5959 = vpack.c.b16 %v3807, %v3799
        %v5960 = vpack.c.b16 %v3816, %v3808
        %v5961 = vpack.c.b16 %v3817, %v3809
        %v5962 = vpack.c.b16 %v3818, %v3810
        %v5963 = vpack.c.b16 %v3819, %v3811
        %v5964 = vpack.c.b16 %v3820, %v3812
        %v5965 = vpack.c.b16 %v3821, %v3813
        %v5966 = vpack.c.b16 %v3822, %v3814
        %v5967 = vpack.c.b16 %v3823, %v3815
        %v5968 = vpack.c.b16 %v3832, %v3824
        %v5969 = vpack.c.b16 %v3833, %v3825
        %v5970 = vpack.c.b16 %v3834, %v3826
        %v5971 = vpack.c.b16 %v3835, %v3827
        %v5972 = vpack.c.b16 %v3836, %v3828
        %v5973 = vpack.c.b16 %v3837, %v3829
        %v5974 = vpack.c.b16 %v3838, %v3830
        %v5975 = vpack.c.b16 %v3839, %v3831
        %v5976 = vpack.c.b16 %v3848, %v3840
        %v5977 = vpack.c.b16 %v3849, %v3841
        %v5978 = vpack.c.b16 %v3850, %v3842
        %v5979 = vpack.c.b16 %v3851, %v3843
        %v5980 = vpack.c.b16 %v3852, %v3844
        %v5981 = vpack.c.b16 %v3853, %v3845
        %v5982 = vpack.c.b16 %v3854, %v3846
        %v5983 = vpack.c.b16 %v3855, %v3847
        %v5984 = vpack.c.b16 %v3864, %v3856
        %v5985 = vpack.c.b16 %v3865, %v3857
        %v5986 = vpack.c.b16 %v3866, %v3858
        %v5987 = vpack.c.b16 %v3867, %v3859
        %v5988 = vpack.c.b16 %v3868, %v3860
        %v5989 = vpack.c.b16 %v3869, %v3861
        %v5990 = vpack.c.b16 %v3870, %v3862
        %v5991 = vpack.c.b16 %v3871, %v3863
        %v5992 = vpack.c.b16 %v3880, %v3872
        %v5993 = vpack.c.b16 %v3881, %v3873
        %v5994 = vpack.c.b16 %v3882, %v3874
        %v5995 = vpack.c.b16 %v3883, %v3875
        %v5996 = vpack.c.b16 %v3884, %v3876
        %v5997 = vpack.c.b16 %v3885, %v3877
        %v5998 = vpack.c.b16 %v3886, %v3878
        %v5999 = vpack.c.b16 %v3887, %v3879
        %v6000 = vpack.c.b16 %v3896, %v3888
        %v6001 = vpack.c.b16 %v3897, %v3889
        %v6002 = vpack.c.b16 %v3898, %v3890
        %v6003 = vpack.c.b16 %v3899, %v3891
        %v6004 = vpack.c.b16 %v3900, %v3892
        %v6005 = vpack.c.b16 %v3901, %v3893
        %v6006 = vpack.c.b16 %v3902, %v3894
        %v6007 = vpack.c.b16 %v3903, %v3895
        %v6008 = vpack.c.b16 %v3912, %v3904
        %v6009 = vpack.c.b16 %v3913, %v3905
        %v6010 = vpack.c.b16 %v3914, %v3906
        %v6011 = vpack.c.b16 %v3915, %v3907
        %v6012 = vpack.c.b16 %v3916, %v3908
        %v6013 = vpack.c.b16 %v3917, %v3909
        %v6014 = vpack.c.b16 %v3918, %v3910
        %v6015 = vpack.c.b16 %v3919, %v3911
        %v6016 = vpack.c.b16 %v3928, %v3920
        %v6017 = vpack.c.b16 %v3929, %v3921
        %v6018 = vpack.c.b16 %v3930, %v3922
        %v6019 = vpack.c.b16 %v3931, %v3923
        %v6020 = vpack.c.b16 %v3932, %v3924
        %v6021 = vpack.c.b16 %v3933, %v3925
        %v6022 = vpack.c.b16 %v3934, %v3926
        %v6023 = vpack.c.b16 %v3935, %v3927
        %v6024 = vpack.c.b16 %v3944, %v3936
        %v6025 = vpack.c.b16 %v3945, %v3937
        %v6026 = vpack.c.b16 %v3946, %v3938
        %v6027 = vpack.c.b16 %v3947, %v3939
        %v6028 = vpack.c.b16 %v3948, %v3940
        %v6029 = vpack.c.b16 %v3949, %v3941
        %v6030 = vpack.c.b16 %v3950, %v3942
        %v6031 = vpack.c.b16 %v3951, %v3943
        %v6032 = vpack.c.b16 %v3960, %v3952
        %v6033 = vpack.c.b16 %v3961, %v3953
        %v6034 = vpack.c.b16 %v3962, %v3954
        %v6035 = vpack.c.b16 %v3963, %v3955
        %v6036 = vpack.c.b16 %v3964, %v3956
        %v6037 = vpack.c.b16 %v3965, %v3957
        %v6038 = vpack.c.b16 %v3966, %v3958
        %v6039 = vpack.c.b16 %v3967, %v3959
        %v6040 = vpack.c.b16 %v3976, %v3968
        %v6041 = vpack.c.b16 %v3977, %v3969
        %v6042 = vpack.c.b16 %v3978, %v3970
        %v6043 = vpack.c.b16 %v3979, %v3971
        %v6044 = vpack.c.b16 %v3980, %v3972
        %v6045 = vpack.c.b16 %v3981, %v3973
        %v6046 = vpack.c.b16 %v3982, %v3974
        %v6047 = vpack.c.b16 %v3983, %v3975
        %v6048 = vpack.c.b16 %v3992, %v3984
        %v6049 = vpack.c.b16 %v3993, %v3985
        %v6050 = vpack.c.b16 %v3994, %v3986
        %v6051 = vpack.c.b16 %v3995, %v3987
        %v6052 = vpack.c.b16 %v3996, %v3988
        %v6053 = vpack.c.b16 %v3997, %v3989
        %v6054 = vpack.c.b16 %v3998, %v3990
        %v6055 = vpack.c.b16 %v3999, %v3991
        %v6056 = vpack.c.b16 %v4008, %v4000
        %v6057 = vpack.c.b16 %v4009, %v4001
        %v6058 = vpack.c.b16 %v4010, %v4002
        %v6059 = vpack.c.b16 %v4011, %v4003
        %v6060 = vpack.c.b16 %v4012, %v4004
        %v6061 = vpack.c.b16 %v4013, %v4005
        %v6062 = vpack.c.b16 %v4014, %v4006
        %v6063 = vpack.c.b16 %v4015, %v4007
        %v6064 = vpack.c.b16 %v4024, %v4016
        %v6065 = vpack.c.b16 %v4025, %v4017
        %v6066 = vpack.c.b16 %v4026, %v4018
        %v6067 = vpack.c.b16 %v4027, %v4019
        %v6068 = vpack.c.b16 %v4028, %v4020
        %v6069 = vpack.c.b16 %v4029, %v4021
        %v6070 = vpack.c.b16 %v4030, %v4022
        %v6071 = vpack.c.b16 %v4031, %v4023
        %v6072 = vpack.c.b16 %v4040, %v4032
        %v6073 = vpack.c.b16 %v4041, %v4033
        %v6074 = vpack.c.b16 %v4042, %v4034
        %v6075 = vpack.c.b16 %v4043, %v4035
        %v6076 = vpack.c.b16 %v4044, %v4036
        %v6077 = vpack.c.b16 %v4045, %v4037
        %v6078 = vpack.c.b16 %v4046, %v4038
        %v6079 = vpack.c.b16 %v4047, %v4039
        %v6080 = vpack.c.b16 %v4056, %v4048
        %v6081 = vpack.c.b16 %v4057, %v4049
        %v6082 = vpack.c.b16 %v4058, %v4050
        %v6083 = vpack.c.b16 %v4059, %v4051
        %v6084 = vpack.c.b16 %v4060, %v4052
        %v6085 = vpack.c.b16 %v4061, %v4053
        %v6086 = vpack.c.b16 %v4062, %v4054
        %v6087 = vpack.c.b16 %v4063, %v4055
        %v6088 = vpack.c.b16 %v4072, %v4064
        %v6089 = vpack.c.b16 %v4073, %v4065
        %v6090 = vpack.c.b16 %v4074, %v4066
        %v6091 = vpack.c.b16 %v4075, %v4067
        %v6092 = vpack.c.b16 %v4076, %v4068
        %v6093 = vpack.c.b16 %v4077, %v4069
        %v6094 = vpack.c.b16 %v4078, %v4070
        %v6095 = vpack.c.b16 %v4079, %v4071
        %v6096 = vpack.c.b16 %v4088, %v4080
        %v6097 = vpack.c.b16 %v4089, %v4081
        %v6098 = vpack.c.b16 %v4090, %v4082
        %v6099 = vpack.c.b16 %v4091, %v4083
        %v6100 = vpack.c.b16 %v4092, %v4084
        %v6101 = vpack.c.b16 %v4093, %v4085
        %v6102 = vpack.c.b16 %v4094, %v4086
        %v6103 = vpack.c.b16 %v4095, %v4087
        %v6104 = vpack.c.b16 %v4104, %v4096
        %v6105 = vpack.c.b16 %v4105, %v4097
        %v6106 = vpack.c.b16 %v4106, %v4098
        %v6107 = vpack.c.b16 %v4107, %v4099
        %v6108 = vpack.c.b16 %v4108, %v4100
        %v6109 = vpack.c.b16 %v4109, %v4101
        %v6110 = vpack.c.b16 %v4110, %v4102
        %v6111 = vpack.c.b16 %v4111, %v4103
        %v6112 = vpack.c.b16 %v4120, %v4112
        %v6113 = vpack.c.b16 %v4121, %v4113
        %v6114 = vpack.c.b16 %v4122, %v4114
        %v6115 = vpack.c.b16 %v4123, %v4115
        %v6116 = vpack.c.b16 %v4124, %v4116
        %v6117 = vpack.c.b16 %v4125, %v4117
        %v6118 = vpack.c.b16 %v4126, %v4118
        %v6119 = vpack.c.b16 %v4127, %v4119
        %v6120 = vpack.c.b16 %v4136, %v4128
        %v6121 = vpack.c.b16 %v4137, %v4129
        %v6122 = vpack.c.b16 %v4138, %v4130
        %v6123 = vpack.c.b16 %v4139, %v4131
        %v6124 = vpack.c.b16 %v4140, %v4132
        %v6125 = vpack.c.b16 %v4141, %v4133
        %v6126 = vpack.c.b16 %v4142, %v4134
        %v6127 = vpack.c.b16 %v4143, %v4135
        %v6128 = vpack.c.b16 %v4152, %v4144
        %v6129 = vpack.c.b16 %v4153, %v4145
        %v6130 = vpack.c.b16 %v4154, %v4146
        %v6131 = vpack.c.b16 %v4155, %v4147
        %v6132 = vpack.c.b16 %v4156, %v4148
        %v6133 = vpack.c.b16 %v4157, %v4149
        %v6134 = vpack.c.b16 %v4158, %v4150
        %v6135 = vpack.c.b16 %v4159, %v4151
        %v6136 = vpack.c.b16 %v4168, %v4160
        %v6137 = vpack.c.b16 %v4169, %v4161
        %v6138 = vpack.c.b16 %v4170, %v4162
        %v6139 = vpack.c.b16 %v4171, %v4163
        %v6140 = vpack.c.b16 %v4172, %v4164
        %v6141 = vpack.c.b16 %v4173, %v4165
        %v6142 = vpack.c.b16 %v4174, %v4166
        %v6143 = vpack.c.b16 %v4175, %v4167
        %v6144 = vpack.c.b16 %v4184, %v4176
        %v6145 = vpack.c.b16 %v4185, %v4177
        %v6146 = vpack.c.b16 %v4186, %v4178
        %v6147 = vpack.c.b16 %v4187, %v4179
        %v6148 = vpack.c.b16 %v4188, %v4180
        %v6149 = vpack.c.b16 %v4189, %v4181
        %v6150 = vpack.c.b16 %v4190, %v4182
        %v6151 = vpack.c.b16 %v4191, %v4183
        %v6152 = vpack.c.b16 %v4200, %v4192
        %v6153 = vpack.c.b16 %v4201, %v4193
        %v6154 = vpack.c.b16 %v4202, %v4194
        %v6155 = vpack.c.b16 %v4203, %v4195
        %v6156 = vpack.c.b16 %v4204, %v4196
        %v6157 = vpack.c.b16 %v4205, %v4197
        %v6158 = vpack.c.b16 %v4206, %v4198
        %v6159 = vpack.c.b16 %v4207, %v4199
        %v6160 = vpack.c.b16 %v4216, %v4208
        %v6161 = vpack.c.b16 %v4217, %v4209
        %v6162 = vpack.c.b16 %v4218, %v4210
        %v6163 = vpack.c.b16 %v4219, %v4211
        %v6164 = vpack.c.b16 %v4220, %v4212
        %v6165 = vpack.c.b16 %v4221, %v4213
        %v6166 = vpack.c.b16 %v4222, %v4214
        %v6167 = vpack.c.b16 %v4223, %v4215
        %v6168 = vpack.c.b16 %v4232, %v4224
        %v6169 = vpack.c.b16 %v4233, %v4225
        %v6170 = vpack.c.b16 %v4234, %v4226
        %v6171 = vpack.c.b16 %v4235, %v4227
        %v6172 = vpack.c.b16 %v4236, %v4228
        %v6173 = vpack.c.b16 %v4237, %v4229
        %v6174 = vpack.c.b16 %v4238, %v4230
        %v6175 = vpack.c.b16 %v4239, %v4231
        %v6176 = vpack.c.b16 %v4248, %v4240
        %v6177 = vpack.c.b16 %v4249, %v4241
        %v6178 = vpack.c.b16 %v4250, %v4242
        %v6179 = vpack.c.b16 %v4251, %v4243
        %v6180 = vpack.c.b16 %v4252, %v4244
        %v6181 = vpack.c.b16 %v4253, %v4245
        %v6182 = vpack.c.b16 %v4254, %v4246
        %v6183 = vpack.c.b16 %v4255, %v4247
        %v6184 = vpack.c.b16 %v4264, %v4256
        %v6185 = vpack.c.b16 %v4265, %v4257
        %v6186 = vpack.c.b16 %v4266, %v4258
        %v6187 = vpack.c.b16 %v4267, %v4259
        %v6188 = vpack.c.b16 %v4268, %v4260
        %v6189 = vpack.c.b16 %v4269, %v4261
        %v6190 = vpack.c.b16 %v4270, %v4262
        %v6191 = vpack.c.b16 %v4271, %v4263
        %v6192 = vpack.c.b16 %v4280, %v4272
        %v6193 = vpack.c.b16 %v4281, %v4273
        %v6194 = vpack.c.b16 %v4282, %v4274
        %v6195 = vpack.c.b16 %v4283, %v4275
        %v6196 = vpack.c.b16 %v4284, %v4276
        %v6197 = vpack.c.b16 %v4285, %v4277
        %v6198 = vpack.c.b16 %v4286, %v4278
        %v6199 = vpack.c.b16 %v4287, %v4279
        %v6200 = vpack.c.b16 %v4296, %v4288
        %v6201 = vpack.c.b16 %v4297, %v4289
        %v6202 = vpack.c.b16 %v4298, %v4290
        %v6203 = vpack.c.b16 %v4299, %v4291
        %v6204 = vpack.c.b16 %v4300, %v4292
        %v6205 = vpack.c.b16 %v4301, %v4293
        %v6206 = vpack.c.b16 %v4302, %v4294
        %v6207 = vpack.c.b16 %v4303, %v4295
        %v6208 = vpack.c.b16 %v4312, %v4304
        %v6209 = vpack.c.b16 %v4313, %v4305
        %v6210 = vpack.c.b16 %v4314, %v4306
        %v6211 = vpack.c.b16 %v4315, %v4307
        %v6212 = vpack.c.b16 %v4316, %v4308
        %v6213 = vpack.c.b16 %v4317, %v4309
        %v6214 = vpack.c.b16 %v4318, %v4310
        %v6215 = vpack.c.b16 %v4319, %v4311
        %v6216 = vpack.c.b16 %v4328, %v4320
        %v6217 = vpack.c.b16 %v4329, %v4321
        %v6218 = vpack.c.b16 %v4330, %v4322
        %v6219 = vpack.c.b16 %v4331, %v4323
        %v6220 = vpack.c.b16 %v4332, %v4324
        %v6221 = vpack.c.b16 %v4333, %v4325
        %v6222 = vpack.c.b16 %v4334, %v4326
        %v6223 = vpack.c.b16 %v4335, %v4327
        %v6224 = vpack.c.b16 %v4344, %v4336
        %v6225 = vpack.c.b16 %v4345, %v4337
        %v6226 = vpack.c.b16 %v4346, %v4338
        %v6227 = vpack.c.b16 %v4347, %v4339
        %v6228 = vpack.c.b16 %v4348, %v4340
        %v6229 = vpack.c.b16 %v4349, %v4341
        %v6230 = vpack.c.b16 %v4350, %v4342
        %v6231 = vpack.c.b16 %v4351, %v4343
        %v6232 = vpack.c.b16 %v4360, %v4352
        %v6233 = vpack.c.b16 %v4361, %v4353
        %v6234 = vpack.c.b16 %v4362, %v4354
        %v6235 = vpack.c.b16 %v4363, %v4355
        %v6236 = vpack.c.b16 %v4364, %v4356
        %v6237 = vpack.c.b16 %v4365, %v4357
        %v6238 = vpack.c.b16 %v4366, %v4358
        %v6239 = vpack.c.b16 %v4367, %v4359
        %v6240 = vpack.c.b16 %v4376, %v4368
        %v6241 = vpack.c.b16 %v4377, %v4369
        %v6242 = vpack.c.b16 %v4378, %v4370
        %v6243 = vpack.c.b16 %v4379, %v4371
        %v6244 = vpack.c.b16 %v4380, %v4372
        %v6245 = vpack.c.b16 %v4381, %v4373
        %v6246 = vpack.c.b16 %v4382, %v4374
        %v6247 = vpack.c.b16 %v4383, %v4375
        %v6248 = vpack.c.b16 %v4392, %v4384
        %v6249 = vpack.c.b16 %v4393, %v4385
        %v6250 = vpack.c.b16 %v4394, %v4386
        %v6251 = vpack.c.b16 %v4395, %v4387
        %v6252 = vpack.c.b16 %v4396, %v4388
        %v6253 = vpack.c.b16 %v4397, %v4389
        %v6254 = vpack.c.b16 %v4398, %v4390
        %v6255 = vpack.c.b16 %v4399, %v4391
        %v6256 = vpack.c.b16 %v4408, %v4400
        %v6257 = vpack.c.b16 %v4409, %v4401
        %v6258 = vpack.c.b16 %v4410, %v4402
        %v6259 = vpack.c.b16 %v4411, %v4403
        %v6260 = vpack.c.b16 %v4412, %v4404
        %v6261 = vpack.c.b16 %v4413, %v4405
        %v6262 = vpack.c.b16 %v4414, %v4406
        %v6263 = vpack.c.b16 %v4415, %v4407
        %v6264 = vpack.c.b16 %v4424, %v4416
        %v6265 = vpack.c.b16 %v4425, %v4417
        %v6266 = vpack.c.b16 %v4426, %v4418
        %v6267 = vpack.c.b16 %v4427, %v4419
        %v6268 = vpack.c.b16 %v4428, %v4420
        %v6269 = vpack.c.b16 %v4429, %v4421
        %v6270 = vpack.c.b16 %v4430, %v4422
        %v6271 = vpack.c.b16 %v4431, %v4423
        %v6272 = vpack.c.b16 %v4440, %v4432
        %v6273 = vpack.c.b16 %v4441, %v4433
        %v6274 = vpack.c.b16 %v4442, %v4434
        %v6275 = vpack.c.b16 %v4443, %v4435
        %v6276 = vpack.c.b16 %v4444, %v4436
        %v6277 = vpack.c.b16 %v4445, %v4437
        %v6278 = vpack.c.b16 %v4446, %v4438
        %v6279 = vpack.c.b16 %v4447, %v4439
        %v6280 = vpack.c.b16 %v4456, %v4448
        %v6281 = vpack.c.b16 %v4457, %v4449
        %v6282 = vpack.c.b16 %v4458, %v4450
        %v6283 = vpack.c.b16 %v4459, %v4451
        %v6284 = vpack.c.b16 %v4460, %v4452
        %v6285 = vpack.c.b16 %v4461, %v4453
        %v6286 = vpack.c.b16 %v4462, %v4454
        %v6287 = vpack.c.b16 %v4463, %v4455
        %v6288 = vpack.c.b16 %v4472, %v4464
        %v6289 = vpack.c.b16 %v4473, %v4465
        %v6290 = vpack.c.b16 %v4474, %v4466
        %v6291 = vpack.c.b16 %v4475, %v4467
        %v6292 = vpack.c.b16 %v4476, %v4468
        %v6293 = vpack.c.b16 %v4477, %v4469
        %v6294 = vpack.c.b16 %v4478, %v4470
        %v6295 = vpack.c.b16 %v4479, %v4471
        %v6296 = vpack.c.b16 %v4488, %v4480
        %v6297 = vpack.c.b16 %v4489, %v4481
        %v6298 = vpack.c.b16 %v4490, %v4482
        %v6299 = vpack.c.b16 %v4491, %v4483
        %v6300 = vpack.c.b16 %v4492, %v4484
        %v6301 = vpack.c.b16 %v4493, %v4485
        %v6302 = vpack.c.b16 %v4494, %v4486
        %v6303 = vpack.c.b16 %v4495, %v4487
        %v6304 = vpack.c.b16 %v4504, %v4496
        %v6305 = vpack.c.b16 %v4505, %v4497
        %v6306 = vpack.c.b16 %v4506, %v4498
        %v6307 = vpack.c.b16 %v4507, %v4499
        %v6308 = vpack.c.b16 %v4508, %v4500
        %v6309 = vpack.c.b16 %v4509, %v4501
        %v6310 = vpack.c.b16 %v4510, %v4502
        %v6311 = vpack.c.b16 %v4511, %v4503
        %v6312 = vpack.c.b16 %v4520, %v4512
        %v6313 = vpack.c.b16 %v4521, %v4513
        %v6314 = vpack.c.b16 %v4522, %v4514
        %v6315 = vpack.c.b16 %v4523, %v4515
        %v6316 = vpack.c.b16 %v4524, %v4516
        %v6317 = vpack.c.b16 %v4525, %v4517
        %v6318 = vpack.c.b16 %v4526, %v4518
        %v6319 = vpack.c.b16 %v4527, %v4519
        %v6320 = vpack.c.b16 %v4536, %v4528
        %v6321 = vpack.c.b16 %v4537, %v4529
        %v6322 = vpack.c.b16 %v4538, %v4530
        %v6323 = vpack.c.b16 %v4539, %v4531
        %v6324 = vpack.c.b16 %v4540, %v4532
        %v6325 = vpack.c.b16 %v4541, %v4533
        %v6326 = vpack.c.b16 %v4542, %v4534
        %v6327 = vpack.c.b16 %v4543, %v4535
        %v6328 = vpack.c.b16 %v4552, %v4544
        %v6329 = vpack.c.b16 %v4553, %v4545
        %v6330 = vpack.c.b16 %v4554, %v4546
        %v6331 = vpack.c.b16 %v4555, %v4547
        %v6332 = vpack.c.b16 %v4556, %v4548
        %v6333 = vpack.c.b16 %v4557, %v4549
        %v6334 = vpack.c.b16 %v4558, %v4550
        %v6335 = vpack.c.b16 %v4559, %v4551
        %v6336 = vpack.c.b16 %v4568, %v4560
        %v6337 = vpack.c.b16 %v4569, %v4561
        %v6338 = vpack.c.b16 %v4570, %v4562
        %v6339 = vpack.c.b16 %v4571, %v4563
        %v6340 = vpack.c.b16 %v4572, %v4564
        %v6341 = vpack.c.b16 %v4573, %v4565
        %v6342 = vpack.c.b16 %v4574, %v4566
        %v6343 = vpack.c.b16 %v4575, %v4567
        %v6344 = vpack.c.b16 %v4584, %v4576
        %v6345 = vpack.c.b16 %v4585, %v4577
        %v6346 = vpack.c.b16 %v4586, %v4578
        %v6347 = vpack.c.b16 %v4587, %v4579
        %v6348 = vpack.c.b16 %v4588, %v4580
        %v6349 = vpack.c.b16 %v4589, %v4581
        %v6350 = vpack.c.b16 %v4590, %v4582
        %v6351 = vpack.c.b16 %v4591, %v4583
        %v6352 = vpack.c.b16 %v4600, %v4592
        %v6353 = vpack.c.b16 %v4601, %v4593
        %v6354 = vpack.c.b16 %v4602, %v4594
        %v6355 = vpack.c.b16 %v4603, %v4595
        %v6356 = vpack.c.b16 %v4604, %v4596
        %v6357 = vpack.c.b16 %v4605, %v4597
        %v6358 = vpack.c.b16 %v4606, %v4598
        %v6359 = vpack.c.b16 %v4607, %v4599
        %v6360 = vpack.c.b16 %v4616, %v4608
        %v6361 = vpack.c.b16 %v4617, %v4609
        %v6362 = vpack.c.b16 %v4618, %v4610
        %v6363 = vpack.c.b16 %v4619, %v4611
        %v6364 = vpack.c.b16 %v4620, %v4612
        %v6365 = vpack.c.b16 %v4621, %v4613
        %v6366 = vpack.c.b16 %v4622, %v4614
        %v6367 = vpack.c.b16 %v4623, %v4615
        %v6368 = vpack.c.b16 %v4632, %v4624
        %v6369 = vpack.c.b16 %v4633, %v4625
        %v6370 = vpack.c.b16 %v4634, %v4626
        %v6371 = vpack.c.b16 %v4635, %v4627
        %v6372 = vpack.c.b16 %v4636, %v4628
        %v6373 = vpack.c.b16 %v4637, %v4629
        %v6374 = vpack.c.b16 %v4638, %v4630
        %v6375 = vpack.c.b16 %v4639, %v4631
        %v6376 = vpack.c.b16 %v4648, %v4640
        %v6377 = vpack.c.b16 %v4649, %v4641
        %v6378 = vpack.c.b16 %v4650, %v4642
        %v6379 = vpack.c.b16 %v4651, %v4643
        %v6380 = vpack.c.b16 %v4652, %v4644
        %v6381 = vpack.c.b16 %v4653, %v4645
        %v6382 = vpack.c.b16 %v4654, %v4646
        %v6383 = vpack.c.b16 %v4655, %v4647
        %v6384 = vpack.c.b16 %v4664, %v4656
        %v6385 = vpack.c.b16 %v4665, %v4657
        %v6386 = vpack.c.b16 %v4666, %v4658
        %v6387 = vpack.c.b16 %v4667, %v4659
        %v6388 = vpack.c.b16 %v4668, %v4660
        %v6389 = vpack.c.b16 %v4669, %v4661
        %v6390 = vpack.c.b16 %v4670, %v4662
        %v6391 = vpack.c.b16 %v4671, %v4663
        %v6392 = vpack.c.b16 %v4680, %v4672
        %v6393 = vpack.c.b16 %v4681, %v4673
        %v6394 = vpack.c.b16 %v4682, %v4674
        %v6395 = vpack.c.b16 %v4683, %v4675
        %v6396 = vpack.c.b16 %v4684, %v4676
        %v6397 = vpack.c.b16 %v4685, %v4677
        %v6398 = vpack.c.b16 %v4686, %v4678
        %v6399 = vpack.c.b16 %v4687, %v4679
        %v6400 = vpack.c.b16 %v4696, %v4688
        %v6401 = vpack.c.b16 %v4697, %v4689
        %v6402 = vpack.c.b16 %v4698, %v4690
        %v6403 = vpack.c.b16 %v4699, %v4691
        %v6404 = vpack.c.b16 %v4700, %v4692
        %v6405 = vpack.c.b16 %v4701, %v4693
        %v6406 = vpack.c.b16 %v4702, %v4694
        %v6407 = vpack.c.b16 %v4703, %v4695
        %v6408 = vpack.c.b16 %v4712, %v4704
        %v6409 = vpack.c.b16 %v4713, %v4705
        %v6410 = vpack.c.b16 %v4714, %v4706
        %v6411 = vpack.c.b16 %v4715, %v4707
        %v6412 = vpack.c.b16 %v4716, %v4708
        %v6413 = vpack.c.b16 %v4717, %v4709
        %v6414 = vpack.c.b16 %v4718, %v4710
        %v6415 = vpack.c.b16 %v4719, %v4711
        %v6416 = vpack.c.b16 %v4728, %v4720
        %v6417 = vpack.c.b16 %v4729, %v4721
        %v6418 = vpack.c.b16 %v4730, %v4722
        %v6419 = vpack.c.b16 %v4731, %v4723
        %v6420 = vpack.c.b16 %v4732, %v4724
        %v6421 = vpack.c.b16 %v4733, %v4725
        %v6422 = vpack.c.b16 %v4734, %v4726
        %v6423 = vpack.c.b16 %v4735, %v4727
        %v6424 = vpack.c.b16 %v4744, %v4736
        %v6425 = vpack.c.b16 %v4745, %v4737
        %v6426 = vpack.c.b16 %v4746, %v4738
        %v6427 = vpack.c.b16 %v4747, %v4739
        %v6428 = vpack.c.b16 %v4748, %v4740
        %v6429 = vpack.c.b16 %v4749, %v4741
        %v6430 = vpack.c.b16 %v4750, %v4742
        %v6431 = vpack.c.b16 %v4751, %v4743
        %v6432 = vpack.c.b16 %v4760, %v4752
        %v6433 = vpack.c.b16 %v4761, %v4753
        %v6434 = vpack.c.b16 %v4762, %v4754
        %v6435 = vpack.c.b16 %v4763, %v4755
        %v6436 = vpack.c.b16 %v4764, %v4756
        %v6437 = vpack.c.b16 %v4765, %v4757
        %v6438 = vpack.c.b16 %v4766, %v4758
        %v6439 = vpack.c.b16 %v4767, %v4759
        %v6440 = vpack.c.b16 %v4776, %v4768
        %v6441 = vpack.c.b16 %v4777, %v4769
        %v6442 = vpack.c.b16 %v4778, %v4770
        %v6443 = vpack.c.b16 %v4779, %v4771
        %v6444 = vpack.c.b16 %v4780, %v4772
        %v6445 = vpack.c.b16 %v4781, %v4773
        %v6446 = vpack.c.b16 %v4782, %v4774
        %v6447 = vpack.c.b16 %v4783, %v4775
        %v6448 = vpack.c.b16 %v4792, %v4784
        %v6449 = vpack.c.b16 %v4793, %v4785
        %v6450 = vpack.c.b16 %v4794, %v4786
        %v6451 = vpack.c.b16 %v4795, %v4787
        %v6452 = vpack.c.b16 %v4796, %v4788
        %v6453 = vpack.c.b16 %v4797, %v4789
        %v6454 = vpack.c.b16 %v4798, %v4790
        %v6455 = vpack.c.b16 %v4799, %v4791
        %v6456 = vpack.c.b16 %v4808, %v4800
        %v6457 = vpack.c.b16 %v4809, %v4801
        %v6458 = vpack.c.b16 %v4810, %v4802
        %v6459 = vpack.c.b16 %v4811, %v4803
        %v6460 = vpack.c.b16 %v4812, %v4804
        %v6461 = vpack.c.b16 %v4813, %v4805
        %v6462 = vpack.c.b16 %v4814, %v4806
        %v6463 = vpack.c.b16 %v4815, %v4807
        %v6464 = vpack.c.b16 %v4824, %v4816
        %v6465 = vpack.c.b16 %v4825, %v4817
        %v6466 = vpack.c.b16 %v4826, %v4818
        %v6467 = vpack.c.b16 %v4827, %v4819
        %v6468 = vpack.c.b16 %v4828, %v4820
        %v6469 = vpack.c.b16 %v4829, %v4821
        %v6470 = vpack.c.b16 %v4830, %v4822
        %v6471 = vpack.c.b16 %v4831, %v4823
        %v6472 = vpack.c.b16 %v4840, %v4832
        %v6473 = vpack.c.b16 %v4841, %v4833
        %v6474 = vpack.c.b16 %v4842, %v4834
        %v6475 = vpack.c.b16 %v4843, %v4835
        %v6476 = vpack.c.b16 %v4844, %v4836
        %v6477 = vpack.c.b16 %v4845, %v4837
        %v6478 = vpack.c.b16 %v4846, %v4838
        %v6479 = vpack.c.b16 %v4847, %v4839
        %v6480 = vpack.c.b16 %v4856, %v4848
        %v6481 = vpack.c.b16 %v4857, %v4849
        %v6482 = vpack.c.b16 %v4858, %v4850
        %v6483 = vpack.c.b16 %v4859, %v4851
        %v6484 = vpack.c.b16 %v4860, %v4852
        %v6485 = vpack.c.b16 %v4861, %v4853
        %v6486 = vpack.c.b16 %v4862, %v4854
        %v6487 = vpack.c.b16 %v4863, %v4855
        %v6488 = vpack.c.b16 %v4872, %v4864
        %v6489 = vpack.c.b16 %v4873, %v4865
        %v6490 = vpack.c.b16 %v4874, %v4866
        %v6491 = vpack.c.b16 %v4875, %v4867
        %v6492 = vpack.c.b16 %v4876, %v4868
        %v6493 = vpack.c.b16 %v4877, %v4869
        %v6494 = vpack.c.b16 %v4878, %v4870
        %v6495 = vpack.c.b16 %v4879, %v4871
        %v6496 = vpack.c.b16 %v4888, %v4880
        %v6497 = vpack.c.b16 %v4889, %v4881
        %v6498 = vpack.c.b16 %v4890, %v4882
        %v6499 = vpack.c.b16 %v4891, %v4883
        %v6500 = vpack.c.b16 %v4892, %v4884
        %v6501 = vpack.c.b16 %v4893, %v4885
        %v6502 = vpack.c.b16 %v4894, %v4886
        %v6503 = vpack.c.b16 %v4895, %v4887
        %v6504 = vpack.c.b16 %v4904, %v4896
        %v6505 = vpack.c.b16 %v4905, %v4897
        %v6506 = vpack.c.b16 %v4906, %v4898
        %v6507 = vpack.c.b16 %v4907, %v4899
        %v6508 = vpack.c.b16 %v4908, %v4900
        %v6509 = vpack.c.b16 %v4909, %v4901
        %v6510 = vpack.c.b16 %v4910, %v4902
        %v6511 = vpack.c.b16 %v4911, %v4903
        %v6512 = vpack.c.b16 %v4920, %v4912
        %v6513 = vpack.c.b16 %v4921, %v4913
        %v6514 = vpack.c.b16 %v4922, %v4914
        %v6515 = vpack.c.b16 %v4923, %v4915
        %v6516 = vpack.c.b16 %v4924, %v4916
        %v6517 = vpack.c.b16 %v4925, %v4917
        %v6518 = vpack.c.b16 %v4926, %v4918
        %v6519 = vpack.c.b16 %v4927, %v4919
        %v6520 = vpack.c.b16 %v4936, %v4928
        %v6521 = vpack.c.b16 %v4937, %v4929
        %v6522 = vpack.c.b16 %v4938, %v4930
        %v6523 = vpack.c.b16 %v4939, %v4931
        %v6524 = vpack.c.b16 %v4940, %v4932
        %v6525 = vpack.c.b16 %v4941, %v4933
        %v6526 = vpack.c.b16 %v4942, %v4934
        %v6527 = vpack.c.b16 %v4943, %v4935
        %v6528 = vpack.c.b16 %v4952, %v4944
        %v6529 = vpack.c.b16 %v4953, %v4945
        %v6530 = vpack.c.b16 %v4954, %v4946
        %v6531 = vpack.c.b16 %v4955, %v4947
        %v6532 = vpack.c.b16 %v4956, %v4948
        %v6533 = vpack.c.b16 %v4957, %v4949
        %v6534 = vpack.c.b16 %v4958, %v4950
        %v6535 = vpack.c.b16 %v4959, %v4951
        %v6536 = vpack.c.b16 %v4968, %v4960
        %v6537 = vpack.c.b16 %v4969, %v4961
        %v6538 = vpack.c.b16 %v4970, %v4962
        %v6539 = vpack.c.b16 %v4971, %v4963
        %v6540 = vpack.c.b16 %v4972, %v4964
        %v6541 = vpack.c.b16 %v4973, %v4965
        %v6542 = vpack.c.b16 %v4974, %v4966
        %v6543 = vpack.c.b16 %v4975, %v4967
        %v6544 = vpack.c.b16 %v4984, %v4976
        %v6545 = vpack.c.b16 %v4985, %v4977
        %v6546 = vpack.c.b16 %v4986, %v4978
        %v6547 = vpack.c.b16 %v4987, %v4979
        %v6548 = vpack.c.b16 %v4988, %v4980
        %v6549 = vpack.c.b16 %v4989, %v4981
        %v6550 = vpack.c.b16 %v4990, %v4982
        %v6551 = vpack.c.b16 %v4991, %v4983
        %v6552 = vpack.c.b16 %v5000, %v4992
        %v6553 = vpack.c.b16 %v5001, %v4993
        %v6554 = vpack.c.b16 %v5002, %v4994
        %v6555 = vpack.c.b16 %v5003, %v4995
        %v6556 = vpack.c.b16 %v5004, %v4996
        %v6557 = vpack.c.b16 %v5005, %v4997
        %v6558 = vpack.c.b16 %v5006, %v4998
        %v6559 = vpack.c.b16 %v5007, %v4999
        %v6560 = vpack.c.b16 %v5016, %v5008
        %v6561 = vpack.c.b16 %v5017, %v5009
        %v6562 = vpack.c.b16 %v5018, %v5010
        %v6563 = vpack.c.b16 %v5019, %v5011
        %v6564 = vpack.c.b16 %v5020, %v5012
        %v6565 = vpack.c.b16 %v5021, %v5013
        %v6566 = vpack.c.b16 %v5022, %v5014
        %v6567 = vpack.c.b16 %v5023, %v5015
        %v6568 = vpack.c.b16 %v5032, %v5024
        %v6569 = vpack.c.b16 %v5033, %v5025
        %v6570 = vpack.c.b16 %v5034, %v5026
        %v6571 = vpack.c.b16 %v5035, %v5027
        %v6572 = vpack.c.b16 %v5036, %v5028
        %v6573 = vpack.c.b16 %v5037, %v5029
        %v6574 = vpack.c.b16 %v5038, %v5030
        %v6575 = vpack.c.b16 %v5039, %v5031
        %v6576 = vpack.c.b16 %v5048, %v5040
        %v6577 = vpack.c.b16 %v5049, %v5041
        %v6578 = vpack.c.b16 %v5050, %v5042
        %v6579 = vpack.c.b16 %v5051, %v5043
        %v6580 = vpack.c.b16 %v5052, %v5044
        %v6581 = vpack.c.b16 %v5053, %v5045
        %v6582 = vpack.c.b16 %v5054, %v5046
        %v6583 = vpack.c.b16 %v5055, %v5047
        %v6584 = vpack.c.b16 %v5064, %v5056
        %v6585 = vpack.c.b16 %v5065, %v5057
        %v6586 = vpack.c.b16 %v5066, %v5058
        %v6587 = vpack.c.b16 %v5067, %v5059
        %v6588 = vpack.c.b16 %v5068, %v5060
        %v6589 = vpack.c.b16 %v5069, %v5061
        %v6590 = vpack.c.b16 %v5070, %v5062
        %v6591 = vpack.c.b16 %v5071, %v5063
        %v6592 = vpack.c.b16 %v5080, %v5072
        %v6593 = vpack.c.b16 %v5081, %v5073
        %v6594 = vpack.c.b16 %v5082, %v5074
        %v6595 = vpack.c.b16 %v5083, %v5075
        %v6596 = vpack.c.b16 %v5084, %v5076
        %v6597 = vpack.c.b16 %v5085, %v5077
        %v6598 = vpack.c.b16 %v5086, %v5078
        %v6599 = vpack.c.b16 %v5087, %v5079
        %v6600 = vpack.c.b16 %v5096, %v5088
        %v6601 = vpack.c.b16 %v5097, %v5089
        %v6602 = vpack.c.b16 %v5098, %v5090
        %v6603 = vpack.c.b16 %v5099, %v5091
        %v6604 = vpack.c.b16 %v5100, %v5092
        %v6605 = vpack.c.b16 %v5101, %v5093
        %v6606 = vpack.c.b16 %v5102, %v5094
        %v6607 = vpack.c.b16 %v5103, %v5095
        %v6608 = vpack.c.b16 %v5112, %v5104
        %v6609 = vpack.c.b16 %v5113, %v5105
        %v6610 = vpack.c.b16 %v5114, %v5106
        %v6611 = vpack.c.b16 %v5115, %v5107
        %v6612 = vpack.c.b16 %v5116, %v5108
        %v6613 = vpack.c.b16 %v5117, %v5109
        %v6614 = vpack.c.b16 %v5118, %v5110
        %v6615 = vpack.c.b16 %v5119, %v5111
        %v6616 = vpack.c.b16 %v5128, %v5120
        %v6617 = vpack.c.b16 %v5129, %v5121
        %v6618 = vpack.c.b16 %v5130, %v5122
        %v6619 = vpack.c.b16 %v5131, %v5123
        %v6620 = vpack.c.b16 %v5132, %v5124
        %v6621 = vpack.c.b16 %v5133, %v5125
        %v6622 = vpack.c.b16 %v5134, %v5126
        %v6623 = vpack.c.b16 %v5135, %v5127
        %v6624 = vpack.c.b16 %v5144, %v5136
        %v6625 = vpack.c.b16 %v5145, %v5137
        %v6626 = vpack.c.b16 %v5146, %v5138
        %v6627 = vpack.c.b16 %v5147, %v5139
        %v6628 = vpack.c.b16 %v5148, %v5140
        %v6629 = vpack.c.b16 %v5149, %v5141
        %v6630 = vpack.c.b16 %v5150, %v5142
        %v6631 = vpack.c.b16 %v5151, %v5143
        %v6632 = vpack.c.b16 %v5160, %v5152
        %v6633 = vpack.c.b16 %v5161, %v5153
        %v6634 = vpack.c.b16 %v5162, %v5154
        %v6635 = vpack.c.b16 %v5163, %v5155
        %v6636 = vpack.c.b16 %v5164, %v5156
        %v6637 = vpack.c.b16 %v5165, %v5157
        %v6638 = vpack.c.b16 %v5166, %v5158
        %v6639 = vpack.c.b16 %v5167, %v5159
        %v6640 = vpack.c.b16 %v5176, %v5168
        %v6641 = vpack.c.b16 %v5177, %v5169
        %v6642 = vpack.c.b16 %v5178, %v5170
        %v6643 = vpack.c.b16 %v5179, %v5171
        %v6644 = vpack.c.b16 %v5180, %v5172
        %v6645 = vpack.c.b16 %v5181, %v5173
        %v6646 = vpack.c.b16 %v5182, %v5174
        %v6647 = vpack.c.b16 %v5183, %v5175
        %v6648 = vpack.c.b16 %v5192, %v5184
        %v6649 = vpack.c.b16 %v5193, %v5185
        %v6650 = vpack.c.b16 %v5194, %v5186
        %v6651 = vpack.c.b16 %v5195, %v5187
        %v6652 = vpack.c.b16 %v5196, %v5188
        %v6653 = vpack.c.b16 %v5197, %v5189
        %v6654 = vpack.c.b16 %v5198, %v5190
        %v6655 = vpack.c.b16 %v5199, %v5191
        %v6656 = vpack.c.b16 %v5208, %v5200
        %v6657 = vpack.c.b16 %v5209, %v5201
        %v6658 = vpack.c.b16 %v5210, %v5202
        %v6659 = vpack.c.b16 %v5211, %v5203
        %v6660 = vpack.c.b16 %v5212, %v5204
        %v6661 = vpack.c.b16 %v5213, %v5205
        %v6662 = vpack.c.b16 %v5214, %v5206
        %v6663 = vpack.c.b16 %v5215, %v5207
        %v6664 = vpack.c.b16 %v5224, %v5216
        %v6665 = vpack.c.b16 %v5225, %v5217
        %v6666 = vpack.c.b16 %v5226, %v5218
        %v6667 = vpack.c.b16 %v5227, %v5219
        %v6668 = vpack.c.b16 %v5228, %v5220
        %v6669 = vpack.c.b16 %v5229, %v5221
        %v6670 = vpack.c.b16 %v5230, %v5222
        %v6671 = vpack.c.b16 %v5231, %v5223
        %v6672 = vpack.c.b16 %v5240, %v5232
        %v6673 = vpack.c.b16 %v5241, %v5233
        %v6674 = vpack.c.b16 %v5242, %v5234
        %v6675 = vpack.c.b16 %v5243, %v5235
        %v6676 = vpack.c.b16 %v5244, %v5236
        %v6677 = vpack.c.b16 %v5245, %v5237
        %v6678 = vpack.c.b16 %v5246, %v5238
        %v6679 = vpack.c.b16 %v5247, %v5239
        %v6680 = vpack.c.b16 %v5256, %v5248
        %v6681 = vpack.c.b16 %v5257, %v5249
        %v6682 = vpack.c.b16 %v5258, %v5250
        %v6683 = vpack.c.b16 %v5259, %v5251
        %v6684 = vpack.c.b16 %v5260, %v5252
        %v6685 = vpack.c.b16 %v5261, %v5253
        %v6686 = vpack.c.b16 %v5262, %v5254
        %v6687 = vpack.c.b16 %v5263, %v5255
        %v6688 = vpack.c.b16 %v5272, %v5264
        %v6689 = vpack.c.b16 %v5273, %v5265
        %v6690 = vpack.c.b16 %v5274, %v5266
        %v6691 = vpack.c.b16 %v5275, %v5267
        %v6692 = vpack.c.b16 %v5276, %v5268
        %v6693 = vpack.c.b16 %v5277, %v5269
        %v6694 = vpack.c.b16 %v5278, %v5270
        %v6695 = vpack.c.b16 %v5279, %v5271
        %v6696 = vpack.c.b16 %v5288, %v5280
        %v6697 = vpack.c.b16 %v5289, %v5281
        %v6698 = vpack.c.b16 %v5290, %v5282
        %v6699 = vpack.c.b16 %v5291, %v5283
        %v6700 = vpack.c.b16 %v5292, %v5284
        %v6701 = vpack.c.b16 %v5293, %v5285
        %v6702 = vpack.c.b16 %v5294, %v5286
        %v6703 = vpack.c.b16 %v5295, %v5287
        %v6704 = vpack.c.b16 %v5304, %v5296
        %v6705 = vpack.c.b16 %v5305, %v5297
        %v6706 = vpack.c.b16 %v5306, %v5298
        %v6707 = vpack.c.b16 %v5307, %v5299
        %v6708 = vpack.c.b16 %v5308, %v5300
        %v6709 = vpack.c.b16 %v5309, %v5301
        %v6710 = vpack.c.b16 %v5310, %v5302
        %v6711 = vpack.c.b16 %v5311, %v5303
        %v6712 = vpack.c.b16 %v5320, %v5312
        %v6713 = vpack.c.b16 %v5321, %v5313
        %v6714 = vpack.c.b16 %v5322, %v5314
        %v6715 = vpack.c.b16 %v5323, %v5315
        %v6716 = vpack.c.b16 %v5324, %v5316
        %v6717 = vpack.c.b16 %v5325, %v5317
        %v6718 = vpack.c.b16 %v5326, %v5318
        %v6719 = vpack.c.b16 %v5327, %v5319
        %v6720 = vpack.c.b16 %v5336, %v5328
        %v6721 = vpack.c.b16 %v5337, %v5329
        %v6722 = vpack.c.b16 %v5338, %v5330
        %v6723 = vpack.c.b16 %v5339, %v5331
        %v6724 = vpack.c.b16 %v5340, %v5332
        %v6725 = vpack.c.b16 %v5341, %v5333
        %v6726 = vpack.c.b16 %v5342, %v5334
        %v6727 = vpack.c.b16 %v5343, %v5335
        %v6728 = vpack.c.b16 %v5352, %v5344
        %v6729 = vpack.c.b16 %v5353, %v5345
        %v6730 = vpack.c.b16 %v5354, %v5346
        %v6731 = vpack.c.b16 %v5355, %v5347
        %v6732 = vpack.c.b16 %v5356, %v5348
        %v6733 = vpack.c.b16 %v5357, %v5349
        %v6734 = vpack.c.b16 %v5358, %v5350
        %v6735 = vpack.c.b16 %v5359, %v5351
        %v6736 = vpack.c.b16 %v5368, %v5360
        %v6737 = vpack.c.b16 %v5369, %v5361
        %v6738 = vpack.c.b16 %v5370, %v5362
        %v6739 = vpack.c.b16 %v5371, %v5363
        %v6740 = vpack.c.b16 %v5372, %v5364
        %v6741 = vpack.c.b16 %v5373, %v5365
        %v6742 = vpack.c.b16 %v5374, %v5366
        %v6743 = vpack.c.b16 %v5375, %v5367
        %v6744 = vpack.c.b16 %v5384, %v5376
        %v6745 = vpack.c.b16 %v5385, %v5377
        %v6746 = vpack.c.b16 %v5386, %v5378
        %v6747 = vpack.c.b16 %v5387, %v5379
        %v6748 = vpack.c.b16 %v5388, %v5380
        %v6749 = vpack.c.b16 %v5389, %v5381
        %v6750 = vpack.c.b16 %v5390, %v5382
        %v6751 = vpack.c.b16 %v5391, %v5383
        %v6752 = vpack.c.b16 %v5400, %v5392
        %v6753 = vpack.c.b16 %v5401, %v5393
        %v6754 = vpack.c.b16 %v5402, %v5394
        %v6755 = vpack.c.b16 %v5403, %v5395
        %v6756 = vpack.c.b16 %v5404, %v5396
        %v6757 = vpack.c.b16 %v5405, %v5397
        %v6758 = vpack.c.b16 %v5406, %v5398
        %v6759 = vpack.c.b16 %v5407, %v5399
        %v6760 = vpack.c.b16 %v5416, %v5408
        %v6761 = vpack.c.b16 %v5417, %v5409
        %v6762 = vpack.c.b16 %v5418, %v5410
        %v6763 = vpack.c.b16 %v5419, %v5411
        %v6764 = vpack.c.b16 %v5420, %v5412
        %v6765 = vpack.c.b16 %v5421, %v5413
        %v6766 = vpack.c.b16 %v5422, %v5414
        %v6767 = vpack.c.b16 %v5423, %v5415
        %v6768 = vpack.c.b16 %v5432, %v5424
        %v6769 = vpack.c.b16 %v5433, %v5425
        %v6770 = vpack.c.b16 %v5434, %v5426
        %v6771 = vpack.c.b16 %v5435, %v5427
        %v6772 = vpack.c.b16 %v5436, %v5428
        %v6773 = vpack.c.b16 %v5437, %v5429
        %v6774 = vpack.c.b16 %v5438, %v5430
        %v6775 = vpack.c.b16 %v5439, %v5431
        %v6776 = vpack.c.b16 %v5448, %v5440
        %v6777 = vpack.c.b16 %v5449, %v5441
        %v6778 = vpack.c.b16 %v5450, %v5442
        %v6779 = vpack.c.b16 %v5451, %v5443
        %v6780 = vpack.c.b16 %v5452, %v5444
        %v6781 = vpack.c.b16 %v5453, %v5445
        %v6782 = vpack.c.b16 %v5454, %v5446
        %v6783 = vpack.c.b16 %v5455, %v5447
        %v6784 = vpack.c.b16 %v5464, %v5456
        %v6785 = vpack.c.b16 %v5465, %v5457
        %v6786 = vpack.c.b16 %v5466, %v5458
        %v6787 = vpack.c.b16 %v5467, %v5459
        %v6788 = vpack.c.b16 %v5468, %v5460
        %v6789 = vpack.c.b16 %v5469, %v5461
        %v6790 = vpack.c.b16 %v5470, %v5462
        %v6791 = vpack.c.b16 %v5471, %v5463
        %v6792 = vpack.c.b16 %v5480, %v5472
        %v6793 = vpack.c.b16 %v5481, %v5473
        %v6794 = vpack.c.b16 %v5482, %v5474
        %v6795 = vpack.c.b16 %v5483, %v5475
        %v6796 = vpack.c.b16 %v5484, %v5476
        %v6797 = vpack.c.b16 %v5485, %v5477
        %v6798 = vpack.c.b16 %v5486, %v5478
        %v6799 = vpack.c.b16 %v5487, %v5479
        %v6800 = vpack.c.b16 %v5496, %v5488
        %v6801 = vpack.c.b16 %v5497, %v5489
        %v6802 = vpack.c.b16 %v5498, %v5490
        %v6803 = vpack.c.b16 %v5499, %v5491
        %v6804 = vpack.c.b16 %v5500, %v5492
        %v6805 = vpack.c.b16 %v5501, %v5493
        %v6806 = vpack.c.b16 %v5502, %v5494
        %v6807 = vpack.c.b16 %v5503, %v5495
        %v6808 = vpack.c.b16 %v5512, %v5504
        %v6809 = vpack.c.b16 %v5513, %v5505
        %v6810 = vpack.c.b16 %v5514, %v5506
        %v6811 = vpack.c.b16 %v5515, %v5507
        %v6812 = vpack.c.b16 %v5516, %v5508
        %v6813 = vpack.c.b16 %v5517, %v5509
        %v6814 = vpack.c.b16 %v5518, %v5510
        %v6815 = vpack.c.b16 %v5519, %v5511
        %v6816 = vpack.c.b16 %v5528, %v5520
        %v6817 = vpack.c.b16 %v5529, %v5521
        %v6818 = vpack.c.b16 %v5530, %v5522
        %v6819 = vpack.c.b16 %v5531, %v5523
        %v6820 = vpack.c.b16 %v5532, %v5524
        %v6821 = vpack.c.b16 %v5533, %v5525
        %v6822 = vpack.c.b16 %v5534, %v5526
        %v6823 = vpack.c.b16 %v5535, %v5527
        %v6824 = vpack.c.b16 %v5544, %v5536
        %v6825 = vpack.c.b16 %v5545, %v5537
        %v6826 = vpack.c.b16 %v5546, %v5538
        %v6827 = vpack.c.b16 %v5547, %v5539
        %v6828 = vpack.c.b16 %v5548, %v5540
        %v6829 = vpack.c.b16 %v5549, %v5541
        %v6830 = vpack.c.b16 %v5550, %v5542
        %v6831 = vpack.c.b16 %v5551, %v5543
        %8112 = vmatprep.subr.bf16.mxu0 %v5609
        %8113 = vmatpush1.bf16.msra.mxu0 %v5608
        %8114 = vmatprep.subr.bf16.mxu0 %v5601
        %8115 = vmatpush1.bf16.msra.mxu0 %v5600
        %8116 = vmatprep.subr.bf16.mxu0 %v5593
        %8117 = vmatpush1.bf16.msra.mxu0 %v5592
        %8118 = vmatprep.subr.bf16.mxu0 %v5585
        %8119 = vmatpush1.bf16.msra.mxu0 %v5584
        %8120 = vmatprep.subr.bf16.mxu0 %v5577
        %8121 = vmatpush1.bf16.msra.mxu0 %v5576
        %8122 = vmatprep.subr.bf16.mxu0 %v5569
        %8123 = vmatpush1.bf16.msra.mxu0 %v5568
        %8124 = vmatprep.subr.bf16.mxu0 %v5561
        %8125 = vmatpush1.bf16.msra.mxu0 %v5560
        %8126 = vmatprep.subr.bf16.mxu0 %v5553
        %8127 = vmatpush1.bf16.msra.mxu0 %v5552
        %8128 = vmatprep.subr.bf16.mxu0 %v5673
        %8129 = vmatpush2.bf16.msra.mxu0 %v5672
        %8130 = vmatprep.subr.bf16.mxu0 %v5665
        %8131 = vmatpush2.bf16.msra.mxu0 %v5664
        %8132 = vmatprep.subr.bf16.mxu0 %v5657
        %8133 = vmatpush2.bf16.msra.mxu0 %v5656
        %8134 = vmatprep.subr.bf16.mxu0 %v5649
        %8135 = vmatpush2.bf16.msra.mxu0 %v5648
        %8136 = vmatprep.subr.bf16.mxu0 %v5641
        %8137 = vmatpush2.bf16.msra.mxu0 %v5640
        %8138 = vmatprep.subr.bf16.mxu0 %v5633
        %8139 = vmatpush2.bf16.msra.mxu0 %v5632
        %8140 = vmatprep.subr.bf16.mxu0 %v5625
        %8141 = vmatpush2.bf16.msra.mxu0 %v5624
        %8142 = vmatprep.subr.bf16.mxu0 %v5617
        %8143 = vmatpush2.bf16.msra.mxu0 %v5616
        %8144 = vmatprep.mubr.bf16.mxu0 %v413
        %8145 = vmatmul.mubr.bf16.gmra.mxu0 %v412
        %v8146 = vpop.f32.mrf.mxu0
        %v8147 = vadd.f32 0.0, %v8146
        %v8148 = vpop.f32.mrf.mxu0
        %v8149 = vadd.f32 0.0, %v8148
        %v8150 = vpop.f32.mrf.mxu0
        %v8151 = vpop.f32.mrf.mxu0
        %8152 = vdwg.mxu0
        %8153 = vmatprep.subr.bf16.mxu0 %v5737
        %8154 = vmatpush1.bf16.msra.mxu0 %v5736
        %8155 = vmatprep.subr.bf16.mxu0 %v5729
        %8156 = vmatpush1.bf16.msra.mxu0 %v5728
        %8157 = vmatprep.subr.bf16.mxu0 %v5721
        %8158 = vmatpush1.bf16.msra.mxu0 %v5720
        %8159 = vmatprep.subr.bf16.mxu0 %v5713
        %8160 = vmatpush1.bf16.msra.mxu0 %v5712
        %8161 = vmatprep.subr.bf16.mxu0 %v5705
        %8162 = vmatpush1.bf16.msra.mxu0 %v5704
        %8163 = vmatprep.subr.bf16.mxu0 %v5697
        %8164 = vmatpush1.bf16.msra.mxu0 %v5696
        %8165 = vmatprep.subr.bf16.mxu0 %v5689
        %8166 = vmatpush1.bf16.msra.mxu0 %v5688
        %8167 = vmatprep.subr.bf16.mxu0 %v5681
        %8168 = vmatpush1.bf16.msra.mxu0 %v5680
        %8169 = vmatprep.subr.bf16.mxu0 %v5801
        %8170 = vmatpush2.bf16.msra.mxu0 %v5800
        %8171 = vmatprep.subr.bf16.mxu0 %v5793
        %8172 = vmatpush2.bf16.msra.mxu0 %v5792
        %8173 = vmatprep.subr.bf16.mxu0 %v5785
        %8174 = vmatpush2.bf16.msra.mxu0 %v5784
        %8175 = vmatprep.subr.bf16.mxu0 %v5777
        %8176 = vmatpush2.bf16.msra.mxu0 %v5776
        %8177 = vmatprep.subr.bf16.mxu0 %v5769
        %8178 = vmatpush2.bf16.msra.mxu0 %v5768
        %8179 = vmatprep.subr.bf16.mxu0 %v5761
        %8180 = vmatpush2.bf16.msra.mxu0 %v5760
        %8181 = vmatprep.subr.bf16.mxu0 %v5753
        %8182 = vmatpush2.bf16.msra.mxu0 %v5752
        %8183 = vmatprep.subr.bf16.mxu0 %v5745
        %8184 = vmatpush2.bf16.msra.mxu0 %v5744
        %8185 = vmatprep.mubr.bf16.mxu0 %v415
        %8186 = vmatmul.mubr.bf16.gmra.mxu0 %v414
        %v8187 = vpop.f32.mrf.mxu0
        %v8188 = vadd.f32 %v8147, %v8187
        %v8189 = vpop.f32.mrf.mxu0
        %v8190 = vadd.f32 %v8149, %v8189
        %v8191 = vpop.f32.mrf.mxu0
        %v8192 = vpop.f32.mrf.mxu0
        %8193 = vdwg.mxu0
        %8194 = vmatprep.subr.bf16.mxu0 %v5865
        %8195 = vmatpush1.bf16.msra.mxu0 %v5864
        %8196 = vmatprep.subr.bf16.mxu0 %v5857
        %8197 = vmatpush1.bf16.msra.mxu0 %v5856
        %8198 = vmatprep.subr.bf16.mxu0 %v5849
        %8199 = vmatpush1.bf16.msra.mxu0 %v5848
        %8200 = vmatprep.subr.bf16.mxu0 %v5841
        %8201 = vmatpush1.bf16.msra.mxu0 %v5840
        %8202 = vmatprep.subr.bf16.mxu0 %v5833
        %8203 = vmatpush1.bf16.msra.mxu0 %v5832
        %8204 = vmatprep.subr.bf16.mxu0 %v5825
        %8205 = vmatpush1.bf16.msra.mxu0 %v5824
        %8206 = vmatprep.subr.bf16.mxu0 %v5817
        %8207 = vmatpush1.bf16.msra.mxu0 %v5816
        %8208 = vmatprep.subr.bf16.mxu0 %v5809
        %8209 = vmatpush1.bf16.msra.mxu0 %v5808
        %8210 = vmatprep.subr.bf16.mxu0 %v5929
        %8211 = vmatpush2.bf16.msra.mxu0 %v5928
        %8212 = vmatprep.subr.bf16.mxu0 %v5921
        %8213 = vmatpush2.bf16.msra.mxu0 %v5920
        %8214 = vmatprep.subr.bf16.mxu0 %v5913
        %8215 = vmatpush2.bf16.msra.mxu0 %v5912
        %8216 = vmatprep.subr.bf16.mxu0 %v5905
        %8217 = vmatpush2.bf16.msra.mxu0 %v5904
        %8218 = vmatprep.subr.bf16.mxu0 %v5897
        %8219 = vmatpush2.bf16.msra.mxu0 %v5896
        %8220 = vmatprep.subr.bf16.mxu0 %v5889
        %8221 = vmatpush2.bf16.msra.mxu0 %v5888
        %8222 = vmatprep.subr.bf16.mxu0 %v5881
        %8223 = vmatpush2.bf16.msra.mxu0 %v5880
        %8224 = vmatprep.subr.bf16.mxu0 %v5873
        %8225 = vmatpush2.bf16.msra.mxu0 %v5872
        %8226 = vmatprep.mubr.bf16.mxu0 %v417
        %8227 = vmatmul.mubr.bf16.gmra.mxu0 %v416
        %v8228 = vpop.f32.mrf.mxu0
        %v8229 = vadd.f32 %v8188, %v8228
        %v8230 = vpop.f32.mrf.mxu0
        %v8231 = vadd.f32 %v8190, %v8230
        %v8232 = vpop.f32.mrf.mxu0
        %v8233 = vpop.f32.mrf.mxu0
        %8234 = vdwg.mxu0
        %8235 = vmatprep.subr.bf16.mxu0 %v5993
        %8236 = vmatpush1.bf16.msra.mxu0 %v5992
        %8237 = vmatprep.subr.bf16.mxu0 %v5985
        %8238 = vmatpush1.bf16.msra.mxu0 %v5984
        %8239 = vmatprep.subr.bf16.mxu0 %v5977
        %8240 = vmatpush1.bf16.msra.mxu0 %v5976
        %8241 = vmatprep.subr.bf16.mxu0 %v5969
        %8242 = vmatpush1.bf16.msra.mxu0 %v5968
        %8243 = vmatprep.subr.bf16.mxu0 %v5961
        %8244 = vmatpush1.bf16.msra.mxu0 %v5960
        %8245 = vmatprep.subr.bf16.mxu0 %v5953
        %8246 = vmatpush1.bf16.msra.mxu0 %v5952
        %8247 = vmatprep.subr.bf16.mxu0 %v5945
        %8248 = vmatpush1.bf16.msra.mxu0 %v5944
        %8249 = vmatprep.subr.bf16.mxu0 %v5937
        %8250 = vmatpush1.bf16.msra.mxu0 %v5936
        %8251 = vmatprep.subr.bf16.mxu0 %v6057
        %8252 = vmatpush2.bf16.msra.mxu0 %v6056
        %8253 = vmatprep.subr.bf16.mxu0 %v6049
        %8254 = vmatpush2.bf16.msra.mxu0 %v6048
        %8255 = vmatprep.subr.bf16.mxu0 %v6041
        %8256 = vmatpush2.bf16.msra.mxu0 %v6040
        %8257 = vmatprep.subr.bf16.mxu0 %v6033
        %8258 = vmatpush2.bf16.msra.mxu0 %v6032
        %8259 = vmatprep.subr.bf16.mxu0 %v6025
        %8260 = vmatpush2.bf16.msra.mxu0 %v6024
        %8261 = vmatprep.subr.bf16.mxu0 %v6017
        %8262 = vmatpush2.bf16.msra.mxu0 %v6016
        %8263 = vmatprep.subr.bf16.mxu0 %v6009
        %8264 = vmatpush2.bf16.msra.mxu0 %v6008
        %8265 = vmatprep.subr.bf16.mxu0 %v6001
        %8266 = vmatpush2.bf16.msra.mxu0 %v6000
        %8267 = vmatprep.mubr.bf16.mxu0 %v419
        %8268 = vmatmul.mubr.bf16.gmra.mxu0 %v418
        %v8269 = vpop.f32.mrf.mxu0
        %v8270 = vadd.f32 %v8229, %v8269
        %v8271 = vpop.f32.mrf.mxu0
        %v8272 = vadd.f32 %v8231, %v8271
        %v8273 = vpop.f32.mrf.mxu0
        %v8274 = vpop.f32.mrf.mxu0
        %8275 = vdwg.mxu0
        %8276 = vmatprep.subr.bf16.mxu0 %v6121
        %8277 = vmatpush1.bf16.msra.mxu0 %v6120
        %8278 = vmatprep.subr.bf16.mxu0 %v6113
        %8279 = vmatpush1.bf16.msra.mxu0 %v6112
        %8280 = vmatprep.subr.bf16.mxu0 %v6105
        %8281 = vmatpush1.bf16.msra.mxu0 %v6104
        %8282 = vmatprep.subr.bf16.mxu0 %v6097
        %8283 = vmatpush1.bf16.msra.mxu0 %v6096
        %8284 = vmatprep.subr.bf16.mxu0 %v6089
        %8285 = vmatpush1.bf16.msra.mxu0 %v6088
        %8286 = vmatprep.subr.bf16.mxu0 %v6081
        %8287 = vmatpush1.bf16.msra.mxu0 %v6080
        %8288 = vmatprep.subr.bf16.mxu0 %v6073
        %8289 = vmatpush1.bf16.msra.mxu0 %v6072
        %8290 = vmatprep.subr.bf16.mxu0 %v6065
        %8291 = vmatpush1.bf16.msra.mxu0 %v6064
        %8292 = vmatprep.subr.bf16.mxu0 %v6185
        %8293 = vmatpush2.bf16.msra.mxu0 %v6184
        %8294 = vmatprep.subr.bf16.mxu0 %v6177
        %8295 = vmatpush2.bf16.msra.mxu0 %v6176
        %8296 = vmatprep.subr.bf16.mxu0 %v6169
        %8297 = vmatpush2.bf16.msra.mxu0 %v6168
        %8298 = vmatprep.subr.bf16.mxu0 %v6161
        %8299 = vmatpush2.bf16.msra.mxu0 %v6160
        %8300 = vmatprep.subr.bf16.mxu0 %v6153
        %8301 = vmatpush2.bf16.msra.mxu0 %v6152
        %8302 = vmatprep.subr.bf16.mxu0 %v6145
        %8303 = vmatpush2.bf16.msra.mxu0 %v6144
        %8304 = vmatprep.subr.bf16.mxu0 %v6137
        %8305 = vmatpush2.bf16.msra.mxu0 %v6136
        %8306 = vmatprep.subr.bf16.mxu0 %v6129
        %8307 = vmatpush2.bf16.msra.mxu0 %v6128
        %8308 = vmatprep.mubr.bf16.mxu0 %v421
        %8309 = vmatmul.mubr.bf16.gmra.mxu0 %v420
        %v8310 = vpop.f32.mrf.mxu0
        %v8311 = vadd.f32 %v8270, %v8310
        %v8312 = vpop.f32.mrf.mxu0
        %v8313 = vadd.f32 %v8272, %v8312
        %v8314 = vpop.f32.mrf.mxu0
        %v8315 = vpop.f32.mrf.mxu0
        %8316 = vdwg.mxu0
        %8317 = vmatprep.subr.bf16.mxu0 %v6249
        %8318 = vmatpush1.bf16.msra.mxu0 %v6248
        %8319 = vmatprep.subr.bf16.mxu0 %v6241
        %8320 = vmatpush1.bf16.msra.mxu0 %v6240
        %8321 = vmatprep.subr.bf16.mxu0 %v6233
        %8322 = vmatpush1.bf16.msra.mxu0 %v6232
        %8323 = vmatprep.subr.bf16.mxu0 %v6225
        %8324 = vmatpush1.bf16.msra.mxu0 %v6224
        %8325 = vmatprep.subr.bf16.mxu0 %v6217
        %8326 = vmatpush1.bf16.msra.mxu0 %v6216
        %8327 = vmatprep.subr.bf16.mxu0 %v6209
        %8328 = vmatpush1.bf16.msra.mxu0 %v6208
        %8329 = vmatprep.subr.bf16.mxu0 %v6201
        %8330 = vmatpush1.bf16.msra.mxu0 %v6200
        %8331 = vmatprep.subr.bf16.mxu0 %v6193
        %8332 = vmatpush1.bf16.msra.mxu0 %v6192
        %8333 = vmatprep.subr.bf16.mxu0 %v6313
        %8334 = vmatpush2.bf16.msra.mxu0 %v6312
        %8335 = vmatprep.subr.bf16.mxu0 %v6305
        %8336 = vmatpush2.bf16.msra.mxu0 %v6304
        %8337 = vmatprep.subr.bf16.mxu0 %v6297
        %8338 = vmatpush2.bf16.msra.mxu0 %v6296
        %8339 = vmatprep.subr.bf16.mxu0 %v6289
        %8340 = vmatpush2.bf16.msra.mxu0 %v6288
        %8341 = vmatprep.subr.bf16.mxu0 %v6281
        %8342 = vmatpush2.bf16.msra.mxu0 %v6280
        %8343 = vmatprep.subr.bf16.mxu0 %v6273
        %8344 = vmatpush2.bf16.msra.mxu0 %v6272
        %8345 = vmatprep.subr.bf16.mxu0 %v6265
        %8346 = vmatpush2.bf16.msra.mxu0 %v6264
        %8347 = vmatprep.subr.bf16.mxu0 %v6257
        %8348 = vmatpush2.bf16.msra.mxu0 %v6256
        %8349 = vmatprep.mubr.bf16.mxu0 %v423
        %8350 = vmatmul.mubr.bf16.gmra.mxu0 %v422
        %v8351 = vpop.f32.mrf.mxu0
        %v8352 = vadd.f32 %v8311, %v8351
        %v8353 = vpop.f32.mrf.mxu0
        %v8354 = vadd.f32 %v8313, %v8353
        %v8355 = vpop.f32.mrf.mxu0
        %v8356 = vpop.f32.mrf.mxu0
        %8357 = vdwg.mxu0
        %8358 = vmatprep.subr.bf16.mxu0 %v6377
        %8359 = vmatpush1.bf16.msra.mxu0 %v6376
        %8360 = vmatprep.subr.bf16.mxu0 %v6369
        %8361 = vmatpush1.bf16.msra.mxu0 %v6368
        %8362 = vmatprep.subr.bf16.mxu0 %v6361
        %8363 = vmatpush1.bf16.msra.mxu0 %v6360
        %8364 = vmatprep.subr.bf16.mxu0 %v6353
        %8365 = vmatpush1.bf16.msra.mxu0 %v6352
        %8366 = vmatprep.subr.bf16.mxu0 %v6345
        %8367 = vmatpush1.bf16.msra.mxu0 %v6344
        %8368 = vmatprep.subr.bf16.mxu0 %v6337
        %8369 = vmatpush1.bf16.msra.mxu0 %v6336
        %8370 = vmatprep.subr.bf16.mxu0 %v6329
        %8371 = vmatpush1.bf16.msra.mxu0 %v6328
        %8372 = vmatprep.subr.bf16.mxu0 %v6321
        %8373 = vmatpush1.bf16.msra.mxu0 %v6320
        %8374 = vmatprep.subr.bf16.mxu0 %v6441
        %8375 = vmatpush2.bf16.msra.mxu0 %v6440
        %8376 = vmatprep.subr.bf16.mxu0 %v6433
        %8377 = vmatpush2.bf16.msra.mxu0 %v6432
        %8378 = vmatprep.subr.bf16.mxu0 %v6425
        %8379 = vmatpush2.bf16.msra.mxu0 %v6424
        %8380 = vmatprep.subr.bf16.mxu0 %v6417
        %8381 = vmatpush2.bf16.msra.mxu0 %v6416
        %8382 = vmatprep.subr.bf16.mxu0 %v6409
        %8383 = vmatpush2.bf16.msra.mxu0 %v6408
        %8384 = vmatprep.subr.bf16.mxu0 %v6401
        %8385 = vmatpush2.bf16.msra.mxu0 %v6400
        %8386 = vmatprep.subr.bf16.mxu0 %v6393
        %8387 = vmatpush2.bf16.msra.mxu0 %v6392
        %8388 = vmatprep.subr.bf16.mxu0 %v6385
        %8389 = vmatpush2.bf16.msra.mxu0 %v6384
        %8390 = vmatprep.mubr.bf16.mxu0 %v425
        %8391 = vmatmul.mubr.bf16.gmra.mxu0 %v424
        %v8392 = vpop.f32.mrf.mxu0
        %v8393 = vadd.f32 %v8352, %v8392
        %v8394 = vpop.f32.mrf.mxu0
        %v8395 = vadd.f32 %v8354, %v8394
        %v8396 = vpop.f32.mrf.mxu0
        %v8397 = vpop.f32.mrf.mxu0
        %8398 = vdwg.mxu0
        %8399 = vmatprep.subr.bf16.mxu0 %v6505
        %8400 = vmatpush1.bf16.msra.mxu0 %v6504
        %8401 = vmatprep.subr.bf16.mxu0 %v6497
        %8402 = vmatpush1.bf16.msra.mxu0 %v6496
        %8403 = vmatprep.subr.bf16.mxu0 %v6489
        %8404 = vmatpush1.bf16.msra.mxu0 %v6488
        %8405 = vmatprep.subr.bf16.mxu0 %v6481
        %8406 = vmatpush1.bf16.msra.mxu0 %v6480
        %8407 = vmatprep.subr.bf16.mxu0 %v6473
        %8408 = vmatpush1.bf16.msra.mxu0 %v6472
        %8409 = vmatprep.subr.bf16.mxu0 %v6465
        %8410 = vmatpush1.bf16.msra.mxu0 %v6464
        %8411 = vmatprep.subr.bf16.mxu0 %v6457
        %8412 = vmatpush1.bf16.msra.mxu0 %v6456
        %8413 = vmatprep.subr.bf16.mxu0 %v6449
        %8414 = vmatpush1.bf16.msra.mxu0 %v6448
        %8415 = vmatprep.subr.bf16.mxu0 %v6569
        %8416 = vmatpush2.bf16.msra.mxu0 %v6568
        %8417 = vmatprep.subr.bf16.mxu0 %v6561
        %8418 = vmatpush2.bf16.msra.mxu0 %v6560
        %8419 = vmatprep.subr.bf16.mxu0 %v6553
        %8420 = vmatpush2.bf16.msra.mxu0 %v6552
        %8421 = vmatprep.subr.bf16.mxu0 %v6545
        %8422 = vmatpush2.bf16.msra.mxu0 %v6544
        %8423 = vmatprep.subr.bf16.mxu0 %v6537
        %8424 = vmatpush2.bf16.msra.mxu0 %v6536
        %8425 = vmatprep.subr.bf16.mxu0 %v6529
        %8426 = vmatpush2.bf16.msra.mxu0 %v6528
        %8427 = vmatprep.subr.bf16.mxu0 %v6521
        %8428 = vmatpush2.bf16.msra.mxu0 %v6520
        %8429 = vmatprep.subr.bf16.mxu0 %v6513
        %8430 = vmatpush2.bf16.msra.mxu0 %v6512
        %8431 = vmatprep.mubr.bf16.mxu0 %v427
        %8432 = vmatmul.mubr.bf16.gmra.mxu0 %v426
        %v8433 = vpop.f32.mrf.mxu0
        %v8434 = vadd.f32 %v8393, %v8433
        %v8435 = vpop.f32.mrf.mxu0
        %v8436 = vadd.f32 %v8395, %v8435
        %v8437 = vpop.f32.mrf.mxu0
        %v8438 = vpop.f32.mrf.mxu0
        %8439 = vdwg.mxu0
        %8440 = vmatprep.subr.bf16.mxu0 %v6633
        %8441 = vmatpush1.bf16.msra.mxu0 %v6632
        %8442 = vmatprep.subr.bf16.mxu0 %v6625
        %8443 = vmatpush1.bf16.msra.mxu0 %v6624
        %8444 = vmatprep.subr.bf16.mxu0 %v6617
        %8445 = vmatpush1.bf16.msra.mxu0 %v6616
        %8446 = vmatprep.subr.bf16.mxu0 %v6609
        %8447 = vmatpush1.bf16.msra.mxu0 %v6608
        %8448 = vmatprep.subr.bf16.mxu0 %v6601
        %8449 = vmatpush1.bf16.msra.mxu0 %v6600
        %8450 = vmatprep.subr.bf16.mxu0 %v6593
        %8451 = vmatpush1.bf16.msra.mxu0 %v6592
        %8452 = vmatprep.subr.bf16.mxu0 %v6585
        %8453 = vmatpush1.bf16.msra.mxu0 %v6584
        %8454 = vmatprep.subr.bf16.mxu0 %v6577
        %8455 = vmatpush1.bf16.msra.mxu0 %v6576
        %8456 = vmatprep.subr.bf16.mxu0 %v6697
        %8457 = vmatpush2.bf16.msra.mxu0 %v6696
        %8458 = vmatprep.subr.bf16.mxu0 %v6689
        %8459 = vmatpush2.bf16.msra.mxu0 %v6688
        %8460 = vmatprep.subr.bf16.mxu0 %v6681
        %8461 = vmatpush2.bf16.msra.mxu0 %v6680
        %8462 = vmatprep.subr.bf16.mxu0 %v6673
        %8463 = vmatpush2.bf16.msra.mxu0 %v6672
        %8464 = vmatprep.subr.bf16.mxu0 %v6665
        %8465 = vmatpush2.bf16.msra.mxu0 %v6664
        %8466 = vmatprep.subr.bf16.mxu0 %v6657
        %8467 = vmatpush2.bf16.msra.mxu0 %v6656
        %8468 = vmatprep.subr.bf16.mxu0 %v6649
        %8469 = vmatpush2.bf16.msra.mxu0 %v6648
        %8470 = vmatprep.subr.bf16.mxu0 %v6641
        %8471 = vmatpush2.bf16.msra.mxu0 %v6640
        %8472 = vmatprep.mubr.bf16.mxu0 %v429
        %8473 = vmatmul.mubr.bf16.gmra.mxu0 %v428
        %v8474 = vpop.f32.mrf.mxu0
        %v8475 = vadd.f32 %v8434, %v8474
        %v8476 = vpop.f32.mrf.mxu0
        %v8477 = vadd.f32 %v8436, %v8476
        %v8478 = vpop.f32.mrf.mxu0
        %v8479 = vpop.f32.mrf.mxu0
        %8480 = vdwg.mxu0
        %8481 = vmatprep.subr.bf16.mxu0 %v6761
        %8482 = vmatpush1.bf16.msra.mxu0 %v6760
        %8483 = vmatprep.subr.bf16.mxu0 %v6753
        %8484 = vmatpush1.bf16.msra.mxu0 %v6752
        %8485 = vmatprep.subr.bf16.mxu0 %v6745
        %8486 = vmatpush1.bf16.msra.mxu0 %v6744
        %8487 = vmatprep.subr.bf16.mxu0 %v6737
        %8488 = vmatpush1.bf16.msra.mxu0 %v6736
        %8489 = vmatprep.subr.bf16.mxu0 %v6729
        %8490 = vmatpush1.bf16.msra.mxu0 %v6728
        %8491 = vmatprep.subr.bf16.mxu0 %v6721
        %8492 = vmatpush1.bf16.msra.mxu0 %v6720
        %8493 = vmatprep.subr.bf16.mxu0 %v6713
        %8494 = vmatpush1.bf16.msra.mxu0 %v6712
        %8495 = vmatprep.subr.bf16.mxu0 %v6705
        %8496 = vmatpush1.bf16.msra.mxu0 %v6704
        %8497 = vmatprep.subr.bf16.mxu0 %v6825
        %8498 = vmatpush2.bf16.msra.mxu0 %v6824
        %8499 = vmatprep.subr.bf16.mxu0 %v6817
        %8500 = vmatpush2.bf16.msra.mxu0 %v6816
        %8501 = vmatprep.subr.bf16.mxu0 %v6809
        %8502 = vmatpush2.bf16.msra.mxu0 %v6808
        %8503 = vmatprep.subr.bf16.mxu0 %v6801
        %8504 = vmatpush2.bf16.msra.mxu0 %v6800
        %8505 = vmatprep.subr.bf16.mxu0 %v6793
        %8506 = vmatpush2.bf16.msra.mxu0 %v6792
        %8507 = vmatprep.subr.bf16.mxu0 %v6785
        %8508 = vmatpush2.bf16.msra.mxu0 %v6784
        %8509 = vmatprep.subr.bf16.mxu0 %v6777
        %8510 = vmatpush2.bf16.msra.mxu0 %v6776
        %8511 = vmatprep.subr.bf16.mxu0 %v6769
        %8512 = vmatpush2.bf16.msra.mxu0 %v6768
        %8513 = vmatprep.mubr.bf16.mxu0 %v431
        %8514 = vmatmul.mubr.bf16.gmra.mxu0 %v430
        %v8515 = vpop.f32.mrf.mxu0
        %v8516 = vadd.f32 %v8475, %v8515
        %v8517 = vpop.f32.mrf.mxu0
        %v8518 = vadd.f32 %v8477, %v8517
        %v8519 = vpop.f32.mrf.mxu0
        %v8520 = vpop.f32.mrf.mxu0
        %8521 = vdwg.mxu0
        %8522 = vmatprep.subr.bf16.mxu0 %v5611
        %8523 = vmatpush1.bf16.msra.mxu0 %v5610
        %8524 = vmatprep.subr.bf16.mxu0 %v5603
        %8525 = vmatpush1.bf16.msra.mxu0 %v5602
        %8526 = vmatprep.subr.bf16.mxu0 %v5595
        %8527 = vmatpush1.bf16.msra.mxu0 %v5594
        %8528 = vmatprep.subr.bf16.mxu0 %v5587
        %8529 = vmatpush1.bf16.msra.mxu0 %v5586
        %8530 = vmatprep.subr.bf16.mxu0 %v5579
        %8531 = vmatpush1.bf16.msra.mxu0 %v5578
        %8532 = vmatprep.subr.bf16.mxu0 %v5571
        %8533 = vmatpush1.bf16.msra.mxu0 %v5570
        %8534 = vmatprep.subr.bf16.mxu0 %v5563
        %8535 = vmatpush1.bf16.msra.mxu0 %v5562
        %8536 = vmatprep.subr.bf16.mxu0 %v5555
        %8537 = vmatpush1.bf16.msra.mxu0 %v5554
        %8538 = vmatprep.subr.bf16.mxu0 %v5675
        %8539 = vmatpush2.bf16.msra.mxu0 %v5674
        %8540 = vmatprep.subr.bf16.mxu0 %v5667
        %8541 = vmatpush2.bf16.msra.mxu0 %v5666
        %8542 = vmatprep.subr.bf16.mxu0 %v5659
        %8543 = vmatpush2.bf16.msra.mxu0 %v5658
        %8544 = vmatprep.subr.bf16.mxu0 %v5651
        %8545 = vmatpush2.bf16.msra.mxu0 %v5650
        %8546 = vmatprep.subr.bf16.mxu0 %v5643
        %8547 = vmatpush2.bf16.msra.mxu0 %v5642
        %8548 = vmatprep.subr.bf16.mxu0 %v5635
        %8549 = vmatpush2.bf16.msra.mxu0 %v5634
        %8550 = vmatprep.subr.bf16.mxu0 %v5627
        %8551 = vmatpush2.bf16.msra.mxu0 %v5626
        %8552 = vmatprep.subr.bf16.mxu0 %v5619
        %8553 = vmatpush2.bf16.msra.mxu0 %v5618
        %8554 = vmatprep.mubr.bf16.mxu0 %v413
        %8555 = vmatmul.mubr.bf16.gmra.mxu0 %v412
        %v8556 = vpop.f32.mrf.mxu0
        %v8557 = vadd.f32 0.0, %v8556
        %v8558 = vpop.f32.mrf.mxu0
        %v8559 = vadd.f32 0.0, %v8558
        %v8560 = vpop.f32.mrf.mxu0
        %v8561 = vpop.f32.mrf.mxu0
        %8562 = vdwg.mxu0
        %8563 = vmatprep.subr.bf16.mxu0 %v5739
        %8564 = vmatpush1.bf16.msra.mxu0 %v5738
        %8565 = vmatprep.subr.bf16.mxu0 %v5731
        %8566 = vmatpush1.bf16.msra.mxu0 %v5730
        %8567 = vmatprep.subr.bf16.mxu0 %v5723
        %8568 = vmatpush1.bf16.msra.mxu0 %v5722
        %8569 = vmatprep.subr.bf16.mxu0 %v5715
        %8570 = vmatpush1.bf16.msra.mxu0 %v5714
        %8571 = vmatprep.subr.bf16.mxu0 %v5707
        %8572 = vmatpush1.bf16.msra.mxu0 %v5706
        %8573 = vmatprep.subr.bf16.mxu0 %v5699
        %8574 = vmatpush1.bf16.msra.mxu0 %v5698
        %8575 = vmatprep.subr.bf16.mxu0 %v5691
        %8576 = vmatpush1.bf16.msra.mxu0 %v5690
        %8577 = vmatprep.subr.bf16.mxu0 %v5683
        %8578 = vmatpush1.bf16.msra.mxu0 %v5682
        %8579 = vmatprep.subr.bf16.mxu0 %v5803
        %8580 = vmatpush2.bf16.msra.mxu0 %v5802
        %8581 = vmatprep.subr.bf16.mxu0 %v5795
        %8582 = vmatpush2.bf16.msra.mxu0 %v5794
        %8583 = vmatprep.subr.bf16.mxu0 %v5787
        %8584 = vmatpush2.bf16.msra.mxu0 %v5786
        %8585 = vmatprep.subr.bf16.mxu0 %v5779
        %8586 = vmatpush2.bf16.msra.mxu0 %v5778
        %8587 = vmatprep.subr.bf16.mxu0 %v5771
        %8588 = vmatpush2.bf16.msra.mxu0 %v5770
        %8589 = vmatprep.subr.bf16.mxu0 %v5763
        %8590 = vmatpush2.bf16.msra.mxu0 %v5762
        %8591 = vmatprep.subr.bf16.mxu0 %v5755
        %8592 = vmatpush2.bf16.msra.mxu0 %v5754
        %8593 = vmatprep.subr.bf16.mxu0 %v5747
        %8594 = vmatpush2.bf16.msra.mxu0 %v5746
        %8595 = vmatprep.mubr.bf16.mxu0 %v415
        %8596 = vmatmul.mubr.bf16.gmra.mxu0 %v414
        %v8597 = vpop.f32.mrf.mxu0
        %v8598 = vadd.f32 %v8557, %v8597
        %v8599 = vpop.f32.mrf.mxu0
        %v8600 = vadd.f32 %v8559, %v8599
        %v8601 = vpop.f32.mrf.mxu0
        %v8602 = vpop.f32.mrf.mxu0
        %8603 = vdwg.mxu0
        %8604 = vmatprep.subr.bf16.mxu0 %v5867
        %8605 = vmatpush1.bf16.msra.mxu0 %v5866
        %8606 = vmatprep.subr.bf16.mxu0 %v5859
        %8607 = vmatpush1.bf16.msra.mxu0 %v5858
        %8608 = vmatprep.subr.bf16.mxu0 %v5851
        %8609 = vmatpush1.bf16.msra.mxu0 %v5850
        %8610 = vmatprep.subr.bf16.mxu0 %v5843
        %8611 = vmatpush1.bf16.msra.mxu0 %v5842
        %8612 = vmatprep.subr.bf16.mxu0 %v5835
        %8613 = vmatpush1.bf16.msra.mxu0 %v5834
        %8614 = vmatprep.subr.bf16.mxu0 %v5827
        %8615 = vmatpush1.bf16.msra.mxu0 %v5826
        %8616 = vmatprep.subr.bf16.mxu0 %v5819
        %8617 = vmatpush1.bf16.msra.mxu0 %v5818
        %8618 = vmatprep.subr.bf16.mxu0 %v5811
        %8619 = vmatpush1.bf16.msra.mxu0 %v5810
        %8620 = vmatprep.subr.bf16.mxu0 %v5931
        %8621 = vmatpush2.bf16.msra.mxu0 %v5930
        %8622 = vmatprep.subr.bf16.mxu0 %v5923
        %8623 = vmatpush2.bf16.msra.mxu0 %v5922
        %8624 = vmatprep.subr.bf16.mxu0 %v5915
        %8625 = vmatpush2.bf16.msra.mxu0 %v5914
        %8626 = vmatprep.subr.bf16.mxu0 %v5907
        %8627 = vmatpush2.bf16.msra.mxu0 %v5906
        %8628 = vmatprep.subr.bf16.mxu0 %v5899
        %8629 = vmatpush2.bf16.msra.mxu0 %v5898
        %8630 = vmatprep.subr.bf16.mxu0 %v5891
        %8631 = vmatpush2.bf16.msra.mxu0 %v5890
        %8632 = vmatprep.subr.bf16.mxu0 %v5883
        %8633 = vmatpush2.bf16.msra.mxu0 %v5882
        %8634 = vmatprep.subr.bf16.mxu0 %v5875
        %8635 = vmatpush2.bf16.msra.mxu0 %v5874
        %8636 = vmatprep.mubr.bf16.mxu0 %v417
        %8637 = vmatmul.mubr.bf16.gmra.mxu0 %v416
        %v8638 = vpop.f32.mrf.mxu0
        %v8639 = vadd.f32 %v8598, %v8638
        %v8640 = vpop.f32.mrf.mxu0
        %v8641 = vadd.f32 %v8600, %v8640
        %v8642 = vpop.f32.mrf.mxu0
        %v8643 = vpop.f32.mrf.mxu0
        %8644 = vdwg.mxu0
        %8645 = vmatprep.subr.bf16.mxu0 %v5995
        %8646 = vmatpush1.bf16.msra.mxu0 %v5994
        %8647 = vmatprep.subr.bf16.mxu0 %v5987
        %8648 = vmatpush1.bf16.msra.mxu0 %v5986
        %8649 = vmatprep.subr.bf16.mxu0 %v5979
        %8650 = vmatpush1.bf16.msra.mxu0 %v5978
        %8651 = vmatprep.subr.bf16.mxu0 %v5971
        %8652 = vmatpush1.bf16.msra.mxu0 %v5970
        %8653 = vmatprep.subr.bf16.mxu0 %v5963
        %8654 = vmatpush1.bf16.msra.mxu0 %v5962
        %8655 = vmatprep.subr.bf16.mxu0 %v5955
        %8656 = vmatpush1.bf16.msra.mxu0 %v5954
        %8657 = vmatprep.subr.bf16.mxu0 %v5947
        %8658 = vmatpush1.bf16.msra.mxu0 %v5946
        %8659 = vmatprep.subr.bf16.mxu0 %v5939
        %8660 = vmatpush1.bf16.msra.mxu0 %v5938
        %8661 = vmatprep.subr.bf16.mxu0 %v6059
        %8662 = vmatpush2.bf16.msra.mxu0 %v6058
        %8663 = vmatprep.subr.bf16.mxu0 %v6051
        %8664 = vmatpush2.bf16.msra.mxu0 %v6050
        %8665 = vmatprep.subr.bf16.mxu0 %v6043
        %8666 = vmatpush2.bf16.msra.mxu0 %v6042
        %8667 = vmatprep.subr.bf16.mxu0 %v6035
        %8668 = vmatpush2.bf16.msra.mxu0 %v6034
        %8669 = vmatprep.subr.bf16.mxu0 %v6027
        %8670 = vmatpush2.bf16.msra.mxu0 %v6026
        %8671 = vmatprep.subr.bf16.mxu0 %v6019
        %8672 = vmatpush2.bf16.msra.mxu0 %v6018
        %8673 = vmatprep.subr.bf16.mxu0 %v6011
        %8674 = vmatpush2.bf16.msra.mxu0 %v6010
        %8675 = vmatprep.subr.bf16.mxu0 %v6003
        %8676 = vmatpush2.bf16.msra.mxu0 %v6002
        %8677 = vmatprep.mubr.bf16.mxu0 %v419
        %8678 = vmatmul.mubr.bf16.gmra.mxu0 %v418
        %v8679 = vpop.f32.mrf.mxu0
        %v8680 = vadd.f32 %v8639, %v8679
        %v8681 = vpop.f32.mrf.mxu0
        %v8682 = vadd.f32 %v8641, %v8681
        %v8683 = vpop.f32.mrf.mxu0
        %v8684 = vpop.f32.mrf.mxu0
        %8685 = vdwg.mxu0
        %8686 = vmatprep.subr.bf16.mxu0 %v6123
        %8687 = vmatpush1.bf16.msra.mxu0 %v6122
        %8688 = vmatprep.subr.bf16.mxu0 %v6115
        %8689 = vmatpush1.bf16.msra.mxu0 %v6114
        %8690 = vmatprep.subr.bf16.mxu0 %v6107
        %8691 = vmatpush1.bf16.msra.mxu0 %v6106
        %8692 = vmatprep.subr.bf16.mxu0 %v6099
        %8693 = vmatpush1.bf16.msra.mxu0 %v6098
        %8694 = vmatprep.subr.bf16.mxu0 %v6091
        %8695 = vmatpush1.bf16.msra.mxu0 %v6090
        %8696 = vmatprep.subr.bf16.mxu0 %v6083
        %8697 = vmatpush1.bf16.msra.mxu0 %v6082
        %8698 = vmatprep.subr.bf16.mxu0 %v6075
        %8699 = vmatpush1.bf16.msra.mxu0 %v6074
        %8700 = vmatprep.subr.bf16.mxu0 %v6067
        %8701 = vmatpush1.bf16.msra.mxu0 %v6066
        %8702 = vmatprep.subr.bf16.mxu0 %v6187
        %8703 = vmatpush2.bf16.msra.mxu0 %v6186
        %8704 = vmatprep.subr.bf16.mxu0 %v6179
        %8705 = vmatpush2.bf16.msra.mxu0 %v6178
        %8706 = vmatprep.subr.bf16.mxu0 %v6171
        %8707 = vmatpush2.bf16.msra.mxu0 %v6170
        %8708 = vmatprep.subr.bf16.mxu0 %v6163
        %8709 = vmatpush2.bf16.msra.mxu0 %v6162
        %8710 = vmatprep.subr.bf16.mxu0 %v6155
        %8711 = vmatpush2.bf16.msra.mxu0 %v6154
        %8712 = vmatprep.subr.bf16.mxu0 %v6147
        %8713 = vmatpush2.bf16.msra.mxu0 %v6146
        %8714 = vmatprep.subr.bf16.mxu0 %v6139
        %8715 = vmatpush2.bf16.msra.mxu0 %v6138
        %8716 = vmatprep.subr.bf16.mxu0 %v6131
        %8717 = vmatpush2.bf16.msra.mxu0 %v6130
        %8718 = vmatprep.mubr.bf16.mxu0 %v421
        %8719 = vmatmul.mubr.bf16.gmra.mxu0 %v420
        %v8720 = vpop.f32.mrf.mxu0
        %v8721 = vadd.f32 %v8680, %v8720
        %v8722 = vpop.f32.mrf.mxu0
        %v8723 = vadd.f32 %v8682, %v8722
        %v8724 = vpop.f32.mrf.mxu0
        %v8725 = vpop.f32.mrf.mxu0
        %8726 = vdwg.mxu0
        %8727 = vmatprep.subr.bf16.mxu0 %v6251
        %8728 = vmatpush1.bf16.msra.mxu0 %v6250
        %8729 = vmatprep.subr.bf16.mxu0 %v6243
        %8730 = vmatpush1.bf16.msra.mxu0 %v6242
        %8731 = vmatprep.subr.bf16.mxu0 %v6235
        %8732 = vmatpush1.bf16.msra.mxu0 %v6234
        %8733 = vmatprep.subr.bf16.mxu0 %v6227
        %8734 = vmatpush1.bf16.msra.mxu0 %v6226
        %8735 = vmatprep.subr.bf16.mxu0 %v6219
        %8736 = vmatpush1.bf16.msra.mxu0 %v6218
        %8737 = vmatprep.subr.bf16.mxu0 %v6211
        %8738 = vmatpush1.bf16.msra.mxu0 %v6210
        %8739 = vmatprep.subr.bf16.mxu0 %v6203
        %8740 = vmatpush1.bf16.msra.mxu0 %v6202
        %8741 = vmatprep.subr.bf16.mxu0 %v6195
        %8742 = vmatpush1.bf16.msra.mxu0 %v6194
        %8743 = vmatprep.subr.bf16.mxu0 %v6315
        %8744 = vmatpush2.bf16.msra.mxu0 %v6314
        %8745 = vmatprep.subr.bf16.mxu0 %v6307
        %8746 = vmatpush2.bf16.msra.mxu0 %v6306
        %8747 = vmatprep.subr.bf16.mxu0 %v6299
        %8748 = vmatpush2.bf16.msra.mxu0 %v6298
        %8749 = vmatprep.subr.bf16.mxu0 %v6291
        %8750 = vmatpush2.bf16.msra.mxu0 %v6290
        %8751 = vmatprep.subr.bf16.mxu0 %v6283
        %8752 = vmatpush2.bf16.msra.mxu0 %v6282
        %8753 = vmatprep.subr.bf16.mxu0 %v6275
        %8754 = vmatpush2.bf16.msra.mxu0 %v6274
        %8755 = vmatprep.subr.bf16.mxu0 %v6267
        %8756 = vmatpush2.bf16.msra.mxu0 %v6266
        %8757 = vmatprep.subr.bf16.mxu0 %v6259
        %8758 = vmatpush2.bf16.msra.mxu0 %v6258
        %8759 = vmatprep.mubr.bf16.mxu0 %v423
        %8760 = vmatmul.mubr.bf16.gmra.mxu0 %v422
        %v8761 = vpop.f32.mrf.mxu0
        %v8762 = vadd.f32 %v8721, %v8761
        %v8763 = vpop.f32.mrf.mxu0
        %v8764 = vadd.f32 %v8723, %v8763
        %v8765 = vpop.f32.mrf.mxu0
        %v8766 = vpop.f32.mrf.mxu0
        %8767 = vdwg.mxu0
        %8768 = vmatprep.subr.bf16.mxu0 %v6379
        %8769 = vmatpush1.bf16.msra.mxu0 %v6378
        %8770 = vmatprep.subr.bf16.mxu0 %v6371
        %8771 = vmatpush1.bf16.msra.mxu0 %v6370
        %8772 = vmatprep.subr.bf16.mxu0 %v6363
        %8773 = vmatpush1.bf16.msra.mxu0 %v6362
        %8774 = vmatprep.subr.bf16.mxu0 %v6355
        %8775 = vmatpush1.bf16.msra.mxu0 %v6354
        %8776 = vmatprep.subr.bf16.mxu0 %v6347
        %8777 = vmatpush1.bf16.msra.mxu0 %v6346
        %8778 = vmatprep.subr.bf16.mxu0 %v6339
        %8779 = vmatpush1.bf16.msra.mxu0 %v6338
        %8780 = vmatprep.subr.bf16.mxu0 %v6331
        %8781 = vmatpush1.bf16.msra.mxu0 %v6330
        %8782 = vmatprep.subr.bf16.mxu0 %v6323
        %8783 = vmatpush1.bf16.msra.mxu0 %v6322
        %8784 = vmatprep.subr.bf16.mxu0 %v6443
        %8785 = vmatpush2.bf16.msra.mxu0 %v6442
        %8786 = vmatprep.subr.bf16.mxu0 %v6435
        %8787 = vmatpush2.bf16.msra.mxu0 %v6434
        %8788 = vmatprep.subr.bf16.mxu0 %v6427
        %8789 = vmatpush2.bf16.msra.mxu0 %v6426
        %8790 = vmatprep.subr.bf16.mxu0 %v6419
        %8791 = vmatpush2.bf16.msra.mxu0 %v6418
        %8792 = vmatprep.subr.bf16.mxu0 %v6411
        %8793 = vmatpush2.bf16.msra.mxu0 %v6410
        %8794 = vmatprep.subr.bf16.mxu0 %v6403
        %8795 = vmatpush2.bf16.msra.mxu0 %v6402
        %8796 = vmatprep.subr.bf16.mxu0 %v6395
        %8797 = vmatpush2.bf16.msra.mxu0 %v6394
        %8798 = vmatprep.subr.bf16.mxu0 %v6387
        %8799 = vmatpush2.bf16.msra.mxu0 %v6386
        %8800 = vmatprep.mubr.bf16.mxu0 %v425
        %8801 = vmatmul.mubr.bf16.gmra.mxu0 %v424
        %v8802 = vpop.f32.mrf.mxu0
        %v8803 = vadd.f32 %v8762, %v8802
        %v8804 = vpop.f32.mrf.mxu0
        %v8805 = vadd.f32 %v8764, %v8804
        %v8806 = vpop.f32.mrf.mxu0
        %v8807 = vpop.f32.mrf.mxu0
        %8808 = vdwg.mxu0
        %8809 = vmatprep.subr.bf16.mxu0 %v6507
        %8810 = vmatpush1.bf16.msra.mxu0 %v6506
        %8811 = vmatprep.subr.bf16.mxu0 %v6499
        %8812 = vmatpush1.bf16.msra.mxu0 %v6498
        %8813 = vmatprep.subr.bf16.mxu0 %v6491
        %8814 = vmatpush1.bf16.msra.mxu0 %v6490
        %8815 = vmatprep.subr.bf16.mxu0 %v6483
        %8816 = vmatpush1.bf16.msra.mxu0 %v6482
        %8817 = vmatprep.subr.bf16.mxu0 %v6475
        %8818 = vmatpush1.bf16.msra.mxu0 %v6474
        %8819 = vmatprep.subr.bf16.mxu0 %v6467
        %8820 = vmatpush1.bf16.msra.mxu0 %v6466
        %8821 = vmatprep.subr.bf16.mxu0 %v6459
        %8822 = vmatpush1.bf16.msra.mxu0 %v6458
        %8823 = vmatprep.subr.bf16.mxu0 %v6451
        %8824 = vmatpush1.bf16.msra.mxu0 %v6450
        %8825 = vmatprep.subr.bf16.mxu0 %v6571
        %8826 = vmatpush2.bf16.msra.mxu0 %v6570
        %8827 = vmatprep.subr.bf16.mxu0 %v6563
        %8828 = vmatpush2.bf16.msra.mxu0 %v6562
        %8829 = vmatprep.subr.bf16.mxu0 %v6555
        %8830 = vmatpush2.bf16.msra.mxu0 %v6554
        %8831 = vmatprep.subr.bf16.mxu0 %v6547
        %8832 = vmatpush2.bf16.msra.mxu0 %v6546
        %8833 = vmatprep.subr.bf16.mxu0 %v6539
        %8834 = vmatpush2.bf16.msra.mxu0 %v6538
        %8835 = vmatprep.subr.bf16.mxu0 %v6531
        %8836 = vmatpush2.bf16.msra.mxu0 %v6530
        %8837 = vmatprep.subr.bf16.mxu0 %v6523
        %8838 = vmatpush2.bf16.msra.mxu0 %v6522
        %8839 = vmatprep.subr.bf16.mxu0 %v6515
        %8840 = vmatpush2.bf16.msra.mxu0 %v6514
        %8841 = vmatprep.mubr.bf16.mxu0 %v427
        %8842 = vmatmul.mubr.bf16.gmra.mxu0 %v426
        %v8843 = vpop.f32.mrf.mxu0
        %v8844 = vadd.f32 %v8803, %v8843
        %v8845 = vpop.f32.mrf.mxu0
        %v8846 = vadd.f32 %v8805, %v8845
        %v8847 = vpop.f32.mrf.mxu0
        %v8848 = vpop.f32.mrf.mxu0
        %8849 = vdwg.mxu0
        %8850 = vmatprep.subr.bf16.mxu0 %v6635
        %8851 = vmatpush1.bf16.msra.mxu0 %v6634
        %8852 = vmatprep.subr.bf16.mxu0 %v6627
        %8853 = vmatpush1.bf16.msra.mxu0 %v6626
        %8854 = vmatprep.subr.bf16.mxu0 %v6619
        %8855 = vmatpush1.bf16.msra.mxu0 %v6618
        %8856 = vmatprep.subr.bf16.mxu0 %v6611
        %8857 = vmatpush1.bf16.msra.mxu0 %v6610
        %8858 = vmatprep.subr.bf16.mxu0 %v6603
        %8859 = vmatpush1.bf16.msra.mxu0 %v6602
        %8860 = vmatprep.subr.bf16.mxu0 %v6595
        %8861 = vmatpush1.bf16.msra.mxu0 %v6594
        %8862 = vmatprep.subr.bf16.mxu0 %v6587
        %8863 = vmatpush1.bf16.msra.mxu0 %v6586
        %8864 = vmatprep.subr.bf16.mxu0 %v6579
        %8865 = vmatpush1.bf16.msra.mxu0 %v6578
        %8866 = vmatprep.subr.bf16.mxu0 %v6699
        %8867 = vmatpush2.bf16.msra.mxu0 %v6698
        %8868 = vmatprep.subr.bf16.mxu0 %v6691
        %8869 = vmatpush2.bf16.msra.mxu0 %v6690
        %8870 = vmatprep.subr.bf16.mxu0 %v6683
        %8871 = vmatpush2.bf16.msra.mxu0 %v6682
        %8872 = vmatprep.subr.bf16.mxu0 %v6675
        %8873 = vmatpush2.bf16.msra.mxu0 %v6674
        %8874 = vmatprep.subr.bf16.mxu0 %v6667
        %8875 = vmatpush2.bf16.msra.mxu0 %v6666
        %8876 = vmatprep.subr.bf16.mxu0 %v6659
        %8877 = vmatpush2.bf16.msra.mxu0 %v6658
        %8878 = vmatprep.subr.bf16.mxu0 %v6651
        %8879 = vmatpush2.bf16.msra.mxu0 %v6650
        %8880 = vmatprep.subr.bf16.mxu0 %v6643
        %8881 = vmatpush2.bf16.msra.mxu0 %v6642
        %8882 = vmatprep.mubr.bf16.mxu0 %v429
        %8883 = vmatmul.mubr.bf16.gmra.mxu0 %v428
        %v8884 = vpop.f32.mrf.mxu0
        %v8885 = vadd.f32 %v8844, %v8884
        %v8886 = vpop.f32.mrf.mxu0
        %v8887 = vadd.f32 %v8846, %v8886
        %v8888 = vpop.f32.mrf.mxu0
        %v8889 = vpop.f32.mrf.mxu0
        %8890 = vdwg.mxu0
        %8891 = vmatprep.subr.bf16.mxu0 %v6763
        %8892 = vmatpush1.bf16.msra.mxu0 %v6762
        %8893 = vmatprep.subr.bf16.mxu0 %v6755
        %8894 = vmatpush1.bf16.msra.mxu0 %v6754
        %8895 = vmatprep.subr.bf16.mxu0 %v6747
        %8896 = vmatpush1.bf16.msra.mxu0 %v6746
        %8897 = vmatprep.subr.bf16.mxu0 %v6739
        %8898 = vmatpush1.bf16.msra.mxu0 %v6738
        %8899 = vmatprep.subr.bf16.mxu0 %v6731
        %8900 = vmatpush1.bf16.msra.mxu0 %v6730
        %8901 = vmatprep.subr.bf16.mxu0 %v6723
        %8902 = vmatpush1.bf16.msra.mxu0 %v6722
        %8903 = vmatprep.subr.bf16.mxu0 %v6715
        %8904 = vmatpush1.bf16.msra.mxu0 %v6714
        %8905 = vmatprep.subr.bf16.mxu0 %v6707
        %8906 = vmatpush1.bf16.msra.mxu0 %v6706
        %8907 = vmatprep.subr.bf16.mxu0 %v6827
        %8908 = vmatpush2.bf16.msra.mxu0 %v6826
        %8909 = vmatprep.subr.bf16.mxu0 %v6819
        %8910 = vmatpush2.bf16.msra.mxu0 %v6818
        %8911 = vmatprep.subr.bf16.mxu0 %v6811
        %8912 = vmatpush2.bf16.msra.mxu0 %v6810
        %8913 = vmatprep.subr.bf16.mxu0 %v6803
        %8914 = vmatpush2.bf16.msra.mxu0 %v6802
        %8915 = vmatprep.subr.bf16.mxu0 %v6795
        %8916 = vmatpush2.bf16.msra.mxu0 %v6794
        %8917 = vmatprep.subr.bf16.mxu0 %v6787
        %8918 = vmatpush2.bf16.msra.mxu0 %v6786
        %8919 = vmatprep.subr.bf16.mxu0 %v6779
        %8920 = vmatpush2.bf16.msra.mxu0 %v6778
        %8921 = vmatprep.subr.bf16.mxu0 %v6771
        %8922 = vmatpush2.bf16.msra.mxu0 %v6770
        %8923 = vmatprep.mubr.bf16.mxu0 %v431
        %8924 = vmatmul.mubr.bf16.gmra.mxu0 %v430
        %v8925 = vpop.f32.mrf.mxu0
        %v8926 = vadd.f32 %v8885, %v8925
        %v8927 = vpop.f32.mrf.mxu0
        %v8928 = vadd.f32 %v8887, %v8927
        %v8929 = vpop.f32.mrf.mxu0
        %v8930 = vpop.f32.mrf.mxu0
        %8931 = vdwg.mxu0
        %8932 = vmatprep.subr.bf16.mxu0 %v5613
        %8933 = vmatpush1.bf16.msra.mxu0 %v5612
        %8934 = vmatprep.subr.bf16.mxu0 %v5605
        %8935 = vmatpush1.bf16.msra.mxu0 %v5604
        %8936 = vmatprep.subr.bf16.mxu0 %v5597
        %8937 = vmatpush1.bf16.msra.mxu0 %v5596
        %8938 = vmatprep.subr.bf16.mxu0 %v5589
        %8939 = vmatpush1.bf16.msra.mxu0 %v5588
        %8940 = vmatprep.subr.bf16.mxu0 %v5581
        %8941 = vmatpush1.bf16.msra.mxu0 %v5580
        %8942 = vmatprep.subr.bf16.mxu0 %v5573
        %8943 = vmatpush1.bf16.msra.mxu0 %v5572
        %8944 = vmatprep.subr.bf16.mxu0 %v5565
        %8945 = vmatpush1.bf16.msra.mxu0 %v5564
        %8946 = vmatprep.subr.bf16.mxu0 %v5557
        %8947 = vmatpush1.bf16.msra.mxu0 %v5556
        %8948 = vmatprep.subr.bf16.mxu0 %v5677
        %8949 = vmatpush2.bf16.msra.mxu0 %v5676
        %8950 = vmatprep.subr.bf16.mxu0 %v5669
        %8951 = vmatpush2.bf16.msra.mxu0 %v5668
        %8952 = vmatprep.subr.bf16.mxu0 %v5661
        %8953 = vmatpush2.bf16.msra.mxu0 %v5660
        %8954 = vmatprep.subr.bf16.mxu0 %v5653
        %8955 = vmatpush2.bf16.msra.mxu0 %v5652
        %8956 = vmatprep.subr.bf16.mxu0 %v5645
        %8957 = vmatpush2.bf16.msra.mxu0 %v5644
        %8958 = vmatprep.subr.bf16.mxu0 %v5637
        %8959 = vmatpush2.bf16.msra.mxu0 %v5636
        %8960 = vmatprep.subr.bf16.mxu0 %v5629
        %8961 = vmatpush2.bf16.msra.mxu0 %v5628
        %8962 = vmatprep.subr.bf16.mxu0 %v5621
        %8963 = vmatpush2.bf16.msra.mxu0 %v5620
        %8964 = vmatprep.mubr.bf16.mxu0 %v413
        %8965 = vmatmul.mubr.bf16.gmra.mxu0 %v412
        %v8966 = vpop.f32.mrf.mxu0
        %v8967 = vadd.f32 0.0, %v8966
        %v8968 = vpop.f32.mrf.mxu0
        %v8969 = vadd.f32 0.0, %v8968
        %v8970 = vpop.f32.mrf.mxu0
        %v8971 = vpop.f32.mrf.mxu0
        %8972 = vdwg.mxu0
        %8973 = vmatprep.subr.bf16.mxu0 %v5741
        %8974 = vmatpush1.bf16.msra.mxu0 %v5740
        %8975 = vmatprep.subr.bf16.mxu0 %v5733
        %8976 = vmatpush1.bf16.msra.mxu0 %v5732
        %8977 = vmatprep.subr.bf16.mxu0 %v5725
        %8978 = vmatpush1.bf16.msra.mxu0 %v5724
        %8979 = vmatprep.subr.bf16.mxu0 %v5717
        %8980 = vmatpush1.bf16.msra.mxu0 %v5716
        %8981 = vmatprep.subr.bf16.mxu0 %v5709
        %8982 = vmatpush1.bf16.msra.mxu0 %v5708
        %8983 = vmatprep.subr.bf16.mxu0 %v5701
        %8984 = vmatpush1.bf16.msra.mxu0 %v5700
        %8985 = vmatprep.subr.bf16.mxu0 %v5693
        %8986 = vmatpush1.bf16.msra.mxu0 %v5692
        %8987 = vmatprep.subr.bf16.mxu0 %v5685
        %8988 = vmatpush1.bf16.msra.mxu0 %v5684
        %8989 = vmatprep.subr.bf16.mxu0 %v5805
        %8990 = vmatpush2.bf16.msra.mxu0 %v5804
        %8991 = vmatprep.subr.bf16.mxu0 %v5797
        %8992 = vmatpush2.bf16.msra.mxu0 %v5796
        %8993 = vmatprep.subr.bf16.mxu0 %v5789
        %8994 = vmatpush2.bf16.msra.mxu0 %v5788
        %8995 = vmatprep.subr.bf16.mxu0 %v5781
        %8996 = vmatpush2.bf16.msra.mxu0 %v5780
        %8997 = vmatprep.subr.bf16.mxu0 %v5773
        %8998 = vmatpush2.bf16.msra.mxu0 %v5772
        %8999 = vmatprep.subr.bf16.mxu0 %v5765
        %9000 = vmatpush2.bf16.msra.mxu0 %v5764
        %9001 = vmatprep.subr.bf16.mxu0 %v5757
        %9002 = vmatpush2.bf16.msra.mxu0 %v5756
        %9003 = vmatprep.subr.bf16.mxu0 %v5749
        %9004 = vmatpush2.bf16.msra.mxu0 %v5748
        %9005 = vmatprep.mubr.bf16.mxu0 %v415
        %9006 = vmatmul.mubr.bf16.gmra.mxu0 %v414
        %v9007 = vpop.f32.mrf.mxu0
        %v9008 = vadd.f32 %v8967, %v9007
        %v9009 = vpop.f32.mrf.mxu0
        %v9010 = vadd.f32 %v8969, %v9009
        %v9011 = vpop.f32.mrf.mxu0
        %v9012 = vpop.f32.mrf.mxu0
        %9013 = vdwg.mxu0
        %9014 = vmatprep.subr.bf16.mxu0 %v5869
        %9015 = vmatpush1.bf16.msra.mxu0 %v5868
        %9016 = vmatprep.subr.bf16.mxu0 %v5861
        %9017 = vmatpush1.bf16.msra.mxu0 %v5860
        %9018 = vmatprep.subr.bf16.mxu0 %v5853
        %9019 = vmatpush1.bf16.msra.mxu0 %v5852
        %9020 = vmatprep.subr.bf16.mxu0 %v5845
        %9021 = vmatpush1.bf16.msra.mxu0 %v5844
        %9022 = vmatprep.subr.bf16.mxu0 %v5837
        %9023 = vmatpush1.bf16.msra.mxu0 %v5836
        %9024 = vmatprep.subr.bf16.mxu0 %v5829
        %9025 = vmatpush1.bf16.msra.mxu0 %v5828
        %9026 = vmatprep.subr.bf16.mxu0 %v5821
        %9027 = vmatpush1.bf16.msra.mxu0 %v5820
        %9028 = vmatprep.subr.bf16.mxu0 %v5813
        %9029 = vmatpush1.bf16.msra.mxu0 %v5812
        %9030 = vmatprep.subr.bf16.mxu0 %v5933
        %9031 = vmatpush2.bf16.msra.mxu0 %v5932
        %9032 = vmatprep.subr.bf16.mxu0 %v5925
        %9033 = vmatpush2.bf16.msra.mxu0 %v5924
        %9034 = vmatprep.subr.bf16.mxu0 %v5917
        %9035 = vmatpush2.bf16.msra.mxu0 %v5916
        %9036 = vmatprep.subr.bf16.mxu0 %v5909
        %9037 = vmatpush2.bf16.msra.mxu0 %v5908
        %9038 = vmatprep.subr.bf16.mxu0 %v5901
        %9039 = vmatpush2.bf16.msra.mxu0 %v5900
        %9040 = vmatprep.subr.bf16.mxu0 %v5893
        %9041 = vmatpush2.bf16.msra.mxu0 %v5892
        %9042 = vmatprep.subr.bf16.mxu0 %v5885
        %9043 = vmatpush2.bf16.msra.mxu0 %v5884
        %9044 = vmatprep.subr.bf16.mxu0 %v5877
        %9045 = vmatpush2.bf16.msra.mxu0 %v5876
        %9046 = vmatprep.mubr.bf16.mxu0 %v417
        %9047 = vmatmul.mubr.bf16.gmra.mxu0 %v416
        %v9048 = vpop.f32.mrf.mxu0
        %v9049 = vadd.f32 %v9008, %v9048
        %v9050 = vpop.f32.mrf.mxu0
        %v9051 = vadd.f32 %v9010, %v9050
        %v9052 = vpop.f32.mrf.mxu0
        %v9053 = vpop.f32.mrf.mxu0
        %9054 = vdwg.mxu0
        %9055 = vmatprep.subr.bf16.mxu0 %v5997
        %9056 = vmatpush1.bf16.msra.mxu0 %v5996
        %9057 = vmatprep.subr.bf16.mxu0 %v5989
        %9058 = vmatpush1.bf16.msra.mxu0 %v5988
        %9059 = vmatprep.subr.bf16.mxu0 %v5981
        %9060 = vmatpush1.bf16.msra.mxu0 %v5980
        %9061 = vmatprep.subr.bf16.mxu0 %v5973
        %9062 = vmatpush1.bf16.msra.mxu0 %v5972
        %9063 = vmatprep.subr.bf16.mxu0 %v5965
        %9064 = vmatpush1.bf16.msra.mxu0 %v5964
        %9065 = vmatprep.subr.bf16.mxu0 %v5957
        %9066 = vmatpush1.bf16.msra.mxu0 %v5956
        %9067 = vmatprep.subr.bf16.mxu0 %v5949
        %9068 = vmatpush1.bf16.msra.mxu0 %v5948
        %9069 = vmatprep.subr.bf16.mxu0 %v5941
        %9070 = vmatpush1.bf16.msra.mxu0 %v5940
        %9071 = vmatprep.subr.bf16.mxu0 %v6061
        %9072 = vmatpush2.bf16.msra.mxu0 %v6060
        %9073 = vmatprep.subr.bf16.mxu0 %v6053
        %9074 = vmatpush2.bf16.msra.mxu0 %v6052
        %9075 = vmatprep.subr.bf16.mxu0 %v6045
        %9076 = vmatpush2.bf16.msra.mxu0 %v6044
        %9077 = vmatprep.subr.bf16.mxu0 %v6037
        %9078 = vmatpush2.bf16.msra.mxu0 %v6036
        %9079 = vmatprep.subr.bf16.mxu0 %v6029
        %9080 = vmatpush2.bf16.msra.mxu0 %v6028
        %9081 = vmatprep.subr.bf16.mxu0 %v6021
        %9082 = vmatpush2.bf16.msra.mxu0 %v6020
        %9083 = vmatprep.subr.bf16.mxu0 %v6013
        %9084 = vmatpush2.bf16.msra.mxu0 %v6012
        %9085 = vmatprep.subr.bf16.mxu0 %v6005
        %9086 = vmatpush2.bf16.msra.mxu0 %v6004
        %9087 = vmatprep.mubr.bf16.mxu0 %v419
        %9088 = vmatmul.mubr.bf16.gmra.mxu0 %v418
        %v9089 = vpop.f32.mrf.mxu0
        %v9090 = vadd.f32 %v9049, %v9089
        %v9091 = vpop.f32.mrf.mxu0
        %v9092 = vadd.f32 %v9051, %v9091
        %v9093 = vpop.f32.mrf.mxu0
        %v9094 = vpop.f32.mrf.mxu0
        %9095 = vdwg.mxu0
        %9096 = vmatprep.subr.bf16.mxu0 %v6125
        %9097 = vmatpush1.bf16.msra.mxu0 %v6124
        %9098 = vmatprep.subr.bf16.mxu0 %v6117
        %9099 = vmatpush1.bf16.msra.mxu0 %v6116
        %9100 = vmatprep.subr.bf16.mxu0 %v6109
        %9101 = vmatpush1.bf16.msra.mxu0 %v6108
        %9102 = vmatprep.subr.bf16.mxu0 %v6101
        %9103 = vmatpush1.bf16.msra.mxu0 %v6100
        %9104 = vmatprep.subr.bf16.mxu0 %v6093
        %9105 = vmatpush1.bf16.msra.mxu0 %v6092
        %9106 = vmatprep.subr.bf16.mxu0 %v6085
        %9107 = vmatpush1.bf16.msra.mxu0 %v6084
        %9108 = vmatprep.subr.bf16.mxu0 %v6077
        %9109 = vmatpush1.bf16.msra.mxu0 %v6076
        %9110 = vmatprep.subr.bf16.mxu0 %v6069
        %9111 = vmatpush1.bf16.msra.mxu0 %v6068
        %9112 = vmatprep.subr.bf16.mxu0 %v6189
        %9113 = vmatpush2.bf16.msra.mxu0 %v6188
        %9114 = vmatprep.subr.bf16.mxu0 %v6181
        %9115 = vmatpush2.bf16.msra.mxu0 %v6180
        %9116 = vmatprep.subr.bf16.mxu0 %v6173
        %9117 = vmatpush2.bf16.msra.mxu0 %v6172
        %9118 = vmatprep.subr.bf16.mxu0 %v6165
        %9119 = vmatpush2.bf16.msra.mxu0 %v6164
        %9120 = vmatprep.subr.bf16.mxu0 %v6157
        %9121 = vmatpush2.bf16.msra.mxu0 %v6156
        %9122 = vmatprep.subr.bf16.mxu0 %v6149
        %9123 = vmatpush2.bf16.msra.mxu0 %v6148
        %9124 = vmatprep.subr.bf16.mxu0 %v6141
        %9125 = vmatpush2.bf16.msra.mxu0 %v6140
        %9126 = vmatprep.subr.bf16.mxu0 %v6133
        %9127 = vmatpush2.bf16.msra.mxu0 %v6132
        %9128 = vmatprep.mubr.bf16.mxu0 %v421
        %9129 = vmatmul.mubr.bf16.gmra.mxu0 %v420
        %v9130 = vpop.f32.mrf.mxu0
        %v9131 = vadd.f32 %v9090, %v9130
        %v9132 = vpop.f32.mrf.mxu0
        %v9133 = vadd.f32 %v9092, %v9132
        %v9134 = vpop.f32.mrf.mxu0
        %v9135 = vpop.f32.mrf.mxu0
        %9136 = vdwg.mxu0
        %9137 = vmatprep.subr.bf16.mxu0 %v6253
        %9138 = vmatpush1.bf16.msra.mxu0 %v6252
        %9139 = vmatprep.subr.bf16.mxu0 %v6245
        %9140 = vmatpush1.bf16.msra.mxu0 %v6244
        %9141 = vmatprep.subr.bf16.mxu0 %v6237
        %9142 = vmatpush1.bf16.msra.mxu0 %v6236
        %9143 = vmatprep.subr.bf16.mxu0 %v6229
        %9144 = vmatpush1.bf16.msra.mxu0 %v6228
        %9145 = vmatprep.subr.bf16.mxu0 %v6221
        %9146 = vmatpush1.bf16.msra.mxu0 %v6220
        %9147 = vmatprep.subr.bf16.mxu0 %v6213
        %9148 = vmatpush1.bf16.msra.mxu0 %v6212
        %9149 = vmatprep.subr.bf16.mxu0 %v6205
        %9150 = vmatpush1.bf16.msra.mxu0 %v6204
        %9151 = vmatprep.subr.bf16.mxu0 %v6197
        %9152 = vmatpush1.bf16.msra.mxu0 %v6196
        %9153 = vmatprep.subr.bf16.mxu0 %v6317
        %9154 = vmatpush2.bf16.msra.mxu0 %v6316
        %9155 = vmatprep.subr.bf16.mxu0 %v6309
        %9156 = vmatpush2.bf16.msra.mxu0 %v6308
        %9157 = vmatprep.subr.bf16.mxu0 %v6301
        %9158 = vmatpush2.bf16.msra.mxu0 %v6300
        %9159 = vmatprep.subr.bf16.mxu0 %v6293
        %9160 = vmatpush2.bf16.msra.mxu0 %v6292
        %9161 = vmatprep.subr.bf16.mxu0 %v6285
        %9162 = vmatpush2.bf16.msra.mxu0 %v6284
        %9163 = vmatprep.subr.bf16.mxu0 %v6277
        %9164 = vmatpush2.bf16.msra.mxu0 %v6276
        %9165 = vmatprep.subr.bf16.mxu0 %v6269
        %9166 = vmatpush2.bf16.msra.mxu0 %v6268
        %9167 = vmatprep.subr.bf16.mxu0 %v6261
        %9168 = vmatpush2.bf16.msra.mxu0 %v6260
        %9169 = vmatprep.mubr.bf16.mxu0 %v423
        %9170 = vmatmul.mubr.bf16.gmra.mxu0 %v422
        %v9171 = vpop.f32.mrf.mxu0
        %v9172 = vadd.f32 %v9131, %v9171
        %v9173 = vpop.f32.mrf.mxu0
        %v9174 = vadd.f32 %v9133, %v9173
        %v9175 = vpop.f32.mrf.mxu0
        %v9176 = vpop.f32.mrf.mxu0
        %9177 = vdwg.mxu0
        %9178 = vmatprep.subr.bf16.mxu0 %v6381
        %9179 = vmatpush1.bf16.msra.mxu0 %v6380
        %9180 = vmatprep.subr.bf16.mxu0 %v6373
        %9181 = vmatpush1.bf16.msra.mxu0 %v6372
        %9182 = vmatprep.subr.bf16.mxu0 %v6365
        %9183 = vmatpush1.bf16.msra.mxu0 %v6364
        %9184 = vmatprep.subr.bf16.mxu0 %v6357
        %9185 = vmatpush1.bf16.msra.mxu0 %v6356
        %9186 = vmatprep.subr.bf16.mxu0 %v6349
        %9187 = vmatpush1.bf16.msra.mxu0 %v6348
        %9188 = vmatprep.subr.bf16.mxu0 %v6341
        %9189 = vmatpush1.bf16.msra.mxu0 %v6340
        %9190 = vmatprep.subr.bf16.mxu0 %v6333
        %9191 = vmatpush1.bf16.msra.mxu0 %v6332
        %9192 = vmatprep.subr.bf16.mxu0 %v6325
        %9193 = vmatpush1.bf16.msra.mxu0 %v6324
        %9194 = vmatprep.subr.bf16.mxu0 %v6445
        %9195 = vmatpush2.bf16.msra.mxu0 %v6444
        %9196 = vmatprep.subr.bf16.mxu0 %v6437
        %9197 = vmatpush2.bf16.msra.mxu0 %v6436
        %9198 = vmatprep.subr.bf16.mxu0 %v6429
        %9199 = vmatpush2.bf16.msra.mxu0 %v6428
        %9200 = vmatprep.subr.bf16.mxu0 %v6421
        %9201 = vmatpush2.bf16.msra.mxu0 %v6420
        %9202 = vmatprep.subr.bf16.mxu0 %v6413
        %9203 = vmatpush2.bf16.msra.mxu0 %v6412
        %9204 = vmatprep.subr.bf16.mxu0 %v6405
        %9205 = vmatpush2.bf16.msra.mxu0 %v6404
        %9206 = vmatprep.subr.bf16.mxu0 %v6397
        %9207 = vmatpush2.bf16.msra.mxu0 %v6396
        %9208 = vmatprep.subr.bf16.mxu0 %v6389
        %9209 = vmatpush2.bf16.msra.mxu0 %v6388
        %9210 = vmatprep.mubr.bf16.mxu0 %v425
        %9211 = vmatmul.mubr.bf16.gmra.mxu0 %v424
        %v9212 = vpop.f32.mrf.mxu0
        %v9213 = vadd.f32 %v9172, %v9212
        %v9214 = vpop.f32.mrf.mxu0
        %v9215 = vadd.f32 %v9174, %v9214
        %v9216 = vpop.f32.mrf.mxu0
        %v9217 = vpop.f32.mrf.mxu0
        %9218 = vdwg.mxu0
        %9219 = vmatprep.subr.bf16.mxu0 %v6509
        %9220 = vmatpush1.bf16.msra.mxu0 %v6508
        %9221 = vmatprep.subr.bf16.mxu0 %v6501
        %9222 = vmatpush1.bf16.msra.mxu0 %v6500
        %9223 = vmatprep.subr.bf16.mxu0 %v6493
        %9224 = vmatpush1.bf16.msra.mxu0 %v6492
        %9225 = vmatprep.subr.bf16.mxu0 %v6485
        %9226 = vmatpush1.bf16.msra.mxu0 %v6484
        %9227 = vmatprep.subr.bf16.mxu0 %v6477
        %9228 = vmatpush1.bf16.msra.mxu0 %v6476
        %9229 = vmatprep.subr.bf16.mxu0 %v6469
        %9230 = vmatpush1.bf16.msra.mxu0 %v6468
        %9231 = vmatprep.subr.bf16.mxu0 %v6461
        %9232 = vmatpush1.bf16.msra.mxu0 %v6460
        %9233 = vmatprep.subr.bf16.mxu0 %v6453
        %9234 = vmatpush1.bf16.msra.mxu0 %v6452
        %9235 = vmatprep.subr.bf16.mxu0 %v6573
        %9236 = vmatpush2.bf16.msra.mxu0 %v6572
        %9237 = vmatprep.subr.bf16.mxu0 %v6565
        %9238 = vmatpush2.bf16.msra.mxu0 %v6564
        %9239 = vmatprep.subr.bf16.mxu0 %v6557
        %9240 = vmatpush2.bf16.msra.mxu0 %v6556
        %9241 = vmatprep.subr.bf16.mxu0 %v6549
        %9242 = vmatpush2.bf16.msra.mxu0 %v6548
        %9243 = vmatprep.subr.bf16.mxu0 %v6541
        %9244 = vmatpush2.bf16.msra.mxu0 %v6540
        %9245 = vmatprep.subr.bf16.mxu0 %v6533
        %9246 = vmatpush2.bf16.msra.mxu0 %v6532
        %9247 = vmatprep.subr.bf16.mxu0 %v6525
        %9248 = vmatpush2.bf16.msra.mxu0 %v6524
        %9249 = vmatprep.subr.bf16.mxu0 %v6517
        %9250 = vmatpush2.bf16.msra.mxu0 %v6516
        %9251 = vmatprep.mubr.bf16.mxu0 %v427
        %9252 = vmatmul.mubr.bf16.gmra.mxu0 %v426
        %v9253 = vpop.f32.mrf.mxu0
        %v9254 = vadd.f32 %v9213, %v9253
        %v9255 = vpop.f32.mrf.mxu0
        %v9256 = vadd.f32 %v9215, %v9255
        %v9257 = vpop.f32.mrf.mxu0
        %v9258 = vpop.f32.mrf.mxu0
        %9259 = vdwg.mxu0
        %9260 = vmatprep.subr.bf16.mxu0 %v6637
        %9261 = vmatpush1.bf16.msra.mxu0 %v6636
        %9262 = vmatprep.subr.bf16.mxu0 %v6629
        %9263 = vmatpush1.bf16.msra.mxu0 %v6628
        %9264 = vmatprep.subr.bf16.mxu0 %v6621
        %9265 = vmatpush1.bf16.msra.mxu0 %v6620
        %9266 = vmatprep.subr.bf16.mxu0 %v6613
        %9267 = vmatpush1.bf16.msra.mxu0 %v6612
        %9268 = vmatprep.subr.bf16.mxu0 %v6605
        %9269 = vmatpush1.bf16.msra.mxu0 %v6604
        %9270 = vmatprep.subr.bf16.mxu0 %v6597
        %9271 = vmatpush1.bf16.msra.mxu0 %v6596
        %9272 = vmatprep.subr.bf16.mxu0 %v6589
        %9273 = vmatpush1.bf16.msra.mxu0 %v6588
        %9274 = vmatprep.subr.bf16.mxu0 %v6581
        %9275 = vmatpush1.bf16.msra.mxu0 %v6580
        %9276 = vmatprep.subr.bf16.mxu0 %v6701
        %9277 = vmatpush2.bf16.msra.mxu0 %v6700
        %9278 = vmatprep.subr.bf16.mxu0 %v6693
        %9279 = vmatpush2.bf16.msra.mxu0 %v6692
        %9280 = vmatprep.subr.bf16.mxu0 %v6685
        %9281 = vmatpush2.bf16.msra.mxu0 %v6684
        %9282 = vmatprep.subr.bf16.mxu0 %v6677
        %9283 = vmatpush2.bf16.msra.mxu0 %v6676
        %9284 = vmatprep.subr.bf16.mxu0 %v6669
        %9285 = vmatpush2.bf16.msra.mxu0 %v6668
        %9286 = vmatprep.subr.bf16.mxu0 %v6661
        %9287 = vmatpush2.bf16.msra.mxu0 %v6660
        %9288 = vmatprep.subr.bf16.mxu0 %v6653
        %9289 = vmatpush2.bf16.msra.mxu0 %v6652
        %9290 = vmatprep.subr.bf16.mxu0 %v6645
        %9291 = vmatpush2.bf16.msra.mxu0 %v6644
        %9292 = vmatprep.mubr.bf16.mxu0 %v429
        %9293 = vmatmul.mubr.bf16.gmra.mxu0 %v428
        %v9294 = vpop.f32.mrf.mxu0
        %v9295 = vadd.f32 %v9254, %v9294
        %v9296 = vpop.f32.mrf.mxu0
        %v9297 = vadd.f32 %v9256, %v9296
        %v9298 = vpop.f32.mrf.mxu0
        %v9299 = vpop.f32.mrf.mxu0
        %9300 = vdwg.mxu0
        %9301 = vmatprep.subr.bf16.mxu0 %v6765
        %9302 = vmatpush1.bf16.msra.mxu0 %v6764
        %9303 = vmatprep.subr.bf16.mxu0 %v6757
        %9304 = vmatpush1.bf16.msra.mxu0 %v6756
        %9305 = vmatprep.subr.bf16.mxu0 %v6749
        %9306 = vmatpush1.bf16.msra.mxu0 %v6748
        %9307 = vmatprep.subr.bf16.mxu0 %v6741
        %9308 = vmatpush1.bf16.msra.mxu0 %v6740
        %9309 = vmatprep.subr.bf16.mxu0 %v6733
        %9310 = vmatpush1.bf16.msra.mxu0 %v6732
        %9311 = vmatprep.subr.bf16.mxu0 %v6725
        %9312 = vmatpush1.bf16.msra.mxu0 %v6724
        %9313 = vmatprep.subr.bf16.mxu0 %v6717
        %9314 = vmatpush1.bf16.msra.mxu0 %v6716
        %9315 = vmatprep.subr.bf16.mxu0 %v6709
        %9316 = vmatpush1.bf16.msra.mxu0 %v6708
        %9317 = vmatprep.subr.bf16.mxu0 %v6829
        %9318 = vmatpush2.bf16.msra.mxu0 %v6828
        %9319 = vmatprep.subr.bf16.mxu0 %v6821
        %9320 = vmatpush2.bf16.msra.mxu0 %v6820
        %9321 = vmatprep.subr.bf16.mxu0 %v6813
        %9322 = vmatpush2.bf16.msra.mxu0 %v6812
        %9323 = vmatprep.subr.bf16.mxu0 %v6805
        %9324 = vmatpush2.bf16.msra.mxu0 %v6804
        %9325 = vmatprep.subr.bf16.mxu0 %v6797
        %9326 = vmatpush2.bf16.msra.mxu0 %v6796
        %9327 = vmatprep.subr.bf16.mxu0 %v6789
        %9328 = vmatpush2.bf16.msra.mxu0 %v6788
        %9329 = vmatprep.subr.bf16.mxu0 %v6781
        %9330 = vmatpush2.bf16.msra.mxu0 %v6780
        %9331 = vmatprep.subr.bf16.mxu0 %v6773
        %9332 = vmatpush2.bf16.msra.mxu0 %v6772
        %9333 = vmatprep.mubr.bf16.mxu0 %v431
        %9334 = vmatmul.mubr.bf16.gmra.mxu0 %v430
        %v9335 = vpop.f32.mrf.mxu0
        %v9336 = vadd.f32 %v9295, %v9335
        %v9337 = vpop.f32.mrf.mxu0
        %v9338 = vadd.f32 %v9297, %v9337
        %v9339 = vpop.f32.mrf.mxu0
        %v9340 = vpop.f32.mrf.mxu0
        %9341 = vdwg.mxu0
        %9342 = vmatprep.subr.bf16.mxu0 %v5615
        %9343 = vmatpush1.bf16.msra.mxu0 %v5614
        %9344 = vmatprep.subr.bf16.mxu0 %v5607
        %9345 = vmatpush1.bf16.msra.mxu0 %v5606
        %9346 = vmatprep.subr.bf16.mxu0 %v5599
        %9347 = vmatpush1.bf16.msra.mxu0 %v5598
        %9348 = vmatprep.subr.bf16.mxu0 %v5591
        %9349 = vmatpush1.bf16.msra.mxu0 %v5590
        %9350 = vmatprep.subr.bf16.mxu0 %v5583
        %9351 = vmatpush1.bf16.msra.mxu0 %v5582
        %9352 = vmatprep.subr.bf16.mxu0 %v5575
        %9353 = vmatpush1.bf16.msra.mxu0 %v5574
        %9354 = vmatprep.subr.bf16.mxu0 %v5567
        %9355 = vmatpush1.bf16.msra.mxu0 %v5566
        %9356 = vmatprep.subr.bf16.mxu0 %v5559
        %9357 = vmatpush1.bf16.msra.mxu0 %v5558
        %9358 = vmatprep.subr.bf16.mxu0 %v5679
        %9359 = vmatpush2.bf16.msra.mxu0 %v5678
        %9360 = vmatprep.subr.bf16.mxu0 %v5671
        %9361 = vmatpush2.bf16.msra.mxu0 %v5670
        %9362 = vmatprep.subr.bf16.mxu0 %v5663
        %9363 = vmatpush2.bf16.msra.mxu0 %v5662
        %9364 = vmatprep.subr.bf16.mxu0 %v5655
        %9365 = vmatpush2.bf16.msra.mxu0 %v5654
        %9366 = vmatprep.subr.bf16.mxu0 %v5647
        %9367 = vmatpush2.bf16.msra.mxu0 %v5646
        %9368 = vmatprep.subr.bf16.mxu0 %v5639
        %9369 = vmatpush2.bf16.msra.mxu0 %v5638
        %9370 = vmatprep.subr.bf16.mxu0 %v5631
        %9371 = vmatpush2.bf16.msra.mxu0 %v5630
        %9372 = vmatprep.subr.bf16.mxu0 %v5623
        %9373 = vmatpush2.bf16.msra.mxu0 %v5622
        %9374 = vmatprep.mubr.bf16.mxu0 %v413
        %9375 = vmatmul.mubr.bf16.gmra.mxu0 %v412
        %v9376 = vpop.f32.mrf.mxu0
        %v9377 = vadd.f32 0.0, %v9376
        %v9378 = vpop.f32.mrf.mxu0
        %v9379 = vadd.f32 0.0, %v9378
        %v9380 = vpop.f32.mrf.mxu0
        %v9381 = vpop.f32.mrf.mxu0
        %9382 = vdwg.mxu0
        %9383 = vmatprep.subr.bf16.mxu0 %v5743
        %9384 = vmatpush1.bf16.msra.mxu0 %v5742
        %9385 = vmatprep.subr.bf16.mxu0 %v5735
        %9386 = vmatpush1.bf16.msra.mxu0 %v5734
        %9387 = vmatprep.subr.bf16.mxu0 %v5727
        %9388 = vmatpush1.bf16.msra.mxu0 %v5726
        %9389 = vmatprep.subr.bf16.mxu0 %v5719
        %9390 = vmatpush1.bf16.msra.mxu0 %v5718
        %9391 = vmatprep.subr.bf16.mxu0 %v5711
        %9392 = vmatpush1.bf16.msra.mxu0 %v5710
        %9393 = vmatprep.subr.bf16.mxu0 %v5703
        %9394 = vmatpush1.bf16.msra.mxu0 %v5702
        %9395 = vmatprep.subr.bf16.mxu0 %v5695
        %9396 = vmatpush1.bf16.msra.mxu0 %v5694
        %9397 = vmatprep.subr.bf16.mxu0 %v5687
        %9398 = vmatpush1.bf16.msra.mxu0 %v5686
        %9399 = vmatprep.subr.bf16.mxu0 %v5807
        %9400 = vmatpush2.bf16.msra.mxu0 %v5806
        %9401 = vmatprep.subr.bf16.mxu0 %v5799
        %9402 = vmatpush2.bf16.msra.mxu0 %v5798
        %9403 = vmatprep.subr.bf16.mxu0 %v5791
        %9404 = vmatpush2.bf16.msra.mxu0 %v5790
        %9405 = vmatprep.subr.bf16.mxu0 %v5783
        %9406 = vmatpush2.bf16.msra.mxu0 %v5782
        %9407 = vmatprep.subr.bf16.mxu0 %v5775
        %9408 = vmatpush2.bf16.msra.mxu0 %v5774
        %9409 = vmatprep.subr.bf16.mxu0 %v5767
        %9410 = vmatpush2.bf16.msra.mxu0 %v5766
        %9411 = vmatprep.subr.bf16.mxu0 %v5759
        %9412 = vmatpush2.bf16.msra.mxu0 %v5758
        %9413 = vmatprep.subr.bf16.mxu0 %v5751
        %9414 = vmatpush2.bf16.msra.mxu0 %v5750
        %9415 = vmatprep.mubr.bf16.mxu0 %v415
        %9416 = vmatmul.mubr.bf16.gmra.mxu0 %v414
        %v9417 = vpop.f32.mrf.mxu0
        %v9418 = vadd.f32 %v9377, %v9417
        %v9419 = vpop.f32.mrf.mxu0
        %v9420 = vadd.f32 %v9379, %v9419
        %v9421 = vpop.f32.mrf.mxu0
        %v9422 = vpop.f32.mrf.mxu0
        %9423 = vdwg.mxu0
        %9424 = vmatprep.subr.bf16.mxu0 %v5871
        %9425 = vmatpush1.bf16.msra.mxu0 %v5870
        %9426 = vmatprep.subr.bf16.mxu0 %v5863
        %9427 = vmatpush1.bf16.msra.mxu0 %v5862
        %9428 = vmatprep.subr.bf16.mxu0 %v5855
        %9429 = vmatpush1.bf16.msra.mxu0 %v5854
        %9430 = vmatprep.subr.bf16.mxu0 %v5847
        %9431 = vmatpush1.bf16.msra.mxu0 %v5846
        %9432 = vmatprep.subr.bf16.mxu0 %v5839
        %9433 = vmatpush1.bf16.msra.mxu0 %v5838
        %9434 = vmatprep.subr.bf16.mxu0 %v5831
        %9435 = vmatpush1.bf16.msra.mxu0 %v5830
        %9436 = vmatprep.subr.bf16.mxu0 %v5823
        %9437 = vmatpush1.bf16.msra.mxu0 %v5822
        %9438 = vmatprep.subr.bf16.mxu0 %v5815
        %9439 = vmatpush1.bf16.msra.mxu0 %v5814
        %9440 = vmatprep.subr.bf16.mxu0 %v5935
        %9441 = vmatpush2.bf16.msra.mxu0 %v5934
        %9442 = vmatprep.subr.bf16.mxu0 %v5927
        %9443 = vmatpush2.bf16.msra.mxu0 %v5926
        %9444 = vmatprep.subr.bf16.mxu0 %v5919
        %9445 = vmatpush2.bf16.msra.mxu0 %v5918
        %9446 = vmatprep.subr.bf16.mxu0 %v5911
        %9447 = vmatpush2.bf16.msra.mxu0 %v5910
        %9448 = vmatprep.subr.bf16.mxu0 %v5903
        %9449 = vmatpush2.bf16.msra.mxu0 %v5902
        %9450 = vmatprep.subr.bf16.mxu0 %v5895
        %9451 = vmatpush2.bf16.msra.mxu0 %v5894
        %9452 = vmatprep.subr.bf16.mxu0 %v5887
        %9453 = vmatpush2.bf16.msra.mxu0 %v5886
        %9454 = vmatprep.subr.bf16.mxu0 %v5879
        %9455 = vmatpush2.bf16.msra.mxu0 %v5878
        %9456 = vmatprep.mubr.bf16.mxu0 %v417
        %9457 = vmatmul.mubr.bf16.gmra.mxu0 %v416
        %v9458 = vpop.f32.mrf.mxu0
        %v9459 = vadd.f32 %v9418, %v9458
        %v9460 = vpop.f32.mrf.mxu0
        %v9461 = vadd.f32 %v9420, %v9460
        %v9462 = vpop.f32.mrf.mxu0
        %v9463 = vpop.f32.mrf.mxu0
        %9464 = vdwg.mxu0
        %9465 = vmatprep.subr.bf16.mxu0 %v5999
        %9466 = vmatpush1.bf16.msra.mxu0 %v5998
        %9467 = vmatprep.subr.bf16.mxu0 %v5991
        %9468 = vmatpush1.bf16.msra.mxu0 %v5990
        %9469 = vmatprep.subr.bf16.mxu0 %v5983
        %9470 = vmatpush1.bf16.msra.mxu0 %v5982
        %9471 = vmatprep.subr.bf16.mxu0 %v5975
        %9472 = vmatpush1.bf16.msra.mxu0 %v5974
        %9473 = vmatprep.subr.bf16.mxu0 %v5967
        %9474 = vmatpush1.bf16.msra.mxu0 %v5966
        %9475 = vmatprep.subr.bf16.mxu0 %v5959
        %9476 = vmatpush1.bf16.msra.mxu0 %v5958
        %9477 = vmatprep.subr.bf16.mxu0 %v5951
        %9478 = vmatpush1.bf16.msra.mxu0 %v5950
        %9479 = vmatprep.subr.bf16.mxu0 %v5943
        %9480 = vmatpush1.bf16.msra.mxu0 %v5942
        %9481 = vmatprep.subr.bf16.mxu0 %v6063
        %9482 = vmatpush2.bf16.msra.mxu0 %v6062
        %9483 = vmatprep.subr.bf16.mxu0 %v6055
        %9484 = vmatpush2.bf16.msra.mxu0 %v6054
        %9485 = vmatprep.subr.bf16.mxu0 %v6047
        %9486 = vmatpush2.bf16.msra.mxu0 %v6046
        %9487 = vmatprep.subr.bf16.mxu0 %v6039
        %9488 = vmatpush2.bf16.msra.mxu0 %v6038
        %9489 = vmatprep.subr.bf16.mxu0 %v6031
        %9490 = vmatpush2.bf16.msra.mxu0 %v6030
        %9491 = vmatprep.subr.bf16.mxu0 %v6023
        %9492 = vmatpush2.bf16.msra.mxu0 %v6022
        %9493 = vmatprep.subr.bf16.mxu0 %v6015
        %9494 = vmatpush2.bf16.msra.mxu0 %v6014
        %9495 = vmatprep.subr.bf16.mxu0 %v6007
        %9496 = vmatpush2.bf16.msra.mxu0 %v6006
        %9497 = vmatprep.mubr.bf16.mxu0 %v419
        %9498 = vmatmul.mubr.bf16.gmra.mxu0 %v418
        %v9499 = vpop.f32.mrf.mxu0
        %v9500 = vadd.f32 %v9459, %v9499
        %v9501 = vpop.f32.mrf.mxu0
        %v9502 = vadd.f32 %v9461, %v9501
        %v9503 = vpop.f32.mrf.mxu0
        %v9504 = vpop.f32.mrf.mxu0
        %9505 = vdwg.mxu0
        %9506 = vmatprep.subr.bf16.mxu0 %v6127
        %9507 = vmatpush1.bf16.msra.mxu0 %v6126
        %9508 = vmatprep.subr.bf16.mxu0 %v6119
        %9509 = vmatpush1.bf16.msra.mxu0 %v6118
        %9510 = vmatprep.subr.bf16.mxu0 %v6111
        %9511 = vmatpush1.bf16.msra.mxu0 %v6110
        %9512 = vmatprep.subr.bf16.mxu0 %v6103
        %9513 = vmatpush1.bf16.msra.mxu0 %v6102
        %9514 = vmatprep.subr.bf16.mxu0 %v6095
        %9515 = vmatpush1.bf16.msra.mxu0 %v6094
        %9516 = vmatprep.subr.bf16.mxu0 %v6087
        %9517 = vmatpush1.bf16.msra.mxu0 %v6086
        %9518 = vmatprep.subr.bf16.mxu0 %v6079
        %9519 = vmatpush1.bf16.msra.mxu0 %v6078
        %9520 = vmatprep.subr.bf16.mxu0 %v6071
        %9521 = vmatpush1.bf16.msra.mxu0 %v6070
        %9522 = vmatprep.subr.bf16.mxu0 %v6191
        %9523 = vmatpush2.bf16.msra.mxu0 %v6190
        %9524 = vmatprep.subr.bf16.mxu0 %v6183
        %9525 = vmatpush2.bf16.msra.mxu0 %v6182
        %9526 = vmatprep.subr.bf16.mxu0 %v6175
        %9527 = vmatpush2.bf16.msra.mxu0 %v6174
        %9528 = vmatprep.subr.bf16.mxu0 %v6167
        %9529 = vmatpush2.bf16.msra.mxu0 %v6166
        %9530 = vmatprep.subr.bf16.mxu0 %v6159
        %9531 = vmatpush2.bf16.msra.mxu0 %v6158
        %9532 = vmatprep.subr.bf16.mxu0 %v6151
        %9533 = vmatpush2.bf16.msra.mxu0 %v6150
        %9534 = vmatprep.subr.bf16.mxu0 %v6143
        %9535 = vmatpush2.bf16.msra.mxu0 %v6142
        %9536 = vmatprep.subr.bf16.mxu0 %v6135
        %9537 = vmatpush2.bf16.msra.mxu0 %v6134
        %9538 = vmatprep.mubr.bf16.mxu0 %v421
        %9539 = vmatmul.mubr.bf16.gmra.mxu0 %v420
        %v9540 = vpop.f32.mrf.mxu0
        %v9541 = vadd.f32 %v9500, %v9540
        %v9542 = vpop.f32.mrf.mxu0
        %v9543 = vadd.f32 %v9502, %v9542
        %v9544 = vpop.f32.mrf.mxu0
        %v9545 = vpop.f32.mrf.mxu0
        %9546 = vdwg.mxu0
        %9547 = vmatprep.subr.bf16.mxu0 %v6255
        %9548 = vmatpush1.bf16.msra.mxu0 %v6254
        %9549 = vmatprep.subr.bf16.mxu0 %v6247
        %9550 = vmatpush1.bf16.msra.mxu0 %v6246
        %9551 = vmatprep.subr.bf16.mxu0 %v6239
        %9552 = vmatpush1.bf16.msra.mxu0 %v6238
        %9553 = vmatprep.subr.bf16.mxu0 %v6231
        %9554 = vmatpush1.bf16.msra.mxu0 %v6230
        %9555 = vmatprep.subr.bf16.mxu0 %v6223
        %9556 = vmatpush1.bf16.msra.mxu0 %v6222
        %9557 = vmatprep.subr.bf16.mxu0 %v6215
        %9558 = vmatpush1.bf16.msra.mxu0 %v6214
        %9559 = vmatprep.subr.bf16.mxu0 %v6207
        %9560 = vmatpush1.bf16.msra.mxu0 %v6206
        %9561 = vmatprep.subr.bf16.mxu0 %v6199
        %9562 = vmatpush1.bf16.msra.mxu0 %v6198
        %9563 = vmatprep.subr.bf16.mxu0 %v6319
        %9564 = vmatpush2.bf16.msra.mxu0 %v6318
        %9565 = vmatprep.subr.bf16.mxu0 %v6311
        %9566 = vmatpush2.bf16.msra.mxu0 %v6310
        %9567 = vmatprep.subr.bf16.mxu0 %v6303
        %9568 = vmatpush2.bf16.msra.mxu0 %v6302
        %9569 = vmatprep.subr.bf16.mxu0 %v6295
        %9570 = vmatpush2.bf16.msra.mxu0 %v6294
        %9571 = vmatprep.subr.bf16.mxu0 %v6287
        %9572 = vmatpush2.bf16.msra.mxu0 %v6286
        %9573 = vmatprep.subr.bf16.mxu0 %v6279
        %9574 = vmatpush2.bf16.msra.mxu0 %v6278
        %9575 = vmatprep.subr.bf16.mxu0 %v6271
        %9576 = vmatpush2.bf16.msra.mxu0 %v6270
        %9577 = vmatprep.subr.bf16.mxu0 %v6263
        %9578 = vmatpush2.bf16.msra.mxu0 %v6262
        %9579 = vmatprep.mubr.bf16.mxu0 %v423
        %9580 = vmatmul.mubr.bf16.gmra.mxu0 %v422
        %v9581 = vpop.f32.mrf.mxu0
        %v9582 = vadd.f32 %v9541, %v9581
        %v9583 = vpop.f32.mrf.mxu0
        %v9584 = vadd.f32 %v9543, %v9583
        %v9585 = vpop.f32.mrf.mxu0
        %v9586 = vpop.f32.mrf.mxu0
        %9587 = vdwg.mxu0
        %9588 = vmatprep.subr.bf16.mxu0 %v6383
        %9589 = vmatpush1.bf16.msra.mxu0 %v6382
        %9590 = vmatprep.subr.bf16.mxu0 %v6375
        %9591 = vmatpush1.bf16.msra.mxu0 %v6374
        %9592 = vmatprep.subr.bf16.mxu0 %v6367
        %9593 = vmatpush1.bf16.msra.mxu0 %v6366
        %9594 = vmatprep.subr.bf16.mxu0 %v6359
        %9595 = vmatpush1.bf16.msra.mxu0 %v6358
        %9596 = vmatprep.subr.bf16.mxu0 %v6351
        %9597 = vmatpush1.bf16.msra.mxu0 %v6350
        %9598 = vmatprep.subr.bf16.mxu0 %v6343
        %9599 = vmatpush1.bf16.msra.mxu0 %v6342
        %9600 = vmatprep.subr.bf16.mxu0 %v6335
        %9601 = vmatpush1.bf16.msra.mxu0 %v6334
        %9602 = vmatprep.subr.bf16.mxu0 %v6327
        %9603 = vmatpush1.bf16.msra.mxu0 %v6326
        %9604 = vmatprep.subr.bf16.mxu0 %v6447
        %9605 = vmatpush2.bf16.msra.mxu0 %v6446
        %9606 = vmatprep.subr.bf16.mxu0 %v6439
        %9607 = vmatpush2.bf16.msra.mxu0 %v6438
        %9608 = vmatprep.subr.bf16.mxu0 %v6431
        %9609 = vmatpush2.bf16.msra.mxu0 %v6430
        %9610 = vmatprep.subr.bf16.mxu0 %v6423
        %9611 = vmatpush2.bf16.msra.mxu0 %v6422
        %9612 = vmatprep.subr.bf16.mxu0 %v6415
        %9613 = vmatpush2.bf16.msra.mxu0 %v6414
        %9614 = vmatprep.subr.bf16.mxu0 %v6407
        %9615 = vmatpush2.bf16.msra.mxu0 %v6406
        %9616 = vmatprep.subr.bf16.mxu0 %v6399
        %9617 = vmatpush2.bf16.msra.mxu0 %v6398
        %9618 = vmatprep.subr.bf16.mxu0 %v6391
        %9619 = vmatpush2.bf16.msra.mxu0 %v6390
        %9620 = vmatprep.mubr.bf16.mxu0 %v425
        %9621 = vmatmul.mubr.bf16.gmra.mxu0 %v424
        %v9622 = vpop.f32.mrf.mxu0
        %v9623 = vadd.f32 %v9582, %v9622
        %v9624 = vpop.f32.mrf.mxu0
        %v9625 = vadd.f32 %v9584, %v9624
        %v9626 = vpop.f32.mrf.mxu0
        %v9627 = vpop.f32.mrf.mxu0
        %9628 = vdwg.mxu0
        %9629 = vmatprep.subr.bf16.mxu0 %v6511
        %9630 = vmatpush1.bf16.msra.mxu0 %v6510
        %9631 = vmatprep.subr.bf16.mxu0 %v6503
        %9632 = vmatpush1.bf16.msra.mxu0 %v6502
        %9633 = vmatprep.subr.bf16.mxu0 %v6495
        %9634 = vmatpush1.bf16.msra.mxu0 %v6494
        %9635 = vmatprep.subr.bf16.mxu0 %v6487
        %9636 = vmatpush1.bf16.msra.mxu0 %v6486
        %9637 = vmatprep.subr.bf16.mxu0 %v6479
        %9638 = vmatpush1.bf16.msra.mxu0 %v6478
        %9639 = vmatprep.subr.bf16.mxu0 %v6471
        %9640 = vmatpush1.bf16.msra.mxu0 %v6470
        %9641 = vmatprep.subr.bf16.mxu0 %v6463
        %9642 = vmatpush1.bf16.msra.mxu0 %v6462
        %9643 = vmatprep.subr.bf16.mxu0 %v6455
        %9644 = vmatpush1.bf16.msra.mxu0 %v6454
        %9645 = vmatprep.subr.bf16.mxu0 %v6575
        %9646 = vmatpush2.bf16.msra.mxu0 %v6574
        %9647 = vmatprep.subr.bf16.mxu0 %v6567
        %9648 = vmatpush2.bf16.msra.mxu0 %v6566
        %9649 = vmatprep.subr.bf16.mxu0 %v6559
        %9650 = vmatpush2.bf16.msra.mxu0 %v6558
        %9651 = vmatprep.subr.bf16.mxu0 %v6551
        %9652 = vmatpush2.bf16.msra.mxu0 %v6550
        %9653 = vmatprep.subr.bf16.mxu0 %v6543
        %9654 = vmatpush2.bf16.msra.mxu0 %v6542
        %9655 = vmatprep.subr.bf16.mxu0 %v6535
        %9656 = vmatpush2.bf16.msra.mxu0 %v6534
        %9657 = vmatprep.subr.bf16.mxu0 %v6527
        %9658 = vmatpush2.bf16.msra.mxu0 %v6526
        %9659 = vmatprep.subr.bf16.mxu0 %v6519
        %9660 = vmatpush2.bf16.msra.mxu0 %v6518
        %9661 = vmatprep.mubr.bf16.mxu0 %v427
        %9662 = vmatmul.mubr.bf16.gmra.mxu0 %v426
        %v9663 = vpop.f32.mrf.mxu0
        %v9664 = vadd.f32 %v9623, %v9663
        %v9665 = vpop.f32.mrf.mxu0
        %v9666 = vadd.f32 %v9625, %v9665
        %v9667 = vpop.f32.mrf.mxu0
        %v9668 = vpop.f32.mrf.mxu0
        %9669 = vdwg.mxu0
        %9670 = vmatprep.subr.bf16.mxu0 %v6639
        %9671 = vmatpush1.bf16.msra.mxu0 %v6638
        %9672 = vmatprep.subr.bf16.mxu0 %v6631
        %9673 = vmatpush1.bf16.msra.mxu0 %v6630
        %9674 = vmatprep.subr.bf16.mxu0 %v6623
        %9675 = vmatpush1.bf16.msra.mxu0 %v6622
        %9676 = vmatprep.subr.bf16.mxu0 %v6615
        %9677 = vmatpush1.bf16.msra.mxu0 %v6614
        %9678 = vmatprep.subr.bf16.mxu0 %v6607
        %9679 = vmatpush1.bf16.msra.mxu0 %v6606
        %9680 = vmatprep.subr.bf16.mxu0 %v6599
        %9681 = vmatpush1.bf16.msra.mxu0 %v6598
        %9682 = vmatprep.subr.bf16.mxu0 %v6591
        %9683 = vmatpush1.bf16.msra.mxu0 %v6590
        %9684 = vmatprep.subr.bf16.mxu0 %v6583
        %9685 = vmatpush1.bf16.msra.mxu0 %v6582
        %9686 = vmatprep.subr.bf16.mxu0 %v6703
        %9687 = vmatpush2.bf16.msra.mxu0 %v6702
        %9688 = vmatprep.subr.bf16.mxu0 %v6695
        %9689 = vmatpush2.bf16.msra.mxu0 %v6694
        %9690 = vmatprep.subr.bf16.mxu0 %v6687
        %9691 = vmatpush2.bf16.msra.mxu0 %v6686
        %9692 = vmatprep.subr.bf16.mxu0 %v6679
        %9693 = vmatpush2.bf16.msra.mxu0 %v6678
        %9694 = vmatprep.subr.bf16.mxu0 %v6671
        %9695 = vmatpush2.bf16.msra.mxu0 %v6670
        %9696 = vmatprep.subr.bf16.mxu0 %v6663
        %9697 = vmatpush2.bf16.msra.mxu0 %v6662
        %9698 = vmatprep.subr.bf16.mxu0 %v6655
        %9699 = vmatpush2.bf16.msra.mxu0 %v6654
        %9700 = vmatprep.subr.bf16.mxu0 %v6647
        %9701 = vmatpush2.bf16.msra.mxu0 %v6646
        %9702 = vmatprep.mubr.bf16.mxu0 %v429
        %9703 = vmatmul.mubr.bf16.gmra.mxu0 %v428
        %v9704 = vpop.f32.mrf.mxu0
        %v9705 = vadd.f32 %v9664, %v9704
        %v9706 = vpop.f32.mrf.mxu0
        %v9707 = vadd.f32 %v9666, %v9706
        %v9708 = vpop.f32.mrf.mxu0
        %v9709 = vpop.f32.mrf.mxu0
        %9710 = vdwg.mxu0
        %9711 = vmatprep.subr.bf16.mxu0 %v6767
        %9712 = vmatpush1.bf16.msra.mxu0 %v6766
        %9713 = vmatprep.subr.bf16.mxu0 %v6759
        %9714 = vmatpush1.bf16.msra.mxu0 %v6758
        %9715 = vmatprep.subr.bf16.mxu0 %v6751
        %9716 = vmatpush1.bf16.msra.mxu0 %v6750
        %9717 = vmatprep.subr.bf16.mxu0 %v6743
        %9718 = vmatpush1.bf16.msra.mxu0 %v6742
        %9719 = vmatprep.subr.bf16.mxu0 %v6735
        %9720 = vmatpush1.bf16.msra.mxu0 %v6734
        %9721 = vmatprep.subr.bf16.mxu0 %v6727
        %9722 = vmatpush1.bf16.msra.mxu0 %v6726
        %9723 = vmatprep.subr.bf16.mxu0 %v6719
        %9724 = vmatpush1.bf16.msra.mxu0 %v6718
        %9725 = vmatprep.subr.bf16.mxu0 %v6711
        %9726 = vmatpush1.bf16.msra.mxu0 %v6710
        %9727 = vmatprep.subr.bf16.mxu0 %v6831
        %9728 = vmatpush2.bf16.msra.mxu0 %v6830
        %9729 = vmatprep.subr.bf16.mxu0 %v6823
        %9730 = vmatpush2.bf16.msra.mxu0 %v6822
        %9731 = vmatprep.subr.bf16.mxu0 %v6815
        %9732 = vmatpush2.bf16.msra.mxu0 %v6814
        %9733 = vmatprep.subr.bf16.mxu0 %v6807
        %9734 = vmatpush2.bf16.msra.mxu0 %v6806
        %9735 = vmatprep.subr.bf16.mxu0 %v6799
        %9736 = vmatpush2.bf16.msra.mxu0 %v6798
        %9737 = vmatprep.subr.bf16.mxu0 %v6791
        %9738 = vmatpush2.bf16.msra.mxu0 %v6790
        %9739 = vmatprep.subr.bf16.mxu0 %v6783
        %9740 = vmatpush2.bf16.msra.mxu0 %v6782
        %9741 = vmatprep.subr.bf16.mxu0 %v6775
        %9742 = vmatpush2.bf16.msra.mxu0 %v6774
        %9743 = vmatprep.mubr.bf16.mxu0 %v431
        %9744 = vmatmul.mubr.bf16.gmra.mxu0 %v430
        %v9745 = vpop.f32.mrf.mxu0
        %v9746 = vadd.f32 %v9705, %v9745
        %v9747 = vpop.f32.mrf.mxu0
        %v9748 = vadd.f32 %v9707, %v9747
        %v9749 = vpop.f32.mrf.mxu0
        %v9750 = vpop.f32.mrf.mxu0
        %9751 = vdwg.mxu0
        %p9752 = scmp.eq.s32.totalorder %s27, 0
        // Predicated region
        $region77: #{tpu_custom_call.1} parent=47 // pred_check
          %p9753 = pneg %p9752
        $region78: #{tpu_custom_call.1} parent=47 // pred_check_branch
          %9755 = sbr.rel (%p9753) target = $region80
        $region79: #{tpu_custom_call.1} parent=47 // pred_region
          %v9756 = vld [vmem:[#allocation8] sm:$0xff]
          %v9758 = vlaneseq
          %v9759 = vshrl.u32 %v9758, 7
          %v9760 = vsub.s32 0, %v9759
          %v9761 = vrot.slane %v9756, %v9760
          %v9762 = vlaneseq
          %v9763 = vshrl.u32 %v9762, 7
          %v9764 = vsub.s32 1, %v9763
          %v9765 = vrot.slane %v9756, %v9764
          %v9766 = vlaneseq
          %v9767 = vshrl.u32 %v9766, 7
          %v9768 = vsub.s32 2, %v9767
          %v9769 = vrot.slane %v9756, %v9768
          %v9770 = vlaneseq
          %v9771 = vshrl.u32 %v9770, 7
          %v9772 = vsub.s32 3, %v9771
          %v9773 = vrot.slane %v9756, %v9772
          %v9774 = vlaneseq
          %v9775 = vshrl.u32 %v9774, 7
          %v9776 = vsub.s32 4, %v9775
          %v9777 = vrot.slane %v9756, %v9776
          %v9778 = vlaneseq
          %v9779 = vshrl.u32 %v9778, 7
          %v9780 = vsub.s32 5, %v9779
          %v9781 = vrot.slane %v9756, %v9780
          %v9782 = vlaneseq
          %v9783 = vshrl.u32 %v9782, 7
          %v9784 = vsub.s32 6, %v9783
          %v9785 = vrot.slane %v9756, %v9784
          %v9786 = vlaneseq
          %v9787 = vshrl.u32 %v9786, 7
          %v9788 = vsub.s32 7, %v9787
          %v9789 = vrot.slane %v9756, %v9788
          %v9798 = vadd.f32 %v9761, %v8516
          %v9799 = vadd.f32 %v9765, %v8518
          %v9800 = vadd.f32 %v9769, %v8926
          %v9801 = vadd.f32 %v9773, %v8928
          %v9802 = vadd.f32 %v9777, %v9336
          %v9803 = vadd.f32 %v9781, %v9338
          %v9804 = vadd.f32 %v9785, %v9746
          %v9805 = vadd.f32 %v9789, %v9748
          %9806 = vst [vmem:[#allocation2] sm:$0xff] %v9798
          %9807 = vst [vmem:[#allocation2 + $0x8] sm:$0xff] %v9799
          %9808 = vst [vmem:[#allocation2 + $0x10] sm:$0xff] %v9800
          %9809 = vst [vmem:[#allocation2 + $0x18] sm:$0xff] %v9801
          %9810 = vst [vmem:[#allocation2 + $0x20] sm:$0xff] %v9802
          %9811 = vst [vmem:[#allocation2 + $0x28] sm:$0xff] %v9803
          %9812 = vst [vmem:[#allocation2 + $0x30] sm:$0xff] %v9804
          %9813 = vst [vmem:[#allocation2 + $0x38] sm:$0xff] %v9805
        $region80: #{tpu_custom_call.1} parent=47 // pred_fallthru
          _
        %p9814 = scmp.gt.s32.totalorder %s27, 0
        // Predicated region
        $region81: #{tpu_custom_call.1} parent=47 // pred_check
          %p9815 = pneg %p9814
        $region82: #{tpu_custom_call.1} parent=47 // pred_check_branch
          %9817 = sbr.rel (%p9815) target = $region84
        $region83: #{tpu_custom_call.1} parent=47 // pred_region
          %v9818 = vld [vmem:[#allocation2] sm:$0xff]
          %v9819 = vld [vmem:[#allocation2 + $0x8] sm:$0xff]
          %v9820 = vld [vmem:[#allocation2 + $0x10] sm:$0xff]
          %v9821 = vld [vmem:[#allocation2 + $0x18] sm:$0xff]
          %v9822 = vld [vmem:[#allocation2 + $0x20] sm:$0xff]
          %v9823 = vld [vmem:[#allocation2 + $0x28] sm:$0xff]
          %v9824 = vld [vmem:[#allocation2 + $0x30] sm:$0xff]
          %v9825 = vld [vmem:[#allocation2 + $0x38] sm:$0xff]
          %v9826 = vadd.f32 %v9818, %v8516
          %v9827 = vadd.f32 %v9819, %v8518
          %v9828 = vadd.f32 %v9820, %v8926
          %v9829 = vadd.f32 %v9821, %v8928
          %v9830 = vadd.f32 %v9822, %v9336
          %v9831 = vadd.f32 %v9823, %v9338
          %v9832 = vadd.f32 %v9824, %v9746
          %v9833 = vadd.f32 %v9825, %v9748
          %9834 = vst [vmem:[#allocation2] sm:$0xff] %v9826
          %9835 = vst [vmem:[#allocation2 + $0x8] sm:$0xff] %v9827
          %9836 = vst [vmem:[#allocation2 + $0x10] sm:$0xff] %v9828
          %9837 = vst [vmem:[#allocation2 + $0x18] sm:$0xff] %v9829
          %9838 = vst [vmem:[#allocation2 + $0x20] sm:$0xff] %v9830
          %9839 = vst [vmem:[#allocation2 + $0x28] sm:$0xff] %v9831
          %9840 = vst [vmem:[#allocation2 + $0x30] sm:$0xff] %v9832
          %9841 = vst [vmem:[#allocation2 + $0x38] sm:$0xff] %v9833
        $region84: #{tpu_custom_call.1} parent=47 // pred_fallthru
          _
        %p9842 = scmp.eq.s32.totalorder %s27, 1
        // Predicated region
        $region85: #{tpu_custom_call.1} parent=47 // pred_check
          %p9843 = pneg %p9842
        $region86: #{tpu_custom_call.1} parent=47 // pred_check_branch
          %9845 = sbr.rel (%p9843) target = $region88
        $region87: #{tpu_custom_call.1} parent=47 // pred_region
          %v9846 = vld [vmem:[#allocation2] sm:$0xff]
          %v9847 = vld [vmem:[#allocation2 + $0x8] sm:$0xff]
          %v9848 = vld [vmem:[#allocation2 + $0x10] sm:$0xff]
          %v9849 = vld [vmem:[#allocation2 + $0x18] sm:$0xff]
          %v9850 = vld [vmem:[#allocation2 + $0x20] sm:$0xff]
          %v9851 = vld [vmem:[#allocation2 + $0x28] sm:$0xff]
          %v9852 = vld [vmem:[#allocation2 + $0x30] sm:$0xff]
          %v9853 = vld [vmem:[#allocation2 + $0x38] sm:$0xff]
          %v9854 = vmax.f32 %v9846, 0.0
          %v9855 = vmax.f32 %v9847, 0.0
          %v9856 = vmax.f32 %v9848, 0.0
          %v9857 = vmax.f32 %v9849, 0.0
          %v9858 = vmax.f32 %v9850, 0.0
          %v9859 = vmax.f32 %v9851, 0.0
          %v9860 = vmax.f32 %v9852, 0.0
          %v9861 = vmax.f32 %v9853, 0.0
          %v9862 = vld [vmem:[#allocation9] sm:$0xff]
          %v9863 = vld [vmem:[#allocation9 + $0x8] sm:$0xff]
          %v9864 = vld [vmem:[#allocation9 + $0x10] sm:$0xff]
          %v9865 = vld [vmem:[#allocation9 + $0x18] sm:$0xff]
          %v9866 = vld [vmem:[#allocation9 + $0x20] sm:$0xff]
          %v9867 = vld [vmem:[#allocation9 + $0x28] sm:$0xff]
          %v9868 = vld [vmem:[#allocation9 + $0x30] sm:$0xff]
          %v9869 = vld [vmem:[#allocation9 + $0x38] sm:$0xff]
          %v9870 = vld [vmem:[#allocation9 + $0x40] sm:$0xff]
          %v9871 = vld [vmem:[#allocation9 + $0x48] sm:$0xff]
          %v9872 = vld [vmem:[#allocation9 + $0x50] sm:$0xff]
          %v9873 = vld [vmem:[#allocation9 + $0x58] sm:$0xff]
          %v9874 = vld [vmem:[#allocation9 + $0x60] sm:$0xff]
          %v9875 = vld [vmem:[#allocation9 + $0x68] sm:$0xff]
          %v9876 = vld [vmem:[#allocation9 + $0x70] sm:$0xff]
          %v9877 = vld [vmem:[#allocation9 + $0x78] sm:$0xff]
          %v9878 = vld [vmem:[#allocation9 + $0x80] sm:$0xff]
          %v9879 = vld [vmem:[#allocation9 + $0x88] sm:$0xff]
          %v9880 = vld [vmem:[#allocation9 + $0x90] sm:$0xff]
          %v9881 = vld [vmem:[#allocation9 + $0x98] sm:$0xff]
          %v9882 = vld [vmem:[#allocation9 + $0xa0] sm:$0xff]
          %v9883 = vld [vmem:[#allocation9 + $0xa8] sm:$0xff]
          %v9884 = vld [vmem:[#allocation9 + $0xb0] sm:$0xff]
          %v9885 = vld [vmem:[#allocation9 + $0xb8] sm:$0xff]
          %v9886 = vld [vmem:[#allocation9 + $0xc0] sm:$0xff]
          %v9887 = vld [vmem:[#allocation9 + $0xc8] sm:$0xff]
          %v9888 = vld [vmem:[#allocation9 + $0xd0] sm:$0xff]
          %v9889 = vld [vmem:[#allocation9 + $0xd8] sm:$0xff]
          %v9890 = vld [vmem:[#allocation9 + $0xe0] sm:$0xff]
          %v9891 = vld [vmem:[#allocation9 + $0xe8] sm:$0xff]
          %v9892 = vld [vmem:[#allocation9 + $0xf0] sm:$0xff]
          %v9893 = vld [vmem:[#allocation9 + $0xf8] sm:$0xff]
          %v9894 = vld [vmem:[#allocation9 + $0x100] sm:$0xff]
          %v9895 = vld [vmem:[#allocation9 + $0x108] sm:$0xff]
          %v9896 = vld [vmem:[#allocation9 + $0x110] sm:$0xff]
          %v9897 = vld [vmem:[#allocation9 + $0x118] sm:$0xff]
          %v9898 = vld [vmem:[#allocation9 + $0x120] sm:$0xff]
          %v9899 = vld [vmem:[#allocation9 + $0x128] sm:$0xff]
          %v9900 = vld [vmem:[#allocation9 + $0x130] sm:$0xff]
          %v9901 = vld [vmem:[#allocation9 + $0x138] sm:$0xff]
          %v9902 = vld [vmem:[#allocation9 + $0x140] sm:$0xff]
          %v9903 = vld [vmem:[#allocation9 + $0x148] sm:$0xff]
          %v9904 = vld [vmem:[#allocation9 + $0x150] sm:$0xff]
          %v9905 = vld [vmem:[#allocation9 + $0x158] sm:$0xff]
          %v9906 = vld [vmem:[#allocation9 + $0x160] sm:$0xff]
          %v9907 = vld [vmem:[#allocation9 + $0x168] sm:$0xff]
          %v9908 = vld [vmem:[#allocation9 + $0x170] sm:$0xff]
          %v9909 = vld [vmem:[#allocation9 + $0x178] sm:$0xff]
          %v9910 = vld [vmem:[#allocation9 + $0x180] sm:$0xff]
          %v9911 = vld [vmem:[#allocation9 + $0x188] sm:$0xff]
          %v9912 = vld [vmem:[#allocation9 + $0x190] sm:$0xff]
          %v9913 = vld [vmem:[#allocation9 + $0x198] sm:$0xff]
          %v9914 = vld [vmem:[#allocation9 + $0x1a0] sm:$0xff]
          %v9915 = vld [vmem:[#allocation9 + $0x1a8] sm:$0xff]
          %v9916 = vld [vmem:[#allocation9 + $0x1b0] sm:$0xff]
          %v9917 = vld [vmem:[#allocation9 + $0x1b8] sm:$0xff]
          %v9918 = vld [vmem:[#allocation9 + $0x1c0] sm:$0xff]
          %v9919 = vld [vmem:[#allocation9 + $0x1c8] sm:$0xff]
          %v9920 = vld [vmem:[#allocation9 + $0x1d0] sm:$0xff]
          %v9921 = vld [vmem:[#allocation9 + $0x1d8] sm:$0xff]
          %v9922 = vld [vmem:[#allocation9 + $0x1e0] sm:$0xff]
          %v9923 = vld [vmem:[#allocation9 + $0x1e8] sm:$0xff]
          %v9924 = vld [vmem:[#allocation9 + $0x1f0] sm:$0xff]
          %v9925 = vld [vmem:[#allocation9 + $0x1f8] sm:$0xff]
          %v9926 = vld [vmem:[#allocation9 + $0x200] sm:$0xff]
          %v9927 = vld [vmem:[#allocation9 + $0x208] sm:$0xff]
          %v9928 = vld [vmem:[#allocation9 + $0x210] sm:$0xff]
          %v9929 = vld [vmem:[#allocation9 + $0x218] sm:$0xff]
          %v9930 = vld [vmem:[#allocation9 + $0x220] sm:$0xff]
          %v9931 = vld [vmem:[#allocation9 + $0x228] sm:$0xff]
          %v9932 = vld [vmem:[#allocation9 + $0x230] sm:$0xff]
          %v9933 = vld [vmem:[#allocation9 + $0x238] sm:$0xff]
          %v9934 = vld [vmem:[#allocation9 + $0x240] sm:$0xff]
          %v9935 = vld [vmem:[#allocation9 + $0x248] sm:$0xff]
          %v9936 = vld [vmem:[#allocation9 + $0x250] sm:$0xff]
          %v9937 = vld [vmem:[#allocation9 + $0x258] sm:$0xff]
          %v9938 = vld [vmem:[#allocation9 + $0x260] sm:$0xff]
          %v9939 = vld [vmem:[#allocation9 + $0x268] sm:$0xff]
          %v9940 = vld [vmem:[#allocation9 + $0x270] sm:$0xff]
          %v9941 = vld [vmem:[#allocation9 + $0x278] sm:$0xff]
          %v9942 = vld [vmem:[#allocation9 + $0x280] sm:$0xff]
          %v9943 = vld [vmem:[#allocation9 + $0x288] sm:$0xff]
          %v9944 = vld [vmem:[#allocation9 + $0x290] sm:$0xff]
          %v9945 = vld [vmem:[#allocation9 + $0x298] sm:$0xff]
          %v9946 = vld [vmem:[#allocation9 + $0x2a0] sm:$0xff]
          %v9947 = vld [vmem:[#allocation9 + $0x2a8] sm:$0xff]
          %v9948 = vld [vmem:[#allocation9 + $0x2b0] sm:$0xff]
          %v9949 = vld [vmem:[#allocation9 + $0x2b8] sm:$0xff]
          %v9950 = vld [vmem:[#allocation9 + $0x2c0] sm:$0xff]
          %v9951 = vld [vmem:[#allocation9 + $0x2c8] sm:$0xff]
          %v9952 = vld [vmem:[#allocation9 + $0x2d0] sm:$0xff]
          %v9953 = vld [vmem:[#allocation9 + $0x2d8] sm:$0xff]
          %v9954 = vld [vmem:[#allocation9 + $0x2e0] sm:$0xff]
          %v9955 = vld [vmem:[#allocation9 + $0x2e8] sm:$0xff]
          %v9956 = vld [vmem:[#allocation9 + $0x2f0] sm:$0xff]
          %v9957 = vld [vmem:[#allocation9 + $0x2f8] sm:$0xff]
          %v9958 = vld [vmem:[#allocation9 + $0x300] sm:$0xff]
          %v9959 = vld [vmem:[#allocation9 + $0x308] sm:$0xff]
          %v9960 = vld [vmem:[#allocation9 + $0x310] sm:$0xff]
          %v9961 = vld [vmem:[#allocation9 + $0x318] sm:$0xff]
          %v9962 = vld [vmem:[#allocation9 + $0x320] sm:$0xff]
          %v9963 = vld [vmem:[#allocation9 + $0x328] sm:$0xff]
          %v9964 = vld [vmem:[#allocation9 + $0x330] sm:$0xff]
          %v9965 = vld [vmem:[#allocation9 + $0x338] sm:$0xff]
          %v9966 = vld [vmem:[#allocation9 + $0x340] sm:$0xff]
          %v9967 = vld [vmem:[#allocation9 + $0x348] sm:$0xff]
          %v9968 = vld [vmem:[#allocation9 + $0x350] sm:$0xff]
          %v9969 = vld [vmem:[#allocation9 + $0x358] sm:$0xff]
          %v9970 = vld [vmem:[#allocation9 + $0x360] sm:$0xff]
          %v9971 = vld [vmem:[#allocation9 + $0x368] sm:$0xff]
          %v9972 = vld [vmem:[#allocation9 + $0x370] sm:$0xff]
          %v9973 = vld [vmem:[#allocation9 + $0x378] sm:$0xff]
          %v9974 = vld [vmem:[#allocation9 + $0x380] sm:$0xff]
          %v9975 = vld [vmem:[#allocation9 + $0x388] sm:$0xff]
          %v9976 = vld [vmem:[#allocation9 + $0x390] sm:$0xff]
          %v9977 = vld [vmem:[#allocation9 + $0x398] sm:$0xff]
          %v9978 = vld [vmem:[#allocation9 + $0x3a0] sm:$0xff]
          %v9979 = vld [vmem:[#allocation9 + $0x3a8] sm:$0xff]
          %v9980 = vld [vmem:[#allocation9 + $0x3b0] sm:$0xff]
          %v9981 = vld [vmem:[#allocation9 + $0x3b8] sm:$0xff]
          %v9982 = vld [vmem:[#allocation9 + $0x3c0] sm:$0xff]
          %v9983 = vld [vmem:[#allocation9 + $0x3c8] sm:$0xff]
          %v9984 = vld [vmem:[#allocation9 + $0x3d0] sm:$0xff]
          %v9985 = vld [vmem:[#allocation9 + $0x3d8] sm:$0xff]
          %v9986 = vld [vmem:[#allocation9 + $0x3e0] sm:$0xff]
          %v9987 = vld [vmem:[#allocation9 + $0x3e8] sm:$0xff]
          %v9988 = vld [vmem:[#allocation9 + $0x3f0] sm:$0xff]
          %v9989 = vld [vmem:[#allocation9 + $0x3f8] sm:$0xff]
          %v9990 = vld [vmem:[#allocation9 + $0x400] sm:$0xff]
          %v9991 = vld [vmem:[#allocation9 + $0x408] sm:$0xff]
          %v9992 = vld [vmem:[#allocation9 + $0x410] sm:$0xff]
          %v9993 = vld [vmem:[#allocation9 + $0x418] sm:$0xff]
          %v9994 = vld [vmem:[#allocation9 + $0x420] sm:$0xff]
          %v9995 = vld [vmem:[#allocation9 + $0x428] sm:$0xff]
          %v9996 = vld [vmem:[#allocation9 + $0x430] sm:$0xff]
          %v9997 = vld [vmem:[#allocation9 + $0x438] sm:$0xff]
          %v9998 = vld [vmem:[#allocation9 + $0x440] sm:$0xff]
          %v9999 = vld [vmem:[#allocation9 + $0x448] sm:$0xff]
          %v10000 = vld [vmem:[#allocation9 + $0x450] sm:$0xff]
          %v10001 = vld [vmem:[#allocation9 + $0x458] sm:$0xff]
          %v10002 = vld [vmem:[#allocation9 + $0x460] sm:$0xff]
          %v10003 = vld [vmem:[#allocation9 + $0x468] sm:$0xff]
          %v10004 = vld [vmem:[#allocation9 + $0x470] sm:$0xff]
          %v10005 = vld [vmem:[#allocation9 + $0x478] sm:$0xff]
          %v10006 = vld [vmem:[#allocation9 + $0x480] sm:$0xff]
          %v10007 = vld [vmem:[#allocation9 + $0x488] sm:$0xff]
          %v10008 = vld [vmem:[#allocation9 + $0x490] sm:$0xff]
          %v10009 = vld [vmem:[#allocation9 + $0x498] sm:$0xff]
          %v10010 = vld [vmem:[#allocation9 + $0x4a0] sm:$0xff]
          %v10011 = vld [vmem:[#allocation9 + $0x4a8] sm:$0xff]
          %v10012 = vld [vmem:[#allocation9 + $0x4b0] sm:$0xff]
          %v10013 = vld [vmem:[#allocation9 + $0x4b8] sm:$0xff]
          %v10014 = vld [vmem:[#allocation9 + $0x4c0] sm:$0xff]
          %v10015 = vld [vmem:[#allocation9 + $0x4c8] sm:$0xff]
          %v10016 = vld [vmem:[#allocation9 + $0x4d0] sm:$0xff]
          %v10017 = vld [vmem:[#allocation9 + $0x4d8] sm:$0xff]
          %v10018 = vld [vmem:[#allocation9 + $0x4e0] sm:$0xff]
          %v10019 = vld [vmem:[#allocation9 + $0x4e8] sm:$0xff]
          %v10020 = vld [vmem:[#allocation9 + $0x4f0] sm:$0xff]
          %v10021 = vld [vmem:[#allocation9 + $0x4f8] sm:$0xff]
          %v10022 = vld [vmem:[#allocation9 + $0x500] sm:$0xff]
          %v10023 = vld [vmem:[#allocation9 + $0x508] sm:$0xff]
          %v10024 = vld [vmem:[#allocation9 + $0x510] sm:$0xff]
          %v10025 = vld [vmem:[#allocation9 + $0x518] sm:$0xff]
          %v10026 = vld [vmem:[#allocation9 + $0x520] sm:$0xff]
          %v10027 = vld [vmem:[#allocation9 + $0x528] sm:$0xff]
          %v10028 = vld [vmem:[#allocation9 + $0x530] sm:$0xff]
          %v10029 = vld [vmem:[#allocation9 + $0x538] sm:$0xff]
          %v10030 = vld [vmem:[#allocation9 + $0x540] sm:$0xff]
          %v10031 = vld [vmem:[#allocation9 + $0x548] sm:$0xff]
          %v10032 = vld [vmem:[#allocation9 + $0x550] sm:$0xff]
          %v10033 = vld [vmem:[#allocation9 + $0x558] sm:$0xff]
          %v10034 = vld [vmem:[#allocation9 + $0x560] sm:$0xff]
          %v10035 = vld [vmem:[#allocation9 + $0x568] sm:$0xff]
          %v10036 = vld [vmem:[#allocation9 + $0x570] sm:$0xff]
          %v10037 = vld [vmem:[#allocation9 + $0x578] sm:$0xff]
          %v10038 = vld [vmem:[#allocation9 + $0x580] sm:$0xff]
          %v10039 = vld [vmem:[#allocation9 + $0x588] sm:$0xff]
          %v10040 = vld [vmem:[#allocation9 + $0x590] sm:$0xff]
          %v10041 = vld [vmem:[#allocation9 + $0x598] sm:$0xff]
          %v10042 = vld [vmem:[#allocation9 + $0x5a0] sm:$0xff]
          %v10043 = vld [vmem:[#allocation9 + $0x5a8] sm:$0xff]
          %v10044 = vld [vmem:[#allocation9 + $0x5b0] sm:$0xff]
          %v10045 = vld [vmem:[#allocation9 + $0x5b8] sm:$0xff]
          %v10046 = vld [vmem:[#allocation9 + $0x5c0] sm:$0xff]
          %v10047 = vld [vmem:[#allocation9 + $0x5c8] sm:$0xff]
          %v10048 = vld [vmem:[#allocation9 + $0x5d0] sm:$0xff]
          %v10049 = vld [vmem:[#allocation9 + $0x5d8] sm:$0xff]
          %v10050 = vld [vmem:[#allocation9 + $0x5e0] sm:$0xff]
          %v10051 = vld [vmem:[#allocation9 + $0x5e8] sm:$0xff]
          %v10052 = vld [vmem:[#allocation9 + $0x5f0] sm:$0xff]
          %v10053 = vld [vmem:[#allocation9 + $0x5f8] sm:$0xff]
          %v10054 = vld [vmem:[#allocation9 + $0x600] sm:$0xff]
          %v10055 = vld [vmem:[#allocation9 + $0x608] sm:$0xff]
          %v10056 = vld [vmem:[#allocation9 + $0x610] sm:$0xff]
          %v10057 = vld [vmem:[#allocation9 + $0x618] sm:$0xff]
          %v10058 = vld [vmem:[#allocation9 + $0x620] sm:$0xff]
          %v10059 = vld [vmem:[#allocation9 + $0x628] sm:$0xff]
          %v10060 = vld [vmem:[#allocation9 + $0x630] sm:$0xff]
          %v10061 = vld [vmem:[#allocation9 + $0x638] sm:$0xff]
          %v10062 = vld [vmem:[#allocation9 + $0x640] sm:$0xff]
          %v10063 = vld [vmem:[#allocation9 + $0x648] sm:$0xff]
          %v10064 = vld [vmem:[#allocation9 + $0x650] sm:$0xff]
          %v10065 = vld [vmem:[#allocation9 + $0x658] sm:$0xff]
          %v10066 = vld [vmem:[#allocation9 + $0x660] sm:$0xff]
          %v10067 = vld [vmem:[#allocation9 + $0x668] sm:$0xff]
          %v10068 = vld [vmem:[#allocation9 + $0x670] sm:$0xff]
          %v10069 = vld [vmem:[#allocation9 + $0x678] sm:$0xff]
          %v10070 = vld [vmem:[#allocation9 + $0x680] sm:$0xff]
          %v10071 = vld [vmem:[#allocation9 + $0x688] sm:$0xff]
          %v10072 = vld [vmem:[#allocation9 + $0x690] sm:$0xff]
          %v10073 = vld [vmem:[#allocation9 + $0x698] sm:$0xff]
          %v10074 = vld [vmem:[#allocation9 + $0x6a0] sm:$0xff]
          %v10075 = vld [vmem:[#allocation9 + $0x6a8] sm:$0xff]
          %v10076 = vld [vmem:[#allocation9 + $0x6b0] sm:$0xff]
          %v10077 = vld [vmem:[#allocation9 + $0x6b8] sm:$0xff]
          %v10078 = vld [vmem:[#allocation9 + $0x6c0] sm:$0xff]
          %v10079 = vld [vmem:[#allocation9 + $0x6c8] sm:$0xff]
          %v10080 = vld [vmem:[#allocation9 + $0x6d0] sm:$0xff]
          %v10081 = vld [vmem:[#allocation9 + $0x6d8] sm:$0xff]
          %v10082 = vld [vmem:[#allocation9 + $0x6e0] sm:$0xff]
          %v10083 = vld [vmem:[#allocation9 + $0x6e8] sm:$0xff]
          %v10084 = vld [vmem:[#allocation9 + $0x6f0] sm:$0xff]
          %v10085 = vld [vmem:[#allocation9 + $0x6f8] sm:$0xff]
          %v10086 = vld [vmem:[#allocation9 + $0x700] sm:$0xff]
          %v10087 = vld [vmem:[#allocation9 + $0x708] sm:$0xff]
          %v10088 = vld [vmem:[#allocation9 + $0x710] sm:$0xff]
          %v10089 = vld [vmem:[#allocation9 + $0x718] sm:$0xff]
          %v10090 = vld [vmem:[#allocation9 + $0x720] sm:$0xff]
          %v10091 = vld [vmem:[#allocation9 + $0x728] sm:$0xff]
          %v10092 = vld [vmem:[#allocation9 + $0x730] sm:$0xff]
          %v10093 = vld [vmem:[#allocation9 + $0x738] sm:$0xff]
          %v10094 = vld [vmem:[#allocation9 + $0x740] sm:$0xff]
          %v10095 = vld [vmem:[#allocation9 + $0x748] sm:$0xff]
          %v10096 = vld [vmem:[#allocation9 + $0x750] sm:$0xff]
          %v10097 = vld [vmem:[#allocation9 + $0x758] sm:$0xff]
          %v10098 = vld [vmem:[#allocation9 + $0x760] sm:$0xff]
          %v10099 = vld [vmem:[#allocation9 + $0x768] sm:$0xff]
          %v10100 = vld [vmem:[#allocation9 + $0x770] sm:$0xff]
          %v10101 = vld [vmem:[#allocation9 + $0x778] sm:$0xff]
          %v10102 = vld [vmem:[#allocation9 + $0x780] sm:$0xff]
          %v10103 = vld [vmem:[#allocation9 + $0x788] sm:$0xff]
          %v10104 = vld [vmem:[#allocation9 + $0x790] sm:$0xff]
          %v10105 = vld [vmem:[#allocation9 + $0x798] sm:$0xff]
          %v10106 = vld [vmem:[#allocation9 + $0x7a0] sm:$0xff]
          %v10107 = vld [vmem:[#allocation9 + $0x7a8] sm:$0xff]
          %v10108 = vld [vmem:[#allocation9 + $0x7b0] sm:$0xff]
          %v10109 = vld [vmem:[#allocation9 + $0x7b8] sm:$0xff]
          %v10110 = vld [vmem:[#allocation9 + $0x7c0] sm:$0xff]
          %v10111 = vld [vmem:[#allocation9 + $0x7c8] sm:$0xff]
          %v10112 = vld [vmem:[#allocation9 + $0x7d0] sm:$0xff]
          %v10113 = vld [vmem:[#allocation9 + $0x7d8] sm:$0xff]
          %v10114 = vld [vmem:[#allocation9 + $0x7e0] sm:$0xff]
          %v10115 = vld [vmem:[#allocation9 + $0x7e8] sm:$0xff]
          %v10116 = vld [vmem:[#allocation9 + $0x7f0] sm:$0xff]
          %v10117 = vld [vmem:[#allocation9 + $0x7f8] sm:$0xff]
          %v10118 = vunpack.c.l.bf16 %v9862
          %v10119 = vunpack.c.h.bf16 %v9862
          %v10120 = vunpack.c.l.bf16 %v9863
          %v10121 = vunpack.c.h.bf16 %v9863
          %v10122 = vunpack.c.l.bf16 %v9864
          %v10123 = vunpack.c.h.bf16 %v9864
          %v10124 = vunpack.c.l.bf16 %v9865
          %v10125 = vunpack.c.h.bf16 %v9865
          %v10126 = vunpack.c.l.bf16 %v9866
          %v10127 = vunpack.c.h.bf16 %v9866
          %v10128 = vunpack.c.l.bf16 %v9867
          %v10129 = vunpack.c.h.bf16 %v9867
          %v10130 = vunpack.c.l.bf16 %v9868
          %v10131 = vunpack.c.h.bf16 %v9868
          %v10132 = vunpack.c.l.bf16 %v9869
          %v10133 = vunpack.c.h.bf16 %v9869
          %v10134 = vunpack.c.l.bf16 %v9870
          %v10135 = vunpack.c.h.bf16 %v9870
          %v10136 = vunpack.c.l.bf16 %v9871
          %v10137 = vunpack.c.h.bf16 %v9871
          %v10138 = vunpack.c.l.bf16 %v9872
          %v10139 = vunpack.c.h.bf16 %v9872
          %v10140 = vunpack.c.l.bf16 %v9873
          %v10141 = vunpack.c.h.bf16 %v9873
          %v10142 = vunpack.c.l.bf16 %v9874
          %v10143 = vunpack.c.h.bf16 %v9874
          %v10144 = vunpack.c.l.bf16 %v9875
          %v10145 = vunpack.c.h.bf16 %v9875
          %v10146 = vunpack.c.l.bf16 %v9876
          %v10147 = vunpack.c.h.bf16 %v9876
          %v10148 = vunpack.c.l.bf16 %v9877
          %v10149 = vunpack.c.h.bf16 %v9877
          %v10150 = vunpack.c.l.bf16 %v9878
          %v10151 = vunpack.c.h.bf16 %v9878
          %v10152 = vunpack.c.l.bf16 %v9879
          %v10153 = vunpack.c.h.bf16 %v9879
          %v10154 = vunpack.c.l.bf16 %v9880
          %v10155 = vunpack.c.h.bf16 %v9880
          %v10156 = vunpack.c.l.bf16 %v9881
          %v10157 = vunpack.c.h.bf16 %v9881
          %v10158 = vunpack.c.l.bf16 %v9882
          %v10159 = vunpack.c.h.bf16 %v9882
          %v10160 = vunpack.c.l.bf16 %v9883
          %v10161 = vunpack.c.h.bf16 %v9883
          %v10162 = vunpack.c.l.bf16 %v9884
          %v10163 = vunpack.c.h.bf16 %v9884
          %v10164 = vunpack.c.l.bf16 %v9885
          %v10165 = vunpack.c.h.bf16 %v9885
          %v10166 = vunpack.c.l.bf16 %v9886
          %v10167 = vunpack.c.h.bf16 %v9886
          %v10168 = vunpack.c.l.bf16 %v9887
          %v10169 = vunpack.c.h.bf16 %v9887
          %v10170 = vunpack.c.l.bf16 %v9888
          %v10171 = vunpack.c.h.bf16 %v9888
          %v10172 = vunpack.c.l.bf16 %v9889
          %v10173 = vunpack.c.h.bf16 %v9889
          %v10174 = vunpack.c.l.bf16 %v9890
          %v10175 = vunpack.c.h.bf16 %v9890
          %v10176 = vunpack.c.l.bf16 %v9891
          %v10177 = vunpack.c.h.bf16 %v9891
          %v10178 = vunpack.c.l.bf16 %v9892
          %v10179 = vunpack.c.h.bf16 %v9892
          %v10180 = vunpack.c.l.bf16 %v9893
          %v10181 = vunpack.c.h.bf16 %v9893
          %v10182 = vunpack.c.l.bf16 %v9894
          %v10183 = vunpack.c.h.bf16 %v9894
          %v10184 = vunpack.c.l.bf16 %v9895
          %v10185 = vunpack.c.h.bf16 %v9895
          %v10186 = vunpack.c.l.bf16 %v9896
          %v10187 = vunpack.c.h.bf16 %v9896
          %v10188 = vunpack.c.l.bf16 %v9897
          %v10189 = vunpack.c.h.bf16 %v9897
          %v10190 = vunpack.c.l.bf16 %v9898
          %v10191 = vunpack.c.h.bf16 %v9898
          %v10192 = vunpack.c.l.bf16 %v9899
          %v10193 = vunpack.c.h.bf16 %v9899
          %v10194 = vunpack.c.l.bf16 %v9900
          %v10195 = vunpack.c.h.bf16 %v9900
          %v10196 = vunpack.c.l.bf16 %v9901
          %v10197 = vunpack.c.h.bf16 %v9901
          %v10198 = vunpack.c.l.bf16 %v9902
          %v10199 = vunpack.c.h.bf16 %v9902
          %v10200 = vunpack.c.l.bf16 %v9903
          %v10201 = vunpack.c.h.bf16 %v9903
          %v10202 = vunpack.c.l.bf16 %v9904
          %v10203 = vunpack.c.h.bf16 %v9904
          %v10204 = vunpack.c.l.bf16 %v9905
          %v10205 = vunpack.c.h.bf16 %v9905
          %v10206 = vunpack.c.l.bf16 %v9906
          %v10207 = vunpack.c.h.bf16 %v9906
          %v10208 = vunpack.c.l.bf16 %v9907
          %v10209 = vunpack.c.h.bf16 %v9907
          %v10210 = vunpack.c.l.bf16 %v9908
          %v10211 = vunpack.c.h.bf16 %v9908
          %v10212 = vunpack.c.l.bf16 %v9909
          %v10213 = vunpack.c.h.bf16 %v9909
          %v10214 = vunpack.c.l.bf16 %v9910
          %v10215 = vunpack.c.h.bf16 %v9910
          %v10216 = vunpack.c.l.bf16 %v9911
          %v10217 = vunpack.c.h.bf16 %v9911
          %v10218 = vunpack.c.l.bf16 %v9912
          %v10219 = vunpack.c.h.bf16 %v9912
          %v10220 = vunpack.c.l.bf16 %v9913
          %v10221 = vunpack.c.h.bf16 %v9913
          %v10222 = vunpack.c.l.bf16 %v9914
          %v10223 = vunpack.c.h.bf16 %v9914
          %v10224 = vunpack.c.l.bf16 %v9915
          %v10225 = vunpack.c.h.bf16 %v9915
          %v10226 = vunpack.c.l.bf16 %v9916
          %v10227 = vunpack.c.h.bf16 %v9916
          %v10228 = vunpack.c.l.bf16 %v9917
          %v10229 = vunpack.c.h.bf16 %v9917
          %v10230 = vunpack.c.l.bf16 %v9918
          %v10231 = vunpack.c.h.bf16 %v9918
          %v10232 = vunpack.c.l.bf16 %v9919
          %v10233 = vunpack.c.h.bf16 %v9919
          %v10234 = vunpack.c.l.bf16 %v9920
          %v10235 = vunpack.c.h.bf16 %v9920
          %v10236 = vunpack.c.l.bf16 %v9921
          %v10237 = vunpack.c.h.bf16 %v9921
          %v10238 = vunpack.c.l.bf16 %v9922
          %v10239 = vunpack.c.h.bf16 %v9922
          %v10240 = vunpack.c.l.bf16 %v9923
          %v10241 = vunpack.c.h.bf16 %v9923
          %v10242 = vunpack.c.l.bf16 %v9924
          %v10243 = vunpack.c.h.bf16 %v9924
          %v10244 = vunpack.c.l.bf16 %v9925
          %v10245 = vunpack.c.h.bf16 %v9925
          %v10246 = vunpack.c.l.bf16 %v9926
          %v10247 = vunpack.c.h.bf16 %v9926
          %v10248 = vunpack.c.l.bf16 %v9927
          %v10249 = vunpack.c.h.bf16 %v9927
          %v10250 = vunpack.c.l.bf16 %v9928
          %v10251 = vunpack.c.h.bf16 %v9928
          %v10252 = vunpack.c.l.bf16 %v9929
          %v10253 = vunpack.c.h.bf16 %v9929
          %v10254 = vunpack.c.l.bf16 %v9930
          %v10255 = vunpack.c.h.bf16 %v9930
          %v10256 = vunpack.c.l.bf16 %v9931
          %v10257 = vunpack.c.h.bf16 %v9931
          %v10258 = vunpack.c.l.bf16 %v9932
          %v10259 = vunpack.c.h.bf16 %v9932
          %v10260 = vunpack.c.l.bf16 %v9933
          %v10261 = vunpack.c.h.bf16 %v9933
          %v10262 = vunpack.c.l.bf16 %v9934
          %v10263 = vunpack.c.h.bf16 %v9934
          %v10264 = vunpack.c.l.bf16 %v9935
          %v10265 = vunpack.c.h.bf16 %v9935
          %v10266 = vunpack.c.l.bf16 %v9936
          %v10267 = vunpack.c.h.bf16 %v9936
          %v10268 = vunpack.c.l.bf16 %v9937
          %v10269 = vunpack.c.h.bf16 %v9937
          %v10270 = vunpack.c.l.bf16 %v9938
          %v10271 = vunpack.c.h.bf16 %v9938
          %v10272 = vunpack.c.l.bf16 %v9939
          %v10273 = vunpack.c.h.bf16 %v9939
          %v10274 = vunpack.c.l.bf16 %v9940
          %v10275 = vunpack.c.h.bf16 %v9940
          %v10276 = vunpack.c.l.bf16 %v9941
          %v10277 = vunpack.c.h.bf16 %v9941
          %v10278 = vunpack.c.l.bf16 %v9942
          %v10279 = vunpack.c.h.bf16 %v9942
          %v10280 = vunpack.c.l.bf16 %v9943
          %v10281 = vunpack.c.h.bf16 %v9943
          %v10282 = vunpack.c.l.bf16 %v9944
          %v10283 = vunpack.c.h.bf16 %v9944
          %v10284 = vunpack.c.l.bf16 %v9945
          %v10285 = vunpack.c.h.bf16 %v9945
          %v10286 = vunpack.c.l.bf16 %v9946
          %v10287 = vunpack.c.h.bf16 %v9946
          %v10288 = vunpack.c.l.bf16 %v9947
          %v10289 = vunpack.c.h.bf16 %v9947
          %v10290 = vunpack.c.l.bf16 %v9948
          %v10291 = vunpack.c.h.bf16 %v9948
          %v10292 = vunpack.c.l.bf16 %v9949
          %v10293 = vunpack.c.h.bf16 %v9949
          %v10294 = vunpack.c.l.bf16 %v9950
          %v10295 = vunpack.c.h.bf16 %v9950
          %v10296 = vunpack.c.l.bf16 %v9951
          %v10297 = vunpack.c.h.bf16 %v9951
          %v10298 = vunpack.c.l.bf16 %v9952
          %v10299 = vunpack.c.h.bf16 %v9952
          %v10300 = vunpack.c.l.bf16 %v9953
          %v10301 = vunpack.c.h.bf16 %v9953
          %v10302 = vunpack.c.l.bf16 %v9954
          %v10303 = vunpack.c.h.bf16 %v9954
          %v10304 = vunpack.c.l.bf16 %v9955
          %v10305 = vunpack.c.h.bf16 %v9955
          %v10306 = vunpack.c.l.bf16 %v9956
          %v10307 = vunpack.c.h.bf16 %v9956
          %v10308 = vunpack.c.l.bf16 %v9957
          %v10309 = vunpack.c.h.bf16 %v9957
          %v10310 = vunpack.c.l.bf16 %v9958
          %v10311 = vunpack.c.h.bf16 %v9958
          %v10312 = vunpack.c.l.bf16 %v9959
          %v10313 = vunpack.c.h.bf16 %v9959
          %v10314 = vunpack.c.l.bf16 %v9960
          %v10315 = vunpack.c.h.bf16 %v9960
          %v10316 = vunpack.c.l.bf16 %v9961
          %v10317 = vunpack.c.h.bf16 %v9961
          %v10318 = vunpack.c.l.bf16 %v9962
          %v10319 = vunpack.c.h.bf16 %v9962
          %v10320 = vunpack.c.l.bf16 %v9963
          %v10321 = vunpack.c.h.bf16 %v9963
          %v10322 = vunpack.c.l.bf16 %v9964
          %v10323 = vunpack.c.h.bf16 %v9964
          %v10324 = vunpack.c.l.bf16 %v9965
          %v10325 = vunpack.c.h.bf16 %v9965
          %v10326 = vunpack.c.l.bf16 %v9966
          %v10327 = vunpack.c.h.bf16 %v9966
          %v10328 = vunpack.c.l.bf16 %v9967
          %v10329 = vunpack.c.h.bf16 %v9967
          %v10330 = vunpack.c.l.bf16 %v9968
          %v10331 = vunpack.c.h.bf16 %v9968
          %v10332 = vunpack.c.l.bf16 %v9969
          %v10333 = vunpack.c.h.bf16 %v9969
          %v10334 = vunpack.c.l.bf16 %v9970
          %v10335 = vunpack.c.h.bf16 %v9970
          %v10336 = vunpack.c.l.bf16 %v9971
          %v10337 = vunpack.c.h.bf16 %v9971
          %v10338 = vunpack.c.l.bf16 %v9972
          %v10339 = vunpack.c.h.bf16 %v9972
          %v10340 = vunpack.c.l.bf16 %v9973
          %v10341 = vunpack.c.h.bf16 %v9973
          %v10342 = vunpack.c.l.bf16 %v9974
          %v10343 = vunpack.c.h.bf16 %v9974
          %v10344 = vunpack.c.l.bf16 %v9975
          %v10345 = vunpack.c.h.bf16 %v9975
          %v10346 = vunpack.c.l.bf16 %v9976
          %v10347 = vunpack.c.h.bf16 %v9976
          %v10348 = vunpack.c.l.bf16 %v9977
          %v10349 = vunpack.c.h.bf16 %v9977
          %v10350 = vunpack.c.l.bf16 %v9978
          %v10351 = vunpack.c.h.bf16 %v9978
          %v10352 = vunpack.c.l.bf16 %v9979
          %v10353 = vunpack.c.h.bf16 %v9979
          %v10354 = vunpack.c.l.bf16 %v9980
          %v10355 = vunpack.c.h.bf16 %v9980
          %v10356 = vunpack.c.l.bf16 %v9981
          %v10357 = vunpack.c.h.bf16 %v9981
          %v10358 = vunpack.c.l.bf16 %v9982
          %v10359 = vunpack.c.h.bf16 %v9982
          %v10360 = vunpack.c.l.bf16 %v9983
          %v10361 = vunpack.c.h.bf16 %v9983
          %v10362 = vunpack.c.l.bf16 %v9984
          %v10363 = vunpack.c.h.bf16 %v9984
          %v10364 = vunpack.c.l.bf16 %v9985
          %v10365 = vunpack.c.h.bf16 %v9985
          %v10366 = vunpack.c.l.bf16 %v9986
          %v10367 = vunpack.c.h.bf16 %v9986
          %v10368 = vunpack.c.l.bf16 %v9987
          %v10369 = vunpack.c.h.bf16 %v9987
          %v10370 = vunpack.c.l.bf16 %v9988
          %v10371 = vunpack.c.h.bf16 %v9988
          %v10372 = vunpack.c.l.bf16 %v9989
          %v10373 = vunpack.c.h.bf16 %v9989
          %v10374 = vunpack.c.l.bf16 %v9990
          %v10375 = vunpack.c.h.bf16 %v9990
          %v10376 = vunpack.c.l.bf16 %v9991
          %v10377 = vunpack.c.h.bf16 %v9991
          %v10378 = vunpack.c.l.bf16 %v9992
          %v10379 = vunpack.c.h.bf16 %v9992
          %v10380 = vunpack.c.l.bf16 %v9993
          %v10381 = vunpack.c.h.bf16 %v9993
          %v10382 = vunpack.c.l.bf16 %v9994
          %v10383 = vunpack.c.h.bf16 %v9994
          %v10384 = vunpack.c.l.bf16 %v9995
          %v10385 = vunpack.c.h.bf16 %v9995
          %v10386 = vunpack.c.l.bf16 %v9996
          %v10387 = vunpack.c.h.bf16 %v9996
          %v10388 = vunpack.c.l.bf16 %v9997
          %v10389 = vunpack.c.h.bf16 %v9997
          %v10390 = vunpack.c.l.bf16 %v9998
          %v10391 = vunpack.c.h.bf16 %v9998
          %v10392 = vunpack.c.l.bf16 %v9999
          %v10393 = vunpack.c.h.bf16 %v9999
          %v10394 = vunpack.c.l.bf16 %v10000
          %v10395 = vunpack.c.h.bf16 %v10000
          %v10396 = vunpack.c.l.bf16 %v10001
          %v10397 = vunpack.c.h.bf16 %v10001
          %v10398 = vunpack.c.l.bf16 %v10002
          %v10399 = vunpack.c.h.bf16 %v10002
          %v10400 = vunpack.c.l.bf16 %v10003
          %v10401 = vunpack.c.h.bf16 %v10003
          %v10402 = vunpack.c.l.bf16 %v10004
          %v10403 = vunpack.c.h.bf16 %v10004
          %v10404 = vunpack.c.l.bf16 %v10005
          %v10405 = vunpack.c.h.bf16 %v10005
          %v10406 = vunpack.c.l.bf16 %v10006
          %v10407 = vunpack.c.h.bf16 %v10006
          %v10408 = vunpack.c.l.bf16 %v10007
          %v10409 = vunpack.c.h.bf16 %v10007
          %v10410 = vunpack.c.l.bf16 %v10008
          %v10411 = vunpack.c.h.bf16 %v10008
          %v10412 = vunpack.c.l.bf16 %v10009
          %v10413 = vunpack.c.h.bf16 %v10009
          %v10414 = vunpack.c.l.bf16 %v10010
          %v10415 = vunpack.c.h.bf16 %v10010
          %v10416 = vunpack.c.l.bf16 %v10011
          %v10417 = vunpack.c.h.bf16 %v10011
          %v10418 = vunpack.c.l.bf16 %v10012
          %v10419 = vunpack.c.h.bf16 %v10012
          %v10420 = vunpack.c.l.bf16 %v10013
          %v10421 = vunpack.c.h.bf16 %v10013
          %v10422 = vunpack.c.l.bf16 %v10014
          %v10423 = vunpack.c.h.bf16 %v10014
          %v10424 = vunpack.c.l.bf16 %v10015
          %v10425 = vunpack.c.h.bf16 %v10015
          %v10426 = vunpack.c.l.bf16 %v10016
          %v10427 = vunpack.c.h.bf16 %v10016
          %v10428 = vunpack.c.l.bf16 %v10017
          %v10429 = vunpack.c.h.bf16 %v10017
          %v10430 = vunpack.c.l.bf16 %v10018
          %v10431 = vunpack.c.h.bf16 %v10018
          %v10432 = vunpack.c.l.bf16 %v10019
          %v10433 = vunpack.c.h.bf16 %v10019
          %v10434 = vunpack.c.l.bf16 %v10020
          %v10435 = vunpack.c.h.bf16 %v10020
          %v10436 = vunpack.c.l.bf16 %v10021
          %v10437 = vunpack.c.h.bf16 %v10021
          %v10438 = vunpack.c.l.bf16 %v10022
          %v10439 = vunpack.c.h.bf16 %v10022
          %v10440 = vunpack.c.l.bf16 %v10023
          %v10441 = vunpack.c.h.bf16 %v10023
          %v10442 = vunpack.c.l.bf16 %v10024
          %v10443 = vunpack.c.h.bf16 %v10024
          %v10444 = vunpack.c.l.bf16 %v10025
          %v10445 = vunpack.c.h.bf16 %v10025
          %v10446 = vunpack.c.l.bf16 %v10026
          %v10447 = vunpack.c.h.bf16 %v10026
          %v10448 = vunpack.c.l.bf16 %v10027
          %v10449 = vunpack.c.h.bf16 %v10027
          %v10450 = vunpack.c.l.bf16 %v10028
          %v10451 = vunpack.c.h.bf16 %v10028
          %v10452 = vunpack.c.l.bf16 %v10029
          %v10453 = vunpack.c.h.bf16 %v10029
          %v10454 = vunpack.c.l.bf16 %v10030
          %v10455 = vunpack.c.h.bf16 %v10030
          %v10456 = vunpack.c.l.bf16 %v10031
          %v10457 = vunpack.c.h.bf16 %v10031
          %v10458 = vunpack.c.l.bf16 %v10032
          %v10459 = vunpack.c.h.bf16 %v10032
          %v10460 = vunpack.c.l.bf16 %v10033
          %v10461 = vunpack.c.h.bf16 %v10033
          %v10462 = vunpack.c.l.bf16 %v10034
          %v10463 = vunpack.c.h.bf16 %v10034
          %v10464 = vunpack.c.l.bf16 %v10035
          %v10465 = vunpack.c.h.bf16 %v10035
          %v10466 = vunpack.c.l.bf16 %v10036
          %v10467 = vunpack.c.h.bf16 %v10036
          %v10468 = vunpack.c.l.bf16 %v10037
          %v10469 = vunpack.c.h.bf16 %v10037
          %v10470 = vunpack.c.l.bf16 %v10038
          %v10471 = vunpack.c.h.bf16 %v10038
          %v10472 = vunpack.c.l.bf16 %v10039
          %v10473 = vunpack.c.h.bf16 %v10039
          %v10474 = vunpack.c.l.bf16 %v10040
          %v10475 = vunpack.c.h.bf16 %v10040
          %v10476 = vunpack.c.l.bf16 %v10041
          %v10477 = vunpack.c.h.bf16 %v10041
          %v10478 = vunpack.c.l.bf16 %v10042
          %v10479 = vunpack.c.h.bf16 %v10042
          %v10480 = vunpack.c.l.bf16 %v10043
          %v10481 = vunpack.c.h.bf16 %v10043
          %v10482 = vunpack.c.l.bf16 %v10044
          %v10483 = vunpack.c.h.bf16 %v10044
          %v10484 = vunpack.c.l.bf16 %v10045
          %v10485 = vunpack.c.h.bf16 %v10045
          %v10486 = vunpack.c.l.bf16 %v10046
          %v10487 = vunpack.c.h.bf16 %v10046
          %v10488 = vunpack.c.l.bf16 %v10047
          %v10489 = vunpack.c.h.bf16 %v10047
          %v10490 = vunpack.c.l.bf16 %v10048
          %v10491 = vunpack.c.h.bf16 %v10048
          %v10492 = vunpack.c.l.bf16 %v10049
          %v10493 = vunpack.c.h.bf16 %v10049
          %v10494 = vunpack.c.l.bf16 %v10050
          %v10495 = vunpack.c.h.bf16 %v10050
          %v10496 = vunpack.c.l.bf16 %v10051
          %v10497 = vunpack.c.h.bf16 %v10051
          %v10498 = vunpack.c.l.bf16 %v10052
          %v10499 = vunpack.c.h.bf16 %v10052
          %v10500 = vunpack.c.l.bf16 %v10053
          %v10501 = vunpack.c.h.bf16 %v10053
          %v10502 = vunpack.c.l.bf16 %v10054
          %v10503 = vunpack.c.h.bf16 %v10054
          %v10504 = vunpack.c.l.bf16 %v10055
          %v10505 = vunpack.c.h.bf16 %v10055
          %v10506 = vunpack.c.l.bf16 %v10056
          %v10507 = vunpack.c.h.bf16 %v10056
          %v10508 = vunpack.c.l.bf16 %v10057
          %v10509 = vunpack.c.h.bf16 %v10057
          %v10510 = vunpack.c.l.bf16 %v10058
          %v10511 = vunpack.c.h.bf16 %v10058
          %v10512 = vunpack.c.l.bf16 %v10059
          %v10513 = vunpack.c.h.bf16 %v10059
          %v10514 = vunpack.c.l.bf16 %v10060
          %v10515 = vunpack.c.h.bf16 %v10060
          %v10516 = vunpack.c.l.bf16 %v10061
          %v10517 = vunpack.c.h.bf16 %v10061
          %v10518 = vunpack.c.l.bf16 %v10062
          %v10519 = vunpack.c.h.bf16 %v10062
          %v10520 = vunpack.c.l.bf16 %v10063
          %v10521 = vunpack.c.h.bf16 %v10063
          %v10522 = vunpack.c.l.bf16 %v10064
          %v10523 = vunpack.c.h.bf16 %v10064
          %v10524 = vunpack.c.l.bf16 %v10065
          %v10525 = vunpack.c.h.bf16 %v10065
          %v10526 = vunpack.c.l.bf16 %v10066
          %v10527 = vunpack.c.h.bf16 %v10066
          %v10528 = vunpack.c.l.bf16 %v10067
          %v10529 = vunpack.c.h.bf16 %v10067
          %v10530 = vunpack.c.l.bf16 %v10068
          %v10531 = vunpack.c.h.bf16 %v10068
          %v10532 = vunpack.c.l.bf16 %v10069
          %v10533 = vunpack.c.h.bf16 %v10069
          %v10534 = vunpack.c.l.bf16 %v10070
          %v10535 = vunpack.c.h.bf16 %v10070
          %v10536 = vunpack.c.l.bf16 %v10071
          %v10537 = vunpack.c.h.bf16 %v10071
          %v10538 = vunpack.c.l.bf16 %v10072
          %v10539 = vunpack.c.h.bf16 %v10072
          %v10540 = vunpack.c.l.bf16 %v10073
          %v10541 = vunpack.c.h.bf16 %v10073
          %v10542 = vunpack.c.l.bf16 %v10074
          %v10543 = vunpack.c.h.bf16 %v10074
          %v10544 = vunpack.c.l.bf16 %v10075
          %v10545 = vunpack.c.h.bf16 %v10075
          %v10546 = vunpack.c.l.bf16 %v10076
          %v10547 = vunpack.c.h.bf16 %v10076
          %v10548 = vunpack.c.l.bf16 %v10077
          %v10549 = vunpack.c.h.bf16 %v10077
          %v10550 = vunpack.c.l.bf16 %v10078
          %v10551 = vunpack.c.h.bf16 %v10078
          %v10552 = vunpack.c.l.bf16 %v10079
          %v10553 = vunpack.c.h.bf16 %v10079
          %v10554 = vunpack.c.l.bf16 %v10080
          %v10555 = vunpack.c.h.bf16 %v10080
          %v10556 = vunpack.c.l.bf16 %v10081
          %v10557 = vunpack.c.h.bf16 %v10081
          %v10558 = vunpack.c.l.bf16 %v10082
          %v10559 = vunpack.c.h.bf16 %v10082
          %v10560 = vunpack.c.l.bf16 %v10083
          %v10561 = vunpack.c.h.bf16 %v10083
          %v10562 = vunpack.c.l.bf16 %v10084
          %v10563 = vunpack.c.h.bf16 %v10084
          %v10564 = vunpack.c.l.bf16 %v10085
          %v10565 = vunpack.c.h.bf16 %v10085
          %v10566 = vunpack.c.l.bf16 %v10086
          %v10567 = vunpack.c.h.bf16 %v10086
          %v10568 = vunpack.c.l.bf16 %v10087
          %v10569 = vunpack.c.h.bf16 %v10087
          %v10570 = vunpack.c.l.bf16 %v10088
          %v10571 = vunpack.c.h.bf16 %v10088
          %v10572 = vunpack.c.l.bf16 %v10089
          %v10573 = vunpack.c.h.bf16 %v10089
          %v10574 = vunpack.c.l.bf16 %v10090
          %v10575 = vunpack.c.h.bf16 %v10090
          %v10576 = vunpack.c.l.bf16 %v10091
          %v10577 = vunpack.c.h.bf16 %v10091
          %v10578 = vunpack.c.l.bf16 %v10092
          %v10579 = vunpack.c.h.bf16 %v10092
          %v10580 = vunpack.c.l.bf16 %v10093
          %v10581 = vunpack.c.h.bf16 %v10093
          %v10582 = vunpack.c.l.bf16 %v10094
          %v10583 = vunpack.c.h.bf16 %v10094
          %v10584 = vunpack.c.l.bf16 %v10095
          %v10585 = vunpack.c.h.bf16 %v10095
          %v10586 = vunpack.c.l.bf16 %v10096
          %v10587 = vunpack.c.h.bf16 %v10096
          %v10588 = vunpack.c.l.bf16 %v10097
          %v10589 = vunpack.c.h.bf16 %v10097
          %v10590 = vunpack.c.l.bf16 %v10098
          %v10591 = vunpack.c.h.bf16 %v10098
          %v10592 = vunpack.c.l.bf16 %v10099
          %v10593 = vunpack.c.h.bf16 %v10099
          %v10594 = vunpack.c.l.bf16 %v10100
          %v10595 = vunpack.c.h.bf16 %v10100
          %v10596 = vunpack.c.l.bf16 %v10101
          %v10597 = vunpack.c.h.bf16 %v10101
          %v10598 = vunpack.c.l.bf16 %v10102
          %v10599 = vunpack.c.h.bf16 %v10102
          %v10600 = vunpack.c.l.bf16 %v10103
          %v10601 = vunpack.c.h.bf16 %v10103
          %v10602 = vunpack.c.l.bf16 %v10104
          %v10603 = vunpack.c.h.bf16 %v10104
          %v10604 = vunpack.c.l.bf16 %v10105
          %v10605 = vunpack.c.h.bf16 %v10105
          %v10606 = vunpack.c.l.bf16 %v10106
          %v10607 = vunpack.c.h.bf16 %v10106
          %v10608 = vunpack.c.l.bf16 %v10107
          %v10609 = vunpack.c.h.bf16 %v10107
          %v10610 = vunpack.c.l.bf16 %v10108
          %v10611 = vunpack.c.h.bf16 %v10108
          %v10612 = vunpack.c.l.bf16 %v10109
          %v10613 = vunpack.c.h.bf16 %v10109
          %v10614 = vunpack.c.l.bf16 %v10110
          %v10615 = vunpack.c.h.bf16 %v10110
          %v10616 = vunpack.c.l.bf16 %v10111
          %v10617 = vunpack.c.h.bf16 %v10111
          %v10618 = vunpack.c.l.bf16 %v10112
          %v10619 = vunpack.c.h.bf16 %v10112
          %v10620 = vunpack.c.l.bf16 %v10113
          %v10621 = vunpack.c.h.bf16 %v10113
          %v10622 = vunpack.c.l.bf16 %v10114
          %v10623 = vunpack.c.h.bf16 %v10114
          %v10624 = vunpack.c.l.bf16 %v10115
          %v10625 = vunpack.c.h.bf16 %v10115
          %v10626 = vunpack.c.l.bf16 %v10116
          %v10627 = vunpack.c.h.bf16 %v10116
          %v10628 = vunpack.c.l.bf16 %v10117
          %v10629 = vunpack.c.h.bf16 %v10117
          %v10630 = vld [vmem:[#allocation11] sm:$0xf]
          %v10632 = vlaneseq
          %v10633 = vshrl.u32 %v10632, 7
          %v10634 = vsub.s32 0, %v10633
          %v10635 = vrot.slane %v10630, %v10634
          %v10636 = vlaneseq
          %v10637 = vshrl.u32 %v10636, 7
          %v10638 = vsub.s32 1, %v10637
          %v10639 = vrot.slane %v10630, %v10638
          %v10640 = vlaneseq
          %v10641 = vshrl.u32 %v10640, 7
          %v10642 = vsub.s32 2, %v10641
          %v10643 = vrot.slane %v10630, %v10642
          %v10644 = vlaneseq
          %v10645 = vshrl.u32 %v10644, 7
          %v10646 = vsub.s32 3, %v10645
          %v10647 = vrot.slane %v10630, %v10646
          %10652 = vmatprep.subr.mxu0 %v10179
          %10653 = vmatpush1.msra.mxu0 %v10178
          %10654 = vmatprep.subr.mxu0 %v10175
          %10655 = vmatpush1.msra.mxu0 %v10174
          %10656 = vmatprep.subr.mxu0 %v10171
          %10657 = vmatpush1.msra.mxu0 %v10170
          %10658 = vmatprep.subr.mxu0 %v10167
          %10659 = vmatpush1.msra.mxu0 %v10166
          %10660 = vmatprep.subr.mxu0 %v10163
          %10661 = vmatpush1.msra.mxu0 %v10162
          %10662 = vmatprep.subr.mxu0 %v10159
          %10663 = vmatpush1.msra.mxu0 %v10158
          %10664 = vmatprep.subr.mxu0 %v10155
          %10665 = vmatpush1.msra.mxu0 %v10154
          %10666 = vmatprep.subr.mxu0 %v10151
          %10667 = vmatpush1.msra.mxu0 %v10150
          %10668 = vmatprep.subr.mxu0 %v10147
          %10669 = vmatpush1.msra.mxu0 %v10146
          %10670 = vmatprep.subr.mxu0 %v10143
          %10671 = vmatpush1.msra.mxu0 %v10142
          %10672 = vmatprep.subr.mxu0 %v10139
          %10673 = vmatpush1.msra.mxu0 %v10138
          %10674 = vmatprep.subr.mxu0 %v10135
          %10675 = vmatpush1.msra.mxu0 %v10134
          %10676 = vmatprep.subr.mxu0 %v10131
          %10677 = vmatpush1.msra.mxu0 %v10130
          %10678 = vmatprep.subr.mxu0 %v10127
          %10679 = vmatpush1.msra.mxu0 %v10126
          %10680 = vmatprep.subr.mxu0 %v10123
          %10681 = vmatpush1.msra.mxu0 %v10122
          %10682 = vmatprep.subr.mxu0 %v10119
          %10683 = vmatpush1.msra.mxu0 %v10118
          %10684 = vmatprep.subr.mxu0 %v10243
          %10685 = vmatpush2.msra.mxu0 %v10242
          %10686 = vmatprep.subr.mxu0 %v10239
          %10687 = vmatpush2.msra.mxu0 %v10238
          %10688 = vmatprep.subr.mxu0 %v10235
          %10689 = vmatpush2.msra.mxu0 %v10234
          %10690 = vmatprep.subr.mxu0 %v10231
          %10691 = vmatpush2.msra.mxu0 %v10230
          %10692 = vmatprep.subr.mxu0 %v10227
          %10693 = vmatpush2.msra.mxu0 %v10226
          %10694 = vmatprep.subr.mxu0 %v10223
          %10695 = vmatpush2.msra.mxu0 %v10222
          %10696 = vmatprep.subr.mxu0 %v10219
          %10697 = vmatpush2.msra.mxu0 %v10218
          %10698 = vmatprep.subr.mxu0 %v10215
          %10699 = vmatpush2.msra.mxu0 %v10214
          %10700 = vmatprep.subr.mxu0 %v10211
          %10701 = vmatpush2.msra.mxu0 %v10210
          %10702 = vmatprep.subr.mxu0 %v10207
          %10703 = vmatpush2.msra.mxu0 %v10206
          %10704 = vmatprep.subr.mxu0 %v10203
          %10705 = vmatpush2.msra.mxu0 %v10202
          %10706 = vmatprep.subr.mxu0 %v10199
          %10707 = vmatpush2.msra.mxu0 %v10198
          %10708 = vmatprep.subr.mxu0 %v10195
          %10709 = vmatpush2.msra.mxu0 %v10194
          %10710 = vmatprep.subr.mxu0 %v10191
          %10711 = vmatpush2.msra.mxu0 %v10190
          %10712 = vmatprep.subr.mxu0 %v10187
          %10713 = vmatpush2.msra.mxu0 %v10186
          %10714 = vmatprep.subr.mxu0 %v10183
          %10715 = vmatpush2.msra.mxu0 %v10182
          %10716 = vmatprep.mubr.f32.mxu0 %v9855
          %10717 = vmatmul.mubr.f32.gmra.mxu0 %v9854
          %v10718 = vpop.f32.mrf.mxu0
          %v10719 = vadd.f32 %v10635, %v10718
          %v10720 = vpop.f32.mrf.mxu0
          %v10721 = vadd.f32 %v10639, %v10720
          %10722 = vdwg.mxu0
          %10723 = vmatprep.subr.mxu0 %v10307
          %10724 = vmatpush1.msra.mxu0 %v10306
          %10725 = vmatprep.subr.mxu0 %v10303
          %10726 = vmatpush1.msra.mxu0 %v10302
          %10727 = vmatprep.subr.mxu0 %v10299
          %10728 = vmatpush1.msra.mxu0 %v10298
          %10729 = vmatprep.subr.mxu0 %v10295
          %10730 = vmatpush1.msra.mxu0 %v10294
          %10731 = vmatprep.subr.mxu0 %v10291
          %10732 = vmatpush1.msra.mxu0 %v10290
          %10733 = vmatprep.subr.mxu0 %v10287
          %10734 = vmatpush1.msra.mxu0 %v10286
          %10735 = vmatprep.subr.mxu0 %v10283
          %10736 = vmatpush1.msra.mxu0 %v10282
          %10737 = vmatprep.subr.mxu0 %v10279
          %10738 = vmatpush1.msra.mxu0 %v10278
          %10739 = vmatprep.subr.mxu0 %v10275
          %10740 = vmatpush1.msra.mxu0 %v10274
          %10741 = vmatprep.subr.mxu0 %v10271
          %10742 = vmatpush1.msra.mxu0 %v10270
          %10743 = vmatprep.subr.mxu0 %v10267
          %10744 = vmatpush1.msra.mxu0 %v10266
          %10745 = vmatprep.subr.mxu0 %v10263
          %10746 = vmatpush1.msra.mxu0 %v10262
          %10747 = vmatprep.subr.mxu0 %v10259
          %10748 = vmatpush1.msra.mxu0 %v10258
          %10749 = vmatprep.subr.mxu0 %v10255
          %10750 = vmatpush1.msra.mxu0 %v10254
          %10751 = vmatprep.subr.mxu0 %v10251
          %10752 = vmatpush1.msra.mxu0 %v10250
          %10753 = vmatprep.subr.mxu0 %v10247
          %10754 = vmatpush1.msra.mxu0 %v10246
          %10755 = vmatprep.subr.mxu0 %v10371
          %10756 = vmatpush2.msra.mxu0 %v10370
          %10757 = vmatprep.subr.mxu0 %v10367
          %10758 = vmatpush2.msra.mxu0 %v10366
          %10759 = vmatprep.subr.mxu0 %v10363
          %10760 = vmatpush2.msra.mxu0 %v10362
          %10761 = vmatprep.subr.mxu0 %v10359
          %10762 = vmatpush2.msra.mxu0 %v10358
          %10763 = vmatprep.subr.mxu0 %v10355
          %10764 = vmatpush2.msra.mxu0 %v10354
          %10765 = vmatprep.subr.mxu0 %v10351
          %10766 = vmatpush2.msra.mxu0 %v10350
          %10767 = vmatprep.subr.mxu0 %v10347
          %10768 = vmatpush2.msra.mxu0 %v10346
          %10769 = vmatprep.subr.mxu0 %v10343
          %10770 = vmatpush2.msra.mxu0 %v10342
          %10771 = vmatprep.subr.mxu0 %v10339
          %10772 = vmatpush2.msra.mxu0 %v10338
          %10773 = vmatprep.subr.mxu0 %v10335
          %10774 = vmatpush2.msra.mxu0 %v10334
          %10775 = vmatprep.subr.mxu0 %v10331
          %10776 = vmatpush2.msra.mxu0 %v10330
          %10777 = vmatprep.subr.mxu0 %v10327
          %10778 = vmatpush2.msra.mxu0 %v10326
          %10779 = vmatprep.subr.mxu0 %v10323
          %10780 = vmatpush2.msra.mxu0 %v10322
          %10781 = vmatprep.subr.mxu0 %v10319
          %10782 = vmatpush2.msra.mxu0 %v10318
          %10783 = vmatprep.subr.mxu0 %v10315
          %10784 = vmatpush2.msra.mxu0 %v10314
          %10785 = vmatprep.subr.mxu0 %v10311
          %10786 = vmatpush2.msra.mxu0 %v10310
          %10787 = vmatprep.mubr.f32.mxu0 %v9857
          %10788 = vmatmul.mubr.f32.gmra.mxu0 %v9856
          %v10789 = vpop.f32.mrf.mxu0
          %v10790 = vadd.f32 %v10719, %v10789
          %v10791 = vpop.f32.mrf.mxu0
          %v10792 = vadd.f32 %v10721, %v10791
          %10793 = vdwg.mxu0
          %10794 = vmatprep.subr.mxu0 %v10435
          %10795 = vmatpush1.msra.mxu0 %v10434
          %10796 = vmatprep.subr.mxu0 %v10431
          %10797 = vmatpush1.msra.mxu0 %v10430
          %10798 = vmatprep.subr.mxu0 %v10427
          %10799 = vmatpush1.msra.mxu0 %v10426
          %10800 = vmatprep.subr.mxu0 %v10423
          %10801 = vmatpush1.msra.mxu0 %v10422
          %10802 = vmatprep.subr.mxu0 %v10419
          %10803 = vmatpush1.msra.mxu0 %v10418
          %10804 = vmatprep.subr.mxu0 %v10415
          %10805 = vmatpush1.msra.mxu0 %v10414
          %10806 = vmatprep.subr.mxu0 %v10411
          %10807 = vmatpush1.msra.mxu0 %v10410
          %10808 = vmatprep.subr.mxu0 %v10407
          %10809 = vmatpush1.msra.mxu0 %v10406
          %10810 = vmatprep.subr.mxu0 %v10403
          %10811 = vmatpush1.msra.mxu0 %v10402
          %10812 = vmatprep.subr.mxu0 %v10399
          %10813 = vmatpush1.msra.mxu0 %v10398
          %10814 = vmatprep.subr.mxu0 %v10395
          %10815 = vmatpush1.msra.mxu0 %v10394
          %10816 = vmatprep.subr.mxu0 %v10391
          %10817 = vmatpush1.msra.mxu0 %v10390
          %10818 = vmatprep.subr.mxu0 %v10387
          %10819 = vmatpush1.msra.mxu0 %v10386
          %10820 = vmatprep.subr.mxu0 %v10383
          %10821 = vmatpush1.msra.mxu0 %v10382
          %10822 = vmatprep.subr.mxu0 %v10379
          %10823 = vmatpush1.msra.mxu0 %v10378
          %10824 = vmatprep.subr.mxu0 %v10375
          %10825 = vmatpush1.msra.mxu0 %v10374
          %10826 = vmatprep.subr.mxu0 %v10499
          %10827 = vmatpush2.msra.mxu0 %v10498
          %10828 = vmatprep.subr.mxu0 %v10495
          %10829 = vmatpush2.msra.mxu0 %v10494
          %10830 = vmatprep.subr.mxu0 %v10491
          %10831 = vmatpush2.msra.mxu0 %v10490
          %10832 = vmatprep.subr.mxu0 %v10487
          %10833 = vmatpush2.msra.mxu0 %v10486
          %10834 = vmatprep.subr.mxu0 %v10483
          %10835 = vmatpush2.msra.mxu0 %v10482
          %10836 = vmatprep.subr.mxu0 %v10479
          %10837 = vmatpush2.msra.mxu0 %v10478
          %10838 = vmatprep.subr.mxu0 %v10475
          %10839 = vmatpush2.msra.mxu0 %v10474
          %10840 = vmatprep.subr.mxu0 %v10471
          %10841 = vmatpush2.msra.mxu0 %v10470
          %10842 = vmatprep.subr.mxu0 %v10467
          %10843 = vmatpush2.msra.mxu0 %v10466
          %10844 = vmatprep.subr.mxu0 %v10463
          %10845 = vmatpush2.msra.mxu0 %v10462
          %10846 = vmatprep.subr.mxu0 %v10459
          %10847 = vmatpush2.msra.mxu0 %v10458
          %10848 = vmatprep.subr.mxu0 %v10455
          %10849 = vmatpush2.msra.mxu0 %v10454
          %10850 = vmatprep.subr.mxu0 %v10451
          %10851 = vmatpush2.msra.mxu0 %v10450
          %10852 = vmatprep.subr.mxu0 %v10447
          %10853 = vmatpush2.msra.mxu0 %v10446
          %10854 = vmatprep.subr.mxu0 %v10443
          %10855 = vmatpush2.msra.mxu0 %v10442
          %10856 = vmatprep.subr.mxu0 %v10439
          %10857 = vmatpush2.msra.mxu0 %v10438
          %10858 = vmatprep.mubr.f32.mxu0 %v9859
          %10859 = vmatmul.mubr.f32.gmra.mxu0 %v9858
          %v10860 = vpop.f32.mrf.mxu0
          %v10861 = vadd.f32 %v10790, %v10860
          %v10862 = vpop.f32.mrf.mxu0
          %v10863 = vadd.f32 %v10792, %v10862
          %10864 = vdwg.mxu0
          %10865 = vmatprep.subr.mxu0 %v10563
          %10866 = vmatpush1.msra.mxu0 %v10562
          %10867 = vmatprep.subr.mxu0 %v10559
          %10868 = vmatpush1.msra.mxu0 %v10558
          %10869 = vmatprep.subr.mxu0 %v10555
          %10870 = vmatpush1.msra.mxu0 %v10554
          %10871 = vmatprep.subr.mxu0 %v10551
          %10872 = vmatpush1.msra.mxu0 %v10550
          %10873 = vmatprep.subr.mxu0 %v10547
          %10874 = vmatpush1.msra.mxu0 %v10546
          %10875 = vmatprep.subr.mxu0 %v10543
          %10876 = vmatpush1.msra.mxu0 %v10542
          %10877 = vmatprep.subr.mxu0 %v10539
          %10878 = vmatpush1.msra.mxu0 %v10538
          %10879 = vmatprep.subr.mxu0 %v10535
          %10880 = vmatpush1.msra.mxu0 %v10534
          %10881 = vmatprep.subr.mxu0 %v10531
          %10882 = vmatpush1.msra.mxu0 %v10530
          %10883 = vmatprep.subr.mxu0 %v10527
          %10884 = vmatpush1.msra.mxu0 %v10526
          %10885 = vmatprep.subr.mxu0 %v10523
          %10886 = vmatpush1.msra.mxu0 %v10522
          %10887 = vmatprep.subr.mxu0 %v10519
          %10888 = vmatpush1.msra.mxu0 %v10518
          %10889 = vmatprep.subr.mxu0 %v10515
          %10890 = vmatpush1.msra.mxu0 %v10514
          %10891 = vmatprep.subr.mxu0 %v10511
          %10892 = vmatpush1.msra.mxu0 %v10510
          %10893 = vmatprep.subr.mxu0 %v10507
          %10894 = vmatpush1.msra.mxu0 %v10506
          %10895 = vmatprep.subr.mxu0 %v10503
          %10896 = vmatpush1.msra.mxu0 %v10502
          %10897 = vmatprep.subr.mxu0 %v10627
          %10898 = vmatpush2.msra.mxu0 %v10626
          %10899 = vmatprep.subr.mxu0 %v10623
          %10900 = vmatpush2.msra.mxu0 %v10622
          %10901 = vmatprep.subr.mxu0 %v10619
          %10902 = vmatpush2.msra.mxu0 %v10618
          %10903 = vmatprep.subr.mxu0 %v10615
          %10904 = vmatpush2.msra.mxu0 %v10614
          %10905 = vmatprep.subr.mxu0 %v10611
          %10906 = vmatpush2.msra.mxu0 %v10610
          %10907 = vmatprep.subr.mxu0 %v10607
          %10908 = vmatpush2.msra.mxu0 %v10606
          %10909 = vmatprep.subr.mxu0 %v10603
          %10910 = vmatpush2.msra.mxu0 %v10602
          %10911 = vmatprep.subr.mxu0 %v10599
          %10912 = vmatpush2.msra.mxu0 %v10598
          %10913 = vmatprep.subr.mxu0 %v10595
          %10914 = vmatpush2.msra.mxu0 %v10594
          %10915 = vmatprep.subr.mxu0 %v10591
          %10916 = vmatpush2.msra.mxu0 %v10590
          %10917 = vmatprep.subr.mxu0 %v10587
          %10918 = vmatpush2.msra.mxu0 %v10586
          %10919 = vmatprep.subr.mxu0 %v10583
          %10920 = vmatpush2.msra.mxu0 %v10582
          %10921 = vmatprep.subr.mxu0 %v10579
          %10922 = vmatpush2.msra.mxu0 %v10578
          %10923 = vmatprep.subr.mxu0 %v10575
          %10924 = vmatpush2.msra.mxu0 %v10574
          %10925 = vmatprep.subr.mxu0 %v10571
          %10926 = vmatpush2.msra.mxu0 %v10570
          %10927 = vmatprep.subr.mxu0 %v10567
          %10928 = vmatpush2.msra.mxu0 %v10566
          %10929 = vmatprep.mubr.f32.mxu0 %v9861
          %10930 = vmatmul.mubr.f32.gmra.mxu0 %v9860
          %v10931 = vpop.f32.mrf.mxu0
          %v10932 = vadd.f32 %v10861, %v10931
          %v10933 = vpop.f32.mrf.mxu0
          %v10934 = vadd.f32 %v10863, %v10933
          %10935 = vdwg.mxu0
          %10936 = vmatprep.subr.mxu0 %v10181
          %10937 = vmatpush1.msra.mxu0 %v10180
          %10938 = vmatprep.subr.mxu0 %v10177
          %10939 = vmatpush1.msra.mxu0 %v10176
          %10940 = vmatprep.subr.mxu0 %v10173
          %10941 = vmatpush1.msra.mxu0 %v10172
          %10942 = vmatprep.subr.mxu0 %v10169
          %10943 = vmatpush1.msra.mxu0 %v10168
          %10944 = vmatprep.subr.mxu0 %v10165
          %10945 = vmatpush1.msra.mxu0 %v10164
          %10946 = vmatprep.subr.mxu0 %v10161
          %10947 = vmatpush1.msra.mxu0 %v10160
          %10948 = vmatprep.subr.mxu0 %v10157
          %10949 = vmatpush1.msra.mxu0 %v10156
          %10950 = vmatprep.subr.mxu0 %v10153
          %10951 = vmatpush1.msra.mxu0 %v10152
          %10952 = vmatprep.subr.mxu0 %v10149
          %10953 = vmatpush1.msra.mxu0 %v10148
          %10954 = vmatprep.subr.mxu0 %v10145
          %10955 = vmatpush1.msra.mxu0 %v10144
          %10956 = vmatprep.subr.mxu0 %v10141
          %10957 = vmatpush1.msra.mxu0 %v10140
          %10958 = vmatprep.subr.mxu0 %v10137
          %10959 = vmatpush1.msra.mxu0 %v10136
          %10960 = vmatprep.subr.mxu0 %v10133
          %10961 = vmatpush1.msra.mxu0 %v10132
          %10962 = vmatprep.subr.mxu0 %v10129
          %10963 = vmatpush1.msra.mxu0 %v10128
          %10964 = vmatprep.subr.mxu0 %v10125
          %10965 = vmatpush1.msra.mxu0 %v10124
          %10966 = vmatprep.subr.mxu0 %v10121
          %10967 = vmatpush1.msra.mxu0 %v10120
          %10968 = vmatprep.subr.mxu0 %v10245
          %10969 = vmatpush2.msra.mxu0 %v10244
          %10970 = vmatprep.subr.mxu0 %v10241
          %10971 = vmatpush2.msra.mxu0 %v10240
          %10972 = vmatprep.subr.mxu0 %v10237
          %10973 = vmatpush2.msra.mxu0 %v10236
          %10974 = vmatprep.subr.mxu0 %v10233
          %10975 = vmatpush2.msra.mxu0 %v10232
          %10976 = vmatprep.subr.mxu0 %v10229
          %10977 = vmatpush2.msra.mxu0 %v10228
          %10978 = vmatprep.subr.mxu0 %v10225
          %10979 = vmatpush2.msra.mxu0 %v10224
          %10980 = vmatprep.subr.mxu0 %v10221
          %10981 = vmatpush2.msra.mxu0 %v10220
          %10982 = vmatprep.subr.mxu0 %v10217
          %10983 = vmatpush2.msra.mxu0 %v10216
          %10984 = vmatprep.subr.mxu0 %v10213
          %10985 = vmatpush2.msra.mxu0 %v10212
          %10986 = vmatprep.subr.mxu0 %v10209
          %10987 = vmatpush2.msra.mxu0 %v10208
          %10988 = vmatprep.subr.mxu0 %v10205
          %10989 = vmatpush2.msra.mxu0 %v10204
          %10990 = vmatprep.subr.mxu0 %v10201
          %10991 = vmatpush2.msra.mxu0 %v10200
          %10992 = vmatprep.subr.mxu0 %v10197
          %10993 = vmatpush2.msra.mxu0 %v10196
          %10994 = vmatprep.subr.mxu0 %v10193
          %10995 = vmatpush2.msra.mxu0 %v10192
          %10996 = vmatprep.subr.mxu0 %v10189
          %10997 = vmatpush2.msra.mxu0 %v10188
          %10998 = vmatprep.subr.mxu0 %v10185
          %10999 = vmatpush2.msra.mxu0 %v10184
          %11000 = vmatprep.mubr.f32.mxu0 %v9855
          %11001 = vmatmul.mubr.f32.gmra.mxu0 %v9854
          %v11002 = vpop.f32.mrf.mxu0
          %v11003 = vadd.f32 %v10643, %v11002
          %v11004 = vpop.f32.mrf.mxu0
          %v11005 = vadd.f32 %v10647, %v11004
          %11006 = vdwg.mxu0
          %11007 = vmatprep.subr.mxu0 %v10309
          %11008 = vmatpush1.msra.mxu0 %v10308
          %11009 = vmatprep.subr.mxu0 %v10305
          %11010 = vmatpush1.msra.mxu0 %v10304
          %11011 = vmatprep.subr.mxu0 %v10301
          %11012 = vmatpush1.msra.mxu0 %v10300
          %11013 = vmatprep.subr.mxu0 %v10297
          %11014 = vmatpush1.msra.mxu0 %v10296
          %11015 = vmatprep.subr.mxu0 %v10293
          %11016 = vmatpush1.msra.mxu0 %v10292
          %11017 = vmatprep.subr.mxu0 %v10289
          %11018 = vmatpush1.msra.mxu0 %v10288
          %11019 = vmatprep.subr.mxu0 %v10285
          %11020 = vmatpush1.msra.mxu0 %v10284
          %11021 = vmatprep.subr.mxu0 %v10281
          %11022 = vmatpush1.msra.mxu0 %v10280
          %11023 = vmatprep.subr.mxu0 %v10277
          %11024 = vmatpush1.msra.mxu0 %v10276
          %11025 = vmatprep.subr.mxu0 %v10273
          %11026 = vmatpush1.msra.mxu0 %v10272
          %11027 = vmatprep.subr.mxu0 %v10269
          %11028 = vmatpush1.msra.mxu0 %v10268
          %11029 = vmatprep.subr.mxu0 %v10265
          %11030 = vmatpush1.msra.mxu0 %v10264
          %11031 = vmatprep.subr.mxu0 %v10261
          %11032 = vmatpush1.msra.mxu0 %v10260
          %11033 = vmatprep.subr.mxu0 %v10257
          %11034 = vmatpush1.msra.mxu0 %v10256
          %11035 = vmatprep.subr.mxu0 %v10253
          %11036 = vmatpush1.msra.mxu0 %v10252
          %11037 = vmatprep.subr.mxu0 %v10249
          %11038 = vmatpush1.msra.mxu0 %v10248
          %11039 = vmatprep.subr.mxu0 %v10373
          %11040 = vmatpush2.msra.mxu0 %v10372
          %11041 = vmatprep.subr.mxu0 %v10369
          %11042 = vmatpush2.msra.mxu0 %v10368
          %11043 = vmatprep.subr.mxu0 %v10365
          %11044 = vmatpush2.msra.mxu0 %v10364
          %11045 = vmatprep.subr.mxu0 %v10361
          %11046 = vmatpush2.msra.mxu0 %v10360
          %11047 = vmatprep.subr.mxu0 %v10357
          %11048 = vmatpush2.msra.mxu0 %v10356
          %11049 = vmatprep.subr.mxu0 %v10353
          %11050 = vmatpush2.msra.mxu0 %v10352
          %11051 = vmatprep.subr.mxu0 %v10349
          %11052 = vmatpush2.msra.mxu0 %v10348
          %11053 = vmatprep.subr.mxu0 %v10345
          %11054 = vmatpush2.msra.mxu0 %v10344
          %11055 = vmatprep.subr.mxu0 %v10341
          %11056 = vmatpush2.msra.mxu0 %v10340
          %11057 = vmatprep.subr.mxu0 %v10337
          %11058 = vmatpush2.msra.mxu0 %v10336
          %11059 = vmatprep.subr.mxu0 %v10333
          %11060 = vmatpush2.msra.mxu0 %v10332
          %11061 = vmatprep.subr.mxu0 %v10329
          %11062 = vmatpush2.msra.mxu0 %v10328
          %11063 = vmatprep.subr.mxu0 %v10325
          %11064 = vmatpush2.msra.mxu0 %v10324
          %11065 = vmatprep.subr.mxu0 %v10321
          %11066 = vmatpush2.msra.mxu0 %v10320
          %11067 = vmatprep.subr.mxu0 %v10317
          %11068 = vmatpush2.msra.mxu0 %v10316
          %11069 = vmatprep.subr.mxu0 %v10313
          %11070 = vmatpush2.msra.mxu0 %v10312
          %11071 = vmatprep.mubr.f32.mxu0 %v9857
          %11072 = vmatmul.mubr.f32.gmra.mxu0 %v9856
          %v11073 = vpop.f32.mrf.mxu0
          %v11074 = vadd.f32 %v11003, %v11073
          %v11075 = vpop.f32.mrf.mxu0
          %v11076 = vadd.f32 %v11005, %v11075
          %11077 = vdwg.mxu0
          %11078 = vmatprep.subr.mxu0 %v10437
          %11079 = vmatpush1.msra.mxu0 %v10436
          %11080 = vmatprep.subr.mxu0 %v10433
          %11081 = vmatpush1.msra.mxu0 %v10432
          %11082 = vmatprep.subr.mxu0 %v10429
          %11083 = vmatpush1.msra.mxu0 %v10428
          %11084 = vmatprep.subr.mxu0 %v10425
          %11085 = vmatpush1.msra.mxu0 %v10424
          %11086 = vmatprep.subr.mxu0 %v10421
          %11087 = vmatpush1.msra.mxu0 %v10420
          %11088 = vmatprep.subr.mxu0 %v10417
          %11089 = vmatpush1.msra.mxu0 %v10416
          %11090 = vmatprep.subr.mxu0 %v10413
          %11091 = vmatpush1.msra.mxu0 %v10412
          %11092 = vmatprep.subr.mxu0 %v10409
          %11093 = vmatpush1.msra.mxu0 %v10408
          %11094 = vmatprep.subr.mxu0 %v10405
          %11095 = vmatpush1.msra.mxu0 %v10404
          %11096 = vmatprep.subr.mxu0 %v10401
          %11097 = vmatpush1.msra.mxu0 %v10400
          %11098 = vmatprep.subr.mxu0 %v10397
          %11099 = vmatpush1.msra.mxu0 %v10396
          %11100 = vmatprep.subr.mxu0 %v10393
          %11101 = vmatpush1.msra.mxu0 %v10392
          %11102 = vmatprep.subr.mxu0 %v10389
          %11103 = vmatpush1.msra.mxu0 %v10388
          %11104 = vmatprep.subr.mxu0 %v10385
          %11105 = vmatpush1.msra.mxu0 %v10384
          %11106 = vmatprep.subr.mxu0 %v10381
          %11107 = vmatpush1.msra.mxu0 %v10380
          %11108 = vmatprep.subr.mxu0 %v10377
          %11109 = vmatpush1.msra.mxu0 %v10376
          %11110 = vmatprep.subr.mxu0 %v10501
          %11111 = vmatpush2.msra.mxu0 %v10500
          %11112 = vmatprep.subr.mxu0 %v10497
          %11113 = vmatpush2.msra.mxu0 %v10496
          %11114 = vmatprep.subr.mxu0 %v10493
          %11115 = vmatpush2.msra.mxu0 %v10492
          %11116 = vmatprep.subr.mxu0 %v10489
          %11117 = vmatpush2.msra.mxu0 %v10488
          %11118 = vmatprep.subr.mxu0 %v10485
          %11119 = vmatpush2.msra.mxu0 %v10484
          %11120 = vmatprep.subr.mxu0 %v10481
          %11121 = vmatpush2.msra.mxu0 %v10480
          %11122 = vmatprep.subr.mxu0 %v10477
          %11123 = vmatpush2.msra.mxu0 %v10476
          %11124 = vmatprep.subr.mxu0 %v10473
          %11125 = vmatpush2.msra.mxu0 %v10472
          %11126 = vmatprep.subr.mxu0 %v10469
          %11127 = vmatpush2.msra.mxu0 %v10468
          %11128 = vmatprep.subr.mxu0 %v10465
          %11129 = vmatpush2.msra.mxu0 %v10464
          %11130 = vmatprep.subr.mxu0 %v10461
          %11131 = vmatpush2.msra.mxu0 %v10460
          %11132 = vmatprep.subr.mxu0 %v10457
          %11133 = vmatpush2.msra.mxu0 %v10456
          %11134 = vmatprep.subr.mxu0 %v10453
          %11135 = vmatpush2.msra.mxu0 %v10452
          %11136 = vmatprep.subr.mxu0 %v10449
          %11137 = vmatpush2.msra.mxu0 %v10448
          %11138 = vmatprep.subr.mxu0 %v10445
          %11139 = vmatpush2.msra.mxu0 %v10444
          %11140 = vmatprep.subr.mxu0 %v10441
          %11141 = vmatpush2.msra.mxu0 %v10440
          %11142 = vmatprep.mubr.f32.mxu0 %v9859
          %11143 = vmatmul.mubr.f32.gmra.mxu0 %v9858
          %v11144 = vpop.f32.mrf.mxu0
          %v11145 = vadd.f32 %v11074, %v11144
          %v11146 = vpop.f32.mrf.mxu0
          %v11147 = vadd.f32 %v11076, %v11146
          %11148 = vdwg.mxu0
          %11149 = vmatprep.subr.mxu0 %v10565
          %11150 = vmatpush1.msra.mxu0 %v10564
          %11151 = vmatprep.subr.mxu0 %v10561
          %11152 = vmatpush1.msra.mxu0 %v10560
          %11153 = vmatprep.subr.mxu0 %v10557
          %11154 = vmatpush1.msra.mxu0 %v10556
          %11155 = vmatprep.subr.mxu0 %v10553
          %11156 = vmatpush1.msra.mxu0 %v10552
          %11157 = vmatprep.subr.mxu0 %v10549
          %11158 = vmatpush1.msra.mxu0 %v10548
          %11159 = vmatprep.subr.mxu0 %v10545
          %11160 = vmatpush1.msra.mxu0 %v10544
          %11161 = vmatprep.subr.mxu0 %v10541
          %11162 = vmatpush1.msra.mxu0 %v10540
          %11163 = vmatprep.subr.mxu0 %v10537
          %11164 = vmatpush1.msra.mxu0 %v10536
          %11165 = vmatprep.subr.mxu0 %v10533
          %11166 = vmatpush1.msra.mxu0 %v10532
          %11167 = vmatprep.subr.mxu0 %v10529
          %11168 = vmatpush1.msra.mxu0 %v10528
          %11169 = vmatprep.subr.mxu0 %v10525
          %11170 = vmatpush1.msra.mxu0 %v10524
          %11171 = vmatprep.subr.mxu0 %v10521
          %11172 = vmatpush1.msra.mxu0 %v10520
          %11173 = vmatprep.subr.mxu0 %v10517
          %11174 = vmatpush1.msra.mxu0 %v10516
          %11175 = vmatprep.subr.mxu0 %v10513
          %11176 = vmatpush1.msra.mxu0 %v10512
          %11177 = vmatprep.subr.mxu0 %v10509
          %11178 = vmatpush1.msra.mxu0 %v10508
          %11179 = vmatprep.subr.mxu0 %v10505
          %11180 = vmatpush1.msra.mxu0 %v10504
          %11181 = vmatprep.subr.mxu0 %v10629
          %11182 = vmatpush2.msra.mxu0 %v10628
          %11183 = vmatprep.subr.mxu0 %v10625
          %11184 = vmatpush2.msra.mxu0 %v10624
          %11185 = vmatprep.subr.mxu0 %v10621
          %11186 = vmatpush2.msra.mxu0 %v10620
          %11187 = vmatprep.subr.mxu0 %v10617
          %11188 = vmatpush2.msra.mxu0 %v10616
          %11189 = vmatprep.subr.mxu0 %v10613
          %11190 = vmatpush2.msra.mxu0 %v10612
          %11191 = vmatprep.subr.mxu0 %v10609
          %11192 = vmatpush2.msra.mxu0 %v10608
          %11193 = vmatprep.subr.mxu0 %v10605
          %11194 = vmatpush2.msra.mxu0 %v10604
          %11195 = vmatprep.subr.mxu0 %v10601
          %11196 = vmatpush2.msra.mxu0 %v10600
          %11197 = vmatprep.subr.mxu0 %v10597
          %11198 = vmatpush2.msra.mxu0 %v10596
          %11199 = vmatprep.subr.mxu0 %v10593
          %11200 = vmatpush2.msra.mxu0 %v10592
          %11201 = vmatprep.subr.mxu0 %v10589
          %11202 = vmatpush2.msra.mxu0 %v10588
          %11203 = vmatprep.subr.mxu0 %v10585
          %11204 = vmatpush2.msra.mxu0 %v10584
          %11205 = vmatprep.subr.mxu0 %v10581
          %11206 = vmatpush2.msra.mxu0 %v10580
          %11207 = vmatprep.subr.mxu0 %v10577
          %11208 = vmatpush2.msra.mxu0 %v10576
          %11209 = vmatprep.subr.mxu0 %v10573
          %11210 = vmatpush2.msra.mxu0 %v10572
          %11211 = vmatprep.subr.mxu0 %v10569
          %11212 = vmatpush2.msra.mxu0 %v10568
          %11213 = vmatprep.mubr.f32.mxu0 %v9861
          %11214 = vmatmul.mubr.f32.gmra.mxu0 %v9860
          %v11215 = vpop.f32.mrf.mxu0
          %v11216 = vadd.f32 %v11145, %v11215
          %v11217 = vpop.f32.mrf.mxu0
          %v11218 = vadd.f32 %v11147, %v11217
          %11219 = vdwg.mxu0
          %v11220 = vmax.f32 %v10932, 0.0
          %v11221 = vmax.f32 %v10934, 0.0
          %v11222 = vmax.f32 %v11216, 0.0
          %v11223 = vmax.f32 %v11218, 0.0
          %v11224 = vld [vmem:[#allocation12] sm:$0xf]
          %v11225 = vld [vmem:[#allocation12 + $0x4] sm:$0xf]
          %v11226 = vld [vmem:[#allocation12 + $0x8] sm:$0xf]
          %v11227 = vld [vmem:[#allocation12 + $0xc] sm:$0xf]
          %v11228 = vld [vmem:[#allocation12 + $0x10] sm:$0xf]
          %v11229 = vld [vmem:[#allocation12 + $0x14] sm:$0xf]
          %v11230 = vld [vmem:[#allocation12 + $0x18] sm:$0xf]
          %v11231 = vld [vmem:[#allocation12 + $0x1c] sm:$0xf]
          %v11232 = vld [vmem:[#allocation12 + $0x20] sm:$0xf]
          %v11233 = vld [vmem:[#allocation12 + $0x24] sm:$0xf]
          %v11234 = vld [vmem:[#allocation12 + $0x28] sm:$0xf]
          %v11235 = vld [vmem:[#allocation12 + $0x2c] sm:$0xf]
          %v11236 = vld [vmem:[#allocation12 + $0x30] sm:$0xf]
          %v11237 = vld [vmem:[#allocation12 + $0x34] sm:$0xf]
          %v11238 = vld [vmem:[#allocation12 + $0x38] sm:$0xf]
          %v11239 = vld [vmem:[#allocation12 + $0x3c] sm:$0xf]
          %v11240 = vld [vmem:[#allocation12 + $0x40] sm:$0xf]
          %v11241 = vld [vmem:[#allocation12 + $0x44] sm:$0xf]
          %v11242 = vld [vmem:[#allocation12 + $0x48] sm:$0xf]
          %v11243 = vld [vmem:[#allocation12 + $0x4c] sm:$0xf]
          %v11244 = vld [vmem:[#allocation12 + $0x50] sm:$0xf]
          %v11245 = vld [vmem:[#allocation12 + $0x54] sm:$0xf]
          %v11246 = vld [vmem:[#allocation12 + $0x58] sm:$0xf]
          %v11247 = vld [vmem:[#allocation12 + $0x5c] sm:$0xf]
          %v11248 = vld [vmem:[#allocation12 + $0x60] sm:$0xf]
          %v11249 = vld [vmem:[#allocation12 + $0x64] sm:$0xf]
          %v11250 = vld [vmem:[#allocation12 + $0x68] sm:$0xf]
          %v11251 = vld [vmem:[#allocation12 + $0x6c] sm:$0xf]
          %v11252 = vld [vmem:[#allocation12 + $0x70] sm:$0xf]
          %v11253 = vld [vmem:[#allocation12 + $0x74] sm:$0xf]
          %v11254 = vld [vmem:[#allocation12 + $0x78] sm:$0xf]
          %v11255 = vld [vmem:[#allocation12 + $0x7c] sm:$0xf]
          %v11256 = vld [vmem:[#allocation12 + $0x80] sm:$0xf]
          %v11257 = vld [vmem:[#allocation12 + $0x84] sm:$0xf]
          %v11258 = vld [vmem:[#allocation12 + $0x88] sm:$0xf]
          %v11259 = vld [vmem:[#allocation12 + $0x8c] sm:$0xf]
          %v11260 = vld [vmem:[#allocation12 + $0x90] sm:$0xf]
          %v11261 = vld [vmem:[#allocation12 + $0x94] sm:$0xf]
          %v11262 = vld [vmem:[#allocation12 + $0x98] sm:$0xf]
          %v11263 = vld [vmem:[#allocation12 + $0x9c] sm:$0xf]
          %v11264 = vld [vmem:[#allocation12 + $0xa0] sm:$0xf]
          %v11265 = vld [vmem:[#allocation12 + $0xa4] sm:$0xf]
          %v11266 = vld [vmem:[#allocation12 + $0xa8] sm:$0xf]
          %v11267 = vld [vmem:[#allocation12 + $0xac] sm:$0xf]
          %v11268 = vld [vmem:[#allocation12 + $0xb0] sm:$0xf]
          %v11269 = vld [vmem:[#allocation12 + $0xb4] sm:$0xf]
          %v11270 = vld [vmem:[#allocation12 + $0xb8] sm:$0xf]
          %v11271 = vld [vmem:[#allocation12 + $0xbc] sm:$0xf]
          %v11272 = vld [vmem:[#allocation12 + $0xc0] sm:$0xf]
          %v11273 = vld [vmem:[#allocation12 + $0xc4] sm:$0xf]
          %v11274 = vld [vmem:[#allocation12 + $0xc8] sm:$0xf]
          %v11275 = vld [vmem:[#allocation12 + $0xcc] sm:$0xf]
          %v11276 = vld [vmem:[#allocation12 + $0xd0] sm:$0xf]
          %v11277 = vld [vmem:[#allocation12 + $0xd4] sm:$0xf]
          %v11278 = vld [vmem:[#allocation12 + $0xd8] sm:$0xf]
          %v11279 = vld [vmem:[#allocation12 + $0xdc] sm:$0xf]
          %v11280 = vld [vmem:[#allocation12 + $0xe0] sm:$0xf]
          %v11281 = vld [vmem:[#allocation12 + $0xe4] sm:$0xf]
          %v11282 = vld [vmem:[#allocation12 + $0xe8] sm:$0xf]
          %v11283 = vld [vmem:[#allocation12 + $0xec] sm:$0xf]
          %v11284 = vld [vmem:[#allocation12 + $0xf0] sm:$0xf]
          %v11285 = vld [vmem:[#allocation12 + $0xf4] sm:$0xf]
          %v11286 = vld [vmem:[#allocation12 + $0xf8] sm:$0xf]
          %v11287 = vld [vmem:[#allocation12 + $0xfc] sm:$0xf]
          %v11288 = vunpack.c.l.bf16 %v11224
          %v11289 = vunpack.c.l.bf16 %v11225
          %v11290 = vunpack.c.l.bf16 %v11226
          %v11291 = vunpack.c.l.bf16 %v11227
          %v11292 = vunpack.c.l.bf16 %v11228
          %v11293 = vunpack.c.l.bf16 %v11229
          %v11294 = vunpack.c.l.bf16 %v11230
          %v11295 = vunpack.c.l.bf16 %v11231
          %v11296 = vunpack.c.l.bf16 %v11232
          %v11297 = vunpack.c.l.bf16 %v11233
          %v11298 = vunpack.c.l.bf16 %v11234
          %v11299 = vunpack.c.l.bf16 %v11235
          %v11300 = vunpack.c.l.bf16 %v11236
          %v11301 = vunpack.c.l.bf16 %v11237
          %v11302 = vunpack.c.l.bf16 %v11238
          %v11303 = vunpack.c.l.bf16 %v11239
          %v11304 = vunpack.c.l.bf16 %v11240
          %v11305 = vunpack.c.l.bf16 %v11241
          %v11306 = vunpack.c.l.bf16 %v11242
          %v11307 = vunpack.c.l.bf16 %v11243
          %v11308 = vunpack.c.l.bf16 %v11244
          %v11309 = vunpack.c.l.bf16 %v11245
          %v11310 = vunpack.c.l.bf16 %v11246
          %v11311 = vunpack.c.l.bf16 %v11247
          %v11312 = vunpack.c.l.bf16 %v11248
          %v11313 = vunpack.c.l.bf16 %v11249
          %v11314 = vunpack.c.l.bf16 %v11250
          %v11315 = vunpack.c.l.bf16 %v11251
          %v11316 = vunpack.c.l.bf16 %v11252
          %v11317 = vunpack.c.l.bf16 %v11253
          %v11318 = vunpack.c.l.bf16 %v11254
          %v11319 = vunpack.c.l.bf16 %v11255
          %v11320 = vunpack.c.l.bf16 %v11256
          %v11321 = vunpack.c.l.bf16 %v11257
          %v11322 = vunpack.c.l.bf16 %v11258
          %v11323 = vunpack.c.l.bf16 %v11259
          %v11324 = vunpack.c.l.bf16 %v11260
          %v11325 = vunpack.c.l.bf16 %v11261
          %v11326 = vunpack.c.l.bf16 %v11262
          %v11327 = vunpack.c.l.bf16 %v11263
          %v11328 = vunpack.c.l.bf16 %v11264
          %v11329 = vunpack.c.l.bf16 %v11265
          %v11330 = vunpack.c.l.bf16 %v11266
          %v11331 = vunpack.c.l.bf16 %v11267
          %v11332 = vunpack.c.l.bf16 %v11268
          %v11333 = vunpack.c.l.bf16 %v11269
          %v11334 = vunpack.c.l.bf16 %v11270
          %v11335 = vunpack.c.l.bf16 %v11271
          %v11336 = vunpack.c.l.bf16 %v11272
          %v11337 = vunpack.c.l.bf16 %v11273
          %v11338 = vunpack.c.l.bf16 %v11274
          %v11339 = vunpack.c.l.bf16 %v11275
          %v11340 = vunpack.c.l.bf16 %v11276
          %v11341 = vunpack.c.l.bf16 %v11277
          %v11342 = vunpack.c.l.bf16 %v11278
          %v11343 = vunpack.c.l.bf16 %v11279
          %v11344 = vunpack.c.l.bf16 %v11280
          %v11345 = vunpack.c.l.bf16 %v11281
          %v11346 = vunpack.c.l.bf16 %v11282
          %v11347 = vunpack.c.l.bf16 %v11283
          %v11348 = vunpack.c.l.bf16 %v11284
          %v11349 = vunpack.c.l.bf16 %v11285
          %v11350 = vunpack.c.l.bf16 %v11286
          %v11351 = vunpack.c.l.bf16 %v11287
          %v11352 = vld [vmem:[#allocation14] sm:$0x1]
          %v11354 = vlaneseq
          %v11355 = vshrl.u32 %v11354, 7
          %v11356 = vsub.s32 0, %v11355
          %v11357 = vrot.slane %v11352, %v11356
          %11359 = vmatprep.subr.mxu0 0.0
          %11360 = vmatpush1.msra.mxu0 %v11303
          %11361 = vmatprep.subr.mxu0 0.0
          %11362 = vmatpush1.msra.mxu0 %v11302
          %11363 = vmatprep.subr.mxu0 0.0
          %11364 = vmatpush1.msra.mxu0 %v11301
          %11365 = vmatprep.subr.mxu0 0.0
          %11366 = vmatpush1.msra.mxu0 %v11300
          %11367 = vmatprep.subr.mxu0 0.0
          %11368 = vmatpush1.msra.mxu0 %v11299
          %11369 = vmatprep.subr.mxu0 0.0
          %11370 = vmatpush1.msra.mxu0 %v11298
          %11371 = vmatprep.subr.mxu0 0.0
          %11372 = vmatpush1.msra.mxu0 %v11297
          %11373 = vmatprep.subr.mxu0 0.0
          %11374 = vmatpush1.msra.mxu0 %v11296
          %11375 = vmatprep.subr.mxu0 0.0
          %11376 = vmatpush1.msra.mxu0 %v11295
          %11377 = vmatprep.subr.mxu0 0.0
          %11378 = vmatpush1.msra.mxu0 %v11294
          %11379 = vmatprep.subr.mxu0 0.0
          %11380 = vmatpush1.msra.mxu0 %v11293
          %11381 = vmatprep.subr.mxu0 0.0
          %11382 = vmatpush1.msra.mxu0 %v11292
          %11383 = vmatprep.subr.mxu0 0.0
          %11384 = vmatpush1.msra.mxu0 %v11291
          %11385 = vmatprep.subr.mxu0 0.0
          %11386 = vmatpush1.msra.mxu0 %v11290
          %11387 = vmatprep.subr.mxu0 0.0
          %11388 = vmatpush1.msra.mxu0 %v11289
          %11389 = vmatprep.subr.mxu0 0.0
          %11390 = vmatpush1.msra.mxu0 %v11288
          %11391 = vmatprep.subr.mxu0 0.0
          %11392 = vmatpush2.msra.mxu0 %v11319
          %11393 = vmatprep.subr.mxu0 0.0
          %11394 = vmatpush2.msra.mxu0 %v11318
          %11395 = vmatprep.subr.mxu0 0.0
          %11396 = vmatpush2.msra.mxu0 %v11317
          %11397 = vmatprep.subr.mxu0 0.0
          %11398 = vmatpush2.msra.mxu0 %v11316
          %11399 = vmatprep.subr.mxu0 0.0
          %11400 = vmatpush2.msra.mxu0 %v11315
          %11401 = vmatprep.subr.mxu0 0.0
          %11402 = vmatpush2.msra.mxu0 %v11314
          %11403 = vmatprep.subr.mxu0 0.0
          %11404 = vmatpush2.msra.mxu0 %v11313
          %11405 = vmatprep.subr.mxu0 0.0
          %11406 = vmatpush2.msra.mxu0 %v11312
          %11407 = vmatprep.subr.mxu0 0.0
          %11408 = vmatpush2.msra.mxu0 %v11311
          %11409 = vmatprep.subr.mxu0 0.0
          %11410 = vmatpush2.msra.mxu0 %v11310
          %11411 = vmatprep.subr.mxu0 0.0
          %11412 = vmatpush2.msra.mxu0 %v11309
          %11413 = vmatprep.subr.mxu0 0.0
          %11414 = vmatpush2.msra.mxu0 %v11308
          %11415 = vmatprep.subr.mxu0 0.0
          %11416 = vmatpush2.msra.mxu0 %v11307
          %11417 = vmatprep.subr.mxu0 0.0
          %11418 = vmatpush2.msra.mxu0 %v11306
          %11419 = vmatprep.subr.mxu0 0.0
          %11420 = vmatpush2.msra.mxu0 %v11305
          %11421 = vmatprep.subr.mxu0 0.0
          %11422 = vmatpush2.msra.mxu0 %v11304
          %11423 = vmatprep.mubr.f32.mxu0 %v11221
          %11424 = vmatmul.mubr.f32.gmra.mxu0 %v11220
          %v11425 = vpop.f32.mrf.mxu0
          %v11426 = vadd.f32 %v11357, %v11425
          %v11427 = vpop.f32.mrf.mxu0
          %11428 = vdwg.mxu0
          %11429 = vmatprep.subr.mxu0 0.0
          %11430 = vmatpush1.msra.mxu0 %v11335
          %11431 = vmatprep.subr.mxu0 0.0
          %11432 = vmatpush1.msra.mxu0 %v11334
          %11433 = vmatprep.subr.mxu0 0.0
          %11434 = vmatpush1.msra.mxu0 %v11333
          %11435 = vmatprep.subr.mxu0 0.0
          %11436 = vmatpush1.msra.mxu0 %v11332
          %11437 = vmatprep.subr.mxu0 0.0
          %11438 = vmatpush1.msra.mxu0 %v11331
          %11439 = vmatprep.subr.mxu0 0.0
          %11440 = vmatpush1.msra.mxu0 %v11330
          %11441 = vmatprep.subr.mxu0 0.0
          %11442 = vmatpush1.msra.mxu0 %v11329
          %11443 = vmatprep.subr.mxu0 0.0
          %11444 = vmatpush1.msra.mxu0 %v11328
          %11445 = vmatprep.subr.mxu0 0.0
          %11446 = vmatpush1.msra.mxu0 %v11327
          %11447 = vmatprep.subr.mxu0 0.0
          %11448 = vmatpush1.msra.mxu0 %v11326
          %11449 = vmatprep.subr.mxu0 0.0
          %11450 = vmatpush1.msra.mxu0 %v11325
          %11451 = vmatprep.subr.mxu0 0.0
          %11452 = vmatpush1.msra.mxu0 %v11324
          %11453 = vmatprep.subr.mxu0 0.0
          %11454 = vmatpush1.msra.mxu0 %v11323
          %11455 = vmatprep.subr.mxu0 0.0
          %11456 = vmatpush1.msra.mxu0 %v11322
          %11457 = vmatprep.subr.mxu0 0.0
          %11458 = vmatpush1.msra.mxu0 %v11321
          %11459 = vmatprep.subr.mxu0 0.0
          %11460 = vmatpush1.msra.mxu0 %v11320
          %11461 = vmatprep.subr.mxu0 0.0
          %11462 = vmatpush2.msra.mxu0 %v11351
          %11463 = vmatprep.subr.mxu0 0.0
          %11464 = vmatpush2.msra.mxu0 %v11350
          %11465 = vmatprep.subr.mxu0 0.0
          %11466 = vmatpush2.msra.mxu0 %v11349
          %11467 = vmatprep.subr.mxu0 0.0
          %11468 = vmatpush2.msra.mxu0 %v11348
          %11469 = vmatprep.subr.mxu0 0.0
          %11470 = vmatpush2.msra.mxu0 %v11347
          %11471 = vmatprep.subr.mxu0 0.0
          %11472 = vmatpush2.msra.mxu0 %v11346
          %11473 = vmatprep.subr.mxu0 0.0
          %11474 = vmatpush2.msra.mxu0 %v11345
          %11475 = vmatprep.subr.mxu0 0.0
          %11476 = vmatpush2.msra.mxu0 %v11344
          %11477 = vmatprep.subr.mxu0 0.0
          %11478 = vmatpush2.msra.mxu0 %v11343
          %11479 = vmatprep.subr.mxu0 0.0
          %11480 = vmatpush2.msra.mxu0 %v11342
          %11481 = vmatprep.subr.mxu0 0.0
          %11482 = vmatpush2.msra.mxu0 %v11341
          %11483 = vmatprep.subr.mxu0 0.0
          %11484 = vmatpush2.msra.mxu0 %v11340
          %11485 = vmatprep.subr.mxu0 0.0
          %11486 = vmatpush2.msra.mxu0 %v11339
          %11487 = vmatprep.subr.mxu0 0.0
          %11488 = vmatpush2.msra.mxu0 %v11338
          %11489 = vmatprep.subr.mxu0 0.0
          %11490 = vmatpush2.msra.mxu0 %v11337
          %11491 = vmatprep.subr.mxu0 0.0
          %11492 = vmatpush2.msra.mxu0 %v11336
          %11493 = vmatprep.mubr.f32.mxu0 %v11223
          %11494 = vmatmul.mubr.f32.gmra.mxu0 %v11222
          %v11495 = vpop.f32.mrf.mxu0
          %v11496 = vadd.f32 %v11426, %v11495
          %v11497 = vpop.f32.mrf.mxu0
          %11498 = vdwg.mxu0
          %11499 = vst [vmem:[#allocation15] sm:$0xff] %v11496
        $region88: #{tpu_custom_call.1} parent=47 // pred_fallthru
          _
        // Predicated region
        $region89: #{tpu_custom_call.1} parent=47 // pred_check
          %p11500 = pneg %p197
        $region90: #{tpu_custom_call.1} parent=47 // pred_check_branch
          %11502 = sbr.rel (%p11500) target = $region92
        $region91: #{tpu_custom_call.1} parent=47 // pred_region
          %s11504 = ssub.s32 128, 128
          %11505 = vsyncadd [#allocation5], %s11504
          %s11507 = sshll.u32 [#allocation15], 4
          %s11508 = int_to_ptr.vmem [resolvable:$true] %s11507
          %11510 = dma.vmem_to_hbm [thread:$0]  %s11508, 128, %s7, [#allocation5]
        $region92: #{tpu_custom_call.1} parent=47 // pred_fallthru
          _
        // Predicated region
        $region93: #{tpu_custom_call.1} parent=47 // pred_check
          %p11511 = pneg %p197
        $region94: #{tpu_custom_call.1} parent=47 // pred_check_branch
          %11513 = sbr.rel (%p11511) target = $region96
        $region95: #{tpu_custom_call.1} parent=47 // pred_region
          %11514 = dma.done [#allocation5], 128
        $region96: #{tpu_custom_call.1} parent=47 // pred_fallthru
          _
      $region48: #{tpu_custom_call.1} parent=5 // pred_fallthru
        _
      %p11515 = scmp.le.s32.totalorder 2, %s22
      // Predicated region
      $region97: #{tpu_custom_call.1} parent=5 // pred_check
        %p11516 = pneg %p11515
      $region98: #{tpu_custom_call.1} parent=5 // pred_check_branch
        %11518 = sbr.rel (%p11516) target = $region100
      $region99: #{tpu_custom_call.1} parent=5 // pred_region
        %s11519 = ssub.s32 %s22, 2
      $region100: #{tpu_custom_call.1} parent=5 // pred_fallthru
        _
    $region6: #{tpu_custom_call.1} parent=1 // loop_footer
      %s26 = sadd.s32 1, %s22
    $region7: #{tpu_custom_call.1} parent=1 // loop_footer_branch
      %21 = sbr.rel target = $region3
    $region8: #{tpu_custom_call.1} parent=1 // loop_exit
      _
    %11520 = vsyncpa [#allocation4], 1
    %s11521 = scalar_lea.sflag [#allocation4], 1
    %11522 = vsyncpa %s11521, 1
    %11523 = vsyncpa [#allocation7], 1
    %s11524 = scalar_lea.sflag [#allocation7], 1
    %11525 = vsyncpa %s11524, 1
    %11526 = vsyncpa [#allocation10], 1
    %11527 = vsyncpa [#allocation13], 1
    %11528 = vsyncpa [#allocation5], 1
    %s11529 = scalar_lea.sflag [#allocation5], 1
    %11530 = vsyncpa %s11529, 1

</llo_original>
